<compile_context>
chip_gen: v7x
topology: tpu7x:2x2x1
jax: 0.10.0
libtpu: 0.0.40
codegen_flags: <defaults>
</compile_context>

<pallas_src>
import jax
import jax.numpy as jnp
from jax.experimental import pallas as pl
from jax.experimental.pallas import tpu as pltpu

D_IN, H1, H2, H3, D_OUT = 2800, 512, 256, 128, 28
D_OUT_PAD = 128      # lane-dense output width (sliced back to 28 in wrapper)


def _round_up(n, m):
    return ((n + m - 1) // m) * m


def _cdiv(a, b):
    return -(-a // b)


def _prelu(h, alpha):
    return jnp.where(h >= 0, h, alpha * h)


def encoder_kernel(a_ref,            # SMEM (3,) f32   PReLU alphas
                   x_ref,            # (tb, 2800) bf16
                   w1_ref, b1_ref,   # (2800, 512) bf16, (1, 512) f32
                   w2_ref, b2_ref,   # (512, 256)  bf16, (1, 256) f32
                   w3_ref, b3_ref,   # (256, 128)  bf16, (1, 128) f32
                   w4_ref, b4_ref,   # (128, 128)  bf16, (1, 128) f32
                   o_ref):           # (tb, 128)   f32
    h = jnp.dot(x_ref[...], w1_ref[...], preferred_element_type=jnp.float32)
    h = _prelu(h + b1_ref[...], a_ref[0])

    h = jnp.dot(h.astype(jnp.bfloat16), w2_ref[...],
                preferred_element_type=jnp.float32)
    h = _prelu(h + b2_ref[...], a_ref[1])

    h = jnp.dot(h.astype(jnp.bfloat16), w3_ref[...],
                preferred_element_type=jnp.float32)
    h = _prelu(h + b3_ref[...], a_ref[2])

    h = jnp.dot(h.astype(jnp.bfloat16), w4_ref[...],
                preferred_element_type=jnp.float32)
    o_ref[...] = (h + b4_ref[...]).astype(o_ref.dtype)


def _choose_tiling(B, tb_cap):
    """Pick (tile_rows, num_steps): tile multiple of 8, capped by tb_cap,
    padding waste bounded to <8 rows per step, and an even step count whenever
    the batch allows (balanced v7x megacore sharding)."""
    b8 = _round_up(max(B, 1), 8)
    tb_cap = max(8, _round_up(tb_cap, 8))
    n = _cdiv(b8, tb_cap)            # minimum steps under the tile cap
    if b8 >= 16:
        n = max(n, 2)                # give both v7x TensorCores work
        if n % 2 == 1:
            n += 1                   # balanced parallel axis
    tb = _round_up(_cdiv(b8, n), 8)
    return tb, n


def encoder_forward(x, packed, *, tb=512, single_buffer_weights=True):
    """x: [B, 2800] float (f32 or bf16) -> [B, 28] float32.
    `packed` from pack_params."""
    (w1, b1, w2, b2, w3, b3, w4, b4, alphas) = packed
    assert alphas.shape == (3,), "expected scalar PReLU (num_parameters=1) per layer"
    B = x.shape[0]
    assert x.shape[1] == D_IN

    tb_eff, n_steps = _choose_tiling(B, tb)
    b_pad = tb_eff * n_steps

    # Cast to bf16 once in the wrapper (halves the dominant HBM stream); only
    # pad the batch, and only when required -- no padded f32 staging copy.
    xb = x.astype(jnp.bfloat16)
    if b_pad != B:
        xb = jnp.pad(xb, ((0, b_pad - B), (0, 0)))

    weight_bytes = (w1.size + w2.size + w3.size + w4.size) * 2   # bf16
    bias_bytes = (b1.size + b2.size + b3.size + b4.size) * 4     # f32
    cost = pl.CostEstimate(
        flops=2 * b_pad * (D_IN * H1 + H1 * H2 + H2 * H3 + H3 * D_OUT_PAD),
        transcendentals=0,
        bytes_accessed=(b_pad * D_IN * 2 + b_pad * D_OUT_PAD * 4
                        + weight_bytes + bias_bytes),
    )

    def run(buffered_weights):
        if buffered_weights:
            # Constant-index weight/bias blocks: single-buffer them (no
            # pipelining needed) to free ~3.2 MB of VMEM (matters most on v7x).
            resident = lambda shape: pl.BlockSpec(
                shape, lambda i: (0, 0), pipeline_mode=pl.Buffered(1))
        else:
            resident = lambda shape: pl.BlockSpec(shape, lambda i: (0, 0))

        grid_spec = pltpu.PrefetchScalarGridSpec(
            num_scalar_prefetch=0,
            grid=(n_steps,),
            in_specs=[
                pl.BlockSpec(memory_space=pltpu.MemorySpace.SMEM),  # alphas (3,)
                pl.BlockSpec((tb_eff, D_IN), lambda i: (i, 0)),     # x tile
                resident((D_IN, H1)), resident((1, H1)),
                resident((H1, H2)), resident((1, H2)),
                resident((H2, H3)), resident((1, H3)),
                resident((H3, D_OUT_PAD)), resident((1, D_OUT_PAD)),
            ],
            out_specs=pl.BlockSpec((tb_eff, D_OUT_PAD), lambda i: (i, 0)),
        )
        return pl.pallas_call(
            encoder_kernel,
            out_shape=jax.ShapeDtypeStruct((b_pad, D_OUT_PAD), jnp.float32),
            grid_spec=grid_spec,
            compiler_params=pltpu.CompilerParams(
                dimension_semantics=("parallel",),
                # Needed on v5e (16 MiB scoped default) for large tiles;
                # comfortable headroom under v7x's 64 MiB physical VMEM
                # (actual use at tb=512 is ~10-13 MiB).
                vmem_limit_bytes=48 << 20,
            ),
            cost_estimate=cost,
        )(alphas, xb, w1, b1, w2, b2, w3, b3, w4, b4)

    if single_buffer_weights:
        try:
            out = run(True)
        except Exception:
            # Older JAX without pipeline_mode / Buffered(1): identical kernel,
            # default (double) buffering for the constant weight blocks.
            out = run(False)
    else:
        out = run(False)

    return out[:B, :D_OUT]


def init_params(key):
    """Deterministic synthetic f32 parameters matching the PyTorch shapes
    (weights already transposed to [in_features, out_features])."""
    ks = jax.random.split(key, 8)

    def linear(kw, kb, fan_in, fan_out):
        bound = 1.0 / jnp.sqrt(fan_in)
        w = jax.random.uniform(kw, (fan_in, fan_out), jnp.float32, -bound, bound)
        b = jax.random.uniform(kb, (1, fan_out), jnp.float32, -bound, bound)
        return w, b

    w1, b1 = linear(ks[0], ks[1], D_IN, H1)
    w2, b2 = linear(ks[2], ks[3], H1, H2)
    w3, b3 = linear(ks[4], ks[5], H2, H3)
    w4, b4 = linear(ks[6], ks[7], H3, D_OUT)
    alphas = jnp.full((3,), 0.25, jnp.float32)   # PReLU default init (scalar)
    return (w1, b1, w2, b2, w3, b3, w4, b4, alphas)


def pack_params(params):
    """Cast weights to bf16 for the kernel; pad only the last layer's output
    dim (28 -> 128) for lane-dense stores."""
    (w1, b1, w2, b2, w3, b3, w4, b4, alphas) = params
    w4p = jnp.pad(w4, ((0, 0), (0, D_OUT_PAD - D_OUT))).astype(jnp.bfloat16)
    b4p = jnp.pad(b4, ((0, 0), (0, D_OUT_PAD - D_OUT))).astype(jnp.float32)
    return (w1.astype(jnp.bfloat16), b1.astype(jnp.float32),
            w2.astype(jnp.bfloat16), b2.astype(jnp.float32),
            w3.astype(jnp.bfloat16), b3.astype(jnp.float32),
            w4p, b4p, alphas.astype(jnp.float32))


def encoder_ref(x, params):
    """Pure f32 reference of the PyTorch module (unpadded f32 weights)."""
    (w1, b1, w2, b2, w3, b3, w4, b4, a) = params
    h = x @ w1 + b1
    h = jnp.where(h >= 0, h, a[0] * h)
    h = h @ w2 + b2
    h = jnp.where(h >= 0, h, a[1] * h)
    h = h @ w3 + b3
    h = jnp.where(h >= 0, h, a[2] * h)
    return h @ w4 + b4


def encoder_ref_bf16(x, packed):
    """Reference mirroring the kernel's bf16-input / f32-accumulate matmuls."""
    (w1, b1, w2, b2, w3, b3, w4, b4, a) = packed
    f32 = lambda t: t.astype(jnp.float32)
    rnd = lambda t: t.astype(jnp.bfloat16).astype(jnp.float32)
    h = rnd(x) @ f32(w1) + b1
    h = jnp.where(h >= 0, h, a[0] * h)
    h = rnd(h) @ f32(w2) + b2
    h = jnp.where(h >= 0, h, a[1] * h)
    h = rnd(h) @ f32(w3) + b3
    h = jnp.where(h >= 0, h, a[2] * h)
    h = rnd(h) @ f32(w4) + b4
    return h[:, :D_OUT]


if __name__ == "__main__":
    key = jax.random.PRNGKey(0)
    kp, kx = jax.random.split(key)
    params = init_params(kp)
    packed = pack_params(params)

    B = 8
    x = jax.random.normal(kx, (B, D_IN), jnp.float32)

    out = encoder_forward(x, packed)           # small B -> single 8-row tile
    out = jax.block_until_ready(out)
    assert out.shape == (B, D_OUT)

    # Tight check vs a reference using the same bf16-rounded matmul inputs and
    # f32 accumulation (differences are only accumulation-order rounding).
    ref_bf16 = encoder_ref_bf16(x, packed)
    assert jnp.allclose(out, ref_bf16, atol=2e-3, rtol=2e-3), \
        "mismatch vs bf16-mirrored reference"

    # Loose sanity check vs the pure-f32 PyTorch-equivalent forward
    # (deviation comes only from bf16 weight/activation rounding).
    ref_f32 = encoder_ref(x, params)
    assert jnp.allclose(out, ref_f32, atol=1e-1, rtol=1e-1), \
        "mismatch vs f32 reference"

    print("KERNEL_OK")
</pallas_src>

<mosaic_0001>
module attributes {stable_mosaic.version = 11 : i64} {
  func.func @encoder_kernel(%arg0: i32, %arg1: memref<3xf32, #tpu.memory_space<smem>>, %arg2: memref<8x2800xbf16, #tpu.memory_space<vmem>>, %arg3: memref<2800x512xbf16, #tpu.memory_space<vmem>>, %arg4: memref<1x512xf32, #tpu.memory_space<vmem>>, %arg5: memref<512x256xbf16, #tpu.memory_space<vmem>>, %arg6: memref<1x256xf32, #tpu.memory_space<vmem>>, %arg7: memref<256x128xbf16, #tpu.memory_space<vmem>>, %arg8: memref<1x128xf32, #tpu.memory_space<vmem>>, %arg9: memref<128x128xbf16, #tpu.memory_space<vmem>>, %arg10: memref<1x128xf32, #tpu.memory_space<vmem>>, %arg11: memref<8x128xf32, #tpu.memory_space<vmem>>) attributes {dimension_semantics = [#tpu.dimension_semantics<parallel>], iteration_bounds = array<i64: 1>, scalar_prefetch = 0 : i64, scratch_operands = 0 : i64, tpu.core_type = #tpu.core_type<tc>, window_params = [{transform_indices = @transform_0, window_bounds = array<i64: 3>}, {transform_indices = @transform_1, window_bounds = array<i64: 8, 2800>}, {pipeline_mode = #tpu.pipeline_mode<synchronous>, transform_indices = @transform_2, window_bounds = array<i64: 2800, 512>}, {pipeline_mode = #tpu.pipeline_mode<synchronous>, transform_indices = @transform_3, window_bounds = array<i64: 1, 512>}, {pipeline_mode = #tpu.pipeline_mode<synchronous>, transform_indices = @transform_4, window_bounds = array<i64: 512, 256>}, {pipeline_mode = #tpu.pipeline_mode<synchronous>, transform_indices = @transform_5, window_bounds = array<i64: 1, 256>}, {pipeline_mode = #tpu.pipeline_mode<synchronous>, transform_indices = @transform_6, window_bounds = array<i64: 256, 128>}, {pipeline_mode = #tpu.pipeline_mode<synchronous>, transform_indices = @transform_7, window_bounds = array<i64: 1, 128>}, {pipeline_mode = #tpu.pipeline_mode<synchronous>, transform_indices = @transform_8, window_bounds = array<i64: 128, 128>}, {pipeline_mode = #tpu.pipeline_mode<synchronous>, transform_indices = @transform_9, window_bounds = array<i64: 1, 128>}, {transform_indices = @transform_10, window_bounds = array<i64: 8, 128>}]} {
    %c0 = arith.constant 0 : index
    %c0_0 = arith.constant 0 : index
    %0 = vector.load %arg2[%c0, %c0_0] : memref<8x2800xbf16, #tpu.memory_space<vmem>>, vector<8x2800xbf16>
    %c0_1 = arith.constant 0 : index
    %c0_2 = arith.constant 0 : index
    %1 = vector.load %arg3[%c0_1, %c0_2] : memref<2800x512xbf16, #tpu.memory_space<vmem>>, vector<2800x512xbf16>
    %cst = arith.constant dense<0.000000e+00> : vector<8x512xf32>
    %2 = tpu.matmul %0, %1, %cst {dimension_numbers = #tpu.dot_dimension_numbers<[1], [0], [0], [1], [0, 0, 1, 1], [], []>} : vector<8x2800xbf16>, vector<2800x512xbf16>, vector<8x512xf32> -> vector<8x512xf32>
    %c0_3 = arith.constant 0 : index
    %c0_4 = arith.constant 0 : index
    %3 = vector.load %arg4[%c0_3, %c0_4] : memref<1x512xf32, #tpu.memory_space<vmem>>, vector<1x512xf32>
    %4 = vector.broadcast %3 : vector<1x512xf32> to vector<8x512xf32>
    %5 = arith.addf %2, %4 : vector<8x512xf32>
    %c0_5 = arith.constant 0 : index
    %6 = memref.load %arg1[%c0_5] : memref<3xf32, #tpu.memory_space<smem>>
    %cst_6 = arith.constant 0.000000e+00 : f32
    %7 = vector.broadcast %cst_6 : f32 to vector<8x512xf32>
    %8 = arith.cmpf oge, %5, %7 : vector<8x512xf32>
    %9 = vector.broadcast %6 : f32 to vector<8x512xf32>
    %10 = arith.mulf %9, %5 : vector<8x512xf32>
    %11 = arith.select %8, %5, %10 : vector<8x512xi1>, vector<8x512xf32>
    %12 = arith.truncf %11 : vector<8x512xf32> to vector<8x512xbf16>
    %c0_7 = arith.constant 0 : index
    %c0_8 = arith.constant 0 : index
    %13 = vector.load %arg5[%c0_7, %c0_8] : memref<512x256xbf16, #tpu.memory_space<vmem>>, vector<512x256xbf16>
    %cst_9 = arith.constant dense<0.000000e+00> : vector<8x256xf32>
    %14 = tpu.matmul %12, %13, %cst_9 {dimension_numbers = #tpu.dot_dimension_numbers<[1], [0], [0], [1], [0, 0, 1, 1], [], []>} : vector<8x512xbf16>, vector<512x256xbf16>, vector<8x256xf32> -> vector<8x256xf32>
    %c0_10 = arith.constant 0 : index
    %c0_11 = arith.constant 0 : index
    %15 = vector.load %arg6[%c0_10, %c0_11] : memref<1x256xf32, #tpu.memory_space<vmem>>, vector<1x256xf32>
    %16 = vector.broadcast %15 : vector<1x256xf32> to vector<8x256xf32>
    %17 = arith.addf %14, %16 : vector<8x256xf32>
    %c1 = arith.constant 1 : index
    %18 = memref.load %arg1[%c1] : memref<3xf32, #tpu.memory_space<smem>>
    %cst_12 = arith.constant 0.000000e+00 : f32
    %19 = vector.broadcast %cst_12 : f32 to vector<8x256xf32>
    %20 = arith.cmpf oge, %17, %19 : vector<8x256xf32>
    %21 = vector.broadcast %18 : f32 to vector<8x256xf32>
    %22 = arith.mulf %21, %17 : vector<8x256xf32>
    %23 = arith.select %20, %17, %22 : vector<8x256xi1>, vector<8x256xf32>
    %24 = arith.truncf %23 : vector<8x256xf32> to vector<8x256xbf16>
    %c0_13 = arith.constant 0 : index
    %c0_14 = arith.constant 0 : index
    %25 = vector.load %arg7[%c0_13, %c0_14] : memref<256x128xbf16, #tpu.memory_space<vmem>>, vector<256x128xbf16>
    %cst_15 = arith.constant dense<0.000000e+00> : vector<8x128xf32>
    %26 = tpu.matmul %24, %25, %cst_15 {dimension_numbers = #tpu.dot_dimension_numbers<[1], [0], [0], [1], [0, 0, 1, 1], [], []>} : vector<8x256xbf16>, vector<256x128xbf16>, vector<8x128xf32> -> vector<8x128xf32>
    %c0_16 = arith.constant 0 : index
    %c0_17 = arith.constant 0 : index
    %27 = vector.load %arg8[%c0_16, %c0_17] : memref<1x128xf32, #tpu.memory_space<vmem>>, vector<1x128xf32>
    %28 = vector.broadcast %27 : vector<1x128xf32> to vector<8x128xf32>
    %29 = arith.addf %26, %28 : vector<8x128xf32>
    %c2 = arith.constant 2 : index
    %30 = memref.load %arg1[%c2] : memref<3xf32, #tpu.memory_space<smem>>
    %cst_18 = arith.constant 0.000000e+00 : f32
    %31 = vector.broadcast %cst_18 : f32 to vector<8x128xf32>
    %32 = arith.cmpf oge, %29, %31 : vector<8x128xf32>
    %33 = vector.broadcast %30 : f32 to vector<8x128xf32>
    %34 = arith.mulf %33, %29 : vector<8x128xf32>
    %35 = arith.select %32, %29, %34 : vector<8x128xi1>, vector<8x128xf32>
    %36 = arith.truncf %35 : vector<8x128xf32> to vector<8x128xbf16>
    %c0_19 = arith.constant 0 : index
    %c0_20 = arith.constant 0 : index
    %37 = vector.load %arg9[%c0_19, %c0_20] : memref<128x128xbf16, #tpu.memory_space<vmem>>, vector<128x128xbf16>
    %cst_21 = arith.constant dense<0.000000e+00> : vector<8x128xf32>
    %38 = tpu.matmul %36, %37, %cst_21 {dimension_numbers = #tpu.dot_dimension_numbers<[1], [0], [0], [1], [0, 0, 1, 1], [], []>} : vector<8x128xbf16>, vector<128x128xbf16>, vector<8x128xf32> -> vector<8x128xf32>
    %c0_22 = arith.constant 0 : index
    %c0_23 = arith.constant 0 : index
    %39 = vector.load %arg10[%c0_22, %c0_23] : memref<1x128xf32, #tpu.memory_space<vmem>>, vector<1x128xf32>
    %40 = vector.broadcast %39 : vector<1x128xf32> to vector<8x128xf32>
    %41 = arith.addf %38, %40 : vector<8x128xf32>
    %c0_24 = arith.constant 0 : index
    %c0_25 = arith.constant 0 : index
    %42 = vector.load %arg11[%c0_24, %c0_25] : memref<8x128xf32, #tpu.memory_space<vmem>>, vector<8x128xf32>
    tpu.vector_store %arg11[%c0_24, %c0_25], %41 {strides = array<i32>} : memref<8x128xf32, #tpu.memory_space<vmem>>, vector<8x128xf32>,
    return
  }
  func.func @transform_0(%arg0: i32) -> i32 {
    %c0_i32 = arith.constant 0 : i32
    %c0_i32_0 = arith.constant 0 : i32
    return %c0_i32 : i32
  }
  func.func @transform_1(%arg0: i32) -> (i32, i32) {
    %c0_i32 = arith.constant 0 : i32
    %c0_i32_0 = arith.constant 0 : i32
    return %arg0, %c0_i32 : i32, i32
  }
  func.func @transform_2(%arg0: i32) -> (i32, i32) {
    %c0_i32 = arith.constant 0 : i32
    %c0_i32_0 = arith.constant 0 : i32
    %c0_i32_1 = arith.constant 0 : i32
    return %c0_i32, %c0_i32_0 : i32, i32
  }
  func.func @transform_3(%arg0: i32) -> (i32, i32) {
    %c0_i32 = arith.constant 0 : i32
    %c0_i32_0 = arith.constant 0 : i32
    %c0_i32_1 = arith.constant 0 : i32
    return %c0_i32, %c0_i32_0 : i32, i32
  }
  func.func @transform_4(%arg0: i32) -> (i32, i32) {
    %c0_i32 = arith.constant 0 : i32
    %c0_i32_0 = arith.constant 0 : i32
    %c0_i32_1 = arith.constant 0 : i32
    return %c0_i32, %c0_i32_0 : i32, i32
  }
  func.func @transform_5(%arg0: i32) -> (i32, i32) {
    %c0_i32 = arith.constant 0 : i32
    %c0_i32_0 = arith.constant 0 : i32
    %c0_i32_1 = arith.constant 0 : i32
    return %c0_i32, %c0_i32_0 : i32, i32
  }
  func.func @transform_6(%arg0: i32) -> (i32, i32) {
    %c0_i32 = arith.constant 0 : i32
    %c0_i32_0 = arith.constant 0 : i32
    %c0_i32_1 = arith.constant 0 : i32
    return %c0_i32, %c0_i32_0 : i32, i32
  }
  func.func @transform_7(%arg0: i32) -> (i32, i32) {
    %c0_i32 = arith.constant 0 : i32
    %c0_i32_0 = arith.constant 0 : i32
    %c0_i32_1 = arith.constant 0 : i32
    return %c0_i32, %c0_i32_0 : i32, i32
  }
  func.func @transform_8(%arg0: i32) -> (i32, i32) {
    %c0_i32 = arith.constant 0 : i32
    %c0_i32_0 = arith.constant 0 : i32
    %c0_i32_1 = arith.constant 0 : i32
    return %c0_i32, %c0_i32_0 : i32, i32
  }
  func.func @transform_9(%arg0: i32) -> (i32, i32) {
    %c0_i32 = arith.constant 0 : i32
    %c0_i32_0 = arith.constant 0 : i32
    %c0_i32_1 = arith.constant 0 : i32
    return %c0_i32, %c0_i32_0 : i32, i32
  }
  func.func @transform_10(%arg0: i32) -> (i32, i32) {
    %c0_i32 = arith.constant 0 : i32
    %c0_i32_0 = arith.constant 0 : i32
    return %arg0, %c0_i32 : i32, i32
  }
}

module attributes {stable_mosaic.version = 11 : i64} {
  func.func @encoder_kernel(%arg0: i32, %arg1: memref<3xf32, #tpu.memory_space<smem>>, %arg2: memref<8x2800xbf16, #tpu.memory_space<vmem>>, %arg3: memref<2800x512xbf16, #tpu.memory_space<vmem>>, %arg4: memref<1x512xf32, #tpu.memory_space<vmem>>, %arg5: memref<512x256xbf16, #tpu.memory_space<vmem>>, %arg6: memref<1x256xf32, #tpu.memory_space<vmem>>, %arg7: memref<256x128xbf16, #tpu.memory_space<vmem>>, %arg8: memref<1x128xf32, #tpu.memory_space<vmem>>, %arg9: memref<128x128xbf16, #tpu.memory_space<vmem>>, %arg10: memref<1x128xf32, #tpu.memory_space<vmem>>, %arg11: memref<8x128xf32, #tpu.memory_space<vmem>>) attributes {dimension_semantics = [#tpu.dimension_semantics<parallel>], iteration_bounds = array<i64: 1>, scalar_prefetch = 0 : i64, scratch_operands = 0 : i64, tpu.core_type = #tpu.core_type<tc>, window_params = [{transform_indices = @transform_0, window_bounds = array<i64: 3>}, {transform_indices = @transform_1, window_bounds = array<i64: 8, 2800>}, {pipeline_mode = #tpu.pipeline_mode<synchronous>, transform_indices = @transform_2, window_bounds = array<i64: 2800, 512>}, {pipeline_mode = #tpu.pipeline_mode<synchronous>, transform_indices = @transform_3, window_bounds = array<i64: 1, 512>}, {pipeline_mode = #tpu.pipeline_mode<synchronous>, transform_indices = @transform_4, window_bounds = array<i64: 512, 256>}, {pipeline_mode = #tpu.pipeline_mode<synchronous>, transform_indices = @transform_5, window_bounds = array<i64: 1, 256>}, {pipeline_mode = #tpu.pipeline_mode<synchronous>, transform_indices = @transform_6, window_bounds = array<i64: 256, 128>}, {pipeline_mode = #tpu.pipeline_mode<synchronous>, transform_indices = @transform_7, window_bounds = array<i64: 1, 128>}, {pipeline_mode = #tpu.pipeline_mode<synchronous>, transform_indices = @transform_8, window_bounds = array<i64: 128, 128>}, {pipeline_mode = #tpu.pipeline_mode<synchronous>, transform_indices = @transform_9, window_bounds = array<i64: 1, 128>}, {transform_indices = @transform_10, window_bounds = array<i64: 8, 128>}]} {
    %c0 = arith.constant 0 : index
    %c0_0 = arith.constant 0 : index
    %0 = vector.load %arg2[%c0, %c0_0] : memref<8x2800xbf16, #tpu.memory_space<vmem>>, vector<8x2800xbf16>
    %c0_1 = arith.constant 0 : index
    %c0_2 = arith.constant 0 : index
    %1 = vector.load %arg3[%c0_1, %c0_2] : memref<2800x512xbf16, #tpu.memory_space<vmem>>, vector<2800x512xbf16>
    %cst = arith.constant dense<0.000000e+00> : vector<8x512xf32>
    %2 = tpu.matmul %0, %1, %cst {dimension_numbers = #tpu.dot_dimension_numbers<[1], [0], [0], [1], [0, 0, 1, 1], [], []>} : vector<8x2800xbf16>, vector<2800x512xbf16>, vector<8x512xf32> -> vector<8x512xf32>
    %c0_3 = arith.constant 0 : index
    %c0_4 = arith.constant 0 : index
    %3 = vector.load %arg4[%c0_3, %c0_4] : memref<1x512xf32, #tpu.memory_space<vmem>>, vector<1x512xf32>
    %4 = vector.broadcast %3 : vector<1x512xf32> to vector<8x512xf32>
    %5 = arith.addf %2, %4 : vector<8x512xf32>
    %c0_5 = arith.constant 0 : index
    %6 = memref.load %arg1[%c0_5] : memref<3xf32, #tpu.memory_space<smem>>
    %cst_6 = arith.constant 0.000000e+00 : f32
    %7 = vector.broadcast %cst_6 : f32 to vector<8x512xf32>
    %8 = arith.cmpf oge, %5, %7 : vector<8x512xf32>
    %9 = vector.broadcast %6 : f32 to vector<8x512xf32>
    %10 = arith.mulf %9, %5 : vector<8x512xf32>
    %11 = arith.select %8, %5, %10 : vector<8x512xi1>, vector<8x512xf32>
    %12 = arith.truncf %11 : vector<8x512xf32> to vector<8x512xbf16>
    %c0_7 = arith.constant 0 : index
    %c0_8 = arith.constant 0 : index
    %13 = vector.load %arg5[%c0_7, %c0_8] : memref<512x256xbf16, #tpu.memory_space<vmem>>, vector<512x256xbf16>
    %cst_9 = arith.constant dense<0.000000e+00> : vector<8x256xf32>
    %14 = tpu.matmul %12, %13, %cst_9 {dimension_numbers = #tpu.dot_dimension_numbers<[1], [0], [0], [1], [0, 0, 1, 1], [], []>} : vector<8x512xbf16>, vector<512x256xbf16>, vector<8x256xf32> -> vector<8x256xf32>
    %c0_10 = arith.constant 0 : index
    %c0_11 = arith.constant 0 : index
    %15 = vector.load %arg6[%c0_10, %c0_11] : memref<1x256xf32, #tpu.memory_space<vmem>>, vector<1x256xf32>
    %16 = vector.broadcast %15 : vector<1x256xf32> to vector<8x256xf32>
    %17 = arith.addf %14, %16 : vector<8x256xf32>
    %c1 = arith.constant 1 : index
    %18 = memref.load %arg1[%c1] : memref<3xf32, #tpu.memory_space<smem>>
    %cst_12 = arith.constant 0.000000e+00 : f32
    %19 = vector.broadcast %cst_12 : f32 to vector<8x256xf32>
    %20 = arith.cmpf oge, %17, %19 : vector<8x256xf32>
    %21 = vector.broadcast %18 : f32 to vector<8x256xf32>
    %22 = arith.mulf %21, %17 : vector<8x256xf32>
    %23 = arith.select %20, %17, %22 : vector<8x256xi1>, vector<8x256xf32>
    %24 = arith.truncf %23 : vector<8x256xf32> to vector<8x256xbf16>
    %c0_13 = arith.constant 0 : index
    %c0_14 = arith.constant 0 : index
    %25 = vector.load %arg7[%c0_13, %c0_14] : memref<256x128xbf16, #tpu.memory_space<vmem>>, vector<256x128xbf16>
    %cst_15 = arith.constant dense<0.000000e+00> : vector<8x128xf32>
    %26 = tpu.matmul %24, %25, %cst_15 {dimension_numbers = #tpu.dot_dimension_numbers<[1], [0], [0], [1], [0, 0, 1, 1], [], []>} : vector<8x256xbf16>, vector<256x128xbf16>, vector<8x128xf32> -> vector<8x128xf32>
    %c0_16 = arith.constant 0 : index
    %c0_17 = arith.constant 0 : index
    %27 = vector.load %arg8[%c0_16, %c0_17] : memref<1x128xf32, #tpu.memory_space<vmem>>, vector<1x128xf32>
    %28 = vector.broadcast %27 : vector<1x128xf32> to vector<8x128xf32>
    %29 = arith.addf %26, %28 : vector<8x128xf32>
    %c2 = arith.constant 2 : index
    %30 = memref.load %arg1[%c2] : memref<3xf32, #tpu.memory_space<smem>>
    %cst_18 = arith.constant 0.000000e+00 : f32
    %31 = vector.broadcast %cst_18 : f32 to vector<8x128xf32>
    %32 = arith.cmpf oge, %29, %31 : vector<8x128xf32>
    %33 = vector.broadcast %30 : f32 to vector<8x128xf32>
    %34 = arith.mulf %33, %29 : vector<8x128xf32>
    %35 = arith.select %32, %29, %34 : vector<8x128xi1>, vector<8x128xf32>
    %36 = arith.truncf %35 : vector<8x128xf32> to vector<8x128xbf16>
    %c0_19 = arith.constant 0 : index
    %c0_20 = arith.constant 0 : index
    %37 = vector.load %arg9[%c0_19, %c0_20] : memref<128x128xbf16, #tpu.memory_space<vmem>>, vector<128x128xbf16>
    %cst_21 = arith.constant dense<0.000000e+00> : vector<8x128xf32>
    %38 = tpu.matmul %36, %37, %cst_21 {dimension_numbers = #tpu.dot_dimension_numbers<[1], [0], [0], [1], [0, 0, 1, 1], [], []>} : vector<8x128xbf16>, vector<128x128xbf16>, vector<8x128xf32> -> vector<8x128xf32>
    %c0_22 = arith.constant 0 : index
    %c0_23 = arith.constant 0 : index
    %39 = vector.load %arg10[%c0_22, %c0_23] : memref<1x128xf32, #tpu.memory_space<vmem>>, vector<1x128xf32>
    %40 = vector.broadcast %39 : vector<1x128xf32> to vector<8x128xf32>
    %41 = arith.addf %38, %40 : vector<8x128xf32>
    %c0_24 = arith.constant 0 : index
    %c0_25 = arith.constant 0 : index
    %42 = vector.load %arg11[%c0_24, %c0_25] : memref<8x128xf32, #tpu.memory_space<vmem>>, vector<8x128xf32>
    tpu.vector_store %arg11[%c0_24, %c0_25], %41 {strides = array<i32>} : memref<8x128xf32, #tpu.memory_space<vmem>>, vector<8x128xf32>,
    return
  }
  func.func @transform_0(%arg0: i32) -> i32 {
    %c0_i32 = arith.constant 0 : i32
    %c0_i32_0 = arith.constant 0 : i32
    return %c0_i32 : i32
  }
  func.func @transform_1(%arg0: i32) -> (i32, i32) {
    %c0_i32 = arith.constant 0 : i32
    %c0_i32_0 = arith.constant 0 : i32
    return %arg0, %c0_i32 : i32, i32
  }
  func.func @transform_2(%arg0: i32) -> (i32, i32) {
    %c0_i32 = arith.constant 0 : i32
    %c0_i32_0 = arith.constant 0 : i32
    %c0_i32_1 = arith.constant 0 : i32
    return %c0_i32, %c0_i32_0 : i32, i32
  }
  func.func @transform_3(%arg0: i32) -> (i32, i32) {
    %c0_i32 = arith.constant 0 : i32
    %c0_i32_0 = arith.constant 0 : i32
    %c0_i32_1 = arith.constant 0 : i32
    return %c0_i32, %c0_i32_0 : i32, i32
  }
  func.func @transform_4(%arg0: i32) -> (i32, i32) {
    %c0_i32 = arith.constant 0 : i32
    %c0_i32_0 = arith.constant 0 : i32
    %c0_i32_1 = arith.constant 0 : i32
    return %c0_i32, %c0_i32_0 : i32, i32
  }
  func.func @transform_5(%arg0: i32) -> (i32, i32) {
    %c0_i32 = arith.constant 0 : i32
    %c0_i32_0 = arith.constant 0 : i32
    %c0_i32_1 = arith.constant 0 : i32
    return %c0_i32, %c0_i32_0 : i32, i32
  }
  func.func @transform_6(%arg0: i32) -> (i32, i32) {
    %c0_i32 = arith.constant 0 : i32
    %c0_i32_0 = arith.constant 0 : i32
    %c0_i32_1 = arith.constant 0 : i32
    return %c0_i32, %c0_i32_0 : i32, i32
  }
  func.func @transform_7(%arg0: i32) -> (i32, i32) {
    %c0_i32 = arith.constant 0 : i32
    %c0_i32_0 = arith.constant 0 : i32
    %c0_i32_1 = arith.constant 0 : i32
    return %c0_i32, %c0_i32_0 : i32, i32
  }
  func.func @transform_8(%arg0: i32) -> (i32, i32) {
    %c0_i32 = arith.constant 0 : i32
    %c0_i32_0 = arith.constant 0 : i32
    %c0_i32_1 = arith.constant 0 : i32
    return %c0_i32, %c0_i32_0 : i32, i32
  }
  func.func @transform_9(%arg0: i32) -> (i32, i32) {
    %c0_i32 = arith.constant 0 : i32
    %c0_i32_0 = arith.constant 0 : i32
    %c0_i32_1 = arith.constant 0 : i32
    return %c0_i32, %c0_i32_0 : i32, i32
  }
  func.func @transform_10(%arg0: i32) -> (i32, i32) {
    %c0_i32 = arith.constant 0 : i32
    %c0_i32_0 = arith.constant 0 : i32
    return %arg0, %c0_i32 : i32, i32
  }
}

</mosaic_0001>

<llo_original>
// kernel: tpu_custom_call.1
$region0: #{tpu_custom_call.1}
  #allocation0 [shape = 'u32[]', space=smem, size = 0x4, offset = 0x4, fixed_abs, tag = 'smem constant byte address 0x4 - core index']
  #allocation1 [shape = 'u32[144,128]{1,0:T(1,128)}', space=vmem, size = 0x12000, scoped, tag = 'internal scratch']
  %s0 = inlined_call_operand.hbm [shape: f32[3], index: 0, kind: input, shape index: {}]
  %s1 = inlined_call_operand.hbm [shape: bf16[8,2800], index: 1, kind: input, shape index: {}]
  %s2 = inlined_call_operand.hbm [shape: bf16[2800,512], index: 2, kind: input, shape index: {}]
  %s3 = inlined_call_operand.hbm [shape: f32[1,512], index: 3, kind: input, shape index: {}]
  %s4 = inlined_call_operand.hbm [shape: bf16[512,256], index: 4, kind: input, shape index: {}]
  %s5 = inlined_call_operand.hbm [shape: f32[1,256], index: 5, kind: input, shape index: {}]
  %s6 = inlined_call_operand.hbm [shape: bf16[256,128], index: 6, kind: input, shape index: {}]
  %s7 = inlined_call_operand.hbm [shape: f32[1,128], index: 7, kind: input, shape index: {}]
  %s8 = inlined_call_operand.hbm [shape: bf16[128,128], index: 8, kind: input, shape index: {}]
  %s9 = inlined_call_operand.hbm [shape: f32[1,128], index: 9, kind: input, shape index: {}]
  %s10 = inlined_call_operand.hbm [shape: f32[8,128], index: 10, kind: output, shape index: {}]
  %s11 = sld [smem:[#allocation0]]
  $region90: #{tpu_custom_call.1} parent=0
    _
  %s13 = ssub.s32 1, %s11
  %s14 = scalar_select 0, %s13, %s11
  $region1: #{tpu_custom_call.1} parent=0
    #allocation2 [shape = 'u8[512]{0}', space=smem, size = 0x200, scoped, tag = 'input window, operand 0, single buffered']
    #allocation3 [shape = 's32[1]{0}', space=sflag, size = 0x4, scoped, tag = 'scoped memory for tpu_custom_call.1']
    #allocation4 [shape = 's32[1]{0}', space=sflag, size = 0x4, scoped, tag = 'scoped memory for tpu_custom_call.1']
    #allocation5 [shape = 's32[1]{0}', space=sflag, size = 0x4, scoped, tag = 'scoped memory for tpu_custom_call.1']
    #allocation6 [shape = 'u8[45056]{0}', space=vmem, size = 0xb000, scoped, tag = 'input window, operand 1, single buffered']
    #allocation7 [shape = 'u8[2867200]{0}', space=vmem, size = 0x2bc000, scoped, tag = 'input window, operand 2, single buffered']
    #allocation8 [shape = 's32[1]{0}', space=sflag, size = 0x4, scoped, tag = 'scoped memory for tpu_custom_call.1']
    #allocation9 [shape = 'u8[2048]{0}', space=vmem, size = 0x800, scoped, tag = 'input window, operand 3, single buffered']
    #allocation10 [shape = 'u8[262144]{0}', space=vmem, size = 0x40000, scoped, tag = 'input window, operand 4, single buffered']
    #allocation11 [shape = 's32[1]{0}', space=sflag, size = 0x4, scoped, tag = 'scoped memory for tpu_custom_call.1']
    #allocation12 [shape = 'u8[1024]{0}', space=vmem, size = 0x400, scoped, tag = 'input window, operand 5, single buffered']
    #allocation13 [shape = 'u8[65536]{0}', space=vmem, size = 0x10000, scoped, tag = 'input window, operand 6, single buffered']
    #allocation14 [shape = 's32[1]{0}', space=sflag, size = 0x4, scoped, tag = 'scoped memory for tpu_custom_call.1']
    #allocation15 [shape = 'u8[512]{0}', space=vmem, size = 0x400, scoped, tag = 'input window, operand 7, single buffered']
    #allocation16 [shape = 'u8[32768]{0}', space=vmem, size = 0x8000, scoped, tag = 'input window, operand 8, single buffered']
    #allocation17 [shape = 's32[1]{0}', space=sflag, size = 0x4, scoped, tag = 'scoped memory for tpu_custom_call.1']
    #allocation18 [shape = 'u8[512]{0}', space=vmem, size = 0x400, scoped, tag = 'input window, operand 9, single buffered']
    #allocation19 [shape = 'u8[4096]{0}', space=vmem, size = 0x1000, scoped, tag = 'output window, operand 0, single buffered']
    %15 = vsyncpa [#allocation5], 0
    %16 = vsyncpa [#allocation3], 0
    %17 = vsyncpa [#allocation8], 0
    %18 = vsyncpa [#allocation11], 0
    %19 = vsyncpa [#allocation14], 0
    %20 = vsyncpa [#allocation17], 0
    %21 = vsyncpa [#allocation4], 0
    // Predicated region
    $region2: #{tpu_custom_call.1} parent=1 // pred_check
      _
    $region3: #{tpu_custom_call.1} parent=1 // pred_check_branch
      %23 = sbr.rel (0) target = $region5
    $region4: #{tpu_custom_call.1} parent=1 // pred_region
      %s25 = ssub.s32 16, 16
      %26 = vsyncadd [#allocation5], %s25
      %29 = dma.hbm_to_smem %s0, 16, [#allocation2], [#allocation5]
    $region5: #{tpu_custom_call.1} parent=1 // pred_fallthru
      _
    // Predicated region
    $region6: #{tpu_custom_call.1} parent=1 // pred_check
      _
    $region7: #{tpu_custom_call.1} parent=1 // pred_check_branch
      %31 = sbr.rel (0) target = $region9
    $region8: #{tpu_custom_call.1} parent=1 // pred_region
      %s33 = ssub.s32 1408, 1408
      %34 = vsyncadd [#allocation3], %s33
      %s36 = sshll.u32 [#allocation6], 4
      %s37 = int_to_ptr.vmem [resolvable:$true] %s36
      %39 = dma.hbm_to_vmem [thread:$0]  %s1, 1408, %s37, [#allocation3]
    $region9: #{tpu_custom_call.1} parent=1 // pred_fallthru
      _
    // Predicated region
    $region10: #{tpu_custom_call.1} parent=1 // pred_check
      _
    $region11: #{tpu_custom_call.1} parent=1 // pred_check_branch
      %41 = sbr.rel (0) target = $region13
    $region12: #{tpu_custom_call.1} parent=1 // pred_region
      %s43 = ssub.s32 89600, 89600
      %44 = vsyncadd [#allocation8], %s43
      %s45 = sshll.u32 [#allocation7], 4
      %s46 = int_to_ptr.vmem [resolvable:$true] %s45
      %51 = dma.hbm_to_vmem [thread:$0]  %s2, 89600, %s46, [#allocation8], 256, 256, 16
    $region13: #{tpu_custom_call.1} parent=1 // pred_fallthru
      _
    // Predicated region
    $region14: #{tpu_custom_call.1} parent=1 // pred_check
      _
    $region15: #{tpu_custom_call.1} parent=1 // pred_check_branch
      %53 = sbr.rel (0) target = $region17
    $region16: #{tpu_custom_call.1} parent=1 // pred_region
      %s55 = ssub.s32 64, 64
      %56 = vsyncadd [#allocation8], %s55
      %s58 = sshll.u32 [#allocation9], 4
      %s59 = int_to_ptr.vmem [resolvable:$true] %s58
      %61 = dma.hbm_to_vmem [thread:$0]  %s3, 64, %s59, [#allocation8]
    $region17: #{tpu_custom_call.1} parent=1 // pred_fallthru
      _
    // Predicated region
    $region18: #{tpu_custom_call.1} parent=1 // pred_check
      _
    $region19: #{tpu_custom_call.1} parent=1 // pred_check_branch
      %63 = sbr.rel (0) target = $region21
    $region20: #{tpu_custom_call.1} parent=1 // pred_region
      %s65 = ssub.s32 8192, 8192
      %66 = vsyncadd [#allocation11], %s65
      %s67 = sshll.u32 [#allocation10], 4
      %s68 = int_to_ptr.vmem [resolvable:$true] %s67
      %73 = dma.hbm_to_vmem [thread:$0]  %s4, 8192, %s68, [#allocation11], 128, 128, 8
    $region21: #{tpu_custom_call.1} parent=1 // pred_fallthru
      _
    // Predicated region
    $region22: #{tpu_custom_call.1} parent=1 // pred_check
      _
    $region23: #{tpu_custom_call.1} parent=1 // pred_check_branch
      %75 = sbr.rel (0) target = $region25
    $region24: #{tpu_custom_call.1} parent=1 // pred_region
      %s77 = ssub.s32 32, 32
      %78 = vsyncadd [#allocation11], %s77
      %s80 = sshll.u32 [#allocation12], 4
      %s81 = int_to_ptr.vmem [resolvable:$true] %s80
      %83 = dma.hbm_to_vmem [thread:$0]  %s5, 32, %s81, [#allocation11]
    $region25: #{tpu_custom_call.1} parent=1 // pred_fallthru
      _
    // Predicated region
    $region26: #{tpu_custom_call.1} parent=1 // pred_check
      _
    $region27: #{tpu_custom_call.1} parent=1 // pred_check_branch
      %85 = sbr.rel (0) target = $region29
    $region28: #{tpu_custom_call.1} parent=1 // pred_region
      %s87 = ssub.s32 2048, 2048
      %88 = vsyncadd [#allocation14], %s87
      %s89 = sshll.u32 [#allocation13], 4
      %s90 = int_to_ptr.vmem [resolvable:$true] %s89
      %95 = dma.hbm_to_vmem [thread:$0]  %s6, 2048, %s90, [#allocation14], 64, 64, 4
    $region29: #{tpu_custom_call.1} parent=1 // pred_fallthru
      _
    // Predicated region
    $region30: #{tpu_custom_call.1} parent=1 // pred_check
      _
    $region31: #{tpu_custom_call.1} parent=1 // pred_check_branch
      %97 = sbr.rel (0) target = $region33
    $region32: #{tpu_custom_call.1} parent=1 // pred_region
      %s99 = ssub.s32 16, 16
      %100 = vsyncadd [#allocation14], %s99
      %s102 = sshll.u32 [#allocation15], 4
      %s103 = int_to_ptr.vmem [resolvable:$true] %s102
      %105 = dma.hbm_to_vmem [thread:$0]  %s7, 16, %s103, [#allocation14]
    $region33: #{tpu_custom_call.1} parent=1 // pred_fallthru
      _
    // Predicated region
    $region34: #{tpu_custom_call.1} parent=1 // pred_check
      _
    $region35: #{tpu_custom_call.1} parent=1 // pred_check_branch
      %107 = sbr.rel (0) target = $region37
    $region36: #{tpu_custom_call.1} parent=1 // pred_region
      %s109 = ssub.s32 1024, 1024
      %110 = vsyncadd [#allocation17], %s109
      %s111 = sshll.u32 [#allocation16], 4
      %s112 = int_to_ptr.vmem [resolvable:$true] %s111
      %117 = dma.hbm_to_vmem [thread:$0]  %s8, 1024, %s112, [#allocation17], 64, 64, 4
    $region37: #{tpu_custom_call.1} parent=1 // pred_fallthru
      _
    // Predicated region
    $region38: #{tpu_custom_call.1} parent=1 // pred_check
      _
    $region39: #{tpu_custom_call.1} parent=1 // pred_check_branch
      %119 = sbr.rel (0) target = $region41
    $region40: #{tpu_custom_call.1} parent=1 // pred_region
      %s121 = ssub.s32 16, 16
      %122 = vsyncadd [#allocation17], %s121
      %s124 = sshll.u32 [#allocation18], 4
      %s125 = int_to_ptr.vmem [resolvable:$true] %s124
      %127 = dma.hbm_to_vmem [thread:$0]  %s9, 16, %s125, [#allocation17]
    $region41: #{tpu_custom_call.1} parent=1 // pred_fallthru
      _
    // Predicated region
    $region42: #{tpu_custom_call.1} parent=1 // pred_check
      _
    $region43: #{tpu_custom_call.1} parent=1 // pred_check_branch
      %129 = sbr.rel (0) target = $region45
    $region44: #{tpu_custom_call.1} parent=1 // pred_region
      %130 = dma.done [#allocation5], 16
    $region45: #{tpu_custom_call.1} parent=1 // pred_fallthru
      _
    // Predicated region
    $region46: #{tpu_custom_call.1} parent=1 // pred_check
      _
    $region47: #{tpu_custom_call.1} parent=1 // pred_check_branch
      %132 = sbr.rel (0) target = $region49
    $region48: #{tpu_custom_call.1} parent=1 // pred_region
      %133 = dma.done [#allocation3], 1408
    $region49: #{tpu_custom_call.1} parent=1 // pred_fallthru
      _
    // Predicated region
    $region50: #{tpu_custom_call.1} parent=1 // pred_check
      _
    $region51: #{tpu_custom_call.1} parent=1 // pred_check_branch
      %135 = sbr.rel (0) target = $region53
    $region52: #{tpu_custom_call.1} parent=1 // pred_region
      %136 = dma.done [#allocation8], 89600
    $region53: #{tpu_custom_call.1} parent=1 // pred_fallthru
      _
    // Predicated region
    $region54: #{tpu_custom_call.1} parent=1 // pred_check
      _
    $region55: #{tpu_custom_call.1} parent=1 // pred_check_branch
      %138 = sbr.rel (0) target = $region57
    $region56: #{tpu_custom_call.1} parent=1 // pred_region
      %139 = dma.done [#allocation8], 64
    $region57: #{tpu_custom_call.1} parent=1 // pred_fallthru
      _
    // Predicated region
    $region58: #{tpu_custom_call.1} parent=1 // pred_check
      _
    $region59: #{tpu_custom_call.1} parent=1 // pred_check_branch
      %141 = sbr.rel (0) target = $region61
    $region60: #{tpu_custom_call.1} parent=1 // pred_region
      %142 = dma.done [#allocation11], 8192
    $region61: #{tpu_custom_call.1} parent=1 // pred_fallthru
      _
    // Predicated region
    $region62: #{tpu_custom_call.1} parent=1 // pred_check
      _
    $region63: #{tpu_custom_call.1} parent=1 // pred_check_branch
      %144 = sbr.rel (0) target = $region65
    $region64: #{tpu_custom_call.1} parent=1 // pred_region
      %145 = dma.done [#allocation11], 32
    $region65: #{tpu_custom_call.1} parent=1 // pred_fallthru
      _
    // Predicated region
    $region66: #{tpu_custom_call.1} parent=1 // pred_check
      _
    $region67: #{tpu_custom_call.1} parent=1 // pred_check_branch
      %147 = sbr.rel (0) target = $region69
    $region68: #{tpu_custom_call.1} parent=1 // pred_region
      %148 = dma.done [#allocation14], 2048
    $region69: #{tpu_custom_call.1} parent=1 // pred_fallthru
      _
    // Predicated region
    $region70: #{tpu_custom_call.1} parent=1 // pred_check
      _
    $region71: #{tpu_custom_call.1} parent=1 // pred_check_branch
      %150 = sbr.rel (0) target = $region73
    $region72: #{tpu_custom_call.1} parent=1 // pred_region
      %151 = dma.done [#allocation14], 16
    $region73: #{tpu_custom_call.1} parent=1 // pred_fallthru
      _
    // Predicated region
    $region74: #{tpu_custom_call.1} parent=1 // pred_check
      _
    $region75: #{tpu_custom_call.1} parent=1 // pred_check_branch
      %153 = sbr.rel (0) target = $region77
    $region76: #{tpu_custom_call.1} parent=1 // pred_region
      %154 = dma.done [#allocation17], 1024
    $region77: #{tpu_custom_call.1} parent=1 // pred_fallthru
      _
    // Predicated region
    $region78: #{tpu_custom_call.1} parent=1 // pred_check
      _
    $region79: #{tpu_custom_call.1} parent=1 // pred_check_branch
      %156 = sbr.rel (0) target = $region81
    $region80: #{tpu_custom_call.1} parent=1 // pred_region
      %157 = dma.done [#allocation17], 16
    $region81: #{tpu_custom_call.1} parent=1 // pred_fallthru
      _
    %158 = sfence
    %v160 = vld [vmem:[#allocation6] sm:$0xff]
    %v161 = vld [vmem:[#allocation6 + $0x8] sm:$0xff]
    %v162 = vld [vmem:[#allocation6 + $0x10] sm:$0xff]
    %v163 = vld [vmem:[#allocation6 + $0x18] sm:$0xff]
    %v164 = vld [vmem:[#allocation6 + $0x20] sm:$0xff]
    %v165 = vld [vmem:[#allocation6 + $0x28] sm:$0xff]
    %v166 = vld [vmem:[#allocation6 + $0x30] sm:$0xff]
    %v167 = vld [vmem:[#allocation6 + $0x38] sm:$0xff]
    %v168 = vld [vmem:[#allocation6 + $0x40] sm:$0xff]
    %v169 = vld [vmem:[#allocation6 + $0x48] sm:$0xff]
    %v170 = vld [vmem:[#allocation6 + $0x50] sm:$0xff]
    %v171 = vld [vmem:[#allocation7] sm:$0xff]
    %v172 = vld [vmem:[#allocation7 + $0x8] sm:$0xff]
    %v173 = vld [vmem:[#allocation7 + $0x10] sm:$0xff]
    %v174 = vld [vmem:[#allocation7 + $0x18] sm:$0xff]
    %v175 = vld [vmem:[#allocation7 + $0x20] sm:$0xff]
    %v176 = vld [vmem:[#allocation7 + $0x28] sm:$0xff]
    %v177 = vld [vmem:[#allocation7 + $0x30] sm:$0xff]
    %v178 = vld [vmem:[#allocation7 + $0x38] sm:$0xff]
    %v179 = vld [vmem:[#allocation7 + $0x40] sm:$0xff]
    %v180 = vld [vmem:[#allocation7 + $0x48] sm:$0xff]
    %v181 = vld [vmem:[#allocation7 + $0x50] sm:$0xff]
    %v182 = vld [vmem:[#allocation7 + $0x58] sm:$0xff]
    %v183 = vld [vmem:[#allocation7 + $0x60] sm:$0xff]
    %v184 = vld [vmem:[#allocation7 + $0x68] sm:$0xff]
    %v185 = vld [vmem:[#allocation7 + $0x70] sm:$0xff]
    %v186 = vld [vmem:[#allocation7 + $0x78] sm:$0xff]
    %v187 = vld [vmem:[#allocation7 + $0x80] sm:$0xff]
    %v188 = vld [vmem:[#allocation7 + $0x88] sm:$0xff]
    %v189 = vld [vmem:[#allocation7 + $0x90] sm:$0xff]
    %v190 = vld [vmem:[#allocation7 + $0x98] sm:$0xff]
    %v191 = vld [vmem:[#allocation7 + $0xa0] sm:$0xff]
    %v192 = vld [vmem:[#allocation7 + $0xa8] sm:$0xff]
    %v193 = vld [vmem:[#allocation7 + $0xb0] sm:$0xff]
    %v194 = vld [vmem:[#allocation7 + $0xb8] sm:$0xff]
    %v195 = vld [vmem:[#allocation7 + $0xc0] sm:$0xff]
    %v196 = vld [vmem:[#allocation7 + $0xc8] sm:$0xff]
    %v197 = vld [vmem:[#allocation7 + $0xd0] sm:$0xff]
    %v198 = vld [vmem:[#allocation7 + $0xd8] sm:$0xff]
    %v199 = vld [vmem:[#allocation7 + $0xe0] sm:$0xff]
    %v200 = vld [vmem:[#allocation7 + $0xe8] sm:$0xff]
    %v201 = vld [vmem:[#allocation7 + $0xf0] sm:$0xff]
    %v202 = vld [vmem:[#allocation7 + $0xf8] sm:$0xff]
    %v203 = vld [vmem:[#allocation7 + $0x100] sm:$0xff]
    %v204 = vld [vmem:[#allocation7 + $0x108] sm:$0xff]
    %v205 = vld [vmem:[#allocation7 + $0x110] sm:$0xff]
    %v206 = vld [vmem:[#allocation7 + $0x118] sm:$0xff]
    %v207 = vld [vmem:[#allocation7 + $0x120] sm:$0xff]
    %v208 = vld [vmem:[#allocation7 + $0x128] sm:$0xff]
    %v209 = vld [vmem:[#allocation7 + $0x130] sm:$0xff]
    %v210 = vld [vmem:[#allocation7 + $0x138] sm:$0xff]
    %v211 = vld [vmem:[#allocation7 + $0x140] sm:$0xff]
    %v212 = vld [vmem:[#allocation7 + $0x148] sm:$0xff]
    %v213 = vld [vmem:[#allocation7 + $0x150] sm:$0xff]
    %v214 = vld [vmem:[#allocation7 + $0x158] sm:$0xff]
    %v215 = vld [vmem:[#allocation7 + $0x160] sm:$0xff]
    %v216 = vld [vmem:[#allocation7 + $0x168] sm:$0xff]
    %v217 = vld [vmem:[#allocation7 + $0x170] sm:$0xff]
    %v218 = vld [vmem:[#allocation7 + $0x178] sm:$0xff]
    %v219 = vld [vmem:[#allocation7 + $0x180] sm:$0xff]
    %v220 = vld [vmem:[#allocation7 + $0x188] sm:$0xff]
    %v221 = vld [vmem:[#allocation7 + $0x190] sm:$0xff]
    %v222 = vld [vmem:[#allocation7 + $0x198] sm:$0xff]
    %v223 = vld [vmem:[#allocation7 + $0x1a0] sm:$0xff]
    %v224 = vld [vmem:[#allocation7 + $0x1a8] sm:$0xff]
    %v225 = vld [vmem:[#allocation7 + $0x1b0] sm:$0xff]
    %v226 = vld [vmem:[#allocation7 + $0x1b8] sm:$0xff]
    %v227 = vld [vmem:[#allocation7 + $0x1c0] sm:$0xff]
    %v228 = vld [vmem:[#allocation7 + $0x1c8] sm:$0xff]
    %v229 = vld [vmem:[#allocation7 + $0x1d0] sm:$0xff]
    %v230 = vld [vmem:[#allocation7 + $0x1d8] sm:$0xff]
    %v231 = vld [vmem:[#allocation7 + $0x1e0] sm:$0xff]
    %v232 = vld [vmem:[#allocation7 + $0x1e8] sm:$0xff]
    %v233 = vld [vmem:[#allocation7 + $0x1f0] sm:$0xff]
    %v234 = vld [vmem:[#allocation7 + $0x1f8] sm:$0xff]
    %v235 = vld [vmem:[#allocation7 + $0x200] sm:$0xff]
    %v236 = vld [vmem:[#allocation7 + $0x208] sm:$0xff]
    %v237 = vld [vmem:[#allocation7 + $0x210] sm:$0xff]
    %v238 = vld [vmem:[#allocation7 + $0x218] sm:$0xff]
    %v239 = vld [vmem:[#allocation7 + $0x220] sm:$0xff]
    %v240 = vld [vmem:[#allocation7 + $0x228] sm:$0xff]
    %v241 = vld [vmem:[#allocation7 + $0x230] sm:$0xff]
    %v242 = vld [vmem:[#allocation7 + $0x238] sm:$0xff]
    %v243 = vld [vmem:[#allocation7 + $0x240] sm:$0xff]
    %v244 = vld [vmem:[#allocation7 + $0x248] sm:$0xff]
    %v245 = vld [vmem:[#allocation7 + $0x250] sm:$0xff]
    %v246 = vld [vmem:[#allocation7 + $0x258] sm:$0xff]
    %v247 = vld [vmem:[#allocation7 + $0x260] sm:$0xff]
    %v248 = vld [vmem:[#allocation7 + $0x268] sm:$0xff]
    %v249 = vld [vmem:[#allocation7 + $0x270] sm:$0xff]
    %v250 = vld [vmem:[#allocation7 + $0x278] sm:$0xff]
    %v251 = vld [vmem:[#allocation7 + $0x280] sm:$0xff]
    %v252 = vld [vmem:[#allocation7 + $0x288] sm:$0xff]
    %v253 = vld [vmem:[#allocation7 + $0x290] sm:$0xff]
    %v254 = vld [vmem:[#allocation7 + $0x298] sm:$0xff]
    %v255 = vld [vmem:[#allocation7 + $0x2a0] sm:$0xff]
    %v256 = vld [vmem:[#allocation7 + $0x2a8] sm:$0xff]
    %v257 = vld [vmem:[#allocation7 + $0x2b0] sm:$0xff]
    %v258 = vld [vmem:[#allocation7 + $0x2b8] sm:$0xff]
    %v259 = vld [vmem:[#allocation7 + $0x2c0] sm:$0xff]
    %v260 = vld [vmem:[#allocation7 + $0x2c8] sm:$0xff]
    %v261 = vld [vmem:[#allocation7 + $0x2d0] sm:$0xff]
    %v262 = vld [vmem:[#allocation7 + $0x2d8] sm:$0xff]
    %v263 = vld [vmem:[#allocation7 + $0x2e0] sm:$0xff]
    %v264 = vld [vmem:[#allocation7 + $0x2e8] sm:$0xff]
    %v265 = vld [vmem:[#allocation7 + $0x2f0] sm:$0xff]
    %v266 = vld [vmem:[#allocation7 + $0x2f8] sm:$0xff]
    %v267 = vld [vmem:[#allocation7 + $0x300] sm:$0xff]
    %v268 = vld [vmem:[#allocation7 + $0x308] sm:$0xff]
    %v269 = vld [vmem:[#allocation7 + $0x310] sm:$0xff]
    %v270 = vld [vmem:[#allocation7 + $0x318] sm:$0xff]
    %v271 = vld [vmem:[#allocation7 + $0x320] sm:$0xff]
    %v272 = vld [vmem:[#allocation7 + $0x328] sm:$0xff]
    %v273 = vld [vmem:[#allocation7 + $0x330] sm:$0xff]
    %v274 = vld [vmem:[#allocation7 + $0x338] sm:$0xff]
    %v275 = vld [vmem:[#allocation7 + $0x340] sm:$0xff]
    %v276 = vld [vmem:[#allocation7 + $0x348] sm:$0xff]
    %v277 = vld [vmem:[#allocation7 + $0x350] sm:$0xff]
    %v278 = vld [vmem:[#allocation7 + $0x358] sm:$0xff]
    %v279 = vld [vmem:[#allocation7 + $0x360] sm:$0xff]
    %v280 = vld [vmem:[#allocation7 + $0x368] sm:$0xff]
    %v281 = vld [vmem:[#allocation7 + $0x370] sm:$0xff]
    %v282 = vld [vmem:[#allocation7 + $0x378] sm:$0xff]
    %v283 = vld [vmem:[#allocation7 + $0x380] sm:$0xff]
    %v284 = vld [vmem:[#allocation7 + $0x388] sm:$0xff]
    %v285 = vld [vmem:[#allocation7 + $0x390] sm:$0xff]
    %v286 = vld [vmem:[#allocation7 + $0x398] sm:$0xff]
    %v287 = vld [vmem:[#allocation7 + $0x3a0] sm:$0xff]
    %v288 = vld [vmem:[#allocation7 + $0x3a8] sm:$0xff]
    %v289 = vld [vmem:[#allocation7 + $0x3b0] sm:$0xff]
    %v290 = vld [vmem:[#allocation7 + $0x3b8] sm:$0xff]
    %v291 = vld [vmem:[#allocation7 + $0x3c0] sm:$0xff]
    %v292 = vld [vmem:[#allocation7 + $0x3c8] sm:$0xff]
    %v293 = vld [vmem:[#allocation7 + $0x3d0] sm:$0xff]
    %v294 = vld [vmem:[#allocation7 + $0x3d8] sm:$0xff]
    %v295 = vld [vmem:[#allocation7 + $0x3e0] sm:$0xff]
    %v296 = vld [vmem:[#allocation7 + $0x3e8] sm:$0xff]
    %v297 = vld [vmem:[#allocation7 + $0x3f0] sm:$0xff]
    %v298 = vld [vmem:[#allocation7 + $0x3f8] sm:$0xff]
    %v299 = vld [vmem:[#allocation7 + $0x400] sm:$0xff]
    %v300 = vld [vmem:[#allocation7 + $0x408] sm:$0xff]
    %v301 = vld [vmem:[#allocation7 + $0x410] sm:$0xff]
    %v302 = vld [vmem:[#allocation7 + $0x418] sm:$0xff]
    %v303 = vld [vmem:[#allocation7 + $0x420] sm:$0xff]
    %v304 = vld [vmem:[#allocation7 + $0x428] sm:$0xff]
    %v305 = vld [vmem:[#allocation7 + $0x430] sm:$0xff]
    %v306 = vld [vmem:[#allocation7 + $0x438] sm:$0xff]
    %v307 = vld [vmem:[#allocation7 + $0x440] sm:$0xff]
    %v308 = vld [vmem:[#allocation7 + $0x448] sm:$0xff]
    %v309 = vld [vmem:[#allocation7 + $0x450] sm:$0xff]
    %v310 = vld [vmem:[#allocation7 + $0x458] sm:$0xff]
    %v311 = vld [vmem:[#allocation7 + $0x460] sm:$0xff]
    %v312 = vld [vmem:[#allocation7 + $0x468] sm:$0xff]
    %v313 = vld [vmem:[#allocation7 + $0x470] sm:$0xff]
    %v314 = vld [vmem:[#allocation7 + $0x478] sm:$0xff]
    %v315 = vld [vmem:[#allocation7 + $0x480] sm:$0xff]
    %v316 = vld [vmem:[#allocation7 + $0x488] sm:$0xff]
    %v317 = vld [vmem:[#allocation7 + $0x490] sm:$0xff]
    %v318 = vld [vmem:[#allocation7 + $0x498] sm:$0xff]
    %v319 = vld [vmem:[#allocation7 + $0x4a0] sm:$0xff]
    %v320 = vld [vmem:[#allocation7 + $0x4a8] sm:$0xff]
    %v321 = vld [vmem:[#allocation7 + $0x4b0] sm:$0xff]
    %v322 = vld [vmem:[#allocation7 + $0x4b8] sm:$0xff]
    %v323 = vld [vmem:[#allocation7 + $0x4c0] sm:$0xff]
    %v324 = vld [vmem:[#allocation7 + $0x4c8] sm:$0xff]
    %v325 = vld [vmem:[#allocation7 + $0x4d0] sm:$0xff]
    %v326 = vld [vmem:[#allocation7 + $0x4d8] sm:$0xff]
    %v327 = vld [vmem:[#allocation7 + $0x4e0] sm:$0xff]
    %v328 = vld [vmem:[#allocation7 + $0x4e8] sm:$0xff]
    %v329 = vld [vmem:[#allocation7 + $0x4f0] sm:$0xff]
    %v330 = vld [vmem:[#allocation7 + $0x4f8] sm:$0xff]
    %v331 = vld [vmem:[#allocation7 + $0x500] sm:$0xff]
    %v332 = vld [vmem:[#allocation7 + $0x508] sm:$0xff]
    %v333 = vld [vmem:[#allocation7 + $0x510] sm:$0xff]
    %v334 = vld [vmem:[#allocation7 + $0x518] sm:$0xff]
    %v335 = vld [vmem:[#allocation7 + $0x520] sm:$0xff]
    %v336 = vld [vmem:[#allocation7 + $0x528] sm:$0xff]
    %v337 = vld [vmem:[#allocation7 + $0x530] sm:$0xff]
    %v338 = vld [vmem:[#allocation7 + $0x538] sm:$0xff]
    %v339 = vld [vmem:[#allocation7 + $0x540] sm:$0xff]
    %v340 = vld [vmem:[#allocation7 + $0x548] sm:$0xff]
    %v341 = vld [vmem:[#allocation7 + $0x550] sm:$0xff]
    %v342 = vld [vmem:[#allocation7 + $0x558] sm:$0xff]
    %v343 = vld [vmem:[#allocation7 + $0x560] sm:$0xff]
    %v344 = vld [vmem:[#allocation7 + $0x568] sm:$0xff]
    %v345 = vld [vmem:[#allocation7 + $0x570] sm:$0xff]
    %v346 = vld [vmem:[#allocation7 + $0x578] sm:$0xff]
    %v347 = vld [vmem:[#allocation7 + $0x580] sm:$0xff]
    %v348 = vld [vmem:[#allocation7 + $0x588] sm:$0xff]
    %v349 = vld [vmem:[#allocation7 + $0x590] sm:$0xff]
    %v350 = vld [vmem:[#allocation7 + $0x598] sm:$0xff]
    %v351 = vld [vmem:[#allocation7 + $0x5a0] sm:$0xff]
    %v352 = vld [vmem:[#allocation7 + $0x5a8] sm:$0xff]
    %v353 = vld [vmem:[#allocation7 + $0x5b0] sm:$0xff]
    %v354 = vld [vmem:[#allocation7 + $0x5b8] sm:$0xff]
    %v355 = vld [vmem:[#allocation7 + $0x5c0] sm:$0xff]
    %v356 = vld [vmem:[#allocation7 + $0x5c8] sm:$0xff]
    %v357 = vld [vmem:[#allocation7 + $0x5d0] sm:$0xff]
    %v358 = vld [vmem:[#allocation7 + $0x5d8] sm:$0xff]
    %v359 = vld [vmem:[#allocation7 + $0x5e0] sm:$0xff]
    %v360 = vld [vmem:[#allocation7 + $0x5e8] sm:$0xff]
    %v361 = vld [vmem:[#allocation7 + $0x5f0] sm:$0xff]
    %v362 = vld [vmem:[#allocation7 + $0x5f8] sm:$0xff]
    %v363 = vld [vmem:[#allocation7 + $0x600] sm:$0xff]
    %v364 = vld [vmem:[#allocation7 + $0x608] sm:$0xff]
    %v365 = vld [vmem:[#allocation7 + $0x610] sm:$0xff]
    %v366 = vld [vmem:[#allocation7 + $0x618] sm:$0xff]
    %v367 = vld [vmem:[#allocation7 + $0x620] sm:$0xff]
    %v368 = vld [vmem:[#allocation7 + $0x628] sm:$0xff]
    %v369 = vld [vmem:[#allocation7 + $0x630] sm:$0xff]
    %v370 = vld [vmem:[#allocation7 + $0x638] sm:$0xff]
    %v371 = vld [vmem:[#allocation7 + $0x640] sm:$0xff]
    %v372 = vld [vmem:[#allocation7 + $0x648] sm:$0xff]
    %v373 = vld [vmem:[#allocation7 + $0x650] sm:$0xff]
    %v374 = vld [vmem:[#allocation7 + $0x658] sm:$0xff]
    %v375 = vld [vmem:[#allocation7 + $0x660] sm:$0xff]
    %v376 = vld [vmem:[#allocation7 + $0x668] sm:$0xff]
    %v377 = vld [vmem:[#allocation7 + $0x670] sm:$0xff]
    %v378 = vld [vmem:[#allocation7 + $0x678] sm:$0xff]
    %v379 = vld [vmem:[#allocation7 + $0x680] sm:$0xff]
    %v380 = vld [vmem:[#allocation7 + $0x688] sm:$0xff]
    %v381 = vld [vmem:[#allocation7 + $0x690] sm:$0xff]
    %v382 = vld [vmem:[#allocation7 + $0x698] sm:$0xff]
    %v383 = vld [vmem:[#allocation7 + $0x6a0] sm:$0xff]
    %v384 = vld [vmem:[#allocation7 + $0x6a8] sm:$0xff]
    %v385 = vld [vmem:[#allocation7 + $0x6b0] sm:$0xff]
    %v386 = vld [vmem:[#allocation7 + $0x6b8] sm:$0xff]
    %v387 = vld [vmem:[#allocation7 + $0x6c0] sm:$0xff]
    %v388 = vld [vmem:[#allocation7 + $0x6c8] sm:$0xff]
    %v389 = vld [vmem:[#allocation7 + $0x6d0] sm:$0xff]
    %v390 = vld [vmem:[#allocation7 + $0x6d8] sm:$0xff]
    %v391 = vld [vmem:[#allocation7 + $0x6e0] sm:$0xff]
    %v392 = vld [vmem:[#allocation7 + $0x6e8] sm:$0xff]
    %v393 = vld [vmem:[#allocation7 + $0x6f0] sm:$0xff]
    %v394 = vld [vmem:[#allocation7 + $0x6f8] sm:$0xff]
    %v395 = vld [vmem:[#allocation7 + $0x700] sm:$0xff]
    %v396 = vld [vmem:[#allocation7 + $0x708] sm:$0xff]
    %v397 = vld [vmem:[#allocation7 + $0x710] sm:$0xff]
    %v398 = vld [vmem:[#allocation7 + $0x718] sm:$0xff]
    %v399 = vld [vmem:[#allocation7 + $0x720] sm:$0xff]
    %v400 = vld [vmem:[#allocation7 + $0x728] sm:$0xff]
    %v401 = vld [vmem:[#allocation7 + $0x730] sm:$0xff]
    %v402 = vld [vmem:[#allocation7 + $0x738] sm:$0xff]
    %v403 = vld [vmem:[#allocation7 + $0x740] sm:$0xff]
    %v404 = vld [vmem:[#allocation7 + $0x748] sm:$0xff]
    %v405 = vld [vmem:[#allocation7 + $0x750] sm:$0xff]
    %v406 = vld [vmem:[#allocation7 + $0x758] sm:$0xff]
    %v407 = vld [vmem:[#allocation7 + $0x760] sm:$0xff]
    %v408 = vld [vmem:[#allocation7 + $0x768] sm:$0xff]
    %v409 = vld [vmem:[#allocation7 + $0x770] sm:$0xff]
    %v410 = vld [vmem:[#allocation7 + $0x778] sm:$0xff]
    %v411 = vld [vmem:[#allocation7 + $0x780] sm:$0xff]
    %v412 = vld [vmem:[#allocation7 + $0x788] sm:$0xff]
    %v413 = vld [vmem:[#allocation7 + $0x790] sm:$0xff]
    %v414 = vld [vmem:[#allocation7 + $0x798] sm:$0xff]
    %v415 = vld [vmem:[#allocation7 + $0x7a0] sm:$0xff]
    %v416 = vld [vmem:[#allocation7 + $0x7a8] sm:$0xff]
    %v417 = vld [vmem:[#allocation7 + $0x7b0] sm:$0xff]
    %v418 = vld [vmem:[#allocation7 + $0x7b8] sm:$0xff]
    %v419 = vld [vmem:[#allocation7 + $0x7c0] sm:$0xff]
    %v420 = vld [vmem:[#allocation7 + $0x7c8] sm:$0xff]
    %v421 = vld [vmem:[#allocation7 + $0x7d0] sm:$0xff]
    %v422 = vld [vmem:[#allocation7 + $0x7d8] sm:$0xff]
    %v423 = vld [vmem:[#allocation7 + $0x7e0] sm:$0xff]
    %v424 = vld [vmem:[#allocation7 + $0x7e8] sm:$0xff]
    %v425 = vld [vmem:[#allocation7 + $0x7f0] sm:$0xff]
    %v426 = vld [vmem:[#allocation7 + $0x7f8] sm:$0xff]
    %v427 = vld [vmem:[#allocation7 + $0x800] sm:$0xff]
    %v428 = vld [vmem:[#allocation7 + $0x808] sm:$0xff]
    %v429 = vld [vmem:[#allocation7 + $0x810] sm:$0xff]
    %v430 = vld [vmem:[#allocation7 + $0x818] sm:$0xff]
    %v431 = vld [vmem:[#allocation7 + $0x820] sm:$0xff]
    %v432 = vld [vmem:[#allocation7 + $0x828] sm:$0xff]
    %v433 = vld [vmem:[#allocation7 + $0x830] sm:$0xff]
    %v434 = vld [vmem:[#allocation7 + $0x838] sm:$0xff]
    %v435 = vld [vmem:[#allocation7 + $0x840] sm:$0xff]
    %v436 = vld [vmem:[#allocation7 + $0x848] sm:$0xff]
    %v437 = vld [vmem:[#allocation7 + $0x850] sm:$0xff]
    %v438 = vld [vmem:[#allocation7 + $0x858] sm:$0xff]
    %v439 = vld [vmem:[#allocation7 + $0x860] sm:$0xff]
    %v440 = vld [vmem:[#allocation7 + $0x868] sm:$0xff]
    %v441 = vld [vmem:[#allocation7 + $0x870] sm:$0xff]
    %v442 = vld [vmem:[#allocation7 + $0x878] sm:$0xff]
    %v443 = vld [vmem:[#allocation7 + $0x880] sm:$0xff]
    %v444 = vld [vmem:[#allocation7 + $0x888] sm:$0xff]
    %v445 = vld [vmem:[#allocation7 + $0x890] sm:$0xff]
    %v446 = vld [vmem:[#allocation7 + $0x898] sm:$0xff]
    %v447 = vld [vmem:[#allocation7 + $0x8a0] sm:$0xff]
    %v448 = vld [vmem:[#allocation7 + $0x8a8] sm:$0xff]
    %v449 = vld [vmem:[#allocation7 + $0x8b0] sm:$0xff]
    %v450 = vld [vmem:[#allocation7 + $0x8b8] sm:$0xff]
    %v451 = vld [vmem:[#allocation7 + $0x8c0] sm:$0xff]
    %v452 = vld [vmem:[#allocation7 + $0x8c8] sm:$0xff]
    %v453 = vld [vmem:[#allocation7 + $0x8d0] sm:$0xff]
    %v454 = vld [vmem:[#allocation7 + $0x8d8] sm:$0xff]
    %v455 = vld [vmem:[#allocation7 + $0x8e0] sm:$0xff]
    %v456 = vld [vmem:[#allocation7 + $0x8e8] sm:$0xff]
    %v457 = vld [vmem:[#allocation7 + $0x8f0] sm:$0xff]
    %v458 = vld [vmem:[#allocation7 + $0x8f8] sm:$0xff]
    %v459 = vld [vmem:[#allocation7 + $0x900] sm:$0xff]
    %v460 = vld [vmem:[#allocation7 + $0x908] sm:$0xff]
    %v461 = vld [vmem:[#allocation7 + $0x910] sm:$0xff]
    %v462 = vld [vmem:[#allocation7 + $0x918] sm:$0xff]
    %v463 = vld [vmem:[#allocation7 + $0x920] sm:$0xff]
    %v464 = vld [vmem:[#allocation7 + $0x928] sm:$0xff]
    %v465 = vld [vmem:[#allocation7 + $0x930] sm:$0xff]
    %v466 = vld [vmem:[#allocation7 + $0x938] sm:$0xff]
    %v467 = vld [vmem:[#allocation7 + $0x940] sm:$0xff]
    %v468 = vld [vmem:[#allocation7 + $0x948] sm:$0xff]
    %v469 = vld [vmem:[#allocation7 + $0x950] sm:$0xff]
    %v470 = vld [vmem:[#allocation7 + $0x958] sm:$0xff]
    %v471 = vld [vmem:[#allocation7 + $0x960] sm:$0xff]
    %v472 = vld [vmem:[#allocation7 + $0x968] sm:$0xff]
    %v473 = vld [vmem:[#allocation7 + $0x970] sm:$0xff]
    %v474 = vld [vmem:[#allocation7 + $0x978] sm:$0xff]
    %v475 = vld [vmem:[#allocation7 + $0x980] sm:$0xff]
    %v476 = vld [vmem:[#allocation7 + $0x988] sm:$0xff]
    %v477 = vld [vmem:[#allocation7 + $0x990] sm:$0xff]
    %v478 = vld [vmem:[#allocation7 + $0x998] sm:$0xff]
    %v479 = vld [vmem:[#allocation7 + $0x9a0] sm:$0xff]
    %v480 = vld [vmem:[#allocation7 + $0x9a8] sm:$0xff]
    %v481 = vld [vmem:[#allocation7 + $0x9b0] sm:$0xff]
    %v482 = vld [vmem:[#allocation7 + $0x9b8] sm:$0xff]
    %v483 = vld [vmem:[#allocation7 + $0x9c0] sm:$0xff]
    %v484 = vld [vmem:[#allocation7 + $0x9c8] sm:$0xff]
    %v485 = vld [vmem:[#allocation7 + $0x9d0] sm:$0xff]
    %v486 = vld [vmem:[#allocation7 + $0x9d8] sm:$0xff]
    %v487 = vld [vmem:[#allocation7 + $0x9e0] sm:$0xff]
    %v488 = vld [vmem:[#allocation7 + $0x9e8] sm:$0xff]
    %v489 = vld [vmem:[#allocation7 + $0x9f0] sm:$0xff]
    %v490 = vld [vmem:[#allocation7 + $0x9f8] sm:$0xff]
    %v491 = vld [vmem:[#allocation7 + $0xa00] sm:$0xff]
    %v492 = vld [vmem:[#allocation7 + $0xa08] sm:$0xff]
    %v493 = vld [vmem:[#allocation7 + $0xa10] sm:$0xff]
    %v494 = vld [vmem:[#allocation7 + $0xa18] sm:$0xff]
    %v495 = vld [vmem:[#allocation7 + $0xa20] sm:$0xff]
    %v496 = vld [vmem:[#allocation7 + $0xa28] sm:$0xff]
    %v497 = vld [vmem:[#allocation7 + $0xa30] sm:$0xff]
    %v498 = vld [vmem:[#allocation7 + $0xa38] sm:$0xff]
    %v499 = vld [vmem:[#allocation7 + $0xa40] sm:$0xff]
    %v500 = vld [vmem:[#allocation7 + $0xa48] sm:$0xff]
    %v501 = vld [vmem:[#allocation7 + $0xa50] sm:$0xff]
    %v502 = vld [vmem:[#allocation7 + $0xa58] sm:$0xff]
    %v503 = vld [vmem:[#allocation7 + $0xa60] sm:$0xff]
    %v504 = vld [vmem:[#allocation7 + $0xa68] sm:$0xff]
    %v505 = vld [vmem:[#allocation7 + $0xa70] sm:$0xff]
    %v506 = vld [vmem:[#allocation7 + $0xa78] sm:$0xff]
    %v507 = vld [vmem:[#allocation7 + $0xa80] sm:$0xff]
    %v508 = vld [vmem:[#allocation7 + $0xa88] sm:$0xff]
    %v509 = vld [vmem:[#allocation7 + $0xa90] sm:$0xff]
    %v510 = vld [vmem:[#allocation7 + $0xa98] sm:$0xff]
    %v511 = vld [vmem:[#allocation7 + $0xaa0] sm:$0xff]
    %v512 = vld [vmem:[#allocation7 + $0xaa8] sm:$0xff]
    %v513 = vld [vmem:[#allocation7 + $0xab0] sm:$0xff]
    %v514 = vld [vmem:[#allocation7 + $0xab8] sm:$0xff]
    %v515 = vld [vmem:[#allocation7 + $0xac0] sm:$0xff]
    %v516 = vld [vmem:[#allocation7 + $0xac8] sm:$0xff]
    %v517 = vld [vmem:[#allocation7 + $0xad0] sm:$0xff]
    %v518 = vld [vmem:[#allocation7 + $0xad8] sm:$0xff]
    %v519 = vld [vmem:[#allocation7 + $0xae0] sm:$0xff]
    %v520 = vld [vmem:[#allocation7 + $0xae8] sm:$0xff]
    %v521 = vld [vmem:[#allocation7 + $0xaf0] sm:$0xff]
    %v522 = vld [vmem:[#allocation7 + $0xaf8] sm:$0xff]
    %v523 = vld [vmem:[#allocation7 + $0xb00] sm:$0xff]
    %v524 = vld [vmem:[#allocation7 + $0xb08] sm:$0xff]
    %v525 = vld [vmem:[#allocation7 + $0xb10] sm:$0xff]
    %v526 = vld [vmem:[#allocation7 + $0xb18] sm:$0xff]
    %v527 = vld [vmem:[#allocation7 + $0xb20] sm:$0xff]
    %v528 = vld [vmem:[#allocation7 + $0xb28] sm:$0xff]
    %v529 = vld [vmem:[#allocation7 + $0xb30] sm:$0xff]
    %v530 = vld [vmem:[#allocation7 + $0xb38] sm:$0xff]
    %v531 = vld [vmem:[#allocation7 + $0xb40] sm:$0xff]
    %v532 = vld [vmem:[#allocation7 + $0xb48] sm:$0xff]
    %v533 = vld [vmem:[#allocation7 + $0xb50] sm:$0xff]
    %v534 = vld [vmem:[#allocation7 + $0xb58] sm:$0xff]
    %v535 = vld [vmem:[#allocation7 + $0xb60] sm:$0xff]
    %v536 = vld [vmem:[#allocation7 + $0xb68] sm:$0xff]
    %v537 = vld [vmem:[#allocation7 + $0xb70] sm:$0xff]
    %v538 = vld [vmem:[#allocation7 + $0xb78] sm:$0xff]
    %v539 = vld [vmem:[#allocation7 + $0xb80] sm:$0xff]
    %v540 = vld [vmem:[#allocation7 + $0xb88] sm:$0xff]
    %v541 = vld [vmem:[#allocation7 + $0xb90] sm:$0xff]
    %v542 = vld [vmem:[#allocation7 + $0xb98] sm:$0xff]
    %v543 = vld [vmem:[#allocation7 + $0xba0] sm:$0xff]
    %v544 = vld [vmem:[#allocation7 + $0xba8] sm:$0xff]
    %v545 = vld [vmem:[#allocation7 + $0xbb0] sm:$0xff]
    %v546 = vld [vmem:[#allocation7 + $0xbb8] sm:$0xff]
    %v547 = vld [vmem:[#allocation7 + $0xbc0] sm:$0xff]
    %v548 = vld [vmem:[#allocation7 + $0xbc8] sm:$0xff]
    %v549 = vld [vmem:[#allocation7 + $0xbd0] sm:$0xff]
    %v550 = vld [vmem:[#allocation7 + $0xbd8] sm:$0xff]
    %v551 = vld [vmem:[#allocation7 + $0xbe0] sm:$0xff]
    %v552 = vld [vmem:[#allocation7 + $0xbe8] sm:$0xff]
    %v553 = vld [vmem:[#allocation7 + $0xbf0] sm:$0xff]
    %v554 = vld [vmem:[#allocation7 + $0xbf8] sm:$0xff]
    %v555 = vld [vmem:[#allocation7 + $0xc00] sm:$0xff]
    %v556 = vld [vmem:[#allocation7 + $0xc08] sm:$0xff]
    %v557 = vld [vmem:[#allocation7 + $0xc10] sm:$0xff]
    %v558 = vld [vmem:[#allocation7 + $0xc18] sm:$0xff]
    %v559 = vld [vmem:[#allocation7 + $0xc20] sm:$0xff]
    %v560 = vld [vmem:[#allocation7 + $0xc28] sm:$0xff]
    %v561 = vld [vmem:[#allocation7 + $0xc30] sm:$0xff]
    %v562 = vld [vmem:[#allocation7 + $0xc38] sm:$0xff]
    %v563 = vld [vmem:[#allocation7 + $0xc40] sm:$0xff]
    %v564 = vld [vmem:[#allocation7 + $0xc48] sm:$0xff]
    %v565 = vld [vmem:[#allocation7 + $0xc50] sm:$0xff]
    %v566 = vld [vmem:[#allocation7 + $0xc58] sm:$0xff]
    %v567 = vld [vmem:[#allocation7 + $0xc60] sm:$0xff]
    %v568 = vld [vmem:[#allocation7 + $0xc68] sm:$0xff]
    %v569 = vld [vmem:[#allocation7 + $0xc70] sm:$0xff]
    %v570 = vld [vmem:[#allocation7 + $0xc78] sm:$0xff]
    %v571 = vld [vmem:[#allocation7 + $0xc80] sm:$0xff]
    %v572 = vld [vmem:[#allocation7 + $0xc88] sm:$0xff]
    %v573 = vld [vmem:[#allocation7 + $0xc90] sm:$0xff]
    %v574 = vld [vmem:[#allocation7 + $0xc98] sm:$0xff]
    %v575 = vld [vmem:[#allocation7 + $0xca0] sm:$0xff]
    %v576 = vld [vmem:[#allocation7 + $0xca8] sm:$0xff]
    %v577 = vld [vmem:[#allocation7 + $0xcb0] sm:$0xff]
    %v578 = vld [vmem:[#allocation7 + $0xcb8] sm:$0xff]
    %v579 = vld [vmem:[#allocation7 + $0xcc0] sm:$0xff]
    %v580 = vld [vmem:[#allocation7 + $0xcc8] sm:$0xff]
    %v581 = vld [vmem:[#allocation7 + $0xcd0] sm:$0xff]
    %v582 = vld [vmem:[#allocation7 + $0xcd8] sm:$0xff]
    %v583 = vld [vmem:[#allocation7 + $0xce0] sm:$0xff]
    %v584 = vld [vmem:[#allocation7 + $0xce8] sm:$0xff]
    %v585 = vld [vmem:[#allocation7 + $0xcf0] sm:$0xff]
    %v586 = vld [vmem:[#allocation7 + $0xcf8] sm:$0xff]
    %v587 = vld [vmem:[#allocation7 + $0xd00] sm:$0xff]
    %v588 = vld [vmem:[#allocation7 + $0xd08] sm:$0xff]
    %v589 = vld [vmem:[#allocation7 + $0xd10] sm:$0xff]
    %v590 = vld [vmem:[#allocation7 + $0xd18] sm:$0xff]
    %v591 = vld [vmem:[#allocation7 + $0xd20] sm:$0xff]
    %v592 = vld [vmem:[#allocation7 + $0xd28] sm:$0xff]
    %v593 = vld [vmem:[#allocation7 + $0xd30] sm:$0xff]
    %v594 = vld [vmem:[#allocation7 + $0xd38] sm:$0xff]
    %v595 = vld [vmem:[#allocation7 + $0xd40] sm:$0xff]
    %v596 = vld [vmem:[#allocation7 + $0xd48] sm:$0xff]
    %v597 = vld [vmem:[#allocation7 + $0xd50] sm:$0xff]
    %v598 = vld [vmem:[#allocation7 + $0xd58] sm:$0xff]
    %v599 = vld [vmem:[#allocation7 + $0xd60] sm:$0xff]
    %v600 = vld [vmem:[#allocation7 + $0xd68] sm:$0xff]
    %v601 = vld [vmem:[#allocation7 + $0xd70] sm:$0xff]
    %v602 = vld [vmem:[#allocation7 + $0xd78] sm:$0xff]
    %v603 = vld [vmem:[#allocation7 + $0xd80] sm:$0xff]
    %v604 = vld [vmem:[#allocation7 + $0xd88] sm:$0xff]
    %v605 = vld [vmem:[#allocation7 + $0xd90] sm:$0xff]
    %v606 = vld [vmem:[#allocation7 + $0xd98] sm:$0xff]
    %v607 = vld [vmem:[#allocation7 + $0xda0] sm:$0xff]
    %v608 = vld [vmem:[#allocation7 + $0xda8] sm:$0xff]
    %v609 = vld [vmem:[#allocation7 + $0xdb0] sm:$0xff]
    %v610 = vld [vmem:[#allocation7 + $0xdb8] sm:$0xff]
    %v611 = vld [vmem:[#allocation7 + $0xdc0] sm:$0xff]
    %v612 = vld [vmem:[#allocation7 + $0xdc8] sm:$0xff]
    %v613 = vld [vmem:[#allocation7 + $0xdd0] sm:$0xff]
    %v614 = vld [vmem:[#allocation7 + $0xdd8] sm:$0xff]
    %v615 = vld [vmem:[#allocation7 + $0xde0] sm:$0xff]
    %v616 = vld [vmem:[#allocation7 + $0xde8] sm:$0xff]
    %v617 = vld [vmem:[#allocation7 + $0xdf0] sm:$0xff]
    %v618 = vld [vmem:[#allocation7 + $0xdf8] sm:$0xff]
    %v619 = vld [vmem:[#allocation7 + $0xe00] sm:$0xff]
    %v620 = vld [vmem:[#allocation7 + $0xe08] sm:$0xff]
    %v621 = vld [vmem:[#allocation7 + $0xe10] sm:$0xff]
    %v622 = vld [vmem:[#allocation7 + $0xe18] sm:$0xff]
    %v623 = vld [vmem:[#allocation7 + $0xe20] sm:$0xff]
    %v624 = vld [vmem:[#allocation7 + $0xe28] sm:$0xff]
    %v625 = vld [vmem:[#allocation7 + $0xe30] sm:$0xff]
    %v626 = vld [vmem:[#allocation7 + $0xe38] sm:$0xff]
    %v627 = vld [vmem:[#allocation7 + $0xe40] sm:$0xff]
    %v628 = vld [vmem:[#allocation7 + $0xe48] sm:$0xff]
    %v629 = vld [vmem:[#allocation7 + $0xe50] sm:$0xff]
    %v630 = vld [vmem:[#allocation7 + $0xe58] sm:$0xff]
    %v631 = vld [vmem:[#allocation7 + $0xe60] sm:$0xff]
    %v632 = vld [vmem:[#allocation7 + $0xe68] sm:$0xff]
    %v633 = vld [vmem:[#allocation7 + $0xe70] sm:$0xff]
    %v634 = vld [vmem:[#allocation7 + $0xe78] sm:$0xff]
    %v635 = vld [vmem:[#allocation7 + $0xe80] sm:$0xff]
    %v636 = vld [vmem:[#allocation7 + $0xe88] sm:$0xff]
    %v637 = vld [vmem:[#allocation7 + $0xe90] sm:$0xff]
    %v638 = vld [vmem:[#allocation7 + $0xe98] sm:$0xff]
    %v639 = vld [vmem:[#allocation7 + $0xea0] sm:$0xff]
    %v640 = vld [vmem:[#allocation7 + $0xea8] sm:$0xff]
    %v641 = vld [vmem:[#allocation7 + $0xeb0] sm:$0xff]
    %v642 = vld [vmem:[#allocation7 + $0xeb8] sm:$0xff]
    %v643 = vld [vmem:[#allocation7 + $0xec0] sm:$0xff]
    %v644 = vld [vmem:[#allocation7 + $0xec8] sm:$0xff]
    %v645 = vld [vmem:[#allocation7 + $0xed0] sm:$0xff]
    %v646 = vld [vmem:[#allocation7 + $0xed8] sm:$0xff]
    %v647 = vld [vmem:[#allocation7 + $0xee0] sm:$0xff]
    %v648 = vld [vmem:[#allocation7 + $0xee8] sm:$0xff]
    %v649 = vld [vmem:[#allocation7 + $0xef0] sm:$0xff]
    %v650 = vld [vmem:[#allocation7 + $0xef8] sm:$0xff]
    %v651 = vld [vmem:[#allocation7 + $0xf00] sm:$0xff]
    %v652 = vld [vmem:[#allocation7 + $0xf08] sm:$0xff]
    %v653 = vld [vmem:[#allocation7 + $0xf10] sm:$0xff]
    %v654 = vld [vmem:[#allocation7 + $0xf18] sm:$0xff]
    %v655 = vld [vmem:[#allocation7 + $0xf20] sm:$0xff]
    %v656 = vld [vmem:[#allocation7 + $0xf28] sm:$0xff]
    %v657 = vld [vmem:[#allocation7 + $0xf30] sm:$0xff]
    %v658 = vld [vmem:[#allocation7 + $0xf38] sm:$0xff]
    %v659 = vld [vmem:[#allocation7 + $0xf40] sm:$0xff]
    %v660 = vld [vmem:[#allocation7 + $0xf48] sm:$0xff]
    %v661 = vld [vmem:[#allocation7 + $0xf50] sm:$0xff]
    %v662 = vld [vmem:[#allocation7 + $0xf58] sm:$0xff]
    %v663 = vld [vmem:[#allocation7 + $0xf60] sm:$0xff]
    %v664 = vld [vmem:[#allocation7 + $0xf68] sm:$0xff]
    %v665 = vld [vmem:[#allocation7 + $0xf70] sm:$0xff]
    %v666 = vld [vmem:[#allocation7 + $0xf78] sm:$0xff]
    %v667 = vld [vmem:[#allocation7 + $0xf80] sm:$0xff]
    %v668 = vld [vmem:[#allocation7 + $0xf88] sm:$0xff]
    %v669 = vld [vmem:[#allocation7 + $0xf90] sm:$0xff]
    %v670 = vld [vmem:[#allocation7 + $0xf98] sm:$0xff]
    %v671 = vld [vmem:[#allocation7 + $0xfa0] sm:$0xff]
    %v672 = vld [vmem:[#allocation7 + $0xfa8] sm:$0xff]
    %v673 = vld [vmem:[#allocation7 + $0xfb0] sm:$0xff]
    %v674 = vld [vmem:[#allocation7 + $0xfb8] sm:$0xff]
    %v675 = vld [vmem:[#allocation7 + $0xfc0] sm:$0xff]
    %v676 = vld [vmem:[#allocation7 + $0xfc8] sm:$0xff]
    %v677 = vld [vmem:[#allocation7 + $0xfd0] sm:$0xff]
    %v678 = vld [vmem:[#allocation7 + $0xfd8] sm:$0xff]
    %v679 = vld [vmem:[#allocation7 + $0xfe0] sm:$0xff]
    %v680 = vld [vmem:[#allocation7 + $0xfe8] sm:$0xff]
    %v681 = vld [vmem:[#allocation7 + $0xff0] sm:$0xff]
    %v682 = vld [vmem:[#allocation7 + $0xff8] sm:$0xff]
    %v683 = vld [vmem:[#allocation7 + $0x1000] sm:$0xff]
    %v684 = vld [vmem:[#allocation7 + $0x1008] sm:$0xff]
    %v685 = vld [vmem:[#allocation7 + $0x1010] sm:$0xff]
    %v686 = vld [vmem:[#allocation7 + $0x1018] sm:$0xff]
    %v687 = vld [vmem:[#allocation7 + $0x1020] sm:$0xff]
    %v688 = vld [vmem:[#allocation7 + $0x1028] sm:$0xff]
    %v689 = vld [vmem:[#allocation7 + $0x1030] sm:$0xff]
    %v690 = vld [vmem:[#allocation7 + $0x1038] sm:$0xff]
    %v691 = vld [vmem:[#allocation7 + $0x1040] sm:$0xff]
    %v692 = vld [vmem:[#allocation7 + $0x1048] sm:$0xff]
    %v693 = vld [vmem:[#allocation7 + $0x1050] sm:$0xff]
    %v694 = vld [vmem:[#allocation7 + $0x1058] sm:$0xff]
    %v695 = vld [vmem:[#allocation7 + $0x1060] sm:$0xff]
    %v696 = vld [vmem:[#allocation7 + $0x1068] sm:$0xff]
    %v697 = vld [vmem:[#allocation7 + $0x1070] sm:$0xff]
    %v698 = vld [vmem:[#allocation7 + $0x1078] sm:$0xff]
    %v699 = vld [vmem:[#allocation7 + $0x1080] sm:$0xff]
    %v700 = vld [vmem:[#allocation7 + $0x1088] sm:$0xff]
    %v701 = vld [vmem:[#allocation7 + $0x1090] sm:$0xff]
    %v702 = vld [vmem:[#allocation7 + $0x1098] sm:$0xff]
    %v703 = vld [vmem:[#allocation7 + $0x10a0] sm:$0xff]
    %v704 = vld [vmem:[#allocation7 + $0x10a8] sm:$0xff]
    %v705 = vld [vmem:[#allocation7 + $0x10b0] sm:$0xff]
    %v706 = vld [vmem:[#allocation7 + $0x10b8] sm:$0xff]
    %v707 = vld [vmem:[#allocation7 + $0x10c0] sm:$0xff]
    %v708 = vld [vmem:[#allocation7 + $0x10c8] sm:$0xff]
    %v709 = vld [vmem:[#allocation7 + $0x10d0] sm:$0xff]
    %v710 = vld [vmem:[#allocation7 + $0x10d8] sm:$0xff]
    %v711 = vld [vmem:[#allocation7 + $0x10e0] sm:$0xff]
    %v712 = vld [vmem:[#allocation7 + $0x10e8] sm:$0xff]
    %v713 = vld [vmem:[#allocation7 + $0x10f0] sm:$0xff]
    %v714 = vld [vmem:[#allocation7 + $0x10f8] sm:$0xff]
    %v715 = vld [vmem:[#allocation7 + $0x1100] sm:$0xff]
    %v716 = vld [vmem:[#allocation7 + $0x1108] sm:$0xff]
    %v717 = vld [vmem:[#allocation7 + $0x1110] sm:$0xff]
    %v718 = vld [vmem:[#allocation7 + $0x1118] sm:$0xff]
    %v719 = vld [vmem:[#allocation7 + $0x1120] sm:$0xff]
    %v720 = vld [vmem:[#allocation7 + $0x1128] sm:$0xff]
    %v721 = vld [vmem:[#allocation7 + $0x1130] sm:$0xff]
    %v722 = vld [vmem:[#allocation7 + $0x1138] sm:$0xff]
    %v723 = vld [vmem:[#allocation7 + $0x1140] sm:$0xff]
    %v724 = vld [vmem:[#allocation7 + $0x1148] sm:$0xff]
    %v725 = vld [vmem:[#allocation7 + $0x1150] sm:$0xff]
    %v726 = vld [vmem:[#allocation7 + $0x1158] sm:$0xff]
    %v727 = vld [vmem:[#allocation7 + $0x1160] sm:$0xff]
    %v728 = vld [vmem:[#allocation7 + $0x1168] sm:$0xff]
    %v729 = vld [vmem:[#allocation7 + $0x1170] sm:$0xff]
    %v730 = vld [vmem:[#allocation7 + $0x1178] sm:$0xff]
    %v731 = vld [vmem:[#allocation7 + $0x1180] sm:$0xff]
    %v732 = vld [vmem:[#allocation7 + $0x1188] sm:$0xff]
    %v733 = vld [vmem:[#allocation7 + $0x1190] sm:$0xff]
    %v734 = vld [vmem:[#allocation7 + $0x1198] sm:$0xff]
    %v735 = vld [vmem:[#allocation7 + $0x11a0] sm:$0xff]
    %v736 = vld [vmem:[#allocation7 + $0x11a8] sm:$0xff]
    %v737 = vld [vmem:[#allocation7 + $0x11b0] sm:$0xff]
    %v738 = vld [vmem:[#allocation7 + $0x11b8] sm:$0xff]
    %v739 = vld [vmem:[#allocation7 + $0x11c0] sm:$0xff]
    %v740 = vld [vmem:[#allocation7 + $0x11c8] sm:$0xff]
    %v741 = vld [vmem:[#allocation7 + $0x11d0] sm:$0xff]
    %v742 = vld [vmem:[#allocation7 + $0x11d8] sm:$0xff]
    %v743 = vld [vmem:[#allocation7 + $0x11e0] sm:$0xff]
    %v744 = vld [vmem:[#allocation7 + $0x11e8] sm:$0xff]
    %v745 = vld [vmem:[#allocation7 + $0x11f0] sm:$0xff]
    %v746 = vld [vmem:[#allocation7 + $0x11f8] sm:$0xff]
    %v747 = vld [vmem:[#allocation7 + $0x1200] sm:$0xff]
    %v748 = vld [vmem:[#allocation7 + $0x1208] sm:$0xff]
    %v749 = vld [vmem:[#allocation7 + $0x1210] sm:$0xff]
    %v750 = vld [vmem:[#allocation7 + $0x1218] sm:$0xff]
    %v751 = vld [vmem:[#allocation7 + $0x1220] sm:$0xff]
    %v752 = vld [vmem:[#allocation7 + $0x1228] sm:$0xff]
    %v753 = vld [vmem:[#allocation7 + $0x1230] sm:$0xff]
    %v754 = vld [vmem:[#allocation7 + $0x1238] sm:$0xff]
    %v755 = vld [vmem:[#allocation7 + $0x1240] sm:$0xff]
    %v756 = vld [vmem:[#allocation7 + $0x1248] sm:$0xff]
    %v757 = vld [vmem:[#allocation7 + $0x1250] sm:$0xff]
    %v758 = vld [vmem:[#allocation7 + $0x1258] sm:$0xff]
    %v759 = vld [vmem:[#allocation7 + $0x1260] sm:$0xff]
    %v760 = vld [vmem:[#allocation7 + $0x1268] sm:$0xff]
    %v761 = vld [vmem:[#allocation7 + $0x1270] sm:$0xff]
    %v762 = vld [vmem:[#allocation7 + $0x1278] sm:$0xff]
    %v763 = vld [vmem:[#allocation7 + $0x1280] sm:$0xff]
    %v764 = vld [vmem:[#allocation7 + $0x1288] sm:$0xff]
    %v765 = vld [vmem:[#allocation7 + $0x1290] sm:$0xff]
    %v766 = vld [vmem:[#allocation7 + $0x1298] sm:$0xff]
    %v767 = vld [vmem:[#allocation7 + $0x12a0] sm:$0xff]
    %v768 = vld [vmem:[#allocation7 + $0x12a8] sm:$0xff]
    %v769 = vld [vmem:[#allocation7 + $0x12b0] sm:$0xff]
    %v770 = vld [vmem:[#allocation7 + $0x12b8] sm:$0xff]
    %v771 = vld [vmem:[#allocation7 + $0x12c0] sm:$0xff]
    %v772 = vld [vmem:[#allocation7 + $0x12c8] sm:$0xff]
    %v773 = vld [vmem:[#allocation7 + $0x12d0] sm:$0xff]
    %v774 = vld [vmem:[#allocation7 + $0x12d8] sm:$0xff]
    %v775 = vld [vmem:[#allocation7 + $0x12e0] sm:$0xff]
    %v776 = vld [vmem:[#allocation7 + $0x12e8] sm:$0xff]
    %v777 = vld [vmem:[#allocation7 + $0x12f0] sm:$0xff]
    %v778 = vld [vmem:[#allocation7 + $0x12f8] sm:$0xff]
    %v779 = vld [vmem:[#allocation7 + $0x1300] sm:$0xff]
    %v780 = vld [vmem:[#allocation7 + $0x1308] sm:$0xff]
    %v781 = vld [vmem:[#allocation7 + $0x1310] sm:$0xff]
    %v782 = vld [vmem:[#allocation7 + $0x1318] sm:$0xff]
    %v783 = vld [vmem:[#allocation7 + $0x1320] sm:$0xff]
    %v784 = vld [vmem:[#allocation7 + $0x1328] sm:$0xff]
    %v785 = vld [vmem:[#allocation7 + $0x1330] sm:$0xff]
    %v786 = vld [vmem:[#allocation7 + $0x1338] sm:$0xff]
    %v787 = vld [vmem:[#allocation7 + $0x1340] sm:$0xff]
    %v788 = vld [vmem:[#allocation7 + $0x1348] sm:$0xff]
    %v789 = vld [vmem:[#allocation7 + $0x1350] sm:$0xff]
    %v790 = vld [vmem:[#allocation7 + $0x1358] sm:$0xff]
    %v791 = vld [vmem:[#allocation7 + $0x1360] sm:$0xff]
    %v792 = vld [vmem:[#allocation7 + $0x1368] sm:$0xff]
    %v793 = vld [vmem:[#allocation7 + $0x1370] sm:$0xff]
    %v794 = vld [vmem:[#allocation7 + $0x1378] sm:$0xff]
    %v795 = vld [vmem:[#allocation7 + $0x1380] sm:$0xff]
    %v796 = vld [vmem:[#allocation7 + $0x1388] sm:$0xff]
    %v797 = vld [vmem:[#allocation7 + $0x1390] sm:$0xff]
    %v798 = vld [vmem:[#allocation7 + $0x1398] sm:$0xff]
    %v799 = vld [vmem:[#allocation7 + $0x13a0] sm:$0xff]
    %v800 = vld [vmem:[#allocation7 + $0x13a8] sm:$0xff]
    %v801 = vld [vmem:[#allocation7 + $0x13b0] sm:$0xff]
    %v802 = vld [vmem:[#allocation7 + $0x13b8] sm:$0xff]
    %v803 = vld [vmem:[#allocation7 + $0x13c0] sm:$0xff]
    %v804 = vld [vmem:[#allocation7 + $0x13c8] sm:$0xff]
    %v805 = vld [vmem:[#allocation7 + $0x13d0] sm:$0xff]
    %v806 = vld [vmem:[#allocation7 + $0x13d8] sm:$0xff]
    %v807 = vld [vmem:[#allocation7 + $0x13e0] sm:$0xff]
    %v808 = vld [vmem:[#allocation7 + $0x13e8] sm:$0xff]
    %v809 = vld [vmem:[#allocation7 + $0x13f0] sm:$0xff]
    %v810 = vld [vmem:[#allocation7 + $0x13f8] sm:$0xff]
    %v811 = vld [vmem:[#allocation7 + $0x1400] sm:$0xff]
    %v812 = vld [vmem:[#allocation7 + $0x1408] sm:$0xff]
    %v813 = vld [vmem:[#allocation7 + $0x1410] sm:$0xff]
    %v814 = vld [vmem:[#allocation7 + $0x1418] sm:$0xff]
    %v815 = vld [vmem:[#allocation7 + $0x1420] sm:$0xff]
    %v816 = vld [vmem:[#allocation7 + $0x1428] sm:$0xff]
    %v817 = vld [vmem:[#allocation7 + $0x1430] sm:$0xff]
    %v818 = vld [vmem:[#allocation7 + $0x1438] sm:$0xff]
    %v819 = vld [vmem:[#allocation7 + $0x1440] sm:$0xff]
    %v820 = vld [vmem:[#allocation7 + $0x1448] sm:$0xff]
    %v821 = vld [vmem:[#allocation7 + $0x1450] sm:$0xff]
    %v822 = vld [vmem:[#allocation7 + $0x1458] sm:$0xff]
    %v823 = vld [vmem:[#allocation7 + $0x1460] sm:$0xff]
    %v824 = vld [vmem:[#allocation7 + $0x1468] sm:$0xff]
    %v825 = vld [vmem:[#allocation7 + $0x1470] sm:$0xff]
    %v826 = vld [vmem:[#allocation7 + $0x1478] sm:$0xff]
    %v827 = vld [vmem:[#allocation7 + $0x1480] sm:$0xff]
    %v828 = vld [vmem:[#allocation7 + $0x1488] sm:$0xff]
    %v829 = vld [vmem:[#allocation7 + $0x1490] sm:$0xff]
    %v830 = vld [vmem:[#allocation7 + $0x1498] sm:$0xff]
    %v831 = vld [vmem:[#allocation7 + $0x14a0] sm:$0xff]
    %v832 = vld [vmem:[#allocation7 + $0x14a8] sm:$0xff]
    %v833 = vld [vmem:[#allocation7 + $0x14b0] sm:$0xff]
    %v834 = vld [vmem:[#allocation7 + $0x14b8] sm:$0xff]
    %v835 = vld [vmem:[#allocation7 + $0x14c0] sm:$0xff]
    %v836 = vld [vmem:[#allocation7 + $0x14c8] sm:$0xff]
    %v837 = vld [vmem:[#allocation7 + $0x14d0] sm:$0xff]
    %v838 = vld [vmem:[#allocation7 + $0x14d8] sm:$0xff]
    %v839 = vld [vmem:[#allocation7 + $0x14e0] sm:$0xff]
    %v840 = vld [vmem:[#allocation7 + $0x14e8] sm:$0xff]
    %v841 = vld [vmem:[#allocation7 + $0x14f0] sm:$0xff]
    %v842 = vld [vmem:[#allocation7 + $0x14f8] sm:$0xff]
    %v843 = vld [vmem:[#allocation7 + $0x1500] sm:$0xff]
    %v844 = vld [vmem:[#allocation7 + $0x1508] sm:$0xff]
    %v845 = vld [vmem:[#allocation7 + $0x1510] sm:$0xff]
    %v846 = vld [vmem:[#allocation7 + $0x1518] sm:$0xff]
    %v847 = vld [vmem:[#allocation7 + $0x1520] sm:$0xff]
    %v848 = vld [vmem:[#allocation7 + $0x1528] sm:$0xff]
    %v849 = vld [vmem:[#allocation7 + $0x1530] sm:$0xff]
    %v850 = vld [vmem:[#allocation7 + $0x1538] sm:$0xff]
    %v851 = vld [vmem:[#allocation7 + $0x1540] sm:$0xff]
    %v852 = vld [vmem:[#allocation7 + $0x1548] sm:$0xff]
    %v853 = vld [vmem:[#allocation7 + $0x1550] sm:$0xff]
    %v854 = vld [vmem:[#allocation7 + $0x1558] sm:$0xff]
    %v855 = vld [vmem:[#allocation7 + $0x1560] sm:$0xff]
    %v856 = vld [vmem:[#allocation7 + $0x1568] sm:$0xff]
    %v857 = vld [vmem:[#allocation7 + $0x1570] sm:$0xff]
    %v858 = vld [vmem:[#allocation7 + $0x1578] sm:$0xff]
    %v859 = vld [vmem:[#allocation7 + $0x1580] sm:$0xff]
    %v860 = vld [vmem:[#allocation7 + $0x1588] sm:$0xff]
    %v861 = vld [vmem:[#allocation7 + $0x1590] sm:$0xff]
    %v862 = vld [vmem:[#allocation7 + $0x1598] sm:$0xff]
    %v863 = vld [vmem:[#allocation7 + $0x15a0] sm:$0xff]
    %v864 = vld [vmem:[#allocation7 + $0x15a8] sm:$0xff]
    %v865 = vld [vmem:[#allocation7 + $0x15b0] sm:$0xff]
    %v866 = vld [vmem:[#allocation7 + $0x15b8] sm:$0xff]
    %v867 = vld [vmem:[#allocation7 + $0x15c0] sm:$0xff]
    %v868 = vld [vmem:[#allocation7 + $0x15c8] sm:$0xff]
    %v869 = vld [vmem:[#allocation7 + $0x15d0] sm:$0xff]
    %v870 = vld [vmem:[#allocation7 + $0x15d8] sm:$0xff]
    %v871 = vld [vmem:[#allocation9] sm:$0xf]
    %v873 = vlaneseq
    %v874 = vshrl.u32 %v873, 7
    %v875 = vsub.s32 0, %v874
    %v876 = vrot.slane %v871, %v875
    %v877 = vlaneseq
    %v878 = vshrl.u32 %v877, 7
    %v879 = vsub.s32 1, %v878
    %v880 = vrot.slane %v871, %v879
    %v881 = vlaneseq
    %v882 = vshrl.u32 %v881, 7
    %v883 = vsub.s32 2, %v882
    %v884 = vrot.slane %v871, %v883
    %v885 = vlaneseq
    %v886 = vshrl.u32 %v885, 7
    %v887 = vsub.s32 3, %v886
    %v888 = vrot.slane %v871, %v887
    %v904 = vunpack.c.l.b16 %v160
    %v905 = vunpack.c.h.b16 %v160
    %v906 = vunpack.c.l.b16 %v161
    %v907 = vunpack.c.h.b16 %v161
    %v908 = vunpack.c.l.b16 %v162
    %v909 = vunpack.c.h.b16 %v162
    %v910 = vunpack.c.l.b16 %v163
    %v911 = vunpack.c.h.b16 %v163
    %v912 = vunpack.c.l.b16 %v164
    %v913 = vunpack.c.h.b16 %v164
    %v914 = vunpack.c.l.b16 %v165
    %v915 = vunpack.c.h.b16 %v165
    %v916 = vunpack.c.l.b16 %v166
    %v917 = vunpack.c.h.b16 %v166
    %v918 = vunpack.c.l.b16 %v167
    %v919 = vunpack.c.h.b16 %v167
    %v920 = vunpack.c.l.b16 %v168
    %v921 = vunpack.c.h.b16 %v168
    %v922 = vunpack.c.l.b16 %v169
    %v923 = vunpack.c.h.b16 %v169
    %v924 = vunpack.c.l.b16 %v170
    %v925 = vunpack.c.h.b16 %v170
    %v926 = vpack.c.b16 %v904, %v904
    %v927 = vpack.c.b16 %v905, %v905
    %v928 = vpack.c.b16 %v906, %v906
    %v929 = vpack.c.b16 %v907, %v907
    %v930 = vpack.c.b16 %v908, %v908
    %v931 = vpack.c.b16 %v909, %v909
    %v932 = vpack.c.b16 %v910, %v910
    %v933 = vpack.c.b16 %v911, %v911
    %v934 = vpack.c.b16 %v912, %v912
    %v935 = vpack.c.b16 %v913, %v913
    %v936 = vpack.c.b16 %v914, %v914
    %v937 = vpack.c.b16 %v915, %v915
    %v938 = vpack.c.b16 %v916, %v916
    %v939 = vpack.c.b16 %v917, %v917
    %v940 = vpack.c.b16 %v918, %v918
    %v941 = vpack.c.b16 %v919, %v919
    %v942 = vpack.c.b16 %v920, %v920
    %v943 = vpack.c.b16 %v921, %v921
    %v944 = vpack.c.b16 %v922, %v922
    %v945 = vpack.c.b16 %v923, %v923
    %v946 = vpack.c.b16 %v924, %v924
    %v947 = vpack.c.b16 %v925, %v925
    %v1669 = vunpack.c.l.b16 %v171
    %v1670 = vunpack.c.h.b16 %v171
    %v1671 = vunpack.c.l.b16 %v172
    %v1672 = vunpack.c.h.b16 %v172
    %v1673 = vunpack.c.l.b16 %v173
    %v1674 = vunpack.c.h.b16 %v173
    %v1675 = vunpack.c.l.b16 %v174
    %v1676 = vunpack.c.h.b16 %v174
    %v1677 = vunpack.c.l.b16 %v175
    %v1678 = vunpack.c.h.b16 %v175
    %v1679 = vunpack.c.l.b16 %v176
    %v1680 = vunpack.c.h.b16 %v176
    %v1681 = vunpack.c.l.b16 %v177
    %v1682 = vunpack.c.h.b16 %v177
    %v1683 = vunpack.c.l.b16 %v178
    %v1684 = vunpack.c.h.b16 %v178
    %v1685 = vunpack.c.l.b16 %v179
    %v1686 = vunpack.c.h.b16 %v179
    %v1687 = vunpack.c.l.b16 %v180
    %v1688 = vunpack.c.h.b16 %v180
    %v1689 = vunpack.c.l.b16 %v181
    %v1690 = vunpack.c.h.b16 %v181
    %v1691 = vunpack.c.l.b16 %v182
    %v1692 = vunpack.c.h.b16 %v182
    %v1693 = vunpack.c.l.b16 %v183
    %v1694 = vunpack.c.h.b16 %v183
    %v1695 = vunpack.c.l.b16 %v184
    %v1696 = vunpack.c.h.b16 %v184
    %v1697 = vunpack.c.l.b16 %v185
    %v1698 = vunpack.c.h.b16 %v185
    %v1699 = vunpack.c.l.b16 %v186
    %v1700 = vunpack.c.h.b16 %v186
    %v1701 = vunpack.c.l.b16 %v187
    %v1702 = vunpack.c.h.b16 %v187
    %v1703 = vunpack.c.l.b16 %v188
    %v1704 = vunpack.c.h.b16 %v188
    %v1705 = vunpack.c.l.b16 %v189
    %v1706 = vunpack.c.h.b16 %v189
    %v1707 = vunpack.c.l.b16 %v190
    %v1708 = vunpack.c.h.b16 %v190
    %v1709 = vunpack.c.l.b16 %v191
    %v1710 = vunpack.c.h.b16 %v191
    %v1711 = vunpack.c.l.b16 %v192
    %v1712 = vunpack.c.h.b16 %v192
    %v1713 = vunpack.c.l.b16 %v193
    %v1714 = vunpack.c.h.b16 %v193
    %v1715 = vunpack.c.l.b16 %v194
    %v1716 = vunpack.c.h.b16 %v194
    %v1717 = vunpack.c.l.b16 %v195
    %v1718 = vunpack.c.h.b16 %v195
    %v1719 = vunpack.c.l.b16 %v196
    %v1720 = vunpack.c.h.b16 %v196
    %v1721 = vunpack.c.l.b16 %v197
    %v1722 = vunpack.c.h.b16 %v197
    %v1723 = vunpack.c.l.b16 %v198
    %v1724 = vunpack.c.h.b16 %v198
    %v1725 = vunpack.c.l.b16 %v199
    %v1726 = vunpack.c.h.b16 %v199
    %v1727 = vunpack.c.l.b16 %v200
    %v1728 = vunpack.c.h.b16 %v200
    %v1729 = vunpack.c.l.b16 %v201
    %v1730 = vunpack.c.h.b16 %v201
    %v1731 = vunpack.c.l.b16 %v202
    %v1732 = vunpack.c.h.b16 %v202
    %v1733 = vunpack.c.l.b16 %v203
    %v1734 = vunpack.c.h.b16 %v203
    %v1735 = vunpack.c.l.b16 %v204
    %v1736 = vunpack.c.h.b16 %v204
    %v1737 = vunpack.c.l.b16 %v205
    %v1738 = vunpack.c.h.b16 %v205
    %v1739 = vunpack.c.l.b16 %v206
    %v1740 = vunpack.c.h.b16 %v206
    %v1741 = vunpack.c.l.b16 %v207
    %v1742 = vunpack.c.h.b16 %v207
    %v1743 = vunpack.c.l.b16 %v208
    %v1744 = vunpack.c.h.b16 %v208
    %v1745 = vunpack.c.l.b16 %v209
    %v1746 = vunpack.c.h.b16 %v209
    %v1747 = vunpack.c.l.b16 %v210
    %v1748 = vunpack.c.h.b16 %v210
    %v1749 = vunpack.c.l.b16 %v211
    %v1750 = vunpack.c.h.b16 %v211
    %v1751 = vunpack.c.l.b16 %v212
    %v1752 = vunpack.c.h.b16 %v212
    %v1753 = vunpack.c.l.b16 %v213
    %v1754 = vunpack.c.h.b16 %v213
    %v1755 = vunpack.c.l.b16 %v214
    %v1756 = vunpack.c.h.b16 %v214
    %v1757 = vunpack.c.l.b16 %v215
    %v1758 = vunpack.c.h.b16 %v215
    %v1759 = vunpack.c.l.b16 %v216
    %v1760 = vunpack.c.h.b16 %v216
    %v1761 = vunpack.c.l.b16 %v217
    %v1762 = vunpack.c.h.b16 %v217
    %v1763 = vunpack.c.l.b16 %v218
    %v1764 = vunpack.c.h.b16 %v218
    %v1765 = vunpack.c.l.b16 %v219
    %v1766 = vunpack.c.h.b16 %v219
    %v1767 = vunpack.c.l.b16 %v220
    %v1768 = vunpack.c.h.b16 %v220
    %v1769 = vunpack.c.l.b16 %v221
    %v1770 = vunpack.c.h.b16 %v221
    %v1771 = vunpack.c.l.b16 %v222
    %v1772 = vunpack.c.h.b16 %v222
    %v1773 = vunpack.c.l.b16 %v223
    %v1774 = vunpack.c.h.b16 %v223
    %v1775 = vunpack.c.l.b16 %v224
    %v1776 = vunpack.c.h.b16 %v224
    %v1777 = vunpack.c.l.b16 %v225
    %v1778 = vunpack.c.h.b16 %v225
    %v1779 = vunpack.c.l.b16 %v226
    %v1780 = vunpack.c.h.b16 %v226
    %v1781 = vunpack.c.l.b16 %v227
    %v1782 = vunpack.c.h.b16 %v227
    %v1783 = vunpack.c.l.b16 %v228
    %v1784 = vunpack.c.h.b16 %v228
    %v1785 = vunpack.c.l.b16 %v229
    %v1786 = vunpack.c.h.b16 %v229
    %v1787 = vunpack.c.l.b16 %v230
    %v1788 = vunpack.c.h.b16 %v230
    %v1789 = vunpack.c.l.b16 %v231
    %v1790 = vunpack.c.h.b16 %v231
    %v1791 = vunpack.c.l.b16 %v232
    %v1792 = vunpack.c.h.b16 %v232
    %v1793 = vunpack.c.l.b16 %v233
    %v1794 = vunpack.c.h.b16 %v233
    %v1795 = vunpack.c.l.b16 %v234
    %v1796 = vunpack.c.h.b16 %v234
    %v1797 = vunpack.c.l.b16 %v235
    %v1798 = vunpack.c.h.b16 %v235
    %v1799 = vunpack.c.l.b16 %v236
    %v1800 = vunpack.c.h.b16 %v236
    %v1801 = vunpack.c.l.b16 %v237
    %v1802 = vunpack.c.h.b16 %v237
    %v1803 = vunpack.c.l.b16 %v238
    %v1804 = vunpack.c.h.b16 %v238
    %v1805 = vunpack.c.l.b16 %v239
    %v1806 = vunpack.c.h.b16 %v239
    %v1807 = vunpack.c.l.b16 %v240
    %v1808 = vunpack.c.h.b16 %v240
    %v1809 = vunpack.c.l.b16 %v241
    %v1810 = vunpack.c.h.b16 %v241
    %v1811 = vunpack.c.l.b16 %v242
    %v1812 = vunpack.c.h.b16 %v242
    %v1813 = vunpack.c.l.b16 %v243
    %v1814 = vunpack.c.h.b16 %v243
    %v1815 = vunpack.c.l.b16 %v244
    %v1816 = vunpack.c.h.b16 %v244
    %v1817 = vunpack.c.l.b16 %v245
    %v1818 = vunpack.c.h.b16 %v245
    %v1819 = vunpack.c.l.b16 %v246
    %v1820 = vunpack.c.h.b16 %v246
    %v1821 = vunpack.c.l.b16 %v247
    %v1822 = vunpack.c.h.b16 %v247
    %v1823 = vunpack.c.l.b16 %v248
    %v1824 = vunpack.c.h.b16 %v248
    %v1825 = vunpack.c.l.b16 %v249
    %v1826 = vunpack.c.h.b16 %v249
    %v1827 = vunpack.c.l.b16 %v250
    %v1828 = vunpack.c.h.b16 %v250
    %v1829 = vunpack.c.l.b16 %v251
    %v1830 = vunpack.c.h.b16 %v251
    %v1831 = vunpack.c.l.b16 %v252
    %v1832 = vunpack.c.h.b16 %v252
    %v1833 = vunpack.c.l.b16 %v253
    %v1834 = vunpack.c.h.b16 %v253
    %v1835 = vunpack.c.l.b16 %v254
    %v1836 = vunpack.c.h.b16 %v254
    %v1837 = vunpack.c.l.b16 %v255
    %v1838 = vunpack.c.h.b16 %v255
    %v1839 = vunpack.c.l.b16 %v256
    %v1840 = vunpack.c.h.b16 %v256
    %v1841 = vunpack.c.l.b16 %v257
    %v1842 = vunpack.c.h.b16 %v257
    %v1843 = vunpack.c.l.b16 %v258
    %v1844 = vunpack.c.h.b16 %v258
    %v1845 = vunpack.c.l.b16 %v259
    %v1846 = vunpack.c.h.b16 %v259
    %v1847 = vunpack.c.l.b16 %v260
    %v1848 = vunpack.c.h.b16 %v260
    %v1849 = vunpack.c.l.b16 %v261
    %v1850 = vunpack.c.h.b16 %v261
    %v1851 = vunpack.c.l.b16 %v262
    %v1852 = vunpack.c.h.b16 %v262
    %v1853 = vunpack.c.l.b16 %v263
    %v1854 = vunpack.c.h.b16 %v263
    %v1855 = vunpack.c.l.b16 %v264
    %v1856 = vunpack.c.h.b16 %v264
    %v1857 = vunpack.c.l.b16 %v265
    %v1858 = vunpack.c.h.b16 %v265
    %v1859 = vunpack.c.l.b16 %v266
    %v1860 = vunpack.c.h.b16 %v266
    %v1861 = vunpack.c.l.b16 %v267
    %v1862 = vunpack.c.h.b16 %v267
    %v1863 = vunpack.c.l.b16 %v268
    %v1864 = vunpack.c.h.b16 %v268
    %v1865 = vunpack.c.l.b16 %v269
    %v1866 = vunpack.c.h.b16 %v269
    %v1867 = vunpack.c.l.b16 %v270
    %v1868 = vunpack.c.h.b16 %v270
    %v1869 = vunpack.c.l.b16 %v271
    %v1870 = vunpack.c.h.b16 %v271
    %v1871 = vunpack.c.l.b16 %v272
    %v1872 = vunpack.c.h.b16 %v272
    %v1873 = vunpack.c.l.b16 %v273
    %v1874 = vunpack.c.h.b16 %v273
    %v1875 = vunpack.c.l.b16 %v274
    %v1876 = vunpack.c.h.b16 %v274
    %v1877 = vunpack.c.l.b16 %v275
    %v1878 = vunpack.c.h.b16 %v275
    %v1879 = vunpack.c.l.b16 %v276
    %v1880 = vunpack.c.h.b16 %v276
    %v1881 = vunpack.c.l.b16 %v277
    %v1882 = vunpack.c.h.b16 %v277
    %v1883 = vunpack.c.l.b16 %v278
    %v1884 = vunpack.c.h.b16 %v278
    %v1885 = vunpack.c.l.b16 %v279
    %v1886 = vunpack.c.h.b16 %v279
    %v1887 = vunpack.c.l.b16 %v280
    %v1888 = vunpack.c.h.b16 %v280
    %v1889 = vunpack.c.l.b16 %v281
    %v1890 = vunpack.c.h.b16 %v281
    %v1891 = vunpack.c.l.b16 %v282
    %v1892 = vunpack.c.h.b16 %v282
    %v1893 = vunpack.c.l.b16 %v283
    %v1894 = vunpack.c.h.b16 %v283
    %v1895 = vunpack.c.l.b16 %v284
    %v1896 = vunpack.c.h.b16 %v284
    %v1897 = vunpack.c.l.b16 %v285
    %v1898 = vunpack.c.h.b16 %v285
    %v1899 = vunpack.c.l.b16 %v286
    %v1900 = vunpack.c.h.b16 %v286
    %v1901 = vunpack.c.l.b16 %v287
    %v1902 = vunpack.c.h.b16 %v287
    %v1903 = vunpack.c.l.b16 %v288
    %v1904 = vunpack.c.h.b16 %v288
    %v1905 = vunpack.c.l.b16 %v289
    %v1906 = vunpack.c.h.b16 %v289
    %v1907 = vunpack.c.l.b16 %v290
    %v1908 = vunpack.c.h.b16 %v290
    %v1909 = vunpack.c.l.b16 %v291
    %v1910 = vunpack.c.h.b16 %v291
    %v1911 = vunpack.c.l.b16 %v292
    %v1912 = vunpack.c.h.b16 %v292
    %v1913 = vunpack.c.l.b16 %v293
    %v1914 = vunpack.c.h.b16 %v293
    %v1915 = vunpack.c.l.b16 %v294
    %v1916 = vunpack.c.h.b16 %v294
    %v1917 = vunpack.c.l.b16 %v295
    %v1918 = vunpack.c.h.b16 %v295
    %v1919 = vunpack.c.l.b16 %v296
    %v1920 = vunpack.c.h.b16 %v296
    %v1921 = vunpack.c.l.b16 %v297
    %v1922 = vunpack.c.h.b16 %v297
    %v1923 = vunpack.c.l.b16 %v298
    %v1924 = vunpack.c.h.b16 %v298
    %v1925 = vunpack.c.l.b16 %v299
    %v1926 = vunpack.c.h.b16 %v299
    %v1927 = vunpack.c.l.b16 %v300
    %v1928 = vunpack.c.h.b16 %v300
    %v1929 = vunpack.c.l.b16 %v301
    %v1930 = vunpack.c.h.b16 %v301
    %v1931 = vunpack.c.l.b16 %v302
    %v1932 = vunpack.c.h.b16 %v302
    %v1933 = vunpack.c.l.b16 %v303
    %v1934 = vunpack.c.h.b16 %v303
    %v1935 = vunpack.c.l.b16 %v304
    %v1936 = vunpack.c.h.b16 %v304
    %v1937 = vunpack.c.l.b16 %v305
    %v1938 = vunpack.c.h.b16 %v305
    %v1939 = vunpack.c.l.b16 %v306
    %v1940 = vunpack.c.h.b16 %v306
    %v1941 = vunpack.c.l.b16 %v307
    %v1942 = vunpack.c.h.b16 %v307
    %v1943 = vunpack.c.l.b16 %v308
    %v1944 = vunpack.c.h.b16 %v308
    %v1945 = vunpack.c.l.b16 %v309
    %v1946 = vunpack.c.h.b16 %v309
    %v1947 = vunpack.c.l.b16 %v310
    %v1948 = vunpack.c.h.b16 %v310
    %v1949 = vunpack.c.l.b16 %v311
    %v1950 = vunpack.c.h.b16 %v311
    %v1951 = vunpack.c.l.b16 %v312
    %v1952 = vunpack.c.h.b16 %v312
    %v1953 = vunpack.c.l.b16 %v313
    %v1954 = vunpack.c.h.b16 %v313
    %v1955 = vunpack.c.l.b16 %v314
    %v1956 = vunpack.c.h.b16 %v314
    %v1957 = vunpack.c.l.b16 %v315
    %v1958 = vunpack.c.h.b16 %v315
    %v1959 = vunpack.c.l.b16 %v316
    %v1960 = vunpack.c.h.b16 %v316
    %v1961 = vunpack.c.l.b16 %v317
    %v1962 = vunpack.c.h.b16 %v317
    %v1963 = vunpack.c.l.b16 %v318
    %v1964 = vunpack.c.h.b16 %v318
    %v1965 = vunpack.c.l.b16 %v319
    %v1966 = vunpack.c.h.b16 %v319
    %v1967 = vunpack.c.l.b16 %v320
    %v1968 = vunpack.c.h.b16 %v320
    %v1969 = vunpack.c.l.b16 %v321
    %v1970 = vunpack.c.h.b16 %v321
    %v1971 = vunpack.c.l.b16 %v322
    %v1972 = vunpack.c.h.b16 %v322
    %v1973 = vunpack.c.l.b16 %v323
    %v1974 = vunpack.c.h.b16 %v323
    %v1975 = vunpack.c.l.b16 %v324
    %v1976 = vunpack.c.h.b16 %v324
    %v1977 = vunpack.c.l.b16 %v325
    %v1978 = vunpack.c.h.b16 %v325
    %v1979 = vunpack.c.l.b16 %v326
    %v1980 = vunpack.c.h.b16 %v326
    %v1981 = vunpack.c.l.b16 %v327
    %v1982 = vunpack.c.h.b16 %v327
    %v1983 = vunpack.c.l.b16 %v328
    %v1984 = vunpack.c.h.b16 %v328
    %v1985 = vunpack.c.l.b16 %v329
    %v1986 = vunpack.c.h.b16 %v329
    %v1987 = vunpack.c.l.b16 %v330
    %v1988 = vunpack.c.h.b16 %v330
    %v1989 = vunpack.c.l.b16 %v331
    %v1990 = vunpack.c.h.b16 %v331
    %v1991 = vunpack.c.l.b16 %v332
    %v1992 = vunpack.c.h.b16 %v332
    %v1993 = vunpack.c.l.b16 %v333
    %v1994 = vunpack.c.h.b16 %v333
    %v1995 = vunpack.c.l.b16 %v334
    %v1996 = vunpack.c.h.b16 %v334
    %v1997 = vunpack.c.l.b16 %v335
    %v1998 = vunpack.c.h.b16 %v335
    %v1999 = vunpack.c.l.b16 %v336
    %v2000 = vunpack.c.h.b16 %v336
    %v2001 = vunpack.c.l.b16 %v337
    %v2002 = vunpack.c.h.b16 %v337
    %v2003 = vunpack.c.l.b16 %v338
    %v2004 = vunpack.c.h.b16 %v338
    %v2005 = vunpack.c.l.b16 %v339
    %v2006 = vunpack.c.h.b16 %v339
    %v2007 = vunpack.c.l.b16 %v340
    %v2008 = vunpack.c.h.b16 %v340
    %v2009 = vunpack.c.l.b16 %v341
    %v2010 = vunpack.c.h.b16 %v341
    %v2011 = vunpack.c.l.b16 %v342
    %v2012 = vunpack.c.h.b16 %v342
    %v2013 = vunpack.c.l.b16 %v343
    %v2014 = vunpack.c.h.b16 %v343
    %v2015 = vunpack.c.l.b16 %v344
    %v2016 = vunpack.c.h.b16 %v344
    %v2017 = vunpack.c.l.b16 %v345
    %v2018 = vunpack.c.h.b16 %v345
    %v2019 = vunpack.c.l.b16 %v346
    %v2020 = vunpack.c.h.b16 %v346
    %v2021 = vunpack.c.l.b16 %v347
    %v2022 = vunpack.c.h.b16 %v347
    %v2023 = vunpack.c.l.b16 %v348
    %v2024 = vunpack.c.h.b16 %v348
    %v2025 = vunpack.c.l.b16 %v349
    %v2026 = vunpack.c.h.b16 %v349
    %v2027 = vunpack.c.l.b16 %v350
    %v2028 = vunpack.c.h.b16 %v350
    %v2029 = vunpack.c.l.b16 %v351
    %v2030 = vunpack.c.h.b16 %v351
    %v2031 = vunpack.c.l.b16 %v352
    %v2032 = vunpack.c.h.b16 %v352
    %v2033 = vunpack.c.l.b16 %v353
    %v2034 = vunpack.c.h.b16 %v353
    %v2035 = vunpack.c.l.b16 %v354
    %v2036 = vunpack.c.h.b16 %v354
    %v2037 = vunpack.c.l.b16 %v355
    %v2038 = vunpack.c.h.b16 %v355
    %v2039 = vunpack.c.l.b16 %v356
    %v2040 = vunpack.c.h.b16 %v356
    %v2041 = vunpack.c.l.b16 %v357
    %v2042 = vunpack.c.h.b16 %v357
    %v2043 = vunpack.c.l.b16 %v358
    %v2044 = vunpack.c.h.b16 %v358
    %v2045 = vunpack.c.l.b16 %v359
    %v2046 = vunpack.c.h.b16 %v359
    %v2047 = vunpack.c.l.b16 %v360
    %v2048 = vunpack.c.h.b16 %v360
    %v2049 = vunpack.c.l.b16 %v361
    %v2050 = vunpack.c.h.b16 %v361
    %v2051 = vunpack.c.l.b16 %v362
    %v2052 = vunpack.c.h.b16 %v362
    %v2053 = vunpack.c.l.b16 %v363
    %v2054 = vunpack.c.h.b16 %v363
    %v2055 = vunpack.c.l.b16 %v364
    %v2056 = vunpack.c.h.b16 %v364
    %v2057 = vunpack.c.l.b16 %v365
    %v2058 = vunpack.c.h.b16 %v365
    %v2059 = vunpack.c.l.b16 %v366
    %v2060 = vunpack.c.h.b16 %v366
    %v2061 = vunpack.c.l.b16 %v367
    %v2062 = vunpack.c.h.b16 %v367
    %v2063 = vunpack.c.l.b16 %v368
    %v2064 = vunpack.c.h.b16 %v368
    %v2065 = vunpack.c.l.b16 %v369
    %v2066 = vunpack.c.h.b16 %v369
    %v2067 = vunpack.c.l.b16 %v370
    %v2068 = vunpack.c.h.b16 %v370
    %v2069 = vunpack.c.l.b16 %v371
    %v2070 = vunpack.c.h.b16 %v371
    %v2071 = vunpack.c.l.b16 %v372
    %v2072 = vunpack.c.h.b16 %v372
    %v2073 = vunpack.c.l.b16 %v373
    %v2074 = vunpack.c.h.b16 %v373
    %v2075 = vunpack.c.l.b16 %v374
    %v2076 = vunpack.c.h.b16 %v374
    %v2077 = vunpack.c.l.b16 %v375
    %v2078 = vunpack.c.h.b16 %v375
    %v2079 = vunpack.c.l.b16 %v376
    %v2080 = vunpack.c.h.b16 %v376
    %v2081 = vunpack.c.l.b16 %v377
    %v2082 = vunpack.c.h.b16 %v377
    %v2083 = vunpack.c.l.b16 %v378
    %v2084 = vunpack.c.h.b16 %v378
    %v2085 = vunpack.c.l.b16 %v379
    %v2086 = vunpack.c.h.b16 %v379
    %v2087 = vunpack.c.l.b16 %v380
    %v2088 = vunpack.c.h.b16 %v380
    %v2089 = vunpack.c.l.b16 %v381
    %v2090 = vunpack.c.h.b16 %v381
    %v2091 = vunpack.c.l.b16 %v382
    %v2092 = vunpack.c.h.b16 %v382
    %v2093 = vunpack.c.l.b16 %v383
    %v2094 = vunpack.c.h.b16 %v383
    %v2095 = vunpack.c.l.b16 %v384
    %v2096 = vunpack.c.h.b16 %v384
    %v2097 = vunpack.c.l.b16 %v385
    %v2098 = vunpack.c.h.b16 %v385
    %v2099 = vunpack.c.l.b16 %v386
    %v2100 = vunpack.c.h.b16 %v386
    %v2101 = vunpack.c.l.b16 %v387
    %v2102 = vunpack.c.h.b16 %v387
    %v2103 = vunpack.c.l.b16 %v388
    %v2104 = vunpack.c.h.b16 %v388
    %v2105 = vunpack.c.l.b16 %v389
    %v2106 = vunpack.c.h.b16 %v389
    %v2107 = vunpack.c.l.b16 %v390
    %v2108 = vunpack.c.h.b16 %v390
    %v2109 = vunpack.c.l.b16 %v391
    %v2110 = vunpack.c.h.b16 %v391
    %v2111 = vunpack.c.l.b16 %v392
    %v2112 = vunpack.c.h.b16 %v392
    %v2113 = vunpack.c.l.b16 %v393
    %v2114 = vunpack.c.h.b16 %v393
    %v2115 = vunpack.c.l.b16 %v394
    %v2116 = vunpack.c.h.b16 %v394
    %v2117 = vunpack.c.l.b16 %v395
    %v2118 = vunpack.c.h.b16 %v395
    %v2119 = vunpack.c.l.b16 %v396
    %v2120 = vunpack.c.h.b16 %v396
    %v2121 = vunpack.c.l.b16 %v397
    %v2122 = vunpack.c.h.b16 %v397
    %v2123 = vunpack.c.l.b16 %v398
    %v2124 = vunpack.c.h.b16 %v398
    %v2125 = vunpack.c.l.b16 %v399
    %v2126 = vunpack.c.h.b16 %v399
    %v2127 = vunpack.c.l.b16 %v400
    %v2128 = vunpack.c.h.b16 %v400
    %v2129 = vunpack.c.l.b16 %v401
    %v2130 = vunpack.c.h.b16 %v401
    %v2131 = vunpack.c.l.b16 %v402
    %v2132 = vunpack.c.h.b16 %v402
    %v2133 = vunpack.c.l.b16 %v403
    %v2134 = vunpack.c.h.b16 %v403
    %v2135 = vunpack.c.l.b16 %v404
    %v2136 = vunpack.c.h.b16 %v404
    %v2137 = vunpack.c.l.b16 %v405
    %v2138 = vunpack.c.h.b16 %v405
    %v2139 = vunpack.c.l.b16 %v406
    %v2140 = vunpack.c.h.b16 %v406
    %v2141 = vunpack.c.l.b16 %v407
    %v2142 = vunpack.c.h.b16 %v407
    %v2143 = vunpack.c.l.b16 %v408
    %v2144 = vunpack.c.h.b16 %v408
    %v2145 = vunpack.c.l.b16 %v409
    %v2146 = vunpack.c.h.b16 %v409
    %v2147 = vunpack.c.l.b16 %v410
    %v2148 = vunpack.c.h.b16 %v410
    %v2149 = vunpack.c.l.b16 %v411
    %v2150 = vunpack.c.h.b16 %v411
    %v2151 = vunpack.c.l.b16 %v412
    %v2152 = vunpack.c.h.b16 %v412
    %v2153 = vunpack.c.l.b16 %v413
    %v2154 = vunpack.c.h.b16 %v413
    %v2155 = vunpack.c.l.b16 %v414
    %v2156 = vunpack.c.h.b16 %v414
    %v2157 = vunpack.c.l.b16 %v415
    %v2158 = vunpack.c.h.b16 %v415
    %v2159 = vunpack.c.l.b16 %v416
    %v2160 = vunpack.c.h.b16 %v416
    %v2161 = vunpack.c.l.b16 %v417
    %v2162 = vunpack.c.h.b16 %v417
    %v2163 = vunpack.c.l.b16 %v418
    %v2164 = vunpack.c.h.b16 %v418
    %v2165 = vunpack.c.l.b16 %v419
    %v2166 = vunpack.c.h.b16 %v419
    %v2167 = vunpack.c.l.b16 %v420
    %v2168 = vunpack.c.h.b16 %v420
    %v2169 = vunpack.c.l.b16 %v421
    %v2170 = vunpack.c.h.b16 %v421
    %v2171 = vunpack.c.l.b16 %v422
    %v2172 = vunpack.c.h.b16 %v422
    %v2173 = vunpack.c.l.b16 %v423
    %v2174 = vunpack.c.h.b16 %v423
    %v2175 = vunpack.c.l.b16 %v424
    %v2176 = vunpack.c.h.b16 %v424
    %v2177 = vunpack.c.l.b16 %v425
    %v2178 = vunpack.c.h.b16 %v425
    %v2179 = vunpack.c.l.b16 %v426
    %v2180 = vunpack.c.h.b16 %v426
    %v2181 = vunpack.c.l.b16 %v427
    %v2182 = vunpack.c.h.b16 %v427
    %v2183 = vunpack.c.l.b16 %v428
    %v2184 = vunpack.c.h.b16 %v428
    %v2185 = vunpack.c.l.b16 %v429
    %v2186 = vunpack.c.h.b16 %v429
    %v2187 = vunpack.c.l.b16 %v430
    %v2188 = vunpack.c.h.b16 %v430
    %v2189 = vunpack.c.l.b16 %v431
    %v2190 = vunpack.c.h.b16 %v431
    %v2191 = vunpack.c.l.b16 %v432
    %v2192 = vunpack.c.h.b16 %v432
    %v2193 = vunpack.c.l.b16 %v433
    %v2194 = vunpack.c.h.b16 %v433
    %v2195 = vunpack.c.l.b16 %v434
    %v2196 = vunpack.c.h.b16 %v434
    %v2197 = vunpack.c.l.b16 %v435
    %v2198 = vunpack.c.h.b16 %v435
    %v2199 = vunpack.c.l.b16 %v436
    %v2200 = vunpack.c.h.b16 %v436
    %v2201 = vunpack.c.l.b16 %v437
    %v2202 = vunpack.c.h.b16 %v437
    %v2203 = vunpack.c.l.b16 %v438
    %v2204 = vunpack.c.h.b16 %v438
    %v2205 = vunpack.c.l.b16 %v439
    %v2206 = vunpack.c.h.b16 %v439
    %v2207 = vunpack.c.l.b16 %v440
    %v2208 = vunpack.c.h.b16 %v440
    %v2209 = vunpack.c.l.b16 %v441
    %v2210 = vunpack.c.h.b16 %v441
    %v2211 = vunpack.c.l.b16 %v442
    %v2212 = vunpack.c.h.b16 %v442
    %v2213 = vunpack.c.l.b16 %v443
    %v2214 = vunpack.c.h.b16 %v443
    %v2215 = vunpack.c.l.b16 %v444
    %v2216 = vunpack.c.h.b16 %v444
    %v2217 = vunpack.c.l.b16 %v445
    %v2218 = vunpack.c.h.b16 %v445
    %v2219 = vunpack.c.l.b16 %v446
    %v2220 = vunpack.c.h.b16 %v446
    %v2221 = vunpack.c.l.b16 %v447
    %v2222 = vunpack.c.h.b16 %v447
    %v2223 = vunpack.c.l.b16 %v448
    %v2224 = vunpack.c.h.b16 %v448
    %v2225 = vunpack.c.l.b16 %v449
    %v2226 = vunpack.c.h.b16 %v449
    %v2227 = vunpack.c.l.b16 %v450
    %v2228 = vunpack.c.h.b16 %v450
    %v2229 = vunpack.c.l.b16 %v451
    %v2230 = vunpack.c.h.b16 %v451
    %v2231 = vunpack.c.l.b16 %v452
    %v2232 = vunpack.c.h.b16 %v452
    %v2233 = vunpack.c.l.b16 %v453
    %v2234 = vunpack.c.h.b16 %v453
    %v2235 = vunpack.c.l.b16 %v454
    %v2236 = vunpack.c.h.b16 %v454
    %v2237 = vunpack.c.l.b16 %v455
    %v2238 = vunpack.c.h.b16 %v455
    %v2239 = vunpack.c.l.b16 %v456
    %v2240 = vunpack.c.h.b16 %v456
    %v2241 = vunpack.c.l.b16 %v457
    %v2242 = vunpack.c.h.b16 %v457
    %v2243 = vunpack.c.l.b16 %v458
    %v2244 = vunpack.c.h.b16 %v458
    %v2245 = vunpack.c.l.b16 %v459
    %v2246 = vunpack.c.h.b16 %v459
    %v2247 = vunpack.c.l.b16 %v460
    %v2248 = vunpack.c.h.b16 %v460
    %v2249 = vunpack.c.l.b16 %v461
    %v2250 = vunpack.c.h.b16 %v461
    %v2251 = vunpack.c.l.b16 %v462
    %v2252 = vunpack.c.h.b16 %v462
    %v2253 = vunpack.c.l.b16 %v463
    %v2254 = vunpack.c.h.b16 %v463
    %v2255 = vunpack.c.l.b16 %v464
    %v2256 = vunpack.c.h.b16 %v464
    %v2257 = vunpack.c.l.b16 %v465
    %v2258 = vunpack.c.h.b16 %v465
    %v2259 = vunpack.c.l.b16 %v466
    %v2260 = vunpack.c.h.b16 %v466
    %v2261 = vunpack.c.l.b16 %v467
    %v2262 = vunpack.c.h.b16 %v467
    %v2263 = vunpack.c.l.b16 %v468
    %v2264 = vunpack.c.h.b16 %v468
    %v2265 = vunpack.c.l.b16 %v469
    %v2266 = vunpack.c.h.b16 %v469
    %v2267 = vunpack.c.l.b16 %v470
    %v2268 = vunpack.c.h.b16 %v470
    %v2269 = vunpack.c.l.b16 %v471
    %v2270 = vunpack.c.h.b16 %v471
    %v2271 = vunpack.c.l.b16 %v472
    %v2272 = vunpack.c.h.b16 %v472
    %v2273 = vunpack.c.l.b16 %v473
    %v2274 = vunpack.c.h.b16 %v473
    %v2275 = vunpack.c.l.b16 %v474
    %v2276 = vunpack.c.h.b16 %v474
    %v2277 = vunpack.c.l.b16 %v475
    %v2278 = vunpack.c.h.b16 %v475
    %v2279 = vunpack.c.l.b16 %v476
    %v2280 = vunpack.c.h.b16 %v476
    %v2281 = vunpack.c.l.b16 %v477
    %v2282 = vunpack.c.h.b16 %v477
    %v2283 = vunpack.c.l.b16 %v478
    %v2284 = vunpack.c.h.b16 %v478
    %v2285 = vunpack.c.l.b16 %v479
    %v2286 = vunpack.c.h.b16 %v479
    %v2287 = vunpack.c.l.b16 %v480
    %v2288 = vunpack.c.h.b16 %v480
    %v2289 = vunpack.c.l.b16 %v481
    %v2290 = vunpack.c.h.b16 %v481
    %v2291 = vunpack.c.l.b16 %v482
    %v2292 = vunpack.c.h.b16 %v482
    %v2293 = vunpack.c.l.b16 %v483
    %v2294 = vunpack.c.h.b16 %v483
    %v2295 = vunpack.c.l.b16 %v484
    %v2296 = vunpack.c.h.b16 %v484
    %v2297 = vunpack.c.l.b16 %v485
    %v2298 = vunpack.c.h.b16 %v485
    %v2299 = vunpack.c.l.b16 %v486
    %v2300 = vunpack.c.h.b16 %v486
    %v2301 = vunpack.c.l.b16 %v487
    %v2302 = vunpack.c.h.b16 %v487
    %v2303 = vunpack.c.l.b16 %v488
    %v2304 = vunpack.c.h.b16 %v488
    %v2305 = vunpack.c.l.b16 %v489
    %v2306 = vunpack.c.h.b16 %v489
    %v2307 = vunpack.c.l.b16 %v490
    %v2308 = vunpack.c.h.b16 %v490
    %v2309 = vunpack.c.l.b16 %v491
    %v2310 = vunpack.c.h.b16 %v491
    %v2311 = vunpack.c.l.b16 %v492
    %v2312 = vunpack.c.h.b16 %v492
    %v2313 = vunpack.c.l.b16 %v493
    %v2314 = vunpack.c.h.b16 %v493
    %v2315 = vunpack.c.l.b16 %v494
    %v2316 = vunpack.c.h.b16 %v494
    %v2317 = vunpack.c.l.b16 %v495
    %v2318 = vunpack.c.h.b16 %v495
    %v2319 = vunpack.c.l.b16 %v496
    %v2320 = vunpack.c.h.b16 %v496
    %v2321 = vunpack.c.l.b16 %v497
    %v2322 = vunpack.c.h.b16 %v497
    %v2323 = vunpack.c.l.b16 %v498
    %v2324 = vunpack.c.h.b16 %v498
    %v2325 = vunpack.c.l.b16 %v499
    %v2326 = vunpack.c.h.b16 %v499
    %v2327 = vunpack.c.l.b16 %v500
    %v2328 = vunpack.c.h.b16 %v500
    %v2329 = vunpack.c.l.b16 %v501
    %v2330 = vunpack.c.h.b16 %v501
    %v2331 = vunpack.c.l.b16 %v502
    %v2332 = vunpack.c.h.b16 %v502
    %v2333 = vunpack.c.l.b16 %v503
    %v2334 = vunpack.c.h.b16 %v503
    %v2335 = vunpack.c.l.b16 %v504
    %v2336 = vunpack.c.h.b16 %v504
    %v2337 = vunpack.c.l.b16 %v505
    %v2338 = vunpack.c.h.b16 %v505
    %v2339 = vunpack.c.l.b16 %v506
    %v2340 = vunpack.c.h.b16 %v506
    %v2341 = vunpack.c.l.b16 %v507
    %v2342 = vunpack.c.h.b16 %v507
    %v2343 = vunpack.c.l.b16 %v508
    %v2344 = vunpack.c.h.b16 %v508
    %v2345 = vunpack.c.l.b16 %v509
    %v2346 = vunpack.c.h.b16 %v509
    %v2347 = vunpack.c.l.b16 %v510
    %v2348 = vunpack.c.h.b16 %v510
    %v2349 = vunpack.c.l.b16 %v511
    %v2350 = vunpack.c.h.b16 %v511
    %v2351 = vunpack.c.l.b16 %v512
    %v2352 = vunpack.c.h.b16 %v512
    %v2353 = vunpack.c.l.b16 %v513
    %v2354 = vunpack.c.h.b16 %v513
    %v2355 = vunpack.c.l.b16 %v514
    %v2356 = vunpack.c.h.b16 %v514
    %v2357 = vunpack.c.l.b16 %v515
    %v2358 = vunpack.c.h.b16 %v515
    %v2359 = vunpack.c.l.b16 %v516
    %v2360 = vunpack.c.h.b16 %v516
    %v2361 = vunpack.c.l.b16 %v517
    %v2362 = vunpack.c.h.b16 %v517
    %v2363 = vunpack.c.l.b16 %v518
    %v2364 = vunpack.c.h.b16 %v518
    %v2365 = vunpack.c.l.b16 %v519
    %v2366 = vunpack.c.h.b16 %v519
    %v2367 = vunpack.c.l.b16 %v520
    %v2368 = vunpack.c.h.b16 %v520
    %v2369 = vunpack.c.l.b16 %v521
    %v2370 = vunpack.c.h.b16 %v521
    %v2371 = vunpack.c.l.b16 %v522
    %v2372 = vunpack.c.h.b16 %v522
    %v2373 = vunpack.c.l.b16 %v523
    %v2374 = vunpack.c.h.b16 %v523
    %v2375 = vunpack.c.l.b16 %v524
    %v2376 = vunpack.c.h.b16 %v524
    %v2377 = vunpack.c.l.b16 %v525
    %v2378 = vunpack.c.h.b16 %v525
    %v2379 = vunpack.c.l.b16 %v526
    %v2380 = vunpack.c.h.b16 %v526
    %v2381 = vunpack.c.l.b16 %v527
    %v2382 = vunpack.c.h.b16 %v527
    %v2383 = vunpack.c.l.b16 %v528
    %v2384 = vunpack.c.h.b16 %v528
    %v2385 = vunpack.c.l.b16 %v529
    %v2386 = vunpack.c.h.b16 %v529
    %v2387 = vunpack.c.l.b16 %v530
    %v2388 = vunpack.c.h.b16 %v530
    %v2389 = vunpack.c.l.b16 %v531
    %v2390 = vunpack.c.h.b16 %v531
    %v2391 = vunpack.c.l.b16 %v532
    %v2392 = vunpack.c.h.b16 %v532
    %v2393 = vunpack.c.l.b16 %v533
    %v2394 = vunpack.c.h.b16 %v533
    %v2395 = vunpack.c.l.b16 %v534
    %v2396 = vunpack.c.h.b16 %v534
    %v2397 = vunpack.c.l.b16 %v535
    %v2398 = vunpack.c.h.b16 %v535
    %v2399 = vunpack.c.l.b16 %v536
    %v2400 = vunpack.c.h.b16 %v536
    %v2401 = vunpack.c.l.b16 %v537
    %v2402 = vunpack.c.h.b16 %v537
    %v2403 = vunpack.c.l.b16 %v538
    %v2404 = vunpack.c.h.b16 %v538
    %v2405 = vunpack.c.l.b16 %v539
    %v2406 = vunpack.c.h.b16 %v539
    %v2407 = vunpack.c.l.b16 %v540
    %v2408 = vunpack.c.h.b16 %v540
    %v2409 = vunpack.c.l.b16 %v541
    %v2410 = vunpack.c.h.b16 %v541
    %v2411 = vunpack.c.l.b16 %v542
    %v2412 = vunpack.c.h.b16 %v542
    %v2413 = vunpack.c.l.b16 %v543
    %v2414 = vunpack.c.h.b16 %v543
    %v2415 = vunpack.c.l.b16 %v544
    %v2416 = vunpack.c.h.b16 %v544
    %v2417 = vunpack.c.l.b16 %v545
    %v2418 = vunpack.c.h.b16 %v545
    %v2419 = vunpack.c.l.b16 %v546
    %v2420 = vunpack.c.h.b16 %v546
    %v2421 = vunpack.c.l.b16 %v547
    %v2422 = vunpack.c.h.b16 %v547
    %v2423 = vunpack.c.l.b16 %v548
    %v2424 = vunpack.c.h.b16 %v548
    %v2425 = vunpack.c.l.b16 %v549
    %v2426 = vunpack.c.h.b16 %v549
    %v2427 = vunpack.c.l.b16 %v550
    %v2428 = vunpack.c.h.b16 %v550
    %v2429 = vunpack.c.l.b16 %v551
    %v2430 = vunpack.c.h.b16 %v551
    %v2431 = vunpack.c.l.b16 %v552
    %v2432 = vunpack.c.h.b16 %v552
    %v2433 = vunpack.c.l.b16 %v553
    %v2434 = vunpack.c.h.b16 %v553
    %v2435 = vunpack.c.l.b16 %v554
    %v2436 = vunpack.c.h.b16 %v554
    %v2437 = vunpack.c.l.b16 %v555
    %v2438 = vunpack.c.h.b16 %v555
    %v2439 = vunpack.c.l.b16 %v556
    %v2440 = vunpack.c.h.b16 %v556
    %v2441 = vunpack.c.l.b16 %v557
    %v2442 = vunpack.c.h.b16 %v557
    %v2443 = vunpack.c.l.b16 %v558
    %v2444 = vunpack.c.h.b16 %v558
    %v2445 = vunpack.c.l.b16 %v559
    %v2446 = vunpack.c.h.b16 %v559
    %v2447 = vunpack.c.l.b16 %v560
    %v2448 = vunpack.c.h.b16 %v560
    %v2449 = vunpack.c.l.b16 %v561
    %v2450 = vunpack.c.h.b16 %v561
    %v2451 = vunpack.c.l.b16 %v562
    %v2452 = vunpack.c.h.b16 %v562
    %v2453 = vunpack.c.l.b16 %v563
    %v2454 = vunpack.c.h.b16 %v563
    %v2455 = vunpack.c.l.b16 %v564
    %v2456 = vunpack.c.h.b16 %v564
    %v2457 = vunpack.c.l.b16 %v565
    %v2458 = vunpack.c.h.b16 %v565
    %v2459 = vunpack.c.l.b16 %v566
    %v2460 = vunpack.c.h.b16 %v566
    %v2461 = vunpack.c.l.b16 %v567
    %v2462 = vunpack.c.h.b16 %v567
    %v2463 = vunpack.c.l.b16 %v568
    %v2464 = vunpack.c.h.b16 %v568
    %v2465 = vunpack.c.l.b16 %v569
    %v2466 = vunpack.c.h.b16 %v569
    %v2467 = vunpack.c.l.b16 %v570
    %v2468 = vunpack.c.h.b16 %v570
    %v2469 = vunpack.c.l.b16 %v571
    %v2470 = vunpack.c.h.b16 %v571
    %v2471 = vunpack.c.l.b16 %v572
    %v2472 = vunpack.c.h.b16 %v572
    %v2473 = vunpack.c.l.b16 %v573
    %v2474 = vunpack.c.h.b16 %v573
    %v2475 = vunpack.c.l.b16 %v574
    %v2476 = vunpack.c.h.b16 %v574
    %v2477 = vunpack.c.l.b16 %v575
    %v2478 = vunpack.c.h.b16 %v575
    %v2479 = vunpack.c.l.b16 %v576
    %v2480 = vunpack.c.h.b16 %v576
    %v2481 = vunpack.c.l.b16 %v577
    %v2482 = vunpack.c.h.b16 %v577
    %v2483 = vunpack.c.l.b16 %v578
    %v2484 = vunpack.c.h.b16 %v578
    %v2485 = vunpack.c.l.b16 %v579
    %v2486 = vunpack.c.h.b16 %v579
    %v2487 = vunpack.c.l.b16 %v580
    %v2488 = vunpack.c.h.b16 %v580
    %v2489 = vunpack.c.l.b16 %v581
    %v2490 = vunpack.c.h.b16 %v581
    %v2491 = vunpack.c.l.b16 %v582
    %v2492 = vunpack.c.h.b16 %v582
    %v2493 = vunpack.c.l.b16 %v583
    %v2494 = vunpack.c.h.b16 %v583
    %v2495 = vunpack.c.l.b16 %v584
    %v2496 = vunpack.c.h.b16 %v584
    %v2497 = vunpack.c.l.b16 %v585
    %v2498 = vunpack.c.h.b16 %v585
    %v2499 = vunpack.c.l.b16 %v586
    %v2500 = vunpack.c.h.b16 %v586
    %v2501 = vunpack.c.l.b16 %v587
    %v2502 = vunpack.c.h.b16 %v587
    %v2503 = vunpack.c.l.b16 %v588
    %v2504 = vunpack.c.h.b16 %v588
    %v2505 = vunpack.c.l.b16 %v589
    %v2506 = vunpack.c.h.b16 %v589
    %v2507 = vunpack.c.l.b16 %v590
    %v2508 = vunpack.c.h.b16 %v590
    %v2509 = vunpack.c.l.b16 %v591
    %v2510 = vunpack.c.h.b16 %v591
    %v2511 = vunpack.c.l.b16 %v592
    %v2512 = vunpack.c.h.b16 %v592
    %v2513 = vunpack.c.l.b16 %v593
    %v2514 = vunpack.c.h.b16 %v593
    %v2515 = vunpack.c.l.b16 %v594
    %v2516 = vunpack.c.h.b16 %v594
    %v2517 = vunpack.c.l.b16 %v595
    %v2518 = vunpack.c.h.b16 %v595
    %v2519 = vunpack.c.l.b16 %v596
    %v2520 = vunpack.c.h.b16 %v596
    %v2521 = vunpack.c.l.b16 %v597
    %v2522 = vunpack.c.h.b16 %v597
    %v2523 = vunpack.c.l.b16 %v598
    %v2524 = vunpack.c.h.b16 %v598
    %v2525 = vunpack.c.l.b16 %v599
    %v2526 = vunpack.c.h.b16 %v599
    %v2527 = vunpack.c.l.b16 %v600
    %v2528 = vunpack.c.h.b16 %v600
    %v2529 = vunpack.c.l.b16 %v601
    %v2530 = vunpack.c.h.b16 %v601
    %v2531 = vunpack.c.l.b16 %v602
    %v2532 = vunpack.c.h.b16 %v602
    %v2533 = vunpack.c.l.b16 %v603
    %v2534 = vunpack.c.h.b16 %v603
    %v2535 = vunpack.c.l.b16 %v604
    %v2536 = vunpack.c.h.b16 %v604
    %v2537 = vunpack.c.l.b16 %v605
    %v2538 = vunpack.c.h.b16 %v605
    %v2539 = vunpack.c.l.b16 %v606
    %v2540 = vunpack.c.h.b16 %v606
    %v2541 = vunpack.c.l.b16 %v607
    %v2542 = vunpack.c.h.b16 %v607
    %v2543 = vunpack.c.l.b16 %v608
    %v2544 = vunpack.c.h.b16 %v608
    %v2545 = vunpack.c.l.b16 %v609
    %v2546 = vunpack.c.h.b16 %v609
    %v2547 = vunpack.c.l.b16 %v610
    %v2548 = vunpack.c.h.b16 %v610
    %v2549 = vunpack.c.l.b16 %v611
    %v2550 = vunpack.c.h.b16 %v611
    %v2551 = vunpack.c.l.b16 %v612
    %v2552 = vunpack.c.h.b16 %v612
    %v2553 = vunpack.c.l.b16 %v613
    %v2554 = vunpack.c.h.b16 %v613
    %v2555 = vunpack.c.l.b16 %v614
    %v2556 = vunpack.c.h.b16 %v614
    %v2557 = vunpack.c.l.b16 %v615
    %v2558 = vunpack.c.h.b16 %v615
    %v2559 = vunpack.c.l.b16 %v616
    %v2560 = vunpack.c.h.b16 %v616
    %v2561 = vunpack.c.l.b16 %v617
    %v2562 = vunpack.c.h.b16 %v617
    %v2563 = vunpack.c.l.b16 %v618
    %v2564 = vunpack.c.h.b16 %v618
    %v2565 = vunpack.c.l.b16 %v619
    %v2566 = vunpack.c.h.b16 %v619
    %v2567 = vunpack.c.l.b16 %v620
    %v2568 = vunpack.c.h.b16 %v620
    %v2569 = vunpack.c.l.b16 %v621
    %v2570 = vunpack.c.h.b16 %v621
    %v2571 = vunpack.c.l.b16 %v622
    %v2572 = vunpack.c.h.b16 %v622
    %v2573 = vunpack.c.l.b16 %v623
    %v2574 = vunpack.c.h.b16 %v623
    %v2575 = vunpack.c.l.b16 %v624
    %v2576 = vunpack.c.h.b16 %v624
    %v2577 = vunpack.c.l.b16 %v625
    %v2578 = vunpack.c.h.b16 %v625
    %v2579 = vunpack.c.l.b16 %v626
    %v2580 = vunpack.c.h.b16 %v626
    %v2581 = vunpack.c.l.b16 %v627
    %v2582 = vunpack.c.h.b16 %v627
    %v2583 = vunpack.c.l.b16 %v628
    %v2584 = vunpack.c.h.b16 %v628
    %v2585 = vunpack.c.l.b16 %v629
    %v2586 = vunpack.c.h.b16 %v629
    %v2587 = vunpack.c.l.b16 %v630
    %v2588 = vunpack.c.h.b16 %v630
    %v2589 = vunpack.c.l.b16 %v631
    %v2590 = vunpack.c.h.b16 %v631
    %v2591 = vunpack.c.l.b16 %v632
    %v2592 = vunpack.c.h.b16 %v632
    %v2593 = vunpack.c.l.b16 %v633
    %v2594 = vunpack.c.h.b16 %v633
    %v2595 = vunpack.c.l.b16 %v634
    %v2596 = vunpack.c.h.b16 %v634
    %v2597 = vunpack.c.l.b16 %v635
    %v2598 = vunpack.c.h.b16 %v635
    %v2599 = vunpack.c.l.b16 %v636
    %v2600 = vunpack.c.h.b16 %v636
    %v2601 = vunpack.c.l.b16 %v637
    %v2602 = vunpack.c.h.b16 %v637
    %v2603 = vunpack.c.l.b16 %v638
    %v2604 = vunpack.c.h.b16 %v638
    %v2605 = vunpack.c.l.b16 %v639
    %v2606 = vunpack.c.h.b16 %v639
    %v2607 = vunpack.c.l.b16 %v640
    %v2608 = vunpack.c.h.b16 %v640
    %v2609 = vunpack.c.l.b16 %v641
    %v2610 = vunpack.c.h.b16 %v641
    %v2611 = vunpack.c.l.b16 %v642
    %v2612 = vunpack.c.h.b16 %v642
    %v2613 = vunpack.c.l.b16 %v643
    %v2614 = vunpack.c.h.b16 %v643
    %v2615 = vunpack.c.l.b16 %v644
    %v2616 = vunpack.c.h.b16 %v644
    %v2617 = vunpack.c.l.b16 %v645
    %v2618 = vunpack.c.h.b16 %v645
    %v2619 = vunpack.c.l.b16 %v646
    %v2620 = vunpack.c.h.b16 %v646
    %v2621 = vunpack.c.l.b16 %v647
    %v2622 = vunpack.c.h.b16 %v647
    %v2623 = vunpack.c.l.b16 %v648
    %v2624 = vunpack.c.h.b16 %v648
    %v2625 = vunpack.c.l.b16 %v649
    %v2626 = vunpack.c.h.b16 %v649
    %v2627 = vunpack.c.l.b16 %v650
    %v2628 = vunpack.c.h.b16 %v650
    %v2629 = vunpack.c.l.b16 %v651
    %v2630 = vunpack.c.h.b16 %v651
    %v2631 = vunpack.c.l.b16 %v652
    %v2632 = vunpack.c.h.b16 %v652
    %v2633 = vunpack.c.l.b16 %v653
    %v2634 = vunpack.c.h.b16 %v653
    %v2635 = vunpack.c.l.b16 %v654
    %v2636 = vunpack.c.h.b16 %v654
    %v2637 = vunpack.c.l.b16 %v655
    %v2638 = vunpack.c.h.b16 %v655
    %v2639 = vunpack.c.l.b16 %v656
    %v2640 = vunpack.c.h.b16 %v656
    %v2641 = vunpack.c.l.b16 %v657
    %v2642 = vunpack.c.h.b16 %v657
    %v2643 = vunpack.c.l.b16 %v658
    %v2644 = vunpack.c.h.b16 %v658
    %v2645 = vunpack.c.l.b16 %v659
    %v2646 = vunpack.c.h.b16 %v659
    %v2647 = vunpack.c.l.b16 %v660
    %v2648 = vunpack.c.h.b16 %v660
    %v2649 = vunpack.c.l.b16 %v661
    %v2650 = vunpack.c.h.b16 %v661
    %v2651 = vunpack.c.l.b16 %v662
    %v2652 = vunpack.c.h.b16 %v662
    %v2653 = vunpack.c.l.b16 %v663
    %v2654 = vunpack.c.h.b16 %v663
    %v2655 = vunpack.c.l.b16 %v664
    %v2656 = vunpack.c.h.b16 %v664
    %v2657 = vunpack.c.l.b16 %v665
    %v2658 = vunpack.c.h.b16 %v665
    %v2659 = vunpack.c.l.b16 %v666
    %v2660 = vunpack.c.h.b16 %v666
    %v2661 = vunpack.c.l.b16 %v667
    %v2662 = vunpack.c.h.b16 %v667
    %v2663 = vunpack.c.l.b16 %v668
    %v2664 = vunpack.c.h.b16 %v668
    %v2665 = vunpack.c.l.b16 %v669
    %v2666 = vunpack.c.h.b16 %v669
    %v2667 = vunpack.c.l.b16 %v670
    %v2668 = vunpack.c.h.b16 %v670
    %v2669 = vunpack.c.l.b16 %v671
    %v2670 = vunpack.c.h.b16 %v671
    %v2671 = vunpack.c.l.b16 %v672
    %v2672 = vunpack.c.h.b16 %v672
    %v2673 = vunpack.c.l.b16 %v673
    %v2674 = vunpack.c.h.b16 %v673
    %v2675 = vunpack.c.l.b16 %v674
    %v2676 = vunpack.c.h.b16 %v674
    %v2677 = vunpack.c.l.b16 %v675
    %v2678 = vunpack.c.h.b16 %v675
    %v2679 = vunpack.c.l.b16 %v676
    %v2680 = vunpack.c.h.b16 %v676
    %v2681 = vunpack.c.l.b16 %v677
    %v2682 = vunpack.c.h.b16 %v677
    %v2683 = vunpack.c.l.b16 %v678
    %v2684 = vunpack.c.h.b16 %v678
    %v2685 = vunpack.c.l.b16 %v679
    %v2686 = vunpack.c.h.b16 %v679
    %v2687 = vunpack.c.l.b16 %v680
    %v2688 = vunpack.c.h.b16 %v680
    %v2689 = vunpack.c.l.b16 %v681
    %v2690 = vunpack.c.h.b16 %v681
    %v2691 = vunpack.c.l.b16 %v682
    %v2692 = vunpack.c.h.b16 %v682
    %v2693 = vunpack.c.l.b16 %v683
    %v2694 = vunpack.c.h.b16 %v683
    %v2695 = vunpack.c.l.b16 %v684
    %v2696 = vunpack.c.h.b16 %v684
    %v2697 = vunpack.c.l.b16 %v685
    %v2698 = vunpack.c.h.b16 %v685
    %v2699 = vunpack.c.l.b16 %v686
    %v2700 = vunpack.c.h.b16 %v686
    %v2701 = vunpack.c.l.b16 %v687
    %v2702 = vunpack.c.h.b16 %v687
    %v2703 = vunpack.c.l.b16 %v688
    %v2704 = vunpack.c.h.b16 %v688
    %v2705 = vunpack.c.l.b16 %v689
    %v2706 = vunpack.c.h.b16 %v689
    %v2707 = vunpack.c.l.b16 %v690
    %v2708 = vunpack.c.h.b16 %v690
    %v2709 = vunpack.c.l.b16 %v691
    %v2710 = vunpack.c.h.b16 %v691
    %v2711 = vunpack.c.l.b16 %v692
    %v2712 = vunpack.c.h.b16 %v692
    %v2713 = vunpack.c.l.b16 %v693
    %v2714 = vunpack.c.h.b16 %v693
    %v2715 = vunpack.c.l.b16 %v694
    %v2716 = vunpack.c.h.b16 %v694
    %v2717 = vunpack.c.l.b16 %v695
    %v2718 = vunpack.c.h.b16 %v695
    %v2719 = vunpack.c.l.b16 %v696
    %v2720 = vunpack.c.h.b16 %v696
    %v2721 = vunpack.c.l.b16 %v697
    %v2722 = vunpack.c.h.b16 %v697
    %v2723 = vunpack.c.l.b16 %v698
    %v2724 = vunpack.c.h.b16 %v698
    %v2725 = vunpack.c.l.b16 %v699
    %v2726 = vunpack.c.h.b16 %v699
    %v2727 = vunpack.c.l.b16 %v700
    %v2728 = vunpack.c.h.b16 %v700
    %v2729 = vunpack.c.l.b16 %v701
    %v2730 = vunpack.c.h.b16 %v701
    %v2731 = vunpack.c.l.b16 %v702
    %v2732 = vunpack.c.h.b16 %v702
    %v2733 = vunpack.c.l.b16 %v703
    %v2734 = vunpack.c.h.b16 %v703
    %v2735 = vunpack.c.l.b16 %v704
    %v2736 = vunpack.c.h.b16 %v704
    %v2737 = vunpack.c.l.b16 %v705
    %v2738 = vunpack.c.h.b16 %v705
    %v2739 = vunpack.c.l.b16 %v706
    %v2740 = vunpack.c.h.b16 %v706
    %v2741 = vunpack.c.l.b16 %v707
    %v2742 = vunpack.c.h.b16 %v707
    %v2743 = vunpack.c.l.b16 %v708
    %v2744 = vunpack.c.h.b16 %v708
    %v2745 = vunpack.c.l.b16 %v709
    %v2746 = vunpack.c.h.b16 %v709
    %v2747 = vunpack.c.l.b16 %v710
    %v2748 = vunpack.c.h.b16 %v710
    %v2749 = vunpack.c.l.b16 %v711
    %v2750 = vunpack.c.h.b16 %v711
    %v2751 = vunpack.c.l.b16 %v712
    %v2752 = vunpack.c.h.b16 %v712
    %v2753 = vunpack.c.l.b16 %v713
    %v2754 = vunpack.c.h.b16 %v713
    %v2755 = vunpack.c.l.b16 %v714
    %v2756 = vunpack.c.h.b16 %v714
    %v2757 = vunpack.c.l.b16 %v715
    %v2758 = vunpack.c.h.b16 %v715
    %v2759 = vunpack.c.l.b16 %v716
    %v2760 = vunpack.c.h.b16 %v716
    %v2761 = vunpack.c.l.b16 %v717
    %v2762 = vunpack.c.h.b16 %v717
    %v2763 = vunpack.c.l.b16 %v718
    %v2764 = vunpack.c.h.b16 %v718
    %v2765 = vunpack.c.l.b16 %v719
    %v2766 = vunpack.c.h.b16 %v719
    %v2767 = vunpack.c.l.b16 %v720
    %v2768 = vunpack.c.h.b16 %v720
    %v2769 = vunpack.c.l.b16 %v721
    %v2770 = vunpack.c.h.b16 %v721
    %v2771 = vunpack.c.l.b16 %v722
    %v2772 = vunpack.c.h.b16 %v722
    %v2773 = vunpack.c.l.b16 %v723
    %v2774 = vunpack.c.h.b16 %v723
    %v2775 = vunpack.c.l.b16 %v724
    %v2776 = vunpack.c.h.b16 %v724
    %v2777 = vunpack.c.l.b16 %v725
    %v2778 = vunpack.c.h.b16 %v725
    %v2779 = vunpack.c.l.b16 %v726
    %v2780 = vunpack.c.h.b16 %v726
    %v2781 = vunpack.c.l.b16 %v727
    %v2782 = vunpack.c.h.b16 %v727
    %v2783 = vunpack.c.l.b16 %v728
    %v2784 = vunpack.c.h.b16 %v728
    %v2785 = vunpack.c.l.b16 %v729
    %v2786 = vunpack.c.h.b16 %v729
    %v2787 = vunpack.c.l.b16 %v730
    %v2788 = vunpack.c.h.b16 %v730
    %v2789 = vunpack.c.l.b16 %v731
    %v2790 = vunpack.c.h.b16 %v731
    %v2791 = vunpack.c.l.b16 %v732
    %v2792 = vunpack.c.h.b16 %v732
    %v2793 = vunpack.c.l.b16 %v733
    %v2794 = vunpack.c.h.b16 %v733
    %v2795 = vunpack.c.l.b16 %v734
    %v2796 = vunpack.c.h.b16 %v734
    %v2797 = vunpack.c.l.b16 %v735
    %v2798 = vunpack.c.h.b16 %v735
    %v2799 = vunpack.c.l.b16 %v736
    %v2800 = vunpack.c.h.b16 %v736
    %v2801 = vunpack.c.l.b16 %v737
    %v2802 = vunpack.c.h.b16 %v737
    %v2803 = vunpack.c.l.b16 %v738
    %v2804 = vunpack.c.h.b16 %v738
    %v2805 = vunpack.c.l.b16 %v739
    %v2806 = vunpack.c.h.b16 %v739
    %v2807 = vunpack.c.l.b16 %v740
    %v2808 = vunpack.c.h.b16 %v740
    %v2809 = vunpack.c.l.b16 %v741
    %v2810 = vunpack.c.h.b16 %v741
    %v2811 = vunpack.c.l.b16 %v742
    %v2812 = vunpack.c.h.b16 %v742
    %v2813 = vunpack.c.l.b16 %v743
    %v2814 = vunpack.c.h.b16 %v743
    %v2815 = vunpack.c.l.b16 %v744
    %v2816 = vunpack.c.h.b16 %v744
    %v2817 = vunpack.c.l.b16 %v745
    %v2818 = vunpack.c.h.b16 %v745
    %v2819 = vunpack.c.l.b16 %v746
    %v2820 = vunpack.c.h.b16 %v746
    %v2821 = vunpack.c.l.b16 %v747
    %v2822 = vunpack.c.h.b16 %v747
    %v2823 = vunpack.c.l.b16 %v748
    %v2824 = vunpack.c.h.b16 %v748
    %v2825 = vunpack.c.l.b16 %v749
    %v2826 = vunpack.c.h.b16 %v749
    %v2827 = vunpack.c.l.b16 %v750
    %v2828 = vunpack.c.h.b16 %v750
    %v2829 = vunpack.c.l.b16 %v751
    %v2830 = vunpack.c.h.b16 %v751
    %v2831 = vunpack.c.l.b16 %v752
    %v2832 = vunpack.c.h.b16 %v752
    %v2833 = vunpack.c.l.b16 %v753
    %v2834 = vunpack.c.h.b16 %v753
    %v2835 = vunpack.c.l.b16 %v754
    %v2836 = vunpack.c.h.b16 %v754
    %v2837 = vunpack.c.l.b16 %v755
    %v2838 = vunpack.c.h.b16 %v755
    %v2839 = vunpack.c.l.b16 %v756
    %v2840 = vunpack.c.h.b16 %v756
    %v2841 = vunpack.c.l.b16 %v757
    %v2842 = vunpack.c.h.b16 %v757
    %v2843 = vunpack.c.l.b16 %v758
    %v2844 = vunpack.c.h.b16 %v758
    %v2845 = vunpack.c.l.b16 %v759
    %v2846 = vunpack.c.h.b16 %v759
    %v2847 = vunpack.c.l.b16 %v760
    %v2848 = vunpack.c.h.b16 %v760
    %v2849 = vunpack.c.l.b16 %v761
    %v2850 = vunpack.c.h.b16 %v761
    %v2851 = vunpack.c.l.b16 %v762
    %v2852 = vunpack.c.h.b16 %v762
    %v2853 = vunpack.c.l.b16 %v763
    %v2854 = vunpack.c.h.b16 %v763
    %v2855 = vunpack.c.l.b16 %v764
    %v2856 = vunpack.c.h.b16 %v764
    %v2857 = vunpack.c.l.b16 %v765
    %v2858 = vunpack.c.h.b16 %v765
    %v2859 = vunpack.c.l.b16 %v766
    %v2860 = vunpack.c.h.b16 %v766
    %v2861 = vunpack.c.l.b16 %v767
    %v2862 = vunpack.c.h.b16 %v767
    %v2863 = vunpack.c.l.b16 %v768
    %v2864 = vunpack.c.h.b16 %v768
    %v2865 = vunpack.c.l.b16 %v769
    %v2866 = vunpack.c.h.b16 %v769
    %v2867 = vunpack.c.l.b16 %v770
    %v2868 = vunpack.c.h.b16 %v770
    %v2869 = vunpack.c.l.b16 %v771
    %v2870 = vunpack.c.h.b16 %v771
    %v2871 = vunpack.c.l.b16 %v772
    %v2872 = vunpack.c.h.b16 %v772
    %v2873 = vunpack.c.l.b16 %v773
    %v2874 = vunpack.c.h.b16 %v773
    %v2875 = vunpack.c.l.b16 %v774
    %v2876 = vunpack.c.h.b16 %v774
    %v2877 = vunpack.c.l.b16 %v775
    %v2878 = vunpack.c.h.b16 %v775
    %v2879 = vunpack.c.l.b16 %v776
    %v2880 = vunpack.c.h.b16 %v776
    %v2881 = vunpack.c.l.b16 %v777
    %v2882 = vunpack.c.h.b16 %v777
    %v2883 = vunpack.c.l.b16 %v778
    %v2884 = vunpack.c.h.b16 %v778
    %v2885 = vunpack.c.l.b16 %v779
    %v2886 = vunpack.c.h.b16 %v779
    %v2887 = vunpack.c.l.b16 %v780
    %v2888 = vunpack.c.h.b16 %v780
    %v2889 = vunpack.c.l.b16 %v781
    %v2890 = vunpack.c.h.b16 %v781
    %v2891 = vunpack.c.l.b16 %v782
    %v2892 = vunpack.c.h.b16 %v782
    %v2893 = vunpack.c.l.b16 %v783
    %v2894 = vunpack.c.h.b16 %v783
    %v2895 = vunpack.c.l.b16 %v784
    %v2896 = vunpack.c.h.b16 %v784
    %v2897 = vunpack.c.l.b16 %v785
    %v2898 = vunpack.c.h.b16 %v785
    %v2899 = vunpack.c.l.b16 %v786
    %v2900 = vunpack.c.h.b16 %v786
    %v2901 = vunpack.c.l.b16 %v787
    %v2902 = vunpack.c.h.b16 %v787
    %v2903 = vunpack.c.l.b16 %v788
    %v2904 = vunpack.c.h.b16 %v788
    %v2905 = vunpack.c.l.b16 %v789
    %v2906 = vunpack.c.h.b16 %v789
    %v2907 = vunpack.c.l.b16 %v790
    %v2908 = vunpack.c.h.b16 %v790
    %v2909 = vunpack.c.l.b16 %v791
    %v2910 = vunpack.c.h.b16 %v791
    %v2911 = vunpack.c.l.b16 %v792
    %v2912 = vunpack.c.h.b16 %v792
    %v2913 = vunpack.c.l.b16 %v793
    %v2914 = vunpack.c.h.b16 %v793
    %v2915 = vunpack.c.l.b16 %v794
    %v2916 = vunpack.c.h.b16 %v794
    %v2917 = vunpack.c.l.b16 %v795
    %v2918 = vunpack.c.h.b16 %v795
    %v2919 = vunpack.c.l.b16 %v796
    %v2920 = vunpack.c.h.b16 %v796
    %v2921 = vunpack.c.l.b16 %v797
    %v2922 = vunpack.c.h.b16 %v797
    %v2923 = vunpack.c.l.b16 %v798
    %v2924 = vunpack.c.h.b16 %v798
    %v2925 = vunpack.c.l.b16 %v799
    %v2926 = vunpack.c.h.b16 %v799
    %v2927 = vunpack.c.l.b16 %v800
    %v2928 = vunpack.c.h.b16 %v800
    %v2929 = vunpack.c.l.b16 %v801
    %v2930 = vunpack.c.h.b16 %v801
    %v2931 = vunpack.c.l.b16 %v802
    %v2932 = vunpack.c.h.b16 %v802
    %v2933 = vunpack.c.l.b16 %v803
    %v2934 = vunpack.c.h.b16 %v803
    %v2935 = vunpack.c.l.b16 %v804
    %v2936 = vunpack.c.h.b16 %v804
    %v2937 = vunpack.c.l.b16 %v805
    %v2938 = vunpack.c.h.b16 %v805
    %v2939 = vunpack.c.l.b16 %v806
    %v2940 = vunpack.c.h.b16 %v806
    %v2941 = vunpack.c.l.b16 %v807
    %v2942 = vunpack.c.h.b16 %v807
    %v2943 = vunpack.c.l.b16 %v808
    %v2944 = vunpack.c.h.b16 %v808
    %v2945 = vunpack.c.l.b16 %v809
    %v2946 = vunpack.c.h.b16 %v809
    %v2947 = vunpack.c.l.b16 %v810
    %v2948 = vunpack.c.h.b16 %v810
    %v2949 = vunpack.c.l.b16 %v811
    %v2950 = vunpack.c.h.b16 %v811
    %v2951 = vunpack.c.l.b16 %v812
    %v2952 = vunpack.c.h.b16 %v812
    %v2953 = vunpack.c.l.b16 %v813
    %v2954 = vunpack.c.h.b16 %v813
    %v2955 = vunpack.c.l.b16 %v814
    %v2956 = vunpack.c.h.b16 %v814
    %v2957 = vunpack.c.l.b16 %v815
    %v2958 = vunpack.c.h.b16 %v815
    %v2959 = vunpack.c.l.b16 %v816
    %v2960 = vunpack.c.h.b16 %v816
    %v2961 = vunpack.c.l.b16 %v817
    %v2962 = vunpack.c.h.b16 %v817
    %v2963 = vunpack.c.l.b16 %v818
    %v2964 = vunpack.c.h.b16 %v818
    %v2965 = vunpack.c.l.b16 %v819
    %v2966 = vunpack.c.h.b16 %v819
    %v2967 = vunpack.c.l.b16 %v820
    %v2968 = vunpack.c.h.b16 %v820
    %v2969 = vunpack.c.l.b16 %v821
    %v2970 = vunpack.c.h.b16 %v821
    %v2971 = vunpack.c.l.b16 %v822
    %v2972 = vunpack.c.h.b16 %v822
    %v2973 = vunpack.c.l.b16 %v823
    %v2974 = vunpack.c.h.b16 %v823
    %v2975 = vunpack.c.l.b16 %v824
    %v2976 = vunpack.c.h.b16 %v824
    %v2977 = vunpack.c.l.b16 %v825
    %v2978 = vunpack.c.h.b16 %v825
    %v2979 = vunpack.c.l.b16 %v826
    %v2980 = vunpack.c.h.b16 %v826
    %v2981 = vunpack.c.l.b16 %v827
    %v2982 = vunpack.c.h.b16 %v827
    %v2983 = vunpack.c.l.b16 %v828
    %v2984 = vunpack.c.h.b16 %v828
    %v2985 = vunpack.c.l.b16 %v829
    %v2986 = vunpack.c.h.b16 %v829
    %v2987 = vunpack.c.l.b16 %v830
    %v2988 = vunpack.c.h.b16 %v830
    %v2989 = vunpack.c.l.b16 %v831
    %v2990 = vunpack.c.h.b16 %v831
    %v2991 = vunpack.c.l.b16 %v832
    %v2992 = vunpack.c.h.b16 %v832
    %v2993 = vunpack.c.l.b16 %v833
    %v2994 = vunpack.c.h.b16 %v833
    %v2995 = vunpack.c.l.b16 %v834
    %v2996 = vunpack.c.h.b16 %v834
    %v2997 = vunpack.c.l.b16 %v835
    %v2998 = vunpack.c.h.b16 %v835
    %v2999 = vunpack.c.l.b16 %v836
    %v3000 = vunpack.c.h.b16 %v836
    %v3001 = vunpack.c.l.b16 %v837
    %v3002 = vunpack.c.h.b16 %v837
    %v3003 = vunpack.c.l.b16 %v838
    %v3004 = vunpack.c.h.b16 %v838
    %v3005 = vunpack.c.l.b16 %v839
    %v3006 = vunpack.c.h.b16 %v839
    %v3007 = vunpack.c.l.b16 %v840
    %v3008 = vunpack.c.h.b16 %v840
    %v3009 = vunpack.c.l.b16 %v841
    %v3010 = vunpack.c.h.b16 %v841
    %v3011 = vunpack.c.l.b16 %v842
    %v3012 = vunpack.c.h.b16 %v842
    %v3013 = vunpack.c.l.b16 %v843
    %v3014 = vunpack.c.h.b16 %v843
    %v3015 = vunpack.c.l.b16 %v844
    %v3016 = vunpack.c.h.b16 %v844
    %v3017 = vunpack.c.l.b16 %v845
    %v3018 = vunpack.c.h.b16 %v845
    %v3019 = vunpack.c.l.b16 %v846
    %v3020 = vunpack.c.h.b16 %v846
    %v3021 = vunpack.c.l.b16 %v847
    %v3022 = vunpack.c.h.b16 %v847
    %v3023 = vunpack.c.l.b16 %v848
    %v3024 = vunpack.c.h.b16 %v848
    %v3025 = vunpack.c.l.b16 %v849
    %v3026 = vunpack.c.h.b16 %v849
    %v3027 = vunpack.c.l.b16 %v850
    %v3028 = vunpack.c.h.b16 %v850
    %v3029 = vunpack.c.l.b16 %v851
    %v3030 = vunpack.c.h.b16 %v851
    %v3031 = vunpack.c.l.b16 %v852
    %v3032 = vunpack.c.h.b16 %v852
    %v3033 = vunpack.c.l.b16 %v853
    %v3034 = vunpack.c.h.b16 %v853
    %v3035 = vunpack.c.l.b16 %v854
    %v3036 = vunpack.c.h.b16 %v854
    %v3037 = vunpack.c.l.b16 %v855
    %v3038 = vunpack.c.h.b16 %v855
    %v3039 = vunpack.c.l.b16 %v856
    %v3040 = vunpack.c.h.b16 %v856
    %v3041 = vunpack.c.l.b16 %v857
    %v3042 = vunpack.c.h.b16 %v857
    %v3043 = vunpack.c.l.b16 %v858
    %v3044 = vunpack.c.h.b16 %v858
    %v3045 = vunpack.c.l.b16 %v859
    %v3046 = vunpack.c.h.b16 %v859
    %v3047 = vunpack.c.l.b16 %v860
    %v3048 = vunpack.c.h.b16 %v860
    %v3049 = vunpack.c.l.b16 %v861
    %v3050 = vunpack.c.h.b16 %v861
    %v3051 = vunpack.c.l.b16 %v862
    %v3052 = vunpack.c.h.b16 %v862
    %v3053 = vunpack.c.l.b16 %v863
    %v3054 = vunpack.c.h.b16 %v863
    %v3055 = vunpack.c.l.b16 %v864
    %v3056 = vunpack.c.h.b16 %v864
    %v3057 = vunpack.c.l.b16 %v865
    %v3058 = vunpack.c.h.b16 %v865
    %v3059 = vunpack.c.l.b16 %v866
    %v3060 = vunpack.c.h.b16 %v866
    %v3061 = vunpack.c.l.b16 %v867
    %v3062 = vunpack.c.h.b16 %v867
    %v3063 = vunpack.c.l.b16 %v868
    %v3064 = vunpack.c.h.b16 %v868
    %v3065 = vunpack.c.l.b16 %v869
    %v3066 = vunpack.c.h.b16 %v869
    %v3067 = vunpack.c.l.b16 %v870
    %v3068 = vunpack.c.h.b16 %v870
    %v3069 = vpack.c.b16 %v1673, %v1669
    %v3070 = vpack.c.b16 %v1674, %v1670
    %v3071 = vpack.c.b16 %v1675, %v1671
    %v3072 = vpack.c.b16 %v1676, %v1672
    %v3073 = vpack.c.b16 %v1681, %v1677
    %v3074 = vpack.c.b16 %v1682, %v1678
    %v3075 = vpack.c.b16 %v1683, %v1679
    %v3076 = vpack.c.b16 %v1684, %v1680
    %v3077 = vpack.c.b16 %v1689, %v1685
    %v3078 = vpack.c.b16 %v1690, %v1686
    %v3079 = vpack.c.b16 %v1691, %v1687
    %v3080 = vpack.c.b16 %v1692, %v1688
    %v3081 = vpack.c.b16 %v1697, %v1693
    %v3082 = vpack.c.b16 %v1698, %v1694
    %v3083 = vpack.c.b16 %v1699, %v1695
    %v3084 = vpack.c.b16 %v1700, %v1696
    %v3085 = vpack.c.b16 %v1705, %v1701
    %v3086 = vpack.c.b16 %v1706, %v1702
    %v3087 = vpack.c.b16 %v1707, %v1703
    %v3088 = vpack.c.b16 %v1708, %v1704
    %v3089 = vpack.c.b16 %v1713, %v1709
    %v3090 = vpack.c.b16 %v1714, %v1710
    %v3091 = vpack.c.b16 %v1715, %v1711
    %v3092 = vpack.c.b16 %v1716, %v1712
    %v3093 = vpack.c.b16 %v1721, %v1717
    %v3094 = vpack.c.b16 %v1722, %v1718
    %v3095 = vpack.c.b16 %v1723, %v1719
    %v3096 = vpack.c.b16 %v1724, %v1720
    %v3097 = vpack.c.b16 %v1729, %v1725
    %v3098 = vpack.c.b16 %v1730, %v1726
    %v3099 = vpack.c.b16 %v1731, %v1727
    %v3100 = vpack.c.b16 %v1732, %v1728
    %v3101 = vpack.c.b16 %v1737, %v1733
    %v3102 = vpack.c.b16 %v1738, %v1734
    %v3103 = vpack.c.b16 %v1739, %v1735
    %v3104 = vpack.c.b16 %v1740, %v1736
    %v3105 = vpack.c.b16 %v1745, %v1741
    %v3106 = vpack.c.b16 %v1746, %v1742
    %v3107 = vpack.c.b16 %v1747, %v1743
    %v3108 = vpack.c.b16 %v1748, %v1744
    %v3109 = vpack.c.b16 %v1753, %v1749
    %v3110 = vpack.c.b16 %v1754, %v1750
    %v3111 = vpack.c.b16 %v1755, %v1751
    %v3112 = vpack.c.b16 %v1756, %v1752
    %v3113 = vpack.c.b16 %v1761, %v1757
    %v3114 = vpack.c.b16 %v1762, %v1758
    %v3115 = vpack.c.b16 %v1763, %v1759
    %v3116 = vpack.c.b16 %v1764, %v1760
    %v3117 = vpack.c.b16 %v1769, %v1765
    %v3118 = vpack.c.b16 %v1770, %v1766
    %v3119 = vpack.c.b16 %v1771, %v1767
    %v3120 = vpack.c.b16 %v1772, %v1768
    %v3121 = vpack.c.b16 %v1777, %v1773
    %v3122 = vpack.c.b16 %v1778, %v1774
    %v3123 = vpack.c.b16 %v1779, %v1775
    %v3124 = vpack.c.b16 %v1780, %v1776
    %v3125 = vpack.c.b16 %v1785, %v1781
    %v3126 = vpack.c.b16 %v1786, %v1782
    %v3127 = vpack.c.b16 %v1787, %v1783
    %v3128 = vpack.c.b16 %v1788, %v1784
    %v3129 = vpack.c.b16 %v1793, %v1789
    %v3130 = vpack.c.b16 %v1794, %v1790
    %v3131 = vpack.c.b16 %v1795, %v1791
    %v3132 = vpack.c.b16 %v1796, %v1792
    %v3133 = vpack.c.b16 %v1801, %v1797
    %v3134 = vpack.c.b16 %v1802, %v1798
    %v3135 = vpack.c.b16 %v1803, %v1799
    %v3136 = vpack.c.b16 %v1804, %v1800
    %v3137 = vpack.c.b16 %v1809, %v1805
    %v3138 = vpack.c.b16 %v1810, %v1806
    %v3139 = vpack.c.b16 %v1811, %v1807
    %v3140 = vpack.c.b16 %v1812, %v1808
    %v3141 = vpack.c.b16 %v1817, %v1813
    %v3142 = vpack.c.b16 %v1818, %v1814
    %v3143 = vpack.c.b16 %v1819, %v1815
    %v3144 = vpack.c.b16 %v1820, %v1816
    %v3145 = vpack.c.b16 %v1825, %v1821
    %v3146 = vpack.c.b16 %v1826, %v1822
    %v3147 = vpack.c.b16 %v1827, %v1823
    %v3148 = vpack.c.b16 %v1828, %v1824
    %v3149 = vpack.c.b16 %v1833, %v1829
    %v3150 = vpack.c.b16 %v1834, %v1830
    %v3151 = vpack.c.b16 %v1835, %v1831
    %v3152 = vpack.c.b16 %v1836, %v1832
    %v3153 = vpack.c.b16 %v1841, %v1837
    %v3154 = vpack.c.b16 %v1842, %v1838
    %v3155 = vpack.c.b16 %v1843, %v1839
    %v3156 = vpack.c.b16 %v1844, %v1840
    %v3157 = vpack.c.b16 %v1849, %v1845
    %v3158 = vpack.c.b16 %v1850, %v1846
    %v3159 = vpack.c.b16 %v1851, %v1847
    %v3160 = vpack.c.b16 %v1852, %v1848
    %v3161 = vpack.c.b16 %v1857, %v1853
    %v3162 = vpack.c.b16 %v1858, %v1854
    %v3163 = vpack.c.b16 %v1859, %v1855
    %v3164 = vpack.c.b16 %v1860, %v1856
    %v3165 = vpack.c.b16 %v1865, %v1861
    %v3166 = vpack.c.b16 %v1866, %v1862
    %v3167 = vpack.c.b16 %v1867, %v1863
    %v3168 = vpack.c.b16 %v1868, %v1864
    %v3169 = vpack.c.b16 %v1873, %v1869
    %v3170 = vpack.c.b16 %v1874, %v1870
    %v3171 = vpack.c.b16 %v1875, %v1871
    %v3172 = vpack.c.b16 %v1876, %v1872
    %v3173 = vpack.c.b16 %v1881, %v1877
    %v3174 = vpack.c.b16 %v1882, %v1878
    %v3175 = vpack.c.b16 %v1883, %v1879
    %v3176 = vpack.c.b16 %v1884, %v1880
    %v3177 = vpack.c.b16 %v1889, %v1885
    %v3178 = vpack.c.b16 %v1890, %v1886
    %v3179 = vpack.c.b16 %v1891, %v1887
    %v3180 = vpack.c.b16 %v1892, %v1888
    %v3181 = vpack.c.b16 %v1897, %v1893
    %v3182 = vpack.c.b16 %v1898, %v1894
    %v3183 = vpack.c.b16 %v1899, %v1895
    %v3184 = vpack.c.b16 %v1900, %v1896
    %v3185 = vpack.c.b16 %v1905, %v1901
    %v3186 = vpack.c.b16 %v1906, %v1902
    %v3187 = vpack.c.b16 %v1907, %v1903
    %v3188 = vpack.c.b16 %v1908, %v1904
    %v3189 = vpack.c.b16 %v1913, %v1909
    %v3190 = vpack.c.b16 %v1914, %v1910
    %v3191 = vpack.c.b16 %v1915, %v1911
    %v3192 = vpack.c.b16 %v1916, %v1912
    %v3193 = vpack.c.b16 %v1921, %v1917
    %v3194 = vpack.c.b16 %v1922, %v1918
    %v3195 = vpack.c.b16 %v1923, %v1919
    %v3196 = vpack.c.b16 %v1924, %v1920
    %v3197 = vpack.c.b16 %v1929, %v1925
    %v3198 = vpack.c.b16 %v1930, %v1926
    %v3199 = vpack.c.b16 %v1931, %v1927
    %v3200 = vpack.c.b16 %v1932, %v1928
    %v3201 = vpack.c.b16 %v1937, %v1933
    %v3202 = vpack.c.b16 %v1938, %v1934
    %v3203 = vpack.c.b16 %v1939, %v1935
    %v3204 = vpack.c.b16 %v1940, %v1936
    %v3205 = vpack.c.b16 %v1945, %v1941
    %v3206 = vpack.c.b16 %v1946, %v1942
    %v3207 = vpack.c.b16 %v1947, %v1943
    %v3208 = vpack.c.b16 %v1948, %v1944
    %v3209 = vpack.c.b16 %v1953, %v1949
    %v3210 = vpack.c.b16 %v1954, %v1950
    %v3211 = vpack.c.b16 %v1955, %v1951
    %v3212 = vpack.c.b16 %v1956, %v1952
    %v3213 = vpack.c.b16 %v1961, %v1957
    %v3214 = vpack.c.b16 %v1962, %v1958
    %v3215 = vpack.c.b16 %v1963, %v1959
    %v3216 = vpack.c.b16 %v1964, %v1960
    %v3217 = vpack.c.b16 %v1969, %v1965
    %v3218 = vpack.c.b16 %v1970, %v1966
    %v3219 = vpack.c.b16 %v1971, %v1967
    %v3220 = vpack.c.b16 %v1972, %v1968
    %v3221 = vpack.c.b16 %v1977, %v1973
    %v3222 = vpack.c.b16 %v1978, %v1974
    %v3223 = vpack.c.b16 %v1979, %v1975
    %v3224 = vpack.c.b16 %v1980, %v1976
    %v3225 = vpack.c.b16 %v1985, %v1981
    %v3226 = vpack.c.b16 %v1986, %v1982
    %v3227 = vpack.c.b16 %v1987, %v1983
    %v3228 = vpack.c.b16 %v1988, %v1984
    %v3229 = vpack.c.b16 %v1993, %v1989
    %v3230 = vpack.c.b16 %v1994, %v1990
    %v3231 = vpack.c.b16 %v1995, %v1991
    %v3232 = vpack.c.b16 %v1996, %v1992
    %v3233 = vpack.c.b16 %v2001, %v1997
    %v3234 = vpack.c.b16 %v2002, %v1998
    %v3235 = vpack.c.b16 %v2003, %v1999
    %v3236 = vpack.c.b16 %v2004, %v2000
    %v3237 = vpack.c.b16 %v2009, %v2005
    %v3238 = vpack.c.b16 %v2010, %v2006
    %v3239 = vpack.c.b16 %v2011, %v2007
    %v3240 = vpack.c.b16 %v2012, %v2008
    %v3241 = vpack.c.b16 %v2017, %v2013
    %v3242 = vpack.c.b16 %v2018, %v2014
    %v3243 = vpack.c.b16 %v2019, %v2015
    %v3244 = vpack.c.b16 %v2020, %v2016
    %v3245 = vpack.c.b16 %v2025, %v2021
    %v3246 = vpack.c.b16 %v2026, %v2022
    %v3247 = vpack.c.b16 %v2027, %v2023
    %v3248 = vpack.c.b16 %v2028, %v2024
    %v3249 = vpack.c.b16 %v2033, %v2029
    %v3250 = vpack.c.b16 %v2034, %v2030
    %v3251 = vpack.c.b16 %v2035, %v2031
    %v3252 = vpack.c.b16 %v2036, %v2032
    %v3253 = vpack.c.b16 %v2041, %v2037
    %v3254 = vpack.c.b16 %v2042, %v2038
    %v3255 = vpack.c.b16 %v2043, %v2039
    %v3256 = vpack.c.b16 %v2044, %v2040
    %v3257 = vpack.c.b16 %v2049, %v2045
    %v3258 = vpack.c.b16 %v2050, %v2046
    %v3259 = vpack.c.b16 %v2051, %v2047
    %v3260 = vpack.c.b16 %v2052, %v2048
    %v3261 = vpack.c.b16 %v2057, %v2053
    %v3262 = vpack.c.b16 %v2058, %v2054
    %v3263 = vpack.c.b16 %v2059, %v2055
    %v3264 = vpack.c.b16 %v2060, %v2056
    %v3265 = vpack.c.b16 %v2065, %v2061
    %v3266 = vpack.c.b16 %v2066, %v2062
    %v3267 = vpack.c.b16 %v2067, %v2063
    %v3268 = vpack.c.b16 %v2068, %v2064
    %v3269 = vpack.c.b16 %v2073, %v2069
    %v3270 = vpack.c.b16 %v2074, %v2070
    %v3271 = vpack.c.b16 %v2075, %v2071
    %v3272 = vpack.c.b16 %v2076, %v2072
    %v3273 = vpack.c.b16 %v2081, %v2077
    %v3274 = vpack.c.b16 %v2082, %v2078
    %v3275 = vpack.c.b16 %v2083, %v2079
    %v3276 = vpack.c.b16 %v2084, %v2080
    %v3277 = vpack.c.b16 %v2089, %v2085
    %v3278 = vpack.c.b16 %v2090, %v2086
    %v3279 = vpack.c.b16 %v2091, %v2087
    %v3280 = vpack.c.b16 %v2092, %v2088
    %v3281 = vpack.c.b16 %v2097, %v2093
    %v3282 = vpack.c.b16 %v2098, %v2094
    %v3283 = vpack.c.b16 %v2099, %v2095
    %v3284 = vpack.c.b16 %v2100, %v2096
    %v3285 = vpack.c.b16 %v2105, %v2101
    %v3286 = vpack.c.b16 %v2106, %v2102
    %v3287 = vpack.c.b16 %v2107, %v2103
    %v3288 = vpack.c.b16 %v2108, %v2104
    %v3289 = vpack.c.b16 %v2113, %v2109
    %v3290 = vpack.c.b16 %v2114, %v2110
    %v3291 = vpack.c.b16 %v2115, %v2111
    %v3292 = vpack.c.b16 %v2116, %v2112
    %v3293 = vpack.c.b16 %v2121, %v2117
    %v3294 = vpack.c.b16 %v2122, %v2118
    %v3295 = vpack.c.b16 %v2123, %v2119
    %v3296 = vpack.c.b16 %v2124, %v2120
    %v3297 = vpack.c.b16 %v2129, %v2125
    %v3298 = vpack.c.b16 %v2130, %v2126
    %v3299 = vpack.c.b16 %v2131, %v2127
    %v3300 = vpack.c.b16 %v2132, %v2128
    %v3301 = vpack.c.b16 %v2137, %v2133
    %v3302 = vpack.c.b16 %v2138, %v2134
    %v3303 = vpack.c.b16 %v2139, %v2135
    %v3304 = vpack.c.b16 %v2140, %v2136
    %v3305 = vpack.c.b16 %v2145, %v2141
    %v3306 = vpack.c.b16 %v2146, %v2142
    %v3307 = vpack.c.b16 %v2147, %v2143
    %v3308 = vpack.c.b16 %v2148, %v2144
    %v3309 = vpack.c.b16 %v2153, %v2149
    %v3310 = vpack.c.b16 %v2154, %v2150
    %v3311 = vpack.c.b16 %v2155, %v2151
    %v3312 = vpack.c.b16 %v2156, %v2152
    %v3313 = vpack.c.b16 %v2161, %v2157
    %v3314 = vpack.c.b16 %v2162, %v2158
    %v3315 = vpack.c.b16 %v2163, %v2159
    %v3316 = vpack.c.b16 %v2164, %v2160
    %v3317 = vpack.c.b16 %v2169, %v2165
    %v3318 = vpack.c.b16 %v2170, %v2166
    %v3319 = vpack.c.b16 %v2171, %v2167
    %v3320 = vpack.c.b16 %v2172, %v2168
    %v3321 = vpack.c.b16 %v2177, %v2173
    %v3322 = vpack.c.b16 %v2178, %v2174
    %v3323 = vpack.c.b16 %v2179, %v2175
    %v3324 = vpack.c.b16 %v2180, %v2176
    %v3325 = vpack.c.b16 %v2185, %v2181
    %v3326 = vpack.c.b16 %v2186, %v2182
    %v3327 = vpack.c.b16 %v2187, %v2183
    %v3328 = vpack.c.b16 %v2188, %v2184
    %v3329 = vpack.c.b16 %v2193, %v2189
    %v3330 = vpack.c.b16 %v2194, %v2190
    %v3331 = vpack.c.b16 %v2195, %v2191
    %v3332 = vpack.c.b16 %v2196, %v2192
    %v3333 = vpack.c.b16 %v2201, %v2197
    %v3334 = vpack.c.b16 %v2202, %v2198
    %v3335 = vpack.c.b16 %v2203, %v2199
    %v3336 = vpack.c.b16 %v2204, %v2200
    %v3337 = vpack.c.b16 %v2209, %v2205
    %v3338 = vpack.c.b16 %v2210, %v2206
    %v3339 = vpack.c.b16 %v2211, %v2207
    %v3340 = vpack.c.b16 %v2212, %v2208
    %v3341 = vpack.c.b16 %v2217, %v2213
    %v3342 = vpack.c.b16 %v2218, %v2214
    %v3343 = vpack.c.b16 %v2219, %v2215
    %v3344 = vpack.c.b16 %v2220, %v2216
    %v3345 = vpack.c.b16 %v2225, %v2221
    %v3346 = vpack.c.b16 %v2226, %v2222
    %v3347 = vpack.c.b16 %v2227, %v2223
    %v3348 = vpack.c.b16 %v2228, %v2224
    %v3349 = vpack.c.b16 %v2233, %v2229
    %v3350 = vpack.c.b16 %v2234, %v2230
    %v3351 = vpack.c.b16 %v2235, %v2231
    %v3352 = vpack.c.b16 %v2236, %v2232
    %v3353 = vpack.c.b16 %v2241, %v2237
    %v3354 = vpack.c.b16 %v2242, %v2238
    %v3355 = vpack.c.b16 %v2243, %v2239
    %v3356 = vpack.c.b16 %v2244, %v2240
    %v3357 = vpack.c.b16 %v2249, %v2245
    %v3358 = vpack.c.b16 %v2250, %v2246
    %v3359 = vpack.c.b16 %v2251, %v2247
    %v3360 = vpack.c.b16 %v2252, %v2248
    %v3361 = vpack.c.b16 %v2257, %v2253
    %v3362 = vpack.c.b16 %v2258, %v2254
    %v3363 = vpack.c.b16 %v2259, %v2255
    %v3364 = vpack.c.b16 %v2260, %v2256
    %v3365 = vpack.c.b16 %v2265, %v2261
    %v3366 = vpack.c.b16 %v2266, %v2262
    %v3367 = vpack.c.b16 %v2267, %v2263
    %v3368 = vpack.c.b16 %v2268, %v2264
    %v3369 = vpack.c.b16 %v2273, %v2269
    %v3370 = vpack.c.b16 %v2274, %v2270
    %v3371 = vpack.c.b16 %v2275, %v2271
    %v3372 = vpack.c.b16 %v2276, %v2272
    %v3373 = vpack.c.b16 %v2281, %v2277
    %v3374 = vpack.c.b16 %v2282, %v2278
    %v3375 = vpack.c.b16 %v2283, %v2279
    %v3376 = vpack.c.b16 %v2284, %v2280
    %v3377 = vpack.c.b16 %v2289, %v2285
    %v3378 = vpack.c.b16 %v2290, %v2286
    %v3379 = vpack.c.b16 %v2291, %v2287
    %v3380 = vpack.c.b16 %v2292, %v2288
    %v3381 = vpack.c.b16 %v2297, %v2293
    %v3382 = vpack.c.b16 %v2298, %v2294
    %v3383 = vpack.c.b16 %v2299, %v2295
    %v3384 = vpack.c.b16 %v2300, %v2296
    %v3385 = vpack.c.b16 %v2305, %v2301
    %v3386 = vpack.c.b16 %v2306, %v2302
    %v3387 = vpack.c.b16 %v2307, %v2303
    %v3388 = vpack.c.b16 %v2308, %v2304
    %v3389 = vpack.c.b16 %v2313, %v2309
    %v3390 = vpack.c.b16 %v2314, %v2310
    %v3391 = vpack.c.b16 %v2315, %v2311
    %v3392 = vpack.c.b16 %v2316, %v2312
    %v3393 = vpack.c.b16 %v2321, %v2317
    %v3394 = vpack.c.b16 %v2322, %v2318
    %v3395 = vpack.c.b16 %v2323, %v2319
    %v3396 = vpack.c.b16 %v2324, %v2320
    %v3397 = vpack.c.b16 %v2329, %v2325
    %v3398 = vpack.c.b16 %v2330, %v2326
    %v3399 = vpack.c.b16 %v2331, %v2327
    %v3400 = vpack.c.b16 %v2332, %v2328
    %v3401 = vpack.c.b16 %v2337, %v2333
    %v3402 = vpack.c.b16 %v2338, %v2334
    %v3403 = vpack.c.b16 %v2339, %v2335
    %v3404 = vpack.c.b16 %v2340, %v2336
    %v3405 = vpack.c.b16 %v2345, %v2341
    %v3406 = vpack.c.b16 %v2346, %v2342
    %v3407 = vpack.c.b16 %v2347, %v2343
    %v3408 = vpack.c.b16 %v2348, %v2344
    %v3409 = vpack.c.b16 %v2353, %v2349
    %v3410 = vpack.c.b16 %v2354, %v2350
    %v3411 = vpack.c.b16 %v2355, %v2351
    %v3412 = vpack.c.b16 %v2356, %v2352
    %v3413 = vpack.c.b16 %v2361, %v2357
    %v3414 = vpack.c.b16 %v2362, %v2358
    %v3415 = vpack.c.b16 %v2363, %v2359
    %v3416 = vpack.c.b16 %v2364, %v2360
    %v3417 = vpack.c.b16 %v2369, %v2365
    %v3418 = vpack.c.b16 %v2370, %v2366
    %v3419 = vpack.c.b16 %v2371, %v2367
    %v3420 = vpack.c.b16 %v2372, %v2368
    %v3421 = vpack.c.b16 %v2377, %v2373
    %v3422 = vpack.c.b16 %v2378, %v2374
    %v3423 = vpack.c.b16 %v2379, %v2375
    %v3424 = vpack.c.b16 %v2380, %v2376
    %v3425 = vpack.c.b16 %v2385, %v2381
    %v3426 = vpack.c.b16 %v2386, %v2382
    %v3427 = vpack.c.b16 %v2387, %v2383
    %v3428 = vpack.c.b16 %v2388, %v2384
    %v3429 = vpack.c.b16 %v2393, %v2389
    %v3430 = vpack.c.b16 %v2394, %v2390
    %v3431 = vpack.c.b16 %v2395, %v2391
    %v3432 = vpack.c.b16 %v2396, %v2392
    %v3433 = vpack.c.b16 %v2401, %v2397
    %v3434 = vpack.c.b16 %v2402, %v2398
    %v3435 = vpack.c.b16 %v2403, %v2399
    %v3436 = vpack.c.b16 %v2404, %v2400
    %v3437 = vpack.c.b16 %v2409, %v2405
    %v3438 = vpack.c.b16 %v2410, %v2406
    %v3439 = vpack.c.b16 %v2411, %v2407
    %v3440 = vpack.c.b16 %v2412, %v2408
    %v3441 = vpack.c.b16 %v2417, %v2413
    %v3442 = vpack.c.b16 %v2418, %v2414
    %v3443 = vpack.c.b16 %v2419, %v2415
    %v3444 = vpack.c.b16 %v2420, %v2416
    %v3445 = vpack.c.b16 %v2425, %v2421
    %v3446 = vpack.c.b16 %v2426, %v2422
    %v3447 = vpack.c.b16 %v2427, %v2423
    %v3448 = vpack.c.b16 %v2428, %v2424
    %v3449 = vpack.c.b16 %v2433, %v2429
    %v3450 = vpack.c.b16 %v2434, %v2430
    %v3451 = vpack.c.b16 %v2435, %v2431
    %v3452 = vpack.c.b16 %v2436, %v2432
    %v3453 = vpack.c.b16 %v2441, %v2437
    %v3454 = vpack.c.b16 %v2442, %v2438
    %v3455 = vpack.c.b16 %v2443, %v2439
    %v3456 = vpack.c.b16 %v2444, %v2440
    %v3457 = vpack.c.b16 %v2449, %v2445
    %v3458 = vpack.c.b16 %v2450, %v2446
    %v3459 = vpack.c.b16 %v2451, %v2447
    %v3460 = vpack.c.b16 %v2452, %v2448
    %v3461 = vpack.c.b16 %v2457, %v2453
    %v3462 = vpack.c.b16 %v2458, %v2454
    %v3463 = vpack.c.b16 %v2459, %v2455
    %v3464 = vpack.c.b16 %v2460, %v2456
    %v3465 = vpack.c.b16 %v2465, %v2461
    %v3466 = vpack.c.b16 %v2466, %v2462
    %v3467 = vpack.c.b16 %v2467, %v2463
    %v3468 = vpack.c.b16 %v2468, %v2464
    %v3469 = vpack.c.b16 %v2473, %v2469
    %v3470 = vpack.c.b16 %v2474, %v2470
    %v3471 = vpack.c.b16 %v2475, %v2471
    %v3472 = vpack.c.b16 %v2476, %v2472
    %v3473 = vpack.c.b16 %v2481, %v2477
    %v3474 = vpack.c.b16 %v2482, %v2478
    %v3475 = vpack.c.b16 %v2483, %v2479
    %v3476 = vpack.c.b16 %v2484, %v2480
    %v3477 = vpack.c.b16 %v2489, %v2485
    %v3478 = vpack.c.b16 %v2490, %v2486
    %v3479 = vpack.c.b16 %v2491, %v2487
    %v3480 = vpack.c.b16 %v2492, %v2488
    %v3481 = vpack.c.b16 %v2497, %v2493
    %v3482 = vpack.c.b16 %v2498, %v2494
    %v3483 = vpack.c.b16 %v2499, %v2495
    %v3484 = vpack.c.b16 %v2500, %v2496
    %v3485 = vpack.c.b16 %v2505, %v2501
    %v3486 = vpack.c.b16 %v2506, %v2502
    %v3487 = vpack.c.b16 %v2507, %v2503
    %v3488 = vpack.c.b16 %v2508, %v2504
    %v3489 = vpack.c.b16 %v2513, %v2509
    %v3490 = vpack.c.b16 %v2514, %v2510
    %v3491 = vpack.c.b16 %v2515, %v2511
    %v3492 = vpack.c.b16 %v2516, %v2512
    %v3493 = vpack.c.b16 %v2521, %v2517
    %v3494 = vpack.c.b16 %v2522, %v2518
    %v3495 = vpack.c.b16 %v2523, %v2519
    %v3496 = vpack.c.b16 %v2524, %v2520
    %v3497 = vpack.c.b16 %v2529, %v2525
    %v3498 = vpack.c.b16 %v2530, %v2526
    %v3499 = vpack.c.b16 %v2531, %v2527
    %v3500 = vpack.c.b16 %v2532, %v2528
    %v3501 = vpack.c.b16 %v2537, %v2533
    %v3502 = vpack.c.b16 %v2538, %v2534
    %v3503 = vpack.c.b16 %v2539, %v2535
    %v3504 = vpack.c.b16 %v2540, %v2536
    %v3505 = vpack.c.b16 %v2545, %v2541
    %v3506 = vpack.c.b16 %v2546, %v2542
    %v3507 = vpack.c.b16 %v2547, %v2543
    %v3508 = vpack.c.b16 %v2548, %v2544
    %v3509 = vpack.c.b16 %v2553, %v2549
    %v3510 = vpack.c.b16 %v2554, %v2550
    %v3511 = vpack.c.b16 %v2555, %v2551
    %v3512 = vpack.c.b16 %v2556, %v2552
    %v3513 = vpack.c.b16 %v2561, %v2557
    %v3514 = vpack.c.b16 %v2562, %v2558
    %v3515 = vpack.c.b16 %v2563, %v2559
    %v3516 = vpack.c.b16 %v2564, %v2560
    %v3517 = vpack.c.b16 %v2569, %v2565
    %v3518 = vpack.c.b16 %v2570, %v2566
    %v3519 = vpack.c.b16 %v2571, %v2567
    %v3520 = vpack.c.b16 %v2572, %v2568
    %v3521 = vpack.c.b16 %v2577, %v2573
    %v3522 = vpack.c.b16 %v2578, %v2574
    %v3523 = vpack.c.b16 %v2579, %v2575
    %v3524 = vpack.c.b16 %v2580, %v2576
    %v3525 = vpack.c.b16 %v2585, %v2581
    %v3526 = vpack.c.b16 %v2586, %v2582
    %v3527 = vpack.c.b16 %v2587, %v2583
    %v3528 = vpack.c.b16 %v2588, %v2584
    %v3529 = vpack.c.b16 %v2593, %v2589
    %v3530 = vpack.c.b16 %v2594, %v2590
    %v3531 = vpack.c.b16 %v2595, %v2591
    %v3532 = vpack.c.b16 %v2596, %v2592
    %v3533 = vpack.c.b16 %v2601, %v2597
    %v3534 = vpack.c.b16 %v2602, %v2598
    %v3535 = vpack.c.b16 %v2603, %v2599
    %v3536 = vpack.c.b16 %v2604, %v2600
    %v3537 = vpack.c.b16 %v2609, %v2605
    %v3538 = vpack.c.b16 %v2610, %v2606
    %v3539 = vpack.c.b16 %v2611, %v2607
    %v3540 = vpack.c.b16 %v2612, %v2608
    %v3541 = vpack.c.b16 %v2617, %v2613
    %v3542 = vpack.c.b16 %v2618, %v2614
    %v3543 = vpack.c.b16 %v2619, %v2615
    %v3544 = vpack.c.b16 %v2620, %v2616
    %v3545 = vpack.c.b16 %v2625, %v2621
    %v3546 = vpack.c.b16 %v2626, %v2622
    %v3547 = vpack.c.b16 %v2627, %v2623
    %v3548 = vpack.c.b16 %v2628, %v2624
    %v3549 = vpack.c.b16 %v2633, %v2629
    %v3550 = vpack.c.b16 %v2634, %v2630
    %v3551 = vpack.c.b16 %v2635, %v2631
    %v3552 = vpack.c.b16 %v2636, %v2632
    %v3553 = vpack.c.b16 %v2641, %v2637
    %v3554 = vpack.c.b16 %v2642, %v2638
    %v3555 = vpack.c.b16 %v2643, %v2639
    %v3556 = vpack.c.b16 %v2644, %v2640
    %v3557 = vpack.c.b16 %v2649, %v2645
    %v3558 = vpack.c.b16 %v2650, %v2646
    %v3559 = vpack.c.b16 %v2651, %v2647
    %v3560 = vpack.c.b16 %v2652, %v2648
    %v3561 = vpack.c.b16 %v2657, %v2653
    %v3562 = vpack.c.b16 %v2658, %v2654
    %v3563 = vpack.c.b16 %v2659, %v2655
    %v3564 = vpack.c.b16 %v2660, %v2656
    %v3565 = vpack.c.b16 %v2665, %v2661
    %v3566 = vpack.c.b16 %v2666, %v2662
    %v3567 = vpack.c.b16 %v2667, %v2663
    %v3568 = vpack.c.b16 %v2668, %v2664
    %v3569 = vpack.c.b16 %v2673, %v2669
    %v3570 = vpack.c.b16 %v2674, %v2670
    %v3571 = vpack.c.b16 %v2675, %v2671
    %v3572 = vpack.c.b16 %v2676, %v2672
    %v3573 = vpack.c.b16 %v2681, %v2677
    %v3574 = vpack.c.b16 %v2682, %v2678
    %v3575 = vpack.c.b16 %v2683, %v2679
    %v3576 = vpack.c.b16 %v2684, %v2680
    %v3577 = vpack.c.b16 %v2689, %v2685
    %v3578 = vpack.c.b16 %v2690, %v2686
    %v3579 = vpack.c.b16 %v2691, %v2687
    %v3580 = vpack.c.b16 %v2692, %v2688
    %v3581 = vpack.c.b16 %v2697, %v2693
    %v3582 = vpack.c.b16 %v2698, %v2694
    %v3583 = vpack.c.b16 %v2699, %v2695
    %v3584 = vpack.c.b16 %v2700, %v2696
    %v3585 = vpack.c.b16 %v2705, %v2701
    %v3586 = vpack.c.b16 %v2706, %v2702
    %v3587 = vpack.c.b16 %v2707, %v2703
    %v3588 = vpack.c.b16 %v2708, %v2704
    %v3589 = vpack.c.b16 %v2713, %v2709
    %v3590 = vpack.c.b16 %v2714, %v2710
    %v3591 = vpack.c.b16 %v2715, %v2711
    %v3592 = vpack.c.b16 %v2716, %v2712
    %v3593 = vpack.c.b16 %v2721, %v2717
    %v3594 = vpack.c.b16 %v2722, %v2718
    %v3595 = vpack.c.b16 %v2723, %v2719
    %v3596 = vpack.c.b16 %v2724, %v2720
    %v3597 = vpack.c.b16 %v2729, %v2725
    %v3598 = vpack.c.b16 %v2730, %v2726
    %v3599 = vpack.c.b16 %v2731, %v2727
    %v3600 = vpack.c.b16 %v2732, %v2728
    %v3601 = vpack.c.b16 %v2737, %v2733
    %v3602 = vpack.c.b16 %v2738, %v2734
    %v3603 = vpack.c.b16 %v2739, %v2735
    %v3604 = vpack.c.b16 %v2740, %v2736
    %v3605 = vpack.c.b16 %v2745, %v2741
    %v3606 = vpack.c.b16 %v2746, %v2742
    %v3607 = vpack.c.b16 %v2747, %v2743
    %v3608 = vpack.c.b16 %v2748, %v2744
    %v3609 = vpack.c.b16 %v2753, %v2749
    %v3610 = vpack.c.b16 %v2754, %v2750
    %v3611 = vpack.c.b16 %v2755, %v2751
    %v3612 = vpack.c.b16 %v2756, %v2752
    %v3613 = vpack.c.b16 %v2761, %v2757
    %v3614 = vpack.c.b16 %v2762, %v2758
    %v3615 = vpack.c.b16 %v2763, %v2759
    %v3616 = vpack.c.b16 %v2764, %v2760
    %v3617 = vpack.c.b16 %v2769, %v2765
    %v3618 = vpack.c.b16 %v2770, %v2766
    %v3619 = vpack.c.b16 %v2771, %v2767
    %v3620 = vpack.c.b16 %v2772, %v2768
    %v3621 = vpack.c.b16 %v2777, %v2773
    %v3622 = vpack.c.b16 %v2778, %v2774
    %v3623 = vpack.c.b16 %v2779, %v2775
    %v3624 = vpack.c.b16 %v2780, %v2776
    %v3625 = vpack.c.b16 %v2785, %v2781
    %v3626 = vpack.c.b16 %v2786, %v2782
    %v3627 = vpack.c.b16 %v2787, %v2783
    %v3628 = vpack.c.b16 %v2788, %v2784
    %v3629 = vpack.c.b16 %v2793, %v2789
    %v3630 = vpack.c.b16 %v2794, %v2790
    %v3631 = vpack.c.b16 %v2795, %v2791
    %v3632 = vpack.c.b16 %v2796, %v2792
    %v3633 = vpack.c.b16 %v2801, %v2797
    %v3634 = vpack.c.b16 %v2802, %v2798
    %v3635 = vpack.c.b16 %v2803, %v2799
    %v3636 = vpack.c.b16 %v2804, %v2800
    %v3637 = vpack.c.b16 %v2809, %v2805
    %v3638 = vpack.c.b16 %v2810, %v2806
    %v3639 = vpack.c.b16 %v2811, %v2807
    %v3640 = vpack.c.b16 %v2812, %v2808
    %v3641 = vpack.c.b16 %v2817, %v2813
    %v3642 = vpack.c.b16 %v2818, %v2814
    %v3643 = vpack.c.b16 %v2819, %v2815
    %v3644 = vpack.c.b16 %v2820, %v2816
    %v3645 = vpack.c.b16 %v2825, %v2821
    %v3646 = vpack.c.b16 %v2826, %v2822
    %v3647 = vpack.c.b16 %v2827, %v2823
    %v3648 = vpack.c.b16 %v2828, %v2824
    %v3649 = vpack.c.b16 %v2833, %v2829
    %v3650 = vpack.c.b16 %v2834, %v2830
    %v3651 = vpack.c.b16 %v2835, %v2831
    %v3652 = vpack.c.b16 %v2836, %v2832
    %v3653 = vpack.c.b16 %v2841, %v2837
    %v3654 = vpack.c.b16 %v2842, %v2838
    %v3655 = vpack.c.b16 %v2843, %v2839
    %v3656 = vpack.c.b16 %v2844, %v2840
    %v3657 = vpack.c.b16 %v2849, %v2845
    %v3658 = vpack.c.b16 %v2850, %v2846
    %v3659 = vpack.c.b16 %v2851, %v2847
    %v3660 = vpack.c.b16 %v2852, %v2848
    %v3661 = vpack.c.b16 %v2857, %v2853
    %v3662 = vpack.c.b16 %v2858, %v2854
    %v3663 = vpack.c.b16 %v2859, %v2855
    %v3664 = vpack.c.b16 %v2860, %v2856
    %v3665 = vpack.c.b16 %v2865, %v2861
    %v3666 = vpack.c.b16 %v2866, %v2862
    %v3667 = vpack.c.b16 %v2867, %v2863
    %v3668 = vpack.c.b16 %v2868, %v2864
    %v3669 = vpack.c.b16 %v2873, %v2869
    %v3670 = vpack.c.b16 %v2874, %v2870
    %v3671 = vpack.c.b16 %v2875, %v2871
    %v3672 = vpack.c.b16 %v2876, %v2872
    %v3673 = vpack.c.b16 %v2881, %v2877
    %v3674 = vpack.c.b16 %v2882, %v2878
    %v3675 = vpack.c.b16 %v2883, %v2879
    %v3676 = vpack.c.b16 %v2884, %v2880
    %v3677 = vpack.c.b16 %v2889, %v2885
    %v3678 = vpack.c.b16 %v2890, %v2886
    %v3679 = vpack.c.b16 %v2891, %v2887
    %v3680 = vpack.c.b16 %v2892, %v2888
    %v3681 = vpack.c.b16 %v2897, %v2893
    %v3682 = vpack.c.b16 %v2898, %v2894
    %v3683 = vpack.c.b16 %v2899, %v2895
    %v3684 = vpack.c.b16 %v2900, %v2896
    %v3685 = vpack.c.b16 %v2905, %v2901
    %v3686 = vpack.c.b16 %v2906, %v2902
    %v3687 = vpack.c.b16 %v2907, %v2903
    %v3688 = vpack.c.b16 %v2908, %v2904
    %v3689 = vpack.c.b16 %v2913, %v2909
    %v3690 = vpack.c.b16 %v2914, %v2910
    %v3691 = vpack.c.b16 %v2915, %v2911
    %v3692 = vpack.c.b16 %v2916, %v2912
    %v3693 = vpack.c.b16 %v2921, %v2917
    %v3694 = vpack.c.b16 %v2922, %v2918
    %v3695 = vpack.c.b16 %v2923, %v2919
    %v3696 = vpack.c.b16 %v2924, %v2920
    %v3697 = vpack.c.b16 %v2929, %v2925
    %v3698 = vpack.c.b16 %v2930, %v2926
    %v3699 = vpack.c.b16 %v2931, %v2927
    %v3700 = vpack.c.b16 %v2932, %v2928
    %v3701 = vpack.c.b16 %v2937, %v2933
    %v3702 = vpack.c.b16 %v2938, %v2934
    %v3703 = vpack.c.b16 %v2939, %v2935
    %v3704 = vpack.c.b16 %v2940, %v2936
    %v3705 = vpack.c.b16 %v2945, %v2941
    %v3706 = vpack.c.b16 %v2946, %v2942
    %v3707 = vpack.c.b16 %v2947, %v2943
    %v3708 = vpack.c.b16 %v2948, %v2944
    %v3709 = vpack.c.b16 %v2953, %v2949
    %v3710 = vpack.c.b16 %v2954, %v2950
    %v3711 = vpack.c.b16 %v2955, %v2951
    %v3712 = vpack.c.b16 %v2956, %v2952
    %v3713 = vpack.c.b16 %v2961, %v2957
    %v3714 = vpack.c.b16 %v2962, %v2958
    %v3715 = vpack.c.b16 %v2963, %v2959
    %v3716 = vpack.c.b16 %v2964, %v2960
    %v3717 = vpack.c.b16 %v2969, %v2965
    %v3718 = vpack.c.b16 %v2970, %v2966
    %v3719 = vpack.c.b16 %v2971, %v2967
    %v3720 = vpack.c.b16 %v2972, %v2968
    %v3721 = vpack.c.b16 %v2977, %v2973
    %v3722 = vpack.c.b16 %v2978, %v2974
    %v3723 = vpack.c.b16 %v2979, %v2975
    %v3724 = vpack.c.b16 %v2980, %v2976
    %v3725 = vpack.c.b16 %v2985, %v2981
    %v3726 = vpack.c.b16 %v2986, %v2982
    %v3727 = vpack.c.b16 %v2987, %v2983
    %v3728 = vpack.c.b16 %v2988, %v2984
    %v3729 = vpack.c.b16 %v2993, %v2989
    %v3730 = vpack.c.b16 %v2994, %v2990
    %v3731 = vpack.c.b16 %v2995, %v2991
    %v3732 = vpack.c.b16 %v2996, %v2992
    %v3733 = vpack.c.b16 %v3001, %v2997
    %v3734 = vpack.c.b16 %v3002, %v2998
    %v3735 = vpack.c.b16 %v3003, %v2999
    %v3736 = vpack.c.b16 %v3004, %v3000
    %v3737 = vpack.c.b16 %v3009, %v3005
    %v3738 = vpack.c.b16 %v3010, %v3006
    %v3739 = vpack.c.b16 %v3011, %v3007
    %v3740 = vpack.c.b16 %v3012, %v3008
    %v3741 = vpack.c.b16 %v3017, %v3013
    %v3742 = vpack.c.b16 %v3018, %v3014
    %v3743 = vpack.c.b16 %v3019, %v3015
    %v3744 = vpack.c.b16 %v3020, %v3016
    %v3745 = vpack.c.b16 %v3025, %v3021
    %v3746 = vpack.c.b16 %v3026, %v3022
    %v3747 = vpack.c.b16 %v3027, %v3023
    %v3748 = vpack.c.b16 %v3028, %v3024
    %v3749 = vpack.c.b16 %v3033, %v3029
    %v3750 = vpack.c.b16 %v3034, %v3030
    %v3751 = vpack.c.b16 %v3035, %v3031
    %v3752 = vpack.c.b16 %v3036, %v3032
    %v3753 = vpack.c.b16 %v3041, %v3037
    %v3754 = vpack.c.b16 %v3042, %v3038
    %v3755 = vpack.c.b16 %v3043, %v3039
    %v3756 = vpack.c.b16 %v3044, %v3040
    %v3757 = vpack.c.b16 %v3049, %v3045
    %v3758 = vpack.c.b16 %v3050, %v3046
    %v3759 = vpack.c.b16 %v3051, %v3047
    %v3760 = vpack.c.b16 %v3052, %v3048
    %v3761 = vpack.c.b16 %v3057, %v3053
    %v3762 = vpack.c.b16 %v3058, %v3054
    %v3763 = vpack.c.b16 %v3059, %v3055
    %v3764 = vpack.c.b16 %v3060, %v3056
    %v3765 = vpack.c.b16 %v3065, %v3061
    %v3766 = vpack.c.b16 %v3066, %v3062
    %v3767 = vpack.c.b16 %v3067, %v3063
    %v3768 = vpack.c.b16 %v3068, %v3064
    %vm4469 = vcmask 916480
    %v4471 = vsel %vm4469, %v947, 0
    %4473 = vmatprep.subr.bf16.mxu0 %v3070
    %4474 = vmatpush1.bf16.msra.mxu0 %v3069
    %4475 = vmatprep.subr.bf16.mxu0 %v3074
    %4476 = vmatpush1.bf16.msra.mxu0 %v3073
    %4477 = vmatprep.subr.bf16.mxu0 %v3078
    %4478 = vmatpush1.bf16.msra.mxu0 %v3077
    %4479 = vmatprep.subr.bf16.mxu0 %v3082
    %4480 = vmatpush1.bf16.msra.mxu0 %v3081
    %4481 = vmatprep.subr.bf16.mxu0 %v3086
    %4482 = vmatpush1.bf16.msra.mxu0 %v3085
    %4483 = vmatprep.subr.bf16.mxu0 %v3090
    %4484 = vmatpush1.bf16.msra.mxu0 %v3089
    %4485 = vmatprep.subr.bf16.mxu0 %v3094
    %4486 = vmatpush1.bf16.msra.mxu0 %v3093
    %4487 = vmatprep.subr.bf16.mxu0 %v3098
    %4488 = vmatpush1.bf16.msra.mxu0 %v3097
    %4489 = vmatprep.subr.bf16.mxu0 %v3102
    %4490 = vmatpush1.bf16.msra.mxu0 %v3101
    %4491 = vmatprep.subr.bf16.mxu0 %v3106
    %4492 = vmatpush1.bf16.msra.mxu0 %v3105
    %4493 = vmatprep.subr.bf16.mxu0 %v3110
    %4494 = vmatpush1.bf16.msra.mxu0 %v3109
    %4495 = vmatprep.subr.bf16.mxu0 %v3114
    %4496 = vmatpush1.bf16.msra.mxu0 %v3113
    %4497 = vmatprep.subr.bf16.mxu0 %v3118
    %4498 = vmatpush1.bf16.msra.mxu0 %v3117
    %4499 = vmatprep.subr.bf16.mxu0 %v3122
    %4500 = vmatpush1.bf16.msra.mxu0 %v3121
    %4501 = vmatprep.subr.bf16.mxu0 %v3126
    %4502 = vmatpush1.bf16.msra.mxu0 %v3125
    %4503 = vmatprep.subr.bf16.mxu0 %v3130
    %4504 = vmatpush1.bf16.msra.mxu0 %v3129
    %4505 = vmatprep.mubr.bf16.mxu0 %v927
    %4506 = vmatmul.mubr.bf16.gmra.mrb[0].mxu0 %v926
    %v4507 = vpop.f32.mrb[0].mxu0
    %v4508 = vadd.f32 %v876, %v4507
    %v4509 = vpop.f32.mrb[0].mxu0
    %v4510 = vadd.f32 %v880, %v4509
    %v4511 = vpop.f32.mrb[0].mxu0
    %v4512 = vpop.f32.mrb[0].mxu0
    %4513 = vdwg.mxu0
    %4514 = vmatprep.subr.bf16.mxu0 %v3134
    %4515 = vmatpush1.bf16.msra.mxu0 %v3133
    %4516 = vmatprep.subr.bf16.mxu0 %v3138
    %4517 = vmatpush1.bf16.msra.mxu0 %v3137
    %4518 = vmatprep.subr.bf16.mxu0 %v3142
    %4519 = vmatpush1.bf16.msra.mxu0 %v3141
    %4520 = vmatprep.subr.bf16.mxu0 %v3146
    %4521 = vmatpush1.bf16.msra.mxu0 %v3145
    %4522 = vmatprep.subr.bf16.mxu0 %v3150
    %4523 = vmatpush1.bf16.msra.mxu0 %v3149
    %4524 = vmatprep.subr.bf16.mxu0 %v3154
    %4525 = vmatpush1.bf16.msra.mxu0 %v3153
    %4526 = vmatprep.subr.bf16.mxu0 %v3158
    %4527 = vmatpush1.bf16.msra.mxu0 %v3157
    %4528 = vmatprep.subr.bf16.mxu0 %v3162
    %4529 = vmatpush1.bf16.msra.mxu0 %v3161
    %4530 = vmatprep.subr.bf16.mxu0 %v3166
    %4531 = vmatpush1.bf16.msra.mxu0 %v3165
    %4532 = vmatprep.subr.bf16.mxu0 %v3170
    %4533 = vmatpush1.bf16.msra.mxu0 %v3169
    %4534 = vmatprep.subr.bf16.mxu0 %v3174
    %4535 = vmatpush1.bf16.msra.mxu0 %v3173
    %4536 = vmatprep.subr.bf16.mxu0 %v3178
    %4537 = vmatpush1.bf16.msra.mxu0 %v3177
    %4538 = vmatprep.subr.bf16.mxu0 %v3182
    %4539 = vmatpush1.bf16.msra.mxu0 %v3181
    %4540 = vmatprep.subr.bf16.mxu0 %v3186
    %4541 = vmatpush1.bf16.msra.mxu0 %v3185
    %4542 = vmatprep.subr.bf16.mxu0 %v3190
    %4543 = vmatpush1.bf16.msra.mxu0 %v3189
    %4544 = vmatprep.subr.bf16.mxu0 %v3194
    %4545 = vmatpush1.bf16.msra.mxu0 %v3193
    %4546 = vmatprep.mubr.bf16.mxu0 %v929
    %4547 = vmatmul.mubr.bf16.gmra.mrb[0].mxu0 %v928
    %v4548 = vpop.f32.mrb[0].mxu0
    %v4549 = vadd.f32 %v4508, %v4548
    %v4550 = vpop.f32.mrb[0].mxu0
    %v4551 = vadd.f32 %v4510, %v4550
    %v4552 = vpop.f32.mrb[0].mxu0
    %v4553 = vpop.f32.mrb[0].mxu0
    %4554 = vdwg.mxu0
    %4555 = vmatprep.subr.bf16.mxu0 %v3198
    %4556 = vmatpush1.bf16.msra.mxu0 %v3197
    %4557 = vmatprep.subr.bf16.mxu0 %v3202
    %4558 = vmatpush1.bf16.msra.mxu0 %v3201
    %4559 = vmatprep.subr.bf16.mxu0 %v3206
    %4560 = vmatpush1.bf16.msra.mxu0 %v3205
    %4561 = vmatprep.subr.bf16.mxu0 %v3210
    %4562 = vmatpush1.bf16.msra.mxu0 %v3209
    %4563 = vmatprep.subr.bf16.mxu0 %v3214
    %4564 = vmatpush1.bf16.msra.mxu0 %v3213
    %4565 = vmatprep.subr.bf16.mxu0 %v3218
    %4566 = vmatpush1.bf16.msra.mxu0 %v3217
    %4567 = vmatprep.subr.bf16.mxu0 %v3222
    %4568 = vmatpush1.bf16.msra.mxu0 %v3221
    %4569 = vmatprep.subr.bf16.mxu0 %v3226
    %4570 = vmatpush1.bf16.msra.mxu0 %v3225
    %4571 = vmatprep.subr.bf16.mxu0 %v3230
    %4572 = vmatpush1.bf16.msra.mxu0 %v3229
    %4573 = vmatprep.subr.bf16.mxu0 %v3234
    %4574 = vmatpush1.bf16.msra.mxu0 %v3233
    %4575 = vmatprep.subr.bf16.mxu0 %v3238
    %4576 = vmatpush1.bf16.msra.mxu0 %v3237
    %4577 = vmatprep.subr.bf16.mxu0 %v3242
    %4578 = vmatpush1.bf16.msra.mxu0 %v3241
    %4579 = vmatprep.subr.bf16.mxu0 %v3246
    %4580 = vmatpush1.bf16.msra.mxu0 %v3245
    %4581 = vmatprep.subr.bf16.mxu0 %v3250
    %4582 = vmatpush1.bf16.msra.mxu0 %v3249
    %4583 = vmatprep.subr.bf16.mxu0 %v3254
    %4584 = vmatpush1.bf16.msra.mxu0 %v3253
    %4585 = vmatprep.subr.bf16.mxu0 %v3258
    %4586 = vmatpush1.bf16.msra.mxu0 %v3257
    %4587 = vmatprep.mubr.bf16.mxu0 %v931
    %4588 = vmatmul.mubr.bf16.gmra.mrb[0].mxu0 %v930
    %v4589 = vpop.f32.mrb[0].mxu0
    %v4590 = vadd.f32 %v4549, %v4589
    %v4591 = vpop.f32.mrb[0].mxu0
    %v4592 = vadd.f32 %v4551, %v4591
    %v4593 = vpop.f32.mrb[0].mxu0
    %v4594 = vpop.f32.mrb[0].mxu0
    %4595 = vdwg.mxu0
    %4596 = vmatprep.subr.bf16.mxu0 %v3262
    %4597 = vmatpush1.bf16.msra.mxu0 %v3261
    %4598 = vmatprep.subr.bf16.mxu0 %v3266
    %4599 = vmatpush1.bf16.msra.mxu0 %v3265
    %4600 = vmatprep.subr.bf16.mxu0 %v3270
    %4601 = vmatpush1.bf16.msra.mxu0 %v3269
    %4602 = vmatprep.subr.bf16.mxu0 %v3274
    %4603 = vmatpush1.bf16.msra.mxu0 %v3273
    %4604 = vmatprep.subr.bf16.mxu0 %v3278
    %4605 = vmatpush1.bf16.msra.mxu0 %v3277
    %4606 = vmatprep.subr.bf16.mxu0 %v3282
    %4607 = vmatpush1.bf16.msra.mxu0 %v3281
    %4608 = vmatprep.subr.bf16.mxu0 %v3286
    %4609 = vmatpush1.bf16.msra.mxu0 %v3285
    %4610 = vmatprep.subr.bf16.mxu0 %v3290
    %4611 = vmatpush1.bf16.msra.mxu0 %v3289
    %4612 = vmatprep.subr.bf16.mxu0 %v3294
    %4613 = vmatpush1.bf16.msra.mxu0 %v3293
    %4614 = vmatprep.subr.bf16.mxu0 %v3298
    %4615 = vmatpush1.bf16.msra.mxu0 %v3297
    %4616 = vmatprep.subr.bf16.mxu0 %v3302
    %4617 = vmatpush1.bf16.msra.mxu0 %v3301
    %4618 = vmatprep.subr.bf16.mxu0 %v3306
    %4619 = vmatpush1.bf16.msra.mxu0 %v3305
    %4620 = vmatprep.subr.bf16.mxu0 %v3310
    %4621 = vmatpush1.bf16.msra.mxu0 %v3309
    %4622 = vmatprep.subr.bf16.mxu0 %v3314
    %4623 = vmatpush1.bf16.msra.mxu0 %v3313
    %4624 = vmatprep.subr.bf16.mxu0 %v3318
    %4625 = vmatpush1.bf16.msra.mxu0 %v3317
    %4626 = vmatprep.subr.bf16.mxu0 %v3322
    %4627 = vmatpush1.bf16.msra.mxu0 %v3321
    %4628 = vmatprep.mubr.bf16.mxu0 %v933
    %4629 = vmatmul.mubr.bf16.gmra.mrb[0].mxu0 %v932
    %v4630 = vpop.f32.mrb[0].mxu0
    %v4631 = vadd.f32 %v4590, %v4630
    %v4632 = vpop.f32.mrb[0].mxu0
    %v4633 = vadd.f32 %v4592, %v4632
    %v4634 = vpop.f32.mrb[0].mxu0
    %v4635 = vpop.f32.mrb[0].mxu0
    %4636 = vdwg.mxu0
    %4637 = vmatprep.subr.bf16.mxu0 %v3326
    %4638 = vmatpush1.bf16.msra.mxu0 %v3325
    %4639 = vmatprep.subr.bf16.mxu0 %v3330
    %4640 = vmatpush1.bf16.msra.mxu0 %v3329
    %4641 = vmatprep.subr.bf16.mxu0 %v3334
    %4642 = vmatpush1.bf16.msra.mxu0 %v3333
    %4643 = vmatprep.subr.bf16.mxu0 %v3338
    %4644 = vmatpush1.bf16.msra.mxu0 %v3337
    %4645 = vmatprep.subr.bf16.mxu0 %v3342
    %4646 = vmatpush1.bf16.msra.mxu0 %v3341
    %4647 = vmatprep.subr.bf16.mxu0 %v3346
    %4648 = vmatpush1.bf16.msra.mxu0 %v3345
    %4649 = vmatprep.subr.bf16.mxu0 %v3350
    %4650 = vmatpush1.bf16.msra.mxu0 %v3349
    %4651 = vmatprep.subr.bf16.mxu0 %v3354
    %4652 = vmatpush1.bf16.msra.mxu0 %v3353
    %4653 = vmatprep.subr.bf16.mxu0 %v3358
    %4654 = vmatpush1.bf16.msra.mxu0 %v3357
    %4655 = vmatprep.subr.bf16.mxu0 %v3362
    %4656 = vmatpush1.bf16.msra.mxu0 %v3361
    %4657 = vmatprep.subr.bf16.mxu0 %v3366
    %4658 = vmatpush1.bf16.msra.mxu0 %v3365
    %4659 = vmatprep.subr.bf16.mxu0 %v3370
    %4660 = vmatpush1.bf16.msra.mxu0 %v3369
    %4661 = vmatprep.subr.bf16.mxu0 %v3374
    %4662 = vmatpush1.bf16.msra.mxu0 %v3373
    %4663 = vmatprep.subr.bf16.mxu0 %v3378
    %4664 = vmatpush1.bf16.msra.mxu0 %v3377
    %4665 = vmatprep.subr.bf16.mxu0 %v3382
    %4666 = vmatpush1.bf16.msra.mxu0 %v3381
    %4667 = vmatprep.subr.bf16.mxu0 %v3386
    %4668 = vmatpush1.bf16.msra.mxu0 %v3385
    %4669 = vmatprep.mubr.bf16.mxu0 %v935
    %4670 = vmatmul.mubr.bf16.gmra.mrb[0].mxu0 %v934
    %v4671 = vpop.f32.mrb[0].mxu0
    %v4672 = vadd.f32 %v4631, %v4671
    %v4673 = vpop.f32.mrb[0].mxu0
    %v4674 = vadd.f32 %v4633, %v4673
    %v4675 = vpop.f32.mrb[0].mxu0
    %v4676 = vpop.f32.mrb[0].mxu0
    %4677 = vdwg.mxu0
    %4678 = vmatprep.subr.bf16.mxu0 %v3390
    %4679 = vmatpush1.bf16.msra.mxu0 %v3389
    %4680 = vmatprep.subr.bf16.mxu0 %v3394
    %4681 = vmatpush1.bf16.msra.mxu0 %v3393
    %4682 = vmatprep.subr.bf16.mxu0 %v3398
    %4683 = vmatpush1.bf16.msra.mxu0 %v3397
    %4684 = vmatprep.subr.bf16.mxu0 %v3402
    %4685 = vmatpush1.bf16.msra.mxu0 %v3401
    %4686 = vmatprep.subr.bf16.mxu0 %v3406
    %4687 = vmatpush1.bf16.msra.mxu0 %v3405
    %4688 = vmatprep.subr.bf16.mxu0 %v3410
    %4689 = vmatpush1.bf16.msra.mxu0 %v3409
    %4690 = vmatprep.subr.bf16.mxu0 %v3414
    %4691 = vmatpush1.bf16.msra.mxu0 %v3413
    %4692 = vmatprep.subr.bf16.mxu0 %v3418
    %4693 = vmatpush1.bf16.msra.mxu0 %v3417
    %4694 = vmatprep.subr.bf16.mxu0 %v3422
    %4695 = vmatpush1.bf16.msra.mxu0 %v3421
    %4696 = vmatprep.subr.bf16.mxu0 %v3426
    %4697 = vmatpush1.bf16.msra.mxu0 %v3425
    %4698 = vmatprep.subr.bf16.mxu0 %v3430
    %4699 = vmatpush1.bf16.msra.mxu0 %v3429
    %4700 = vmatprep.subr.bf16.mxu0 %v3434
    %4701 = vmatpush1.bf16.msra.mxu0 %v3433
    %4702 = vmatprep.subr.bf16.mxu0 %v3438
    %4703 = vmatpush1.bf16.msra.mxu0 %v3437
    %4704 = vmatprep.subr.bf16.mxu0 %v3442
    %4705 = vmatpush1.bf16.msra.mxu0 %v3441
    %4706 = vmatprep.subr.bf16.mxu0 %v3446
    %4707 = vmatpush1.bf16.msra.mxu0 %v3445
    %4708 = vmatprep.subr.bf16.mxu0 %v3450
    %4709 = vmatpush1.bf16.msra.mxu0 %v3449
    %4710 = vmatprep.mubr.bf16.mxu0 %v937
    %4711 = vmatmul.mubr.bf16.gmra.mrb[0].mxu0 %v936
    %v4712 = vpop.f32.mrb[0].mxu0
    %v4713 = vadd.f32 %v4672, %v4712
    %v4714 = vpop.f32.mrb[0].mxu0
    %v4715 = vadd.f32 %v4674, %v4714
    %v4716 = vpop.f32.mrb[0].mxu0
    %v4717 = vpop.f32.mrb[0].mxu0
    %4718 = vdwg.mxu0
    %4719 = vmatprep.subr.bf16.mxu0 %v3454
    %4720 = vmatpush1.bf16.msra.mxu0 %v3453
    %4721 = vmatprep.subr.bf16.mxu0 %v3458
    %4722 = vmatpush1.bf16.msra.mxu0 %v3457
    %4723 = vmatprep.subr.bf16.mxu0 %v3462
    %4724 = vmatpush1.bf16.msra.mxu0 %v3461
    %4725 = vmatprep.subr.bf16.mxu0 %v3466
    %4726 = vmatpush1.bf16.msra.mxu0 %v3465
    %4727 = vmatprep.subr.bf16.mxu0 %v3470
    %4728 = vmatpush1.bf16.msra.mxu0 %v3469
    %4729 = vmatprep.subr.bf16.mxu0 %v3474
    %4730 = vmatpush1.bf16.msra.mxu0 %v3473
    %4731 = vmatprep.subr.bf16.mxu0 %v3478
    %4732 = vmatpush1.bf16.msra.mxu0 %v3477
    %4733 = vmatprep.subr.bf16.mxu0 %v3482
    %4734 = vmatpush1.bf16.msra.mxu0 %v3481
    %4735 = vmatprep.subr.bf16.mxu0 %v3486
    %4736 = vmatpush1.bf16.msra.mxu0 %v3485
    %4737 = vmatprep.subr.bf16.mxu0 %v3490
    %4738 = vmatpush1.bf16.msra.mxu0 %v3489
    %4739 = vmatprep.subr.bf16.mxu0 %v3494
    %4740 = vmatpush1.bf16.msra.mxu0 %v3493
    %4741 = vmatprep.subr.bf16.mxu0 %v3498
    %4742 = vmatpush1.bf16.msra.mxu0 %v3497
    %4743 = vmatprep.subr.bf16.mxu0 %v3502
    %4744 = vmatpush1.bf16.msra.mxu0 %v3501
    %4745 = vmatprep.subr.bf16.mxu0 %v3506
    %4746 = vmatpush1.bf16.msra.mxu0 %v3505
    %4747 = vmatprep.subr.bf16.mxu0 %v3510
    %4748 = vmatpush1.bf16.msra.mxu0 %v3509
    %4749 = vmatprep.subr.bf16.mxu0 %v3514
    %4750 = vmatpush1.bf16.msra.mxu0 %v3513
    %4751 = vmatprep.mubr.bf16.mxu0 %v939
    %4752 = vmatmul.mubr.bf16.gmra.mrb[0].mxu0 %v938
    %v4753 = vpop.f32.mrb[0].mxu0
    %v4754 = vadd.f32 %v4713, %v4753
    %v4755 = vpop.f32.mrb[0].mxu0
    %v4756 = vadd.f32 %v4715, %v4755
    %v4757 = vpop.f32.mrb[0].mxu0
    %v4758 = vpop.f32.mrb[0].mxu0
    %4759 = vdwg.mxu0
    %4760 = vmatprep.subr.bf16.mxu0 %v3518
    %4761 = vmatpush1.bf16.msra.mxu0 %v3517
    %4762 = vmatprep.subr.bf16.mxu0 %v3522
    %4763 = vmatpush1.bf16.msra.mxu0 %v3521
    %4764 = vmatprep.subr.bf16.mxu0 %v3526
    %4765 = vmatpush1.bf16.msra.mxu0 %v3525
    %4766 = vmatprep.subr.bf16.mxu0 %v3530
    %4767 = vmatpush1.bf16.msra.mxu0 %v3529
    %4768 = vmatprep.subr.bf16.mxu0 %v3534
    %4769 = vmatpush1.bf16.msra.mxu0 %v3533
    %4770 = vmatprep.subr.bf16.mxu0 %v3538
    %4771 = vmatpush1.bf16.msra.mxu0 %v3537
    %4772 = vmatprep.subr.bf16.mxu0 %v3542
    %4773 = vmatpush1.bf16.msra.mxu0 %v3541
    %4774 = vmatprep.subr.bf16.mxu0 %v3546
    %4775 = vmatpush1.bf16.msra.mxu0 %v3545
    %4776 = vmatprep.subr.bf16.mxu0 %v3550
    %4777 = vmatpush1.bf16.msra.mxu0 %v3549
    %4778 = vmatprep.subr.bf16.mxu0 %v3554
    %4779 = vmatpush1.bf16.msra.mxu0 %v3553
    %4780 = vmatprep.subr.bf16.mxu0 %v3558
    %4781 = vmatpush1.bf16.msra.mxu0 %v3557
    %4782 = vmatprep.subr.bf16.mxu0 %v3562
    %4783 = vmatpush1.bf16.msra.mxu0 %v3561
    %4784 = vmatprep.subr.bf16.mxu0 %v3566
    %4785 = vmatpush1.bf16.msra.mxu0 %v3565
    %4786 = vmatprep.subr.bf16.mxu0 %v3570
    %4787 = vmatpush1.bf16.msra.mxu0 %v3569
    %4788 = vmatprep.subr.bf16.mxu0 %v3574
    %4789 = vmatpush1.bf16.msra.mxu0 %v3573
    %4790 = vmatprep.subr.bf16.mxu0 %v3578
    %4791 = vmatpush1.bf16.msra.mxu0 %v3577
    %4792 = vmatprep.mubr.bf16.mxu0 %v941
    %4793 = vmatmul.mubr.bf16.gmra.mrb[0].mxu0 %v940
    %v4794 = vpop.f32.mrb[0].mxu0
    %v4795 = vadd.f32 %v4754, %v4794
    %v4796 = vpop.f32.mrb[0].mxu0
    %v4797 = vadd.f32 %v4756, %v4796
    %v4798 = vpop.f32.mrb[0].mxu0
    %v4799 = vpop.f32.mrb[0].mxu0
    %4800 = vdwg.mxu0
    %4801 = vmatprep.subr.bf16.mxu0 %v3582
    %4802 = vmatpush1.bf16.msra.mxu0 %v3581
    %4803 = vmatprep.subr.bf16.mxu0 %v3586
    %4804 = vmatpush1.bf16.msra.mxu0 %v3585
    %4805 = vmatprep.subr.bf16.mxu0 %v3590
    %4806 = vmatpush1.bf16.msra.mxu0 %v3589
    %4807 = vmatprep.subr.bf16.mxu0 %v3594
    %4808 = vmatpush1.bf16.msra.mxu0 %v3593
    %4809 = vmatprep.subr.bf16.mxu0 %v3598
    %4810 = vmatpush1.bf16.msra.mxu0 %v3597
    %4811 = vmatprep.subr.bf16.mxu0 %v3602
    %4812 = vmatpush1.bf16.msra.mxu0 %v3601
    %4813 = vmatprep.subr.bf16.mxu0 %v3606
    %4814 = vmatpush1.bf16.msra.mxu0 %v3605
    %4815 = vmatprep.subr.bf16.mxu0 %v3610
    %4816 = vmatpush1.bf16.msra.mxu0 %v3609
    %4817 = vmatprep.subr.bf16.mxu0 %v3614
    %4818 = vmatpush1.bf16.msra.mxu0 %v3613
    %4819 = vmatprep.subr.bf16.mxu0 %v3618
    %4820 = vmatpush1.bf16.msra.mxu0 %v3617
    %4821 = vmatprep.subr.bf16.mxu0 %v3622
    %4822 = vmatpush1.bf16.msra.mxu0 %v3621
    %4823 = vmatprep.subr.bf16.mxu0 %v3626
    %4824 = vmatpush1.bf16.msra.mxu0 %v3625
    %4825 = vmatprep.subr.bf16.mxu0 %v3630
    %4826 = vmatpush1.bf16.msra.mxu0 %v3629
    %4827 = vmatprep.subr.bf16.mxu0 %v3634
    %4828 = vmatpush1.bf16.msra.mxu0 %v3633
    %4829 = vmatprep.subr.bf16.mxu0 %v3638
    %4830 = vmatpush1.bf16.msra.mxu0 %v3637
    %4831 = vmatprep.subr.bf16.mxu0 %v3642
    %4832 = vmatpush1.bf16.msra.mxu0 %v3641
    %4833 = vmatprep.mubr.bf16.mxu0 %v943
    %4834 = vmatmul.mubr.bf16.gmra.mrb[0].mxu0 %v942
    %v4835 = vpop.f32.mrb[0].mxu0
    %v4836 = vadd.f32 %v4795, %v4835
    %v4837 = vpop.f32.mrb[0].mxu0
    %v4838 = vadd.f32 %v4797, %v4837
    %v4839 = vpop.f32.mrb[0].mxu0
    %v4840 = vpop.f32.mrb[0].mxu0
    %4841 = vdwg.mxu0
    %4842 = vmatprep.subr.bf16.mxu0 %v3646
    %4843 = vmatpush1.bf16.msra.mxu0 %v3645
    %4844 = vmatprep.subr.bf16.mxu0 %v3650
    %4845 = vmatpush1.bf16.msra.mxu0 %v3649
    %4846 = vmatprep.subr.bf16.mxu0 %v3654
    %4847 = vmatpush1.bf16.msra.mxu0 %v3653
    %4848 = vmatprep.subr.bf16.mxu0 %v3658
    %4849 = vmatpush1.bf16.msra.mxu0 %v3657
    %4850 = vmatprep.subr.bf16.mxu0 %v3662
    %4851 = vmatpush1.bf16.msra.mxu0 %v3661
    %4852 = vmatprep.subr.bf16.mxu0 %v3666
    %4853 = vmatpush1.bf16.msra.mxu0 %v3665
    %4854 = vmatprep.subr.bf16.mxu0 %v3670
    %4855 = vmatpush1.bf16.msra.mxu0 %v3669
    %4856 = vmatprep.subr.bf16.mxu0 %v3674
    %4857 = vmatpush1.bf16.msra.mxu0 %v3673
    %4858 = vmatprep.subr.bf16.mxu0 %v3678
    %4859 = vmatpush1.bf16.msra.mxu0 %v3677
    %4860 = vmatprep.subr.bf16.mxu0 %v3682
    %4861 = vmatpush1.bf16.msra.mxu0 %v3681
    %4862 = vmatprep.subr.bf16.mxu0 %v3686
    %4863 = vmatpush1.bf16.msra.mxu0 %v3685
    %4864 = vmatprep.subr.bf16.mxu0 %v3690
    %4865 = vmatpush1.bf16.msra.mxu0 %v3689
    %4866 = vmatprep.subr.bf16.mxu0 %v3694
    %4867 = vmatpush1.bf16.msra.mxu0 %v3693
    %4868 = vmatprep.subr.bf16.mxu0 %v3698
    %4869 = vmatpush1.bf16.msra.mxu0 %v3697
    %4870 = vmatprep.subr.bf16.mxu0 %v3702
    %4871 = vmatpush1.bf16.msra.mxu0 %v3701
    %4872 = vmatprep.subr.bf16.mxu0 %v3706
    %4873 = vmatpush1.bf16.msra.mxu0 %v3705
    %4874 = vmatprep.mubr.bf16.mxu0 %v945
    %4875 = vmatmul.mubr.bf16.gmra.mrb[0].mxu0 %v944
    %v4876 = vpop.f32.mrb[0].mxu0
    %v4877 = vadd.f32 %v4836, %v4876
    %v4878 = vpop.f32.mrb[0].mxu0
    %v4879 = vadd.f32 %v4838, %v4878
    %v4880 = vpop.f32.mrb[0].mxu0
    %v4881 = vpop.f32.mrb[0].mxu0
    %4882 = vdwg.mxu0
    %4883 = vmatprep.subr.bf16.mxu0 %v3710
    %4884 = vmatpush1.bf16.msra.mxu0 %v3709
    %4885 = vmatprep.subr.bf16.mxu0 %v3714
    %4886 = vmatpush1.bf16.msra.mxu0 %v3713
    %4887 = vmatprep.subr.bf16.mxu0 %v3718
    %4888 = vmatpush1.bf16.msra.mxu0 %v3717
    %4889 = vmatprep.subr.bf16.mxu0 %v3722
    %4890 = vmatpush1.bf16.msra.mxu0 %v3721
    %4891 = vmatprep.subr.bf16.mxu0 %v3726
    %4892 = vmatpush1.bf16.msra.mxu0 %v3725
    %4893 = vmatprep.subr.bf16.mxu0 %v3730
    %4894 = vmatpush1.bf16.msra.mxu0 %v3729
    %4895 = vmatprep.subr.bf16.mxu0 %v3734
    %4896 = vmatpush1.bf16.msra.mxu0 %v3733
    %4897 = vmatprep.subr.bf16.mxu0 %v3738
    %4898 = vmatpush1.bf16.msra.mxu0 %v3737
    %4899 = vmatprep.subr.bf16.mxu0 %v3742
    %4900 = vmatpush1.bf16.msra.mxu0 %v3741
    %4901 = vmatprep.subr.bf16.mxu0 %v3746
    %4902 = vmatpush1.bf16.msra.mxu0 %v3745
    %4903 = vmatprep.subr.bf16.mxu0 %v3750
    %4904 = vmatpush1.bf16.msra.mxu0 %v3749
    %4905 = vmatprep.subr.bf16.mxu0 %v3754
    %4906 = vmatpush1.bf16.msra.mxu0 %v3753
    %4907 = vmatprep.subr.bf16.mxu0 %v3758
    %4908 = vmatpush1.bf16.msra.mxu0 %v3757
    %4909 = vmatprep.subr.bf16.mxu0 %v3762
    %4910 = vmatpush1.bf16.msra.mxu0 %v3761
    %4911 = vmatprep.subr.bf16.mxu0 %v3766
    %4912 = vmatpush1.bf16.msra.mxu0 %v3765
    %4913 = vmatprep.subr.bf16.mxu0 0
    %4914 = vmatpush1.bf16.msra.mxu0 0
    %4915 = vmatprep.mubr.bf16.mxu0 %v4471
    %4916 = vmatmul.mubr.bf16.gmra.mrb[0].mxu0 %v946
    %v4917 = vpop.f32.mrb[0].mxu0
    %v4918 = vadd.f32 %v4877, %v4917
    %v4919 = vpop.f32.mrb[0].mxu0
    %v4920 = vadd.f32 %v4879, %v4919
    %v4921 = vpop.f32.mrb[0].mxu0
    %v4922 = vpop.f32.mrb[0].mxu0
    %4923 = vdwg.mxu0
    %4924 = vmatprep.subr.bf16.mxu0 %v3072
    %4925 = vmatpush1.bf16.msra.mxu0 %v3071
    %4926 = vmatprep.subr.bf16.mxu0 %v3076
    %4927 = vmatpush1.bf16.msra.mxu0 %v3075
    %4928 = vmatprep.subr.bf16.mxu0 %v3080
    %4929 = vmatpush1.bf16.msra.mxu0 %v3079
    %4930 = vmatprep.subr.bf16.mxu0 %v3084
    %4931 = vmatpush1.bf16.msra.mxu0 %v3083
    %4932 = vmatprep.subr.bf16.mxu0 %v3088
    %4933 = vmatpush1.bf16.msra.mxu0 %v3087
    %4934 = vmatprep.subr.bf16.mxu0 %v3092
    %4935 = vmatpush1.bf16.msra.mxu0 %v3091
    %4936 = vmatprep.subr.bf16.mxu0 %v3096
    %4937 = vmatpush1.bf16.msra.mxu0 %v3095
    %4938 = vmatprep.subr.bf16.mxu0 %v3100
    %4939 = vmatpush1.bf16.msra.mxu0 %v3099
    %4940 = vmatprep.subr.bf16.mxu0 %v3104
    %4941 = vmatpush1.bf16.msra.mxu0 %v3103
    %4942 = vmatprep.subr.bf16.mxu0 %v3108
    %4943 = vmatpush1.bf16.msra.mxu0 %v3107
    %4944 = vmatprep.subr.bf16.mxu0 %v3112
    %4945 = vmatpush1.bf16.msra.mxu0 %v3111
    %4946 = vmatprep.subr.bf16.mxu0 %v3116
    %4947 = vmatpush1.bf16.msra.mxu0 %v3115
    %4948 = vmatprep.subr.bf16.mxu0 %v3120
    %4949 = vmatpush1.bf16.msra.mxu0 %v3119
    %4950 = vmatprep.subr.bf16.mxu0 %v3124
    %4951 = vmatpush1.bf16.msra.mxu0 %v3123
    %4952 = vmatprep.subr.bf16.mxu0 %v3128
    %4953 = vmatpush1.bf16.msra.mxu0 %v3127
    %4954 = vmatprep.subr.bf16.mxu0 %v3132
    %4955 = vmatpush1.bf16.msra.mxu0 %v3131
    %4956 = vmatprep.mubr.bf16.mxu0 %v927
    %4957 = vmatmul.mubr.bf16.gmra.mrb[0].mxu0 %v926
    %v4958 = vpop.f32.mrb[0].mxu0
    %v4959 = vadd.f32 %v884, %v4958
    %v4960 = vpop.f32.mrb[0].mxu0
    %v4961 = vadd.f32 %v888, %v4960
    %v4962 = vpop.f32.mrb[0].mxu0
    %v4963 = vpop.f32.mrb[0].mxu0
    %4964 = vdwg.mxu0
    %4965 = vmatprep.subr.bf16.mxu0 %v3136
    %4966 = vmatpush1.bf16.msra.mxu0 %v3135
    %4967 = vmatprep.subr.bf16.mxu0 %v3140
    %4968 = vmatpush1.bf16.msra.mxu0 %v3139
    %4969 = vmatprep.subr.bf16.mxu0 %v3144
    %4970 = vmatpush1.bf16.msra.mxu0 %v3143
    %4971 = vmatprep.subr.bf16.mxu0 %v3148
    %4972 = vmatpush1.bf16.msra.mxu0 %v3147
    %4973 = vmatprep.subr.bf16.mxu0 %v3152
    %4974 = vmatpush1.bf16.msra.mxu0 %v3151
    %4975 = vmatprep.subr.bf16.mxu0 %v3156
    %4976 = vmatpush1.bf16.msra.mxu0 %v3155
    %4977 = vmatprep.subr.bf16.mxu0 %v3160
    %4978 = vmatpush1.bf16.msra.mxu0 %v3159
    %4979 = vmatprep.subr.bf16.mxu0 %v3164
    %4980 = vmatpush1.bf16.msra.mxu0 %v3163
    %4981 = vmatprep.subr.bf16.mxu0 %v3168
    %4982 = vmatpush1.bf16.msra.mxu0 %v3167
    %4983 = vmatprep.subr.bf16.mxu0 %v3172
    %4984 = vmatpush1.bf16.msra.mxu0 %v3171
    %4985 = vmatprep.subr.bf16.mxu0 %v3176
    %4986 = vmatpush1.bf16.msra.mxu0 %v3175
    %4987 = vmatprep.subr.bf16.mxu0 %v3180
    %4988 = vmatpush1.bf16.msra.mxu0 %v3179
    %4989 = vmatprep.subr.bf16.mxu0 %v3184
    %4990 = vmatpush1.bf16.msra.mxu0 %v3183
    %4991 = vmatprep.subr.bf16.mxu0 %v3188
    %4992 = vmatpush1.bf16.msra.mxu0 %v3187
    %4993 = vmatprep.subr.bf16.mxu0 %v3192
    %4994 = vmatpush1.bf16.msra.mxu0 %v3191
    %4995 = vmatprep.subr.bf16.mxu0 %v3196
    %4996 = vmatpush1.bf16.msra.mxu0 %v3195
    %4997 = vmatprep.mubr.bf16.mxu0 %v929
    %4998 = vmatmul.mubr.bf16.gmra.mrb[0].mxu0 %v928
    %v4999 = vpop.f32.mrb[0].mxu0
    %v5000 = vadd.f32 %v4959, %v4999
    %v5001 = vpop.f32.mrb[0].mxu0
    %v5002 = vadd.f32 %v4961, %v5001
    %v5003 = vpop.f32.mrb[0].mxu0
    %v5004 = vpop.f32.mrb[0].mxu0
    %5005 = vdwg.mxu0
    %5006 = vmatprep.subr.bf16.mxu0 %v3200
    %5007 = vmatpush1.bf16.msra.mxu0 %v3199
    %5008 = vmatprep.subr.bf16.mxu0 %v3204
    %5009 = vmatpush1.bf16.msra.mxu0 %v3203
    %5010 = vmatprep.subr.bf16.mxu0 %v3208
    %5011 = vmatpush1.bf16.msra.mxu0 %v3207
    %5012 = vmatprep.subr.bf16.mxu0 %v3212
    %5013 = vmatpush1.bf16.msra.mxu0 %v3211
    %5014 = vmatprep.subr.bf16.mxu0 %v3216
    %5015 = vmatpush1.bf16.msra.mxu0 %v3215
    %5016 = vmatprep.subr.bf16.mxu0 %v3220
    %5017 = vmatpush1.bf16.msra.mxu0 %v3219
    %5018 = vmatprep.subr.bf16.mxu0 %v3224
    %5019 = vmatpush1.bf16.msra.mxu0 %v3223
    %5020 = vmatprep.subr.bf16.mxu0 %v3228
    %5021 = vmatpush1.bf16.msra.mxu0 %v3227
    %5022 = vmatprep.subr.bf16.mxu0 %v3232
    %5023 = vmatpush1.bf16.msra.mxu0 %v3231
    %5024 = vmatprep.subr.bf16.mxu0 %v3236
    %5025 = vmatpush1.bf16.msra.mxu0 %v3235
    %5026 = vmatprep.subr.bf16.mxu0 %v3240
    %5027 = vmatpush1.bf16.msra.mxu0 %v3239
    %5028 = vmatprep.subr.bf16.mxu0 %v3244
    %5029 = vmatpush1.bf16.msra.mxu0 %v3243
    %5030 = vmatprep.subr.bf16.mxu0 %v3248
    %5031 = vmatpush1.bf16.msra.mxu0 %v3247
    %5032 = vmatprep.subr.bf16.mxu0 %v3252
    %5033 = vmatpush1.bf16.msra.mxu0 %v3251
    %5034 = vmatprep.subr.bf16.mxu0 %v3256
    %5035 = vmatpush1.bf16.msra.mxu0 %v3255
    %5036 = vmatprep.subr.bf16.mxu0 %v3260
    %5037 = vmatpush1.bf16.msra.mxu0 %v3259
    %5038 = vmatprep.mubr.bf16.mxu0 %v931
    %5039 = vmatmul.mubr.bf16.gmra.mrb[0].mxu0 %v930
    %v5040 = vpop.f32.mrb[0].mxu0
    %v5041 = vadd.f32 %v5000, %v5040
    %v5042 = vpop.f32.mrb[0].mxu0
    %v5043 = vadd.f32 %v5002, %v5042
    %v5044 = vpop.f32.mrb[0].mxu0
    %v5045 = vpop.f32.mrb[0].mxu0
    %5046 = vdwg.mxu0
    %5047 = vmatprep.subr.bf16.mxu0 %v3264
    %5048 = vmatpush1.bf16.msra.mxu0 %v3263
    %5049 = vmatprep.subr.bf16.mxu0 %v3268
    %5050 = vmatpush1.bf16.msra.mxu0 %v3267
    %5051 = vmatprep.subr.bf16.mxu0 %v3272
    %5052 = vmatpush1.bf16.msra.mxu0 %v3271
    %5053 = vmatprep.subr.bf16.mxu0 %v3276
    %5054 = vmatpush1.bf16.msra.mxu0 %v3275
    %5055 = vmatprep.subr.bf16.mxu0 %v3280
    %5056 = vmatpush1.bf16.msra.mxu0 %v3279
    %5057 = vmatprep.subr.bf16.mxu0 %v3284
    %5058 = vmatpush1.bf16.msra.mxu0 %v3283
    %5059 = vmatprep.subr.bf16.mxu0 %v3288
    %5060 = vmatpush1.bf16.msra.mxu0 %v3287
    %5061 = vmatprep.subr.bf16.mxu0 %v3292
    %5062 = vmatpush1.bf16.msra.mxu0 %v3291
    %5063 = vmatprep.subr.bf16.mxu0 %v3296
    %5064 = vmatpush1.bf16.msra.mxu0 %v3295
    %5065 = vmatprep.subr.bf16.mxu0 %v3300
    %5066 = vmatpush1.bf16.msra.mxu0 %v3299
    %5067 = vmatprep.subr.bf16.mxu0 %v3304
    %5068 = vmatpush1.bf16.msra.mxu0 %v3303
    %5069 = vmatprep.subr.bf16.mxu0 %v3308
    %5070 = vmatpush1.bf16.msra.mxu0 %v3307
    %5071 = vmatprep.subr.bf16.mxu0 %v3312
    %5072 = vmatpush1.bf16.msra.mxu0 %v3311
    %5073 = vmatprep.subr.bf16.mxu0 %v3316
    %5074 = vmatpush1.bf16.msra.mxu0 %v3315
    %5075 = vmatprep.subr.bf16.mxu0 %v3320
    %5076 = vmatpush1.bf16.msra.mxu0 %v3319
    %5077 = vmatprep.subr.bf16.mxu0 %v3324
    %5078 = vmatpush1.bf16.msra.mxu0 %v3323
    %5079 = vmatprep.mubr.bf16.mxu0 %v933
    %5080 = vmatmul.mubr.bf16.gmra.mrb[0].mxu0 %v932
    %v5081 = vpop.f32.mrb[0].mxu0
    %v5082 = vadd.f32 %v5041, %v5081
    %v5083 = vpop.f32.mrb[0].mxu0
    %v5084 = vadd.f32 %v5043, %v5083
    %v5085 = vpop.f32.mrb[0].mxu0
    %v5086 = vpop.f32.mrb[0].mxu0
    %5087 = vdwg.mxu0
    %5088 = vmatprep.subr.bf16.mxu0 %v3328
    %5089 = vmatpush1.bf16.msra.mxu0 %v3327
    %5090 = vmatprep.subr.bf16.mxu0 %v3332
    %5091 = vmatpush1.bf16.msra.mxu0 %v3331
    %5092 = vmatprep.subr.bf16.mxu0 %v3336
    %5093 = vmatpush1.bf16.msra.mxu0 %v3335
    %5094 = vmatprep.subr.bf16.mxu0 %v3340
    %5095 = vmatpush1.bf16.msra.mxu0 %v3339
    %5096 = vmatprep.subr.bf16.mxu0 %v3344
    %5097 = vmatpush1.bf16.msra.mxu0 %v3343
    %5098 = vmatprep.subr.bf16.mxu0 %v3348
    %5099 = vmatpush1.bf16.msra.mxu0 %v3347
    %5100 = vmatprep.subr.bf16.mxu0 %v3352
    %5101 = vmatpush1.bf16.msra.mxu0 %v3351
    %5102 = vmatprep.subr.bf16.mxu0 %v3356
    %5103 = vmatpush1.bf16.msra.mxu0 %v3355
    %5104 = vmatprep.subr.bf16.mxu0 %v3360
    %5105 = vmatpush1.bf16.msra.mxu0 %v3359
    %5106 = vmatprep.subr.bf16.mxu0 %v3364
    %5107 = vmatpush1.bf16.msra.mxu0 %v3363
    %5108 = vmatprep.subr.bf16.mxu0 %v3368
    %5109 = vmatpush1.bf16.msra.mxu0 %v3367
    %5110 = vmatprep.subr.bf16.mxu0 %v3372
    %5111 = vmatpush1.bf16.msra.mxu0 %v3371
    %5112 = vmatprep.subr.bf16.mxu0 %v3376
    %5113 = vmatpush1.bf16.msra.mxu0 %v3375
    %5114 = vmatprep.subr.bf16.mxu0 %v3380
    %5115 = vmatpush1.bf16.msra.mxu0 %v3379
    %5116 = vmatprep.subr.bf16.mxu0 %v3384
    %5117 = vmatpush1.bf16.msra.mxu0 %v3383
    %5118 = vmatprep.subr.bf16.mxu0 %v3388
    %5119 = vmatpush1.bf16.msra.mxu0 %v3387
    %5120 = vmatprep.mubr.bf16.mxu0 %v935
    %5121 = vmatmul.mubr.bf16.gmra.mrb[0].mxu0 %v934
    %v5122 = vpop.f32.mrb[0].mxu0
    %v5123 = vadd.f32 %v5082, %v5122
    %v5124 = vpop.f32.mrb[0].mxu0
    %v5125 = vadd.f32 %v5084, %v5124
    %v5126 = vpop.f32.mrb[0].mxu0
    %v5127 = vpop.f32.mrb[0].mxu0
    %5128 = vdwg.mxu0
    %5129 = vmatprep.subr.bf16.mxu0 %v3392
    %5130 = vmatpush1.bf16.msra.mxu0 %v3391
    %5131 = vmatprep.subr.bf16.mxu0 %v3396
    %5132 = vmatpush1.bf16.msra.mxu0 %v3395
    %5133 = vmatprep.subr.bf16.mxu0 %v3400
    %5134 = vmatpush1.bf16.msra.mxu0 %v3399
    %5135 = vmatprep.subr.bf16.mxu0 %v3404
    %5136 = vmatpush1.bf16.msra.mxu0 %v3403
    %5137 = vmatprep.subr.bf16.mxu0 %v3408
    %5138 = vmatpush1.bf16.msra.mxu0 %v3407
    %5139 = vmatprep.subr.bf16.mxu0 %v3412
    %5140 = vmatpush1.bf16.msra.mxu0 %v3411
    %5141 = vmatprep.subr.bf16.mxu0 %v3416
    %5142 = vmatpush1.bf16.msra.mxu0 %v3415
    %5143 = vmatprep.subr.bf16.mxu0 %v3420
    %5144 = vmatpush1.bf16.msra.mxu0 %v3419
    %5145 = vmatprep.subr.bf16.mxu0 %v3424
    %5146 = vmatpush1.bf16.msra.mxu0 %v3423
    %5147 = vmatprep.subr.bf16.mxu0 %v3428
    %5148 = vmatpush1.bf16.msra.mxu0 %v3427
    %5149 = vmatprep.subr.bf16.mxu0 %v3432
    %5150 = vmatpush1.bf16.msra.mxu0 %v3431
    %5151 = vmatprep.subr.bf16.mxu0 %v3436
    %5152 = vmatpush1.bf16.msra.mxu0 %v3435
    %5153 = vmatprep.subr.bf16.mxu0 %v3440
    %5154 = vmatpush1.bf16.msra.mxu0 %v3439
    %5155 = vmatprep.subr.bf16.mxu0 %v3444
    %5156 = vmatpush1.bf16.msra.mxu0 %v3443
    %5157 = vmatprep.subr.bf16.mxu0 %v3448
    %5158 = vmatpush1.bf16.msra.mxu0 %v3447
    %5159 = vmatprep.subr.bf16.mxu0 %v3452
    %5160 = vmatpush1.bf16.msra.mxu0 %v3451
    %5161 = vmatprep.mubr.bf16.mxu0 %v937
    %5162 = vmatmul.mubr.bf16.gmra.mrb[0].mxu0 %v936
    %v5163 = vpop.f32.mrb[0].mxu0
    %v5164 = vadd.f32 %v5123, %v5163
    %v5165 = vpop.f32.mrb[0].mxu0
    %v5166 = vadd.f32 %v5125, %v5165
    %v5167 = vpop.f32.mrb[0].mxu0
    %v5168 = vpop.f32.mrb[0].mxu0
    %5169 = vdwg.mxu0
    %5170 = vmatprep.subr.bf16.mxu0 %v3456
    %5171 = vmatpush1.bf16.msra.mxu0 %v3455
    %5172 = vmatprep.subr.bf16.mxu0 %v3460
    %5173 = vmatpush1.bf16.msra.mxu0 %v3459
    %5174 = vmatprep.subr.bf16.mxu0 %v3464
    %5175 = vmatpush1.bf16.msra.mxu0 %v3463
    %5176 = vmatprep.subr.bf16.mxu0 %v3468
    %5177 = vmatpush1.bf16.msra.mxu0 %v3467
    %5178 = vmatprep.subr.bf16.mxu0 %v3472
    %5179 = vmatpush1.bf16.msra.mxu0 %v3471
    %5180 = vmatprep.subr.bf16.mxu0 %v3476
    %5181 = vmatpush1.bf16.msra.mxu0 %v3475
    %5182 = vmatprep.subr.bf16.mxu0 %v3480
    %5183 = vmatpush1.bf16.msra.mxu0 %v3479
    %5184 = vmatprep.subr.bf16.mxu0 %v3484
    %5185 = vmatpush1.bf16.msra.mxu0 %v3483
    %5186 = vmatprep.subr.bf16.mxu0 %v3488
    %5187 = vmatpush1.bf16.msra.mxu0 %v3487
    %5188 = vmatprep.subr.bf16.mxu0 %v3492
    %5189 = vmatpush1.bf16.msra.mxu0 %v3491
    %5190 = vmatprep.subr.bf16.mxu0 %v3496
    %5191 = vmatpush1.bf16.msra.mxu0 %v3495
    %5192 = vmatprep.subr.bf16.mxu0 %v3500
    %5193 = vmatpush1.bf16.msra.mxu0 %v3499
    %5194 = vmatprep.subr.bf16.mxu0 %v3504
    %5195 = vmatpush1.bf16.msra.mxu0 %v3503
    %5196 = vmatprep.subr.bf16.mxu0 %v3508
    %5197 = vmatpush1.bf16.msra.mxu0 %v3507
    %5198 = vmatprep.subr.bf16.mxu0 %v3512
    %5199 = vmatpush1.bf16.msra.mxu0 %v3511
    %5200 = vmatprep.subr.bf16.mxu0 %v3516
    %5201 = vmatpush1.bf16.msra.mxu0 %v3515
    %5202 = vmatprep.mubr.bf16.mxu0 %v939
    %5203 = vmatmul.mubr.bf16.gmra.mrb[0].mxu0 %v938
    %v5204 = vpop.f32.mrb[0].mxu0
    %v5205 = vadd.f32 %v5164, %v5204
    %v5206 = vpop.f32.mrb[0].mxu0
    %v5207 = vadd.f32 %v5166, %v5206
    %v5208 = vpop.f32.mrb[0].mxu0
    %v5209 = vpop.f32.mrb[0].mxu0
    %5210 = vdwg.mxu0
    %5211 = vmatprep.subr.bf16.mxu0 %v3520
    %5212 = vmatpush1.bf16.msra.mxu0 %v3519
    %5213 = vmatprep.subr.bf16.mxu0 %v3524
    %5214 = vmatpush1.bf16.msra.mxu0 %v3523
    %5215 = vmatprep.subr.bf16.mxu0 %v3528
    %5216 = vmatpush1.bf16.msra.mxu0 %v3527
    %5217 = vmatprep.subr.bf16.mxu0 %v3532
    %5218 = vmatpush1.bf16.msra.mxu0 %v3531
    %5219 = vmatprep.subr.bf16.mxu0 %v3536
    %5220 = vmatpush1.bf16.msra.mxu0 %v3535
    %5221 = vmatprep.subr.bf16.mxu0 %v3540
    %5222 = vmatpush1.bf16.msra.mxu0 %v3539
    %5223 = vmatprep.subr.bf16.mxu0 %v3544
    %5224 = vmatpush1.bf16.msra.mxu0 %v3543
    %5225 = vmatprep.subr.bf16.mxu0 %v3548
    %5226 = vmatpush1.bf16.msra.mxu0 %v3547
    %5227 = vmatprep.subr.bf16.mxu0 %v3552
    %5228 = vmatpush1.bf16.msra.mxu0 %v3551
    %5229 = vmatprep.subr.bf16.mxu0 %v3556
    %5230 = vmatpush1.bf16.msra.mxu0 %v3555
    %5231 = vmatprep.subr.bf16.mxu0 %v3560
    %5232 = vmatpush1.bf16.msra.mxu0 %v3559
    %5233 = vmatprep.subr.bf16.mxu0 %v3564
    %5234 = vmatpush1.bf16.msra.mxu0 %v3563
    %5235 = vmatprep.subr.bf16.mxu0 %v3568
    %5236 = vmatpush1.bf16.msra.mxu0 %v3567
    %5237 = vmatprep.subr.bf16.mxu0 %v3572
    %5238 = vmatpush1.bf16.msra.mxu0 %v3571
    %5239 = vmatprep.subr.bf16.mxu0 %v3576
    %5240 = vmatpush1.bf16.msra.mxu0 %v3575
    %5241 = vmatprep.subr.bf16.mxu0 %v3580
    %5242 = vmatpush1.bf16.msra.mxu0 %v3579
    %5243 = vmatprep.mubr.bf16.mxu0 %v941
    %5244 = vmatmul.mubr.bf16.gmra.mrb[0].mxu0 %v940
    %v5245 = vpop.f32.mrb[0].mxu0
    %v5246 = vadd.f32 %v5205, %v5245
    %v5247 = vpop.f32.mrb[0].mxu0
    %v5248 = vadd.f32 %v5207, %v5247
    %v5249 = vpop.f32.mrb[0].mxu0
    %v5250 = vpop.f32.mrb[0].mxu0
    %5251 = vdwg.mxu0
    %5252 = vmatprep.subr.bf16.mxu0 %v3584
    %5253 = vmatpush1.bf16.msra.mxu0 %v3583
    %5254 = vmatprep.subr.bf16.mxu0 %v3588
    %5255 = vmatpush1.bf16.msra.mxu0 %v3587
    %5256 = vmatprep.subr.bf16.mxu0 %v3592
    %5257 = vmatpush1.bf16.msra.mxu0 %v3591
    %5258 = vmatprep.subr.bf16.mxu0 %v3596
    %5259 = vmatpush1.bf16.msra.mxu0 %v3595
    %5260 = vmatprep.subr.bf16.mxu0 %v3600
    %5261 = vmatpush1.bf16.msra.mxu0 %v3599
    %5262 = vmatprep.subr.bf16.mxu0 %v3604
    %5263 = vmatpush1.bf16.msra.mxu0 %v3603
    %5264 = vmatprep.subr.bf16.mxu0 %v3608
    %5265 = vmatpush1.bf16.msra.mxu0 %v3607
    %5266 = vmatprep.subr.bf16.mxu0 %v3612
    %5267 = vmatpush1.bf16.msra.mxu0 %v3611
    %5268 = vmatprep.subr.bf16.mxu0 %v3616
    %5269 = vmatpush1.bf16.msra.mxu0 %v3615
    %5270 = vmatprep.subr.bf16.mxu0 %v3620
    %5271 = vmatpush1.bf16.msra.mxu0 %v3619
    %5272 = vmatprep.subr.bf16.mxu0 %v3624
    %5273 = vmatpush1.bf16.msra.mxu0 %v3623
    %5274 = vmatprep.subr.bf16.mxu0 %v3628
    %5275 = vmatpush1.bf16.msra.mxu0 %v3627
    %5276 = vmatprep.subr.bf16.mxu0 %v3632
    %5277 = vmatpush1.bf16.msra.mxu0 %v3631
    %5278 = vmatprep.subr.bf16.mxu0 %v3636
    %5279 = vmatpush1.bf16.msra.mxu0 %v3635
    %5280 = vmatprep.subr.bf16.mxu0 %v3640
    %5281 = vmatpush1.bf16.msra.mxu0 %v3639
    %5282 = vmatprep.subr.bf16.mxu0 %v3644
    %5283 = vmatpush1.bf16.msra.mxu0 %v3643
    %5284 = vmatprep.mubr.bf16.mxu0 %v943
    %5285 = vmatmul.mubr.bf16.gmra.mrb[0].mxu0 %v942
    %v5286 = vpop.f32.mrb[0].mxu0
    %v5287 = vadd.f32 %v5246, %v5286
    %v5288 = vpop.f32.mrb[0].mxu0
    %v5289 = vadd.f32 %v5248, %v5288
    %v5290 = vpop.f32.mrb[0].mxu0
    %v5291 = vpop.f32.mrb[0].mxu0
    %5292 = vdwg.mxu0
    %5293 = vmatprep.subr.bf16.mxu0 %v3648
    %5294 = vmatpush1.bf16.msra.mxu0 %v3647
    %5295 = vmatprep.subr.bf16.mxu0 %v3652
    %5296 = vmatpush1.bf16.msra.mxu0 %v3651
    %5297 = vmatprep.subr.bf16.mxu0 %v3656
    %5298 = vmatpush1.bf16.msra.mxu0 %v3655
    %5299 = vmatprep.subr.bf16.mxu0 %v3660
    %5300 = vmatpush1.bf16.msra.mxu0 %v3659
    %5301 = vmatprep.subr.bf16.mxu0 %v3664
    %5302 = vmatpush1.bf16.msra.mxu0 %v3663
    %5303 = vmatprep.subr.bf16.mxu0 %v3668
    %5304 = vmatpush1.bf16.msra.mxu0 %v3667
    %5305 = vmatprep.subr.bf16.mxu0 %v3672
    %5306 = vmatpush1.bf16.msra.mxu0 %v3671
    %5307 = vmatprep.subr.bf16.mxu0 %v3676
    %5308 = vmatpush1.bf16.msra.mxu0 %v3675
    %5309 = vmatprep.subr.bf16.mxu0 %v3680
    %5310 = vmatpush1.bf16.msra.mxu0 %v3679
    %5311 = vmatprep.subr.bf16.mxu0 %v3684
    %5312 = vmatpush1.bf16.msra.mxu0 %v3683
    %5313 = vmatprep.subr.bf16.mxu0 %v3688
    %5314 = vmatpush1.bf16.msra.mxu0 %v3687
    %5315 = vmatprep.subr.bf16.mxu0 %v3692
    %5316 = vmatpush1.bf16.msra.mxu0 %v3691
    %5317 = vmatprep.subr.bf16.mxu0 %v3696
    %5318 = vmatpush1.bf16.msra.mxu0 %v3695
    %5319 = vmatprep.subr.bf16.mxu0 %v3700
    %5320 = vmatpush1.bf16.msra.mxu0 %v3699
    %5321 = vmatprep.subr.bf16.mxu0 %v3704
    %5322 = vmatpush1.bf16.msra.mxu0 %v3703
    %5323 = vmatprep.subr.bf16.mxu0 %v3708
    %5324 = vmatpush1.bf16.msra.mxu0 %v3707
    %5325 = vmatprep.mubr.bf16.mxu0 %v945
    %5326 = vmatmul.mubr.bf16.gmra.mrb[0].mxu0 %v944
    %v5327 = vpop.f32.mrb[0].mxu0
    %v5328 = vadd.f32 %v5287, %v5327
    %v5329 = vpop.f32.mrb[0].mxu0
    %v5330 = vadd.f32 %v5289, %v5329
    %v5331 = vpop.f32.mrb[0].mxu0
    %v5332 = vpop.f32.mrb[0].mxu0
    %5333 = vdwg.mxu0
    %5334 = vmatprep.subr.bf16.mxu0 %v3712
    %5335 = vmatpush1.bf16.msra.mxu0 %v3711
    %5336 = vmatprep.subr.bf16.mxu0 %v3716
    %5337 = vmatpush1.bf16.msra.mxu0 %v3715
    %5338 = vmatprep.subr.bf16.mxu0 %v3720
    %5339 = vmatpush1.bf16.msra.mxu0 %v3719
    %5340 = vmatprep.subr.bf16.mxu0 %v3724
    %5341 = vmatpush1.bf16.msra.mxu0 %v3723
    %5342 = vmatprep.subr.bf16.mxu0 %v3728
    %5343 = vmatpush1.bf16.msra.mxu0 %v3727
    %5344 = vmatprep.subr.bf16.mxu0 %v3732
    %5345 = vmatpush1.bf16.msra.mxu0 %v3731
    %5346 = vmatprep.subr.bf16.mxu0 %v3736
    %5347 = vmatpush1.bf16.msra.mxu0 %v3735
    %5348 = vmatprep.subr.bf16.mxu0 %v3740
    %5349 = vmatpush1.bf16.msra.mxu0 %v3739
    %5350 = vmatprep.subr.bf16.mxu0 %v3744
    %5351 = vmatpush1.bf16.msra.mxu0 %v3743
    %5352 = vmatprep.subr.bf16.mxu0 %v3748
    %5353 = vmatpush1.bf16.msra.mxu0 %v3747
    %5354 = vmatprep.subr.bf16.mxu0 %v3752
    %5355 = vmatpush1.bf16.msra.mxu0 %v3751
    %5356 = vmatprep.subr.bf16.mxu0 %v3756
    %5357 = vmatpush1.bf16.msra.mxu0 %v3755
    %5358 = vmatprep.subr.bf16.mxu0 %v3760
    %5359 = vmatpush1.bf16.msra.mxu0 %v3759
    %5360 = vmatprep.subr.bf16.mxu0 %v3764
    %5361 = vmatpush1.bf16.msra.mxu0 %v3763
    %5362 = vmatprep.subr.bf16.mxu0 %v3768
    %5363 = vmatpush1.bf16.msra.mxu0 %v3767
    %5364 = vmatprep.subr.bf16.mxu0 0
    %5365 = vmatpush1.bf16.msra.mxu0 0
    %5366 = vmatprep.mubr.bf16.mxu0 %v4471
    %5367 = vmatmul.mubr.bf16.gmra.mrb[0].mxu0 %v946
    %v5368 = vpop.f32.mrb[0].mxu0
    %v5369 = vadd.f32 %v5328, %v5368
    %v5370 = vpop.f32.mrb[0].mxu0
    %v5371 = vadd.f32 %v5330, %v5370
    %v5372 = vpop.f32.mrb[0].mxu0
    %v5373 = vpop.f32.mrb[0].mxu0
    %5374 = vdwg.mxu0
    %s5375 = sld [smem:[#allocation2]]
    %vm5376 = vcmp.ge.f32.partialorder %v4918, 0.0
    %vm5377 = vcmp.ge.f32.partialorder %v4920, 0.0
    %vm5378 = vcmp.ge.f32.partialorder %v5369, 0.0
    %vm5379 = vcmp.ge.f32.partialorder %v5371, 0.0
    %v5380 = vstv %s5375
    %v5381 = vmul.f32 %v5380, %v4918
    %v5382 = vmul.f32 %v5380, %v4920
    %v5383 = vmul.f32 %v5380, %v5369
    %v5384 = vmul.f32 %v5380, %v5371
    %v5385 = vsel %vm5376, %v4918, %v5381
    %v5386 = vsel %vm5377, %v4920, %v5382
    %v5387 = vsel %vm5378, %v5369, %v5383
    %v5388 = vsel %vm5379, %v5371, %v5384
    %v5389 = vpack.c.bf16 %v5385, %v5385
    %v5390 = vpack.c.bf16 %v5386, %v5386
    %v5391 = vpack.c.bf16 %v5387, %v5387
    %v5392 = vpack.c.bf16 %v5388, %v5388
    %v5393 = vld [vmem:[#allocation10] sm:$0xff]
    %v5394 = vld [vmem:[#allocation10 + $0x8] sm:$0xff]
    %v5395 = vld [vmem:[#allocation10 + $0x10] sm:$0xff]
    %v5396 = vld [vmem:[#allocation10 + $0x18] sm:$0xff]
    %v5397 = vld [vmem:[#allocation10 + $0x20] sm:$0xff]
    %v5398 = vld [vmem:[#allocation10 + $0x28] sm:$0xff]
    %v5399 = vld [vmem:[#allocation10 + $0x30] sm:$0xff]
    %v5400 = vld [vmem:[#allocation10 + $0x38] sm:$0xff]
    %v5401 = vld [vmem:[#allocation10 + $0x40] sm:$0xff]
    %v5402 = vld [vmem:[#allocation10 + $0x48] sm:$0xff]
    %v5403 = vld [vmem:[#allocation10 + $0x50] sm:$0xff]
    %v5404 = vld [vmem:[#allocation10 + $0x58] sm:$0xff]
    %v5405 = vld [vmem:[#allocation10 + $0x60] sm:$0xff]
    %v5406 = vld [vmem:[#allocation10 + $0x68] sm:$0xff]
    %v5407 = vld [vmem:[#allocation10 + $0x70] sm:$0xff]
    %v5408 = vld [vmem:[#allocation10 + $0x78] sm:$0xff]
    %v5409 = vld [vmem:[#allocation10 + $0x80] sm:$0xff]
    %v5410 = vld [vmem:[#allocation10 + $0x88] sm:$0xff]
    %v5411 = vld [vmem:[#allocation10 + $0x90] sm:$0xff]
    %v5412 = vld [vmem:[#allocation10 + $0x98] sm:$0xff]
    %v5413 = vld [vmem:[#allocation10 + $0xa0] sm:$0xff]
    %v5414 = vld [vmem:[#allocation10 + $0xa8] sm:$0xff]
    %v5415 = vld [vmem:[#allocation10 + $0xb0] sm:$0xff]
    %v5416 = vld [vmem:[#allocation10 + $0xb8] sm:$0xff]
    %v5417 = vld [vmem:[#allocation10 + $0xc0] sm:$0xff]
    %v5418 = vld [vmem:[#allocation10 + $0xc8] sm:$0xff]
    %v5419 = vld [vmem:[#allocation10 + $0xd0] sm:$0xff]
    %v5420 = vld [vmem:[#allocation10 + $0xd8] sm:$0xff]
    %v5421 = vld [vmem:[#allocation10 + $0xe0] sm:$0xff]
    %v5422 = vld [vmem:[#allocation10 + $0xe8] sm:$0xff]
    %v5423 = vld [vmem:[#allocation10 + $0xf0] sm:$0xff]
    %v5424 = vld [vmem:[#allocation10 + $0xf8] sm:$0xff]
    %v5425 = vld [vmem:[#allocation10 + $0x100] sm:$0xff]
    %v5426 = vld [vmem:[#allocation10 + $0x108] sm:$0xff]
    %v5427 = vld [vmem:[#allocation10 + $0x110] sm:$0xff]
    %v5428 = vld [vmem:[#allocation10 + $0x118] sm:$0xff]
    %v5429 = vld [vmem:[#allocation10 + $0x120] sm:$0xff]
    %v5430 = vld [vmem:[#allocation10 + $0x128] sm:$0xff]
    %v5431 = vld [vmem:[#allocation10 + $0x130] sm:$0xff]
    %v5432 = vld [vmem:[#allocation10 + $0x138] sm:$0xff]
    %v5433 = vld [vmem:[#allocation10 + $0x140] sm:$0xff]
    %v5434 = vld [vmem:[#allocation10 + $0x148] sm:$0xff]
    %v5435 = vld [vmem:[#allocation10 + $0x150] sm:$0xff]
    %v5436 = vld [vmem:[#allocation10 + $0x158] sm:$0xff]
    %v5437 = vld [vmem:[#allocation10 + $0x160] sm:$0xff]
    %v5438 = vld [vmem:[#allocation10 + $0x168] sm:$0xff]
    %v5439 = vld [vmem:[#allocation10 + $0x170] sm:$0xff]
    %v5440 = vld [vmem:[#allocation10 + $0x178] sm:$0xff]
    %v5441 = vld [vmem:[#allocation10 + $0x180] sm:$0xff]
    %v5442 = vld [vmem:[#allocation10 + $0x188] sm:$0xff]
    %v5443 = vld [vmem:[#allocation10 + $0x190] sm:$0xff]
    %v5444 = vld [vmem:[#allocation10 + $0x198] sm:$0xff]
    %v5445 = vld [vmem:[#allocation10 + $0x1a0] sm:$0xff]
    %v5446 = vld [vmem:[#allocation10 + $0x1a8] sm:$0xff]
    %v5447 = vld [vmem:[#allocation10 + $0x1b0] sm:$0xff]
    %v5448 = vld [vmem:[#allocation10 + $0x1b8] sm:$0xff]
    %v5449 = vld [vmem:[#allocation10 + $0x1c0] sm:$0xff]
    %v5450 = vld [vmem:[#allocation10 + $0x1c8] sm:$0xff]
    %v5451 = vld [vmem:[#allocation10 + $0x1d0] sm:$0xff]
    %v5452 = vld [vmem:[#allocation10 + $0x1d8] sm:$0xff]
    %v5453 = vld [vmem:[#allocation10 + $0x1e0] sm:$0xff]
    %v5454 = vld [vmem:[#allocation10 + $0x1e8] sm:$0xff]
    %v5455 = vld [vmem:[#allocation10 + $0x1f0] sm:$0xff]
    %v5456 = vld [vmem:[#allocation10 + $0x1f8] sm:$0xff]
    %v5457 = vld [vmem:[#allocation12] sm:$0x3]
    %v5459 = vlaneseq
    %v5460 = vshrl.u32 %v5459, 7
    %v5461 = vsub.s32 0, %v5460
    %v5462 = vrot.slane %v5457, %v5461
    %v5463 = vlaneseq
    %v5464 = vshrl.u32 %v5463, 7
    %v5465 = vsub.s32 1, %v5464
    %v5466 = vrot.slane %v5457, %v5465
    %v5533 = vunpack.c.l.b16 %v5393
    %v5534 = vunpack.c.h.b16 %v5393
    %v5535 = vunpack.c.l.b16 %v5394
    %v5536 = vunpack.c.h.b16 %v5394
    %v5537 = vunpack.c.l.b16 %v5395
    %v5538 = vunpack.c.h.b16 %v5395
    %v5539 = vunpack.c.l.b16 %v5396
    %v5540 = vunpack.c.h.b16 %v5396
    %v5541 = vunpack.c.l.b16 %v5397
    %v5542 = vunpack.c.h.b16 %v5397
    %v5543 = vunpack.c.l.b16 %v5398
    %v5544 = vunpack.c.h.b16 %v5398
    %v5545 = vunpack.c.l.b16 %v5399
    %v5546 = vunpack.c.h.b16 %v5399
    %v5547 = vunpack.c.l.b16 %v5400
    %v5548 = vunpack.c.h.b16 %v5400
    %v5549 = vunpack.c.l.b16 %v5401
    %v5550 = vunpack.c.h.b16 %v5401
    %v5551 = vunpack.c.l.b16 %v5402
    %v5552 = vunpack.c.h.b16 %v5402
    %v5553 = vunpack.c.l.b16 %v5403
    %v5554 = vunpack.c.h.b16 %v5403
    %v5555 = vunpack.c.l.b16 %v5404
    %v5556 = vunpack.c.h.b16 %v5404
    %v5557 = vunpack.c.l.b16 %v5405
    %v5558 = vunpack.c.h.b16 %v5405
    %v5559 = vunpack.c.l.b16 %v5406
    %v5560 = vunpack.c.h.b16 %v5406
    %v5561 = vunpack.c.l.b16 %v5407
    %v5562 = vunpack.c.h.b16 %v5407
    %v5563 = vunpack.c.l.b16 %v5408
    %v5564 = vunpack.c.h.b16 %v5408
    %v5565 = vunpack.c.l.b16 %v5409
    %v5566 = vunpack.c.h.b16 %v5409
    %v5567 = vunpack.c.l.b16 %v5410
    %v5568 = vunpack.c.h.b16 %v5410
    %v5569 = vunpack.c.l.b16 %v5411
    %v5570 = vunpack.c.h.b16 %v5411
    %v5571 = vunpack.c.l.b16 %v5412
    %v5572 = vunpack.c.h.b16 %v5412
    %v5573 = vunpack.c.l.b16 %v5413
    %v5574 = vunpack.c.h.b16 %v5413
    %v5575 = vunpack.c.l.b16 %v5414
    %v5576 = vunpack.c.h.b16 %v5414
    %v5577 = vunpack.c.l.b16 %v5415
    %v5578 = vunpack.c.h.b16 %v5415
    %v5579 = vunpack.c.l.b16 %v5416
    %v5580 = vunpack.c.h.b16 %v5416
    %v5581 = vunpack.c.l.b16 %v5417
    %v5582 = vunpack.c.h.b16 %v5417
    %v5583 = vunpack.c.l.b16 %v5418
    %v5584 = vunpack.c.h.b16 %v5418
    %v5585 = vunpack.c.l.b16 %v5419
    %v5586 = vunpack.c.h.b16 %v5419
    %v5587 = vunpack.c.l.b16 %v5420
    %v5588 = vunpack.c.h.b16 %v5420
    %v5589 = vunpack.c.l.b16 %v5421
    %v5590 = vunpack.c.h.b16 %v5421
    %v5591 = vunpack.c.l.b16 %v5422
    %v5592 = vunpack.c.h.b16 %v5422
    %v5593 = vunpack.c.l.b16 %v5423
    %v5594 = vunpack.c.h.b16 %v5423
    %v5595 = vunpack.c.l.b16 %v5424
    %v5596 = vunpack.c.h.b16 %v5424
    %v5597 = vunpack.c.l.b16 %v5425
    %v5598 = vunpack.c.h.b16 %v5425
    %v5599 = vunpack.c.l.b16 %v5426
    %v5600 = vunpack.c.h.b16 %v5426
    %v5601 = vunpack.c.l.b16 %v5427
    %v5602 = vunpack.c.h.b16 %v5427
    %v5603 = vunpack.c.l.b16 %v5428
    %v5604 = vunpack.c.h.b16 %v5428
    %v5605 = vunpack.c.l.b16 %v5429
    %v5606 = vunpack.c.h.b16 %v5429
    %v5607 = vunpack.c.l.b16 %v5430
    %v5608 = vunpack.c.h.b16 %v5430
    %v5609 = vunpack.c.l.b16 %v5431
    %v5610 = vunpack.c.h.b16 %v5431
    %v5611 = vunpack.c.l.b16 %v5432
    %v5612 = vunpack.c.h.b16 %v5432
    %v5613 = vunpack.c.l.b16 %v5433
    %v5614 = vunpack.c.h.b16 %v5433
    %v5615 = vunpack.c.l.b16 %v5434
    %v5616 = vunpack.c.h.b16 %v5434
    %v5617 = vunpack.c.l.b16 %v5435
    %v5618 = vunpack.c.h.b16 %v5435
    %v5619 = vunpack.c.l.b16 %v5436
    %v5620 = vunpack.c.h.b16 %v5436
    %v5621 = vunpack.c.l.b16 %v5437
    %v5622 = vunpack.c.h.b16 %v5437
    %v5623 = vunpack.c.l.b16 %v5438
    %v5624 = vunpack.c.h.b16 %v5438
    %v5625 = vunpack.c.l.b16 %v5439
    %v5626 = vunpack.c.h.b16 %v5439
    %v5627 = vunpack.c.l.b16 %v5440
    %v5628 = vunpack.c.h.b16 %v5440
    %v5629 = vunpack.c.l.b16 %v5441
    %v5630 = vunpack.c.h.b16 %v5441
    %v5631 = vunpack.c.l.b16 %v5442
    %v5632 = vunpack.c.h.b16 %v5442
    %v5633 = vunpack.c.l.b16 %v5443
    %v5634 = vunpack.c.h.b16 %v5443
    %v5635 = vunpack.c.l.b16 %v5444
    %v5636 = vunpack.c.h.b16 %v5444
    %v5637 = vunpack.c.l.b16 %v5445
    %v5638 = vunpack.c.h.b16 %v5445
    %v5639 = vunpack.c.l.b16 %v5446
    %v5640 = vunpack.c.h.b16 %v5446
    %v5641 = vunpack.c.l.b16 %v5447
    %v5642 = vunpack.c.h.b16 %v5447
    %v5643 = vunpack.c.l.b16 %v5448
    %v5644 = vunpack.c.h.b16 %v5448
    %v5645 = vunpack.c.l.b16 %v5449
    %v5646 = vunpack.c.h.b16 %v5449
    %v5647 = vunpack.c.l.b16 %v5450
    %v5648 = vunpack.c.h.b16 %v5450
    %v5649 = vunpack.c.l.b16 %v5451
    %v5650 = vunpack.c.h.b16 %v5451
    %v5651 = vunpack.c.l.b16 %v5452
    %v5652 = vunpack.c.h.b16 %v5452
    %v5653 = vunpack.c.l.b16 %v5453
    %v5654 = vunpack.c.h.b16 %v5453
    %v5655 = vunpack.c.l.b16 %v5454
    %v5656 = vunpack.c.h.b16 %v5454
    %v5657 = vunpack.c.l.b16 %v5455
    %v5658 = vunpack.c.h.b16 %v5455
    %v5659 = vunpack.c.l.b16 %v5456
    %v5660 = vunpack.c.h.b16 %v5456
    %v5661 = vpack.c.b16 %v5535, %v5533
    %v5662 = vpack.c.b16 %v5536, %v5534
    %v5663 = vpack.c.b16 %v5539, %v5537
    %v5664 = vpack.c.b16 %v5540, %v5538
    %v5665 = vpack.c.b16 %v5543, %v5541
    %v5666 = vpack.c.b16 %v5544, %v5542
    %v5667 = vpack.c.b16 %v5547, %v5545
    %v5668 = vpack.c.b16 %v5548, %v5546
    %v5669 = vpack.c.b16 %v5551, %v5549
    %v5670 = vpack.c.b16 %v5552, %v5550
    %v5671 = vpack.c.b16 %v5555, %v5553
    %v5672 = vpack.c.b16 %v5556, %v5554
    %v5673 = vpack.c.b16 %v5559, %v5557
    %v5674 = vpack.c.b16 %v5560, %v5558
    %v5675 = vpack.c.b16 %v5563, %v5561
    %v5676 = vpack.c.b16 %v5564, %v5562
    %v5677 = vpack.c.b16 %v5567, %v5565
    %v5678 = vpack.c.b16 %v5568, %v5566
    %v5679 = vpack.c.b16 %v5571, %v5569
    %v5680 = vpack.c.b16 %v5572, %v5570
    %v5681 = vpack.c.b16 %v5575, %v5573
    %v5682 = vpack.c.b16 %v5576, %v5574
    %v5683 = vpack.c.b16 %v5579, %v5577
    %v5684 = vpack.c.b16 %v5580, %v5578
    %v5685 = vpack.c.b16 %v5583, %v5581
    %v5686 = vpack.c.b16 %v5584, %v5582
    %v5687 = vpack.c.b16 %v5587, %v5585
    %v5688 = vpack.c.b16 %v5588, %v5586
    %v5689 = vpack.c.b16 %v5591, %v5589
    %v5690 = vpack.c.b16 %v5592, %v5590
    %v5691 = vpack.c.b16 %v5595, %v5593
    %v5692 = vpack.c.b16 %v5596, %v5594
    %v5693 = vpack.c.b16 %v5599, %v5597
    %v5694 = vpack.c.b16 %v5600, %v5598
    %v5695 = vpack.c.b16 %v5603, %v5601
    %v5696 = vpack.c.b16 %v5604, %v5602
    %v5697 = vpack.c.b16 %v5607, %v5605
    %v5698 = vpack.c.b16 %v5608, %v5606
    %v5699 = vpack.c.b16 %v5611, %v5609
    %v5700 = vpack.c.b16 %v5612, %v5610
    %v5701 = vpack.c.b16 %v5615, %v5613
    %v5702 = vpack.c.b16 %v5616, %v5614
    %v5703 = vpack.c.b16 %v5619, %v5617
    %v5704 = vpack.c.b16 %v5620, %v5618
    %v5705 = vpack.c.b16 %v5623, %v5621
    %v5706 = vpack.c.b16 %v5624, %v5622
    %v5707 = vpack.c.b16 %v5627, %v5625
    %v5708 = vpack.c.b16 %v5628, %v5626
    %v5709 = vpack.c.b16 %v5631, %v5629
    %v5710 = vpack.c.b16 %v5632, %v5630
    %v5711 = vpack.c.b16 %v5635, %v5633
    %v5712 = vpack.c.b16 %v5636, %v5634
    %v5713 = vpack.c.b16 %v5639, %v5637
    %v5714 = vpack.c.b16 %v5640, %v5638
    %v5715 = vpack.c.b16 %v5643, %v5641
    %v5716 = vpack.c.b16 %v5644, %v5642
    %v5717 = vpack.c.b16 %v5647, %v5645
    %v5718 = vpack.c.b16 %v5648, %v5646
    %v5719 = vpack.c.b16 %v5651, %v5649
    %v5720 = vpack.c.b16 %v5652, %v5650
    %v5721 = vpack.c.b16 %v5655, %v5653
    %v5722 = vpack.c.b16 %v5656, %v5654
    %v5723 = vpack.c.b16 %v5659, %v5657
    %v5724 = vpack.c.b16 %v5660, %v5658
    %5789 = vmatprep.subr.bf16.mxu0 %v5662
    %5790 = vmatpush1.bf16.msra.mxu0 %v5661
    %5791 = vmatprep.subr.bf16.mxu0 %v5664
    %5792 = vmatpush1.bf16.msra.mxu0 %v5663
    %5793 = vmatprep.subr.bf16.mxu0 %v5666
    %5794 = vmatpush1.bf16.msra.mxu0 %v5665
    %5795 = vmatprep.subr.bf16.mxu0 %v5668
    %5796 = vmatpush1.bf16.msra.mxu0 %v5667
    %5797 = vmatprep.subr.bf16.mxu0 %v5670
    %5798 = vmatpush1.bf16.msra.mxu0 %v5669
    %5799 = vmatprep.subr.bf16.mxu0 %v5672
    %5800 = vmatpush1.bf16.msra.mxu0 %v5671
    %5801 = vmatprep.subr.bf16.mxu0 %v5674
    %5802 = vmatpush1.bf16.msra.mxu0 %v5673
    %5803 = vmatprep.subr.bf16.mxu0 %v5676
    %5804 = vmatpush1.bf16.msra.mxu0 %v5675
    %5805 = vmatprep.subr.bf16.mxu0 %v5678
    %5806 = vmatpush1.bf16.msra.mxu0 %v5677
    %5807 = vmatprep.subr.bf16.mxu0 %v5680
    %5808 = vmatpush1.bf16.msra.mxu0 %v5679
    %5809 = vmatprep.subr.bf16.mxu0 %v5682
    %5810 = vmatpush1.bf16.msra.mxu0 %v5681
    %5811 = vmatprep.subr.bf16.mxu0 %v5684
    %5812 = vmatpush1.bf16.msra.mxu0 %v5683
    %5813 = vmatprep.subr.bf16.mxu0 %v5686
    %5814 = vmatpush1.bf16.msra.mxu0 %v5685
    %5815 = vmatprep.subr.bf16.mxu0 %v5688
    %5816 = vmatpush1.bf16.msra.mxu0 %v5687
    %5817 = vmatprep.subr.bf16.mxu0 %v5690
    %5818 = vmatpush1.bf16.msra.mxu0 %v5689
    %5819 = vmatprep.subr.bf16.mxu0 %v5692
    %5820 = vmatpush1.bf16.msra.mxu0 %v5691
    %5821 = vmatprep.mubr.bf16.mxu0 %v5390
    %5822 = vmatmul.mubr.bf16.gmra.mrb[0].mxu0 %v5389
    %v5823 = vpop.f32.mrb[0].mxu0
    %v5824 = vadd.f32 %v5462, %v5823
    %v5825 = vpop.f32.mrb[0].mxu0
    %v5826 = vadd.f32 %v5466, %v5825
    %v5827 = vpop.f32.mrb[0].mxu0
    %v5828 = vpop.f32.mrb[0].mxu0
    %5829 = vdwg.mxu0
    %5830 = vmatprep.subr.bf16.mxu0 %v5694
    %5831 = vmatpush1.bf16.msra.mxu0 %v5693
    %5832 = vmatprep.subr.bf16.mxu0 %v5696
    %5833 = vmatpush1.bf16.msra.mxu0 %v5695
    %5834 = vmatprep.subr.bf16.mxu0 %v5698
    %5835 = vmatpush1.bf16.msra.mxu0 %v5697
    %5836 = vmatprep.subr.bf16.mxu0 %v5700
    %5837 = vmatpush1.bf16.msra.mxu0 %v5699
    %5838 = vmatprep.subr.bf16.mxu0 %v5702
    %5839 = vmatpush1.bf16.msra.mxu0 %v5701
    %5840 = vmatprep.subr.bf16.mxu0 %v5704
    %5841 = vmatpush1.bf16.msra.mxu0 %v5703
    %5842 = vmatprep.subr.bf16.mxu0 %v5706
    %5843 = vmatpush1.bf16.msra.mxu0 %v5705
    %5844 = vmatprep.subr.bf16.mxu0 %v5708
    %5845 = vmatpush1.bf16.msra.mxu0 %v5707
    %5846 = vmatprep.subr.bf16.mxu0 %v5710
    %5847 = vmatpush1.bf16.msra.mxu0 %v5709
    %5848 = vmatprep.subr.bf16.mxu0 %v5712
    %5849 = vmatpush1.bf16.msra.mxu0 %v5711
    %5850 = vmatprep.subr.bf16.mxu0 %v5714
    %5851 = vmatpush1.bf16.msra.mxu0 %v5713
    %5852 = vmatprep.subr.bf16.mxu0 %v5716
    %5853 = vmatpush1.bf16.msra.mxu0 %v5715
    %5854 = vmatprep.subr.bf16.mxu0 %v5718
    %5855 = vmatpush1.bf16.msra.mxu0 %v5717
    %5856 = vmatprep.subr.bf16.mxu0 %v5720
    %5857 = vmatpush1.bf16.msra.mxu0 %v5719
    %5858 = vmatprep.subr.bf16.mxu0 %v5722
    %5859 = vmatpush1.bf16.msra.mxu0 %v5721
    %5860 = vmatprep.subr.bf16.mxu0 %v5724
    %5861 = vmatpush1.bf16.msra.mxu0 %v5723
    %5862 = vmatprep.mubr.bf16.mxu0 %v5392
    %5863 = vmatmul.mubr.bf16.gmra.mrb[0].mxu0 %v5391
    %v5864 = vpop.f32.mrb[0].mxu0
    %v5865 = vadd.f32 %v5824, %v5864
    %v5866 = vpop.f32.mrb[0].mxu0
    %v5867 = vadd.f32 %v5826, %v5866
    %v5868 = vpop.f32.mrb[0].mxu0
    %v5869 = vpop.f32.mrb[0].mxu0
    %5870 = vdwg.mxu0
    %s5871 = sld [smem:[#allocation2 + $0x1]]
    %vm5872 = vcmp.ge.f32.partialorder %v5865, 0.0
    %vm5873 = vcmp.ge.f32.partialorder %v5867, 0.0
    %v5874 = vstv %s5871
    %v5875 = vmul.f32 %v5874, %v5865
    %v5876 = vmul.f32 %v5874, %v5867
    %v5877 = vsel %vm5872, %v5865, %v5875
    %v5878 = vsel %vm5873, %v5867, %v5876
    %v5879 = vpack.c.bf16 %v5877, %v5877
    %v5880 = vpack.c.bf16 %v5878, %v5878
    %v5881 = vld [vmem:[#allocation13] sm:$0xf]
    %v5882 = vld [vmem:[#allocation13 + $0x4] sm:$0xf]
    %v5883 = vld [vmem:[#allocation13 + $0x8] sm:$0xf]
    %v5884 = vld [vmem:[#allocation13 + $0xc] sm:$0xf]
    %v5885 = vld [vmem:[#allocation13 + $0x10] sm:$0xf]
    %v5886 = vld [vmem:[#allocation13 + $0x14] sm:$0xf]
    %v5887 = vld [vmem:[#allocation13 + $0x18] sm:$0xf]
    %v5888 = vld [vmem:[#allocation13 + $0x1c] sm:$0xf]
    %v5889 = vld [vmem:[#allocation13 + $0x20] sm:$0xf]
    %v5890 = vld [vmem:[#allocation13 + $0x24] sm:$0xf]
    %v5891 = vld [vmem:[#allocation13 + $0x28] sm:$0xf]
    %v5892 = vld [vmem:[#allocation13 + $0x2c] sm:$0xf]
    %v5893 = vld [vmem:[#allocation13 + $0x30] sm:$0xf]
    %v5894 = vld [vmem:[#allocation13 + $0x34] sm:$0xf]
    %v5895 = vld [vmem:[#allocation13 + $0x38] sm:$0xf]
    %v5896 = vld [vmem:[#allocation13 + $0x3c] sm:$0xf]
    %v5897 = vld [vmem:[#allocation13 + $0x40] sm:$0xf]
    %v5898 = vld [vmem:[#allocation13 + $0x44] sm:$0xf]
    %v5899 = vld [vmem:[#allocation13 + $0x48] sm:$0xf]
    %v5900 = vld [vmem:[#allocation13 + $0x4c] sm:$0xf]
    %v5901 = vld [vmem:[#allocation13 + $0x50] sm:$0xf]
    %v5902 = vld [vmem:[#allocation13 + $0x54] sm:$0xf]
    %v5903 = vld [vmem:[#allocation13 + $0x58] sm:$0xf]
    %v5904 = vld [vmem:[#allocation13 + $0x5c] sm:$0xf]
    %v5905 = vld [vmem:[#allocation13 + $0x60] sm:$0xf]
    %v5906 = vld [vmem:[#allocation13 + $0x64] sm:$0xf]
    %v5907 = vld [vmem:[#allocation13 + $0x68] sm:$0xf]
    %v5908 = vld [vmem:[#allocation13 + $0x6c] sm:$0xf]
    %v5909 = vld [vmem:[#allocation13 + $0x70] sm:$0xf]
    %v5910 = vld [vmem:[#allocation13 + $0x74] sm:$0xf]
    %v5911 = vld [vmem:[#allocation13 + $0x78] sm:$0xf]
    %v5912 = vld [vmem:[#allocation13 + $0x7c] sm:$0xf]
    %v5913 = vld [vmem:[#allocation15] sm:$0x1]
    %v5915 = vlaneseq
    %v5916 = vshrl.u32 %v5915, 7
    %v5917 = vsub.s32 0, %v5916
    %v5918 = vrot.slane %v5913, %v5917
    %v5952 = vunpack.c.l.b16 %v5881
    %v5953 = vunpack.c.l.b16 %v5882
    %v5954 = vunpack.c.l.b16 %v5883
    %v5955 = vunpack.c.l.b16 %v5884
    %v5956 = vunpack.c.l.b16 %v5885
    %v5957 = vunpack.c.l.b16 %v5886
    %v5958 = vunpack.c.l.b16 %v5887
    %v5959 = vunpack.c.l.b16 %v5888
    %v5960 = vunpack.c.l.b16 %v5889
    %v5961 = vunpack.c.l.b16 %v5890
    %v5962 = vunpack.c.l.b16 %v5891
    %v5963 = vunpack.c.l.b16 %v5892
    %v5964 = vunpack.c.l.b16 %v5893
    %v5965 = vunpack.c.l.b16 %v5894
    %v5966 = vunpack.c.l.b16 %v5895
    %v5967 = vunpack.c.l.b16 %v5896
    %v5968 = vunpack.c.l.b16 %v5897
    %v5969 = vunpack.c.l.b16 %v5898
    %v5970 = vunpack.c.l.b16 %v5899
    %v5971 = vunpack.c.l.b16 %v5900
    %v5972 = vunpack.c.l.b16 %v5901
    %v5973 = vunpack.c.l.b16 %v5902
    %v5974 = vunpack.c.l.b16 %v5903
    %v5975 = vunpack.c.l.b16 %v5904
    %v5976 = vunpack.c.l.b16 %v5905
    %v5977 = vunpack.c.l.b16 %v5906
    %v5978 = vunpack.c.l.b16 %v5907
    %v5979 = vunpack.c.l.b16 %v5908
    %v5980 = vunpack.c.l.b16 %v5909
    %v5981 = vunpack.c.l.b16 %v5910
    %v5982 = vunpack.c.l.b16 %v5911
    %v5983 = vunpack.c.l.b16 %v5912
    %v5984 = vpack.c.b16 %v5953, %v5952
    %v5985 = vpack.c.b16 %v5955, %v5954
    %v5986 = vpack.c.b16 %v5957, %v5956
    %v5987 = vpack.c.b16 %v5959, %v5958
    %v5988 = vpack.c.b16 %v5961, %v5960
    %v5989 = vpack.c.b16 %v5963, %v5962
    %v5990 = vpack.c.b16 %v5965, %v5964
    %v5991 = vpack.c.b16 %v5967, %v5966
    %v5992 = vpack.c.b16 %v5969, %v5968
    %v5993 = vpack.c.b16 %v5971, %v5970
    %v5994 = vpack.c.b16 %v5973, %v5972
    %v5995 = vpack.c.b16 %v5975, %v5974
    %v5996 = vpack.c.b16 %v5977, %v5976
    %v5997 = vpack.c.b16 %v5979, %v5978
    %v5998 = vpack.c.b16 %v5981, %v5980
    %v5999 = vpack.c.b16 %v5983, %v5982
    %6016 = vmatprep.subr.bf16.mxu0 0
    %6017 = vmatpush1.bf16.msra.mxu0 %v5984
    %6018 = vmatprep.subr.bf16.mxu0 0
    %6019 = vmatpush1.bf16.msra.mxu0 %v5985
    %6020 = vmatprep.subr.bf16.mxu0 0
    %6021 = vmatpush1.bf16.msra.mxu0 %v5986
    %6022 = vmatprep.subr.bf16.mxu0 0
    %6023 = vmatpush1.bf16.msra.mxu0 %v5987
    %6024 = vmatprep.subr.bf16.mxu0 0
    %6025 = vmatpush1.bf16.msra.mxu0 %v5988
    %6026 = vmatprep.subr.bf16.mxu0 0
    %6027 = vmatpush1.bf16.msra.mxu0 %v5989
    %6028 = vmatprep.subr.bf16.mxu0 0
    %6029 = vmatpush1.bf16.msra.mxu0 %v5990
    %6030 = vmatprep.subr.bf16.mxu0 0
    %6031 = vmatpush1.bf16.msra.mxu0 %v5991
    %6032 = vmatprep.subr.bf16.mxu0 0
    %6033 = vmatpush1.bf16.msra.mxu0 %v5992
    %6034 = vmatprep.subr.bf16.mxu0 0
    %6035 = vmatpush1.bf16.msra.mxu0 %v5993
    %6036 = vmatprep.subr.bf16.mxu0 0
    %6037 = vmatpush1.bf16.msra.mxu0 %v5994
    %6038 = vmatprep.subr.bf16.mxu0 0
    %6039 = vmatpush1.bf16.msra.mxu0 %v5995
    %6040 = vmatprep.subr.bf16.mxu0 0
    %6041 = vmatpush1.bf16.msra.mxu0 %v5996
    %6042 = vmatprep.subr.bf16.mxu0 0
    %6043 = vmatpush1.bf16.msra.mxu0 %v5997
    %6044 = vmatprep.subr.bf16.mxu0 0
    %6045 = vmatpush1.bf16.msra.mxu0 %v5998
    %6046 = vmatprep.subr.bf16.mxu0 0
    %6047 = vmatpush1.bf16.msra.mxu0 %v5999
    %6048 = vmatprep.mubr.bf16.mxu0 %v5880
    %6049 = vmatmul.mubr.bf16.gmra.mrb[0].mxu0 %v5879
    %v6050 = vpop.f32.mrb[0].mxu0
    %v6051 = vadd.f32 %v5918, %v6050
    %v6052 = vpop.f32.mrb[0].mxu0
    %v6053 = vpop.f32.mrb[0].mxu0
    %v6054 = vpop.f32.mrb[0].mxu0
    %6055 = vdwg.mxu0
    %s6056 = sld [smem:[#allocation2 + $0x2]]
    %vm6057 = vcmp.ge.f32.partialorder %v6051, 0.0
    %v6058 = vstv %s6056
    %v6059 = vmul.f32 %v6058, %v6051
    %v6060 = vsel %vm6057, %v6051, %v6059
    %v6061 = vpack.c.bf16 %v6060, %v6060
    %v6062 = vld [vmem:[#allocation16] sm:$0xf]
    %v6063 = vld [vmem:[#allocation16 + $0x4] sm:$0xf]
    %v6064 = vld [vmem:[#allocation16 + $0x8] sm:$0xf]
    %v6065 = vld [vmem:[#allocation16 + $0xc] sm:$0xf]
    %v6066 = vld [vmem:[#allocation16 + $0x10] sm:$0xf]
    %v6067 = vld [vmem:[#allocation16 + $0x14] sm:$0xf]
    %v6068 = vld [vmem:[#allocation16 + $0x18] sm:$0xf]
    %v6069 = vld [vmem:[#allocation16 + $0x1c] sm:$0xf]
    %v6070 = vld [vmem:[#allocation16 + $0x20] sm:$0xf]
    %v6071 = vld [vmem:[#allocation16 + $0x24] sm:$0xf]
    %v6072 = vld [vmem:[#allocation16 + $0x28] sm:$0xf]
    %v6073 = vld [vmem:[#allocation16 + $0x2c] sm:$0xf]
    %v6074 = vld [vmem:[#allocation16 + $0x30] sm:$0xf]
    %v6075 = vld [vmem:[#allocation16 + $0x34] sm:$0xf]
    %v6076 = vld [vmem:[#allocation16 + $0x38] sm:$0xf]
    %v6077 = vld [vmem:[#allocation16 + $0x3c] sm:$0xf]
    %v6078 = vld [vmem:[#allocation18] sm:$0x1]
    %v6080 = vlaneseq
    %v6081 = vshrl.u32 %v6080, 7
    %v6082 = vsub.s32 0, %v6081
    %v6083 = vrot.slane %v6078, %v6082
    %v6101 = vunpack.c.l.b16 %v6062
    %v6102 = vunpack.c.l.b16 %v6063
    %v6103 = vunpack.c.l.b16 %v6064
    %v6104 = vunpack.c.l.b16 %v6065
    %v6105 = vunpack.c.l.b16 %v6066
    %v6106 = vunpack.c.l.b16 %v6067
    %v6107 = vunpack.c.l.b16 %v6068
    %v6108 = vunpack.c.l.b16 %v6069
    %v6109 = vunpack.c.l.b16 %v6070
    %v6110 = vunpack.c.l.b16 %v6071
    %v6111 = vunpack.c.l.b16 %v6072
    %v6112 = vunpack.c.l.b16 %v6073
    %v6113 = vunpack.c.l.b16 %v6074
    %v6114 = vunpack.c.l.b16 %v6075
    %v6115 = vunpack.c.l.b16 %v6076
    %v6116 = vunpack.c.l.b16 %v6077
    %v6117 = vpack.c.b16 %v6102, %v6101
    %v6118 = vpack.c.b16 %v6104, %v6103
    %v6119 = vpack.c.b16 %v6106, %v6105
    %v6120 = vpack.c.b16 %v6108, %v6107
    %v6121 = vpack.c.b16 %v6110, %v6109
    %v6122 = vpack.c.b16 %v6112, %v6111
    %v6123 = vpack.c.b16 %v6114, %v6113
    %v6124 = vpack.c.b16 %v6116, %v6115
    %6133 = vmatprep.subr.bf16.mxu0 0
    %6134 = vmatpush1.bf16.msra.mxu0 %v6117
    %6135 = vmatprep.subr.bf16.mxu0 0
    %6136 = vmatpush1.bf16.msra.mxu0 %v6118
    %6137 = vmatprep.subr.bf16.mxu0 0
    %6138 = vmatpush1.bf16.msra.mxu0 %v6119
    %6139 = vmatprep.subr.bf16.mxu0 0
    %6140 = vmatpush1.bf16.msra.mxu0 %v6120
    %6141 = vmatprep.subr.bf16.mxu0 0
    %6142 = vmatpush1.bf16.msra.mxu0 %v6121
    %6143 = vmatprep.subr.bf16.mxu0 0
    %6144 = vmatpush1.bf16.msra.mxu0 %v6122
    %6145 = vmatprep.subr.bf16.mxu0 0
    %6146 = vmatpush1.bf16.msra.mxu0 %v6123
    %6147 = vmatprep.subr.bf16.mxu0 0
    %6148 = vmatpush1.bf16.msra.mxu0 %v6124
    %6149 = vmatprep.subr.bf16.mxu0 0
    %6150 = vmatpush1.bf16.msra.mxu0 0
    %6151 = vmatprep.subr.bf16.mxu0 0
    %6152 = vmatpush1.bf16.msra.mxu0 0
    %6153 = vmatprep.subr.bf16.mxu0 0
    %6154 = vmatpush1.bf16.msra.mxu0 0
    %6155 = vmatprep.subr.bf16.mxu0 0
    %6156 = vmatpush1.bf16.msra.mxu0 0
    %6157 = vmatprep.subr.bf16.mxu0 0
    %6158 = vmatpush1.bf16.msra.mxu0 0
    %6159 = vmatprep.subr.bf16.mxu0 0
    %6160 = vmatpush1.bf16.msra.mxu0 0
    %6161 = vmatprep.subr.bf16.mxu0 0
    %6162 = vmatpush1.bf16.msra.mxu0 0
    %6163 = vmatprep.subr.bf16.mxu0 0
    %6164 = vmatpush1.bf16.msra.mxu0 0
    %6165 = vmatprep.mubr.bf16.mxu0 0
    %6166 = vmatmul.mubr.bf16.gmra.mrb[0].mxu0 %v6061
    %v6167 = vpop.f32.mrb[0].mxu0
    %v6168 = vadd.f32 %v6083, %v6167
    %v6169 = vpop.f32.mrb[0].mxu0
    %v6170 = vpop.f32.mrb[0].mxu0
    %v6171 = vpop.f32.mrb[0].mxu0
    %6172 = vdwg.mxu0
    %6173 = vst [vmem:[#allocation19] sm:$0xff] %v6168
    // Predicated region
    $region82: #{tpu_custom_call.1} parent=1 // pred_check
      _
    $region83: #{tpu_custom_call.1} parent=1 // pred_check_branch
      %6175 = sbr.rel (0) target = $region85
    $region84: #{tpu_custom_call.1} parent=1 // pred_region
      %s6177 = ssub.s32 128, 128
      %6178 = vsyncadd [#allocation4], %s6177
      %s6180 = sshll.u32 [#allocation19], 4
      %s6181 = int_to_ptr.vmem [resolvable:$true] %s6180
      %6183 = dma.vmem_to_hbm [thread:$0]  %s6181, 128, %s10, [#allocation4]
    $region85: #{tpu_custom_call.1} parent=1 // pred_fallthru
      _
    // Predicated region
    $region86: #{tpu_custom_call.1} parent=1 // pred_check
      _
    $region87: #{tpu_custom_call.1} parent=1 // pred_check_branch
      %6185 = sbr.rel (0) target = $region89
    $region88: #{tpu_custom_call.1} parent=1 // pred_region
      %6186 = dma.done [#allocation4], 128
    $region89: #{tpu_custom_call.1} parent=1 // pred_fallthru
      _
    %6187 = vsyncpa [#allocation3], 1
    %6188 = vsyncpa [#allocation8], 1
    %6189 = vsyncpa [#allocation11], 1
    %6190 = vsyncpa [#allocation14], 1
    %6191 = vsyncpa [#allocation17], 1
    %6192 = vsyncpa [#allocation4], 1
    %6193 = vsyncpa [#allocation5], 1

// kernel: tpu_custom_call.1
$region0: #{tpu_custom_call.1}
  #allocation0 [shape = 'u32[]', space=smem, size = 0x4, offset = 0x4, fixed_abs, tag = 'smem constant byte address 0x4 - core index']
  #allocation1 [shape = 'u32[144,128]{1,0:T(1,128)}', space=vmem, size = 0x12000, scoped, tag = 'internal scratch']
  %s0 = inlined_call_operand.hbm [shape: f32[3], index: 0, kind: input, shape index: {}]
  %s1 = inlined_call_operand.hbm [shape: bf16[8,2800], index: 1, kind: input, shape index: {}]
  %s2 = inlined_call_operand.hbm [shape: bf16[2800,512], index: 2, kind: input, shape index: {}]
  %s3 = inlined_call_operand.hbm [shape: f32[1,512], index: 3, kind: input, shape index: {}]
  %s4 = inlined_call_operand.hbm [shape: bf16[512,256], index: 4, kind: input, shape index: {}]
  %s5 = inlined_call_operand.hbm [shape: f32[1,256], index: 5, kind: input, shape index: {}]
  %s6 = inlined_call_operand.hbm [shape: bf16[256,128], index: 6, kind: input, shape index: {}]
  %s7 = inlined_call_operand.hbm [shape: f32[1,128], index: 7, kind: input, shape index: {}]
  %s8 = inlined_call_operand.hbm [shape: bf16[128,128], index: 8, kind: input, shape index: {}]
  %s9 = inlined_call_operand.hbm [shape: f32[1,128], index: 9, kind: input, shape index: {}]
  %s10 = inlined_call_operand.hbm [shape: f32[8,128], index: 10, kind: output, shape index: {}]
  %s11 = sld [smem:[#allocation0]]
  $region90: #{tpu_custom_call.1} parent=0
    _
  %s13 = ssub.s32 1, %s11
  %s14 = scalar_select 0, %s13, %s11
  $region1: #{tpu_custom_call.1} parent=0
    #allocation2 [shape = 'u8[512]{0}', space=smem, size = 0x200, scoped, tag = 'input window, operand 0, single buffered']
    #allocation3 [shape = 's32[1]{0}', space=sflag, size = 0x4, scoped, tag = 'scoped memory for tpu_custom_call.1']
    #allocation4 [shape = 's32[1]{0}', space=sflag, size = 0x4, scoped, tag = 'scoped memory for tpu_custom_call.1']
    #allocation5 [shape = 's32[1]{0}', space=sflag, size = 0x4, scoped, tag = 'scoped memory for tpu_custom_call.1']
    #allocation6 [shape = 'u8[45056]{0}', space=vmem, size = 0xb000, scoped, tag = 'input window, operand 1, single buffered']
    #allocation7 [shape = 'u8[2867200]{0}', space=vmem, size = 0x2bc000, scoped, tag = 'input window, operand 2, single buffered']
    #allocation8 [shape = 's32[1]{0}', space=sflag, size = 0x4, scoped, tag = 'scoped memory for tpu_custom_call.1']
    #allocation9 [shape = 'u8[2048]{0}', space=vmem, size = 0x800, scoped, tag = 'input window, operand 3, single buffered']
    #allocation10 [shape = 'u8[262144]{0}', space=vmem, size = 0x40000, scoped, tag = 'input window, operand 4, single buffered']
    #allocation11 [shape = 's32[1]{0}', space=sflag, size = 0x4, scoped, tag = 'scoped memory for tpu_custom_call.1']
    #allocation12 [shape = 'u8[1024]{0}', space=vmem, size = 0x400, scoped, tag = 'input window, operand 5, single buffered']
    #allocation13 [shape = 'u8[65536]{0}', space=vmem, size = 0x10000, scoped, tag = 'input window, operand 6, single buffered']
    #allocation14 [shape = 's32[1]{0}', space=sflag, size = 0x4, scoped, tag = 'scoped memory for tpu_custom_call.1']
    #allocation15 [shape = 'u8[512]{0}', space=vmem, size = 0x400, scoped, tag = 'input window, operand 7, single buffered']
    #allocation16 [shape = 'u8[32768]{0}', space=vmem, size = 0x8000, scoped, tag = 'input window, operand 8, single buffered']
    #allocation17 [shape = 's32[1]{0}', space=sflag, size = 0x4, scoped, tag = 'scoped memory for tpu_custom_call.1']
    #allocation18 [shape = 'u8[512]{0}', space=vmem, size = 0x400, scoped, tag = 'input window, operand 9, single buffered']
    #allocation19 [shape = 'u8[4096]{0}', space=vmem, size = 0x1000, scoped, tag = 'output window, operand 0, single buffered']
    %15 = vsyncpa [#allocation5], 0
    %16 = vsyncpa [#allocation3], 0
    %17 = vsyncpa [#allocation8], 0
    %18 = vsyncpa [#allocation11], 0
    %19 = vsyncpa [#allocation14], 0
    %20 = vsyncpa [#allocation17], 0
    %21 = vsyncpa [#allocation4], 0
    // Predicated region
    $region2: #{tpu_custom_call.1} parent=1 // pred_check
      _
    $region3: #{tpu_custom_call.1} parent=1 // pred_check_branch
      %23 = sbr.rel (0) target = $region5
    $region4: #{tpu_custom_call.1} parent=1 // pred_region
      %s25 = ssub.s32 16, 16
      %26 = vsyncadd [#allocation5], %s25
      %29 = dma.hbm_to_smem %s0, 16, [#allocation2], [#allocation5]
    $region5: #{tpu_custom_call.1} parent=1 // pred_fallthru
      _
    // Predicated region
    $region6: #{tpu_custom_call.1} parent=1 // pred_check
      _
    $region7: #{tpu_custom_call.1} parent=1 // pred_check_branch
      %31 = sbr.rel (0) target = $region9
    $region8: #{tpu_custom_call.1} parent=1 // pred_region
      %s33 = ssub.s32 1408, 1408
      %34 = vsyncadd [#allocation3], %s33
      %s36 = sshll.u32 [#allocation6], 4
      %s37 = int_to_ptr.vmem [resolvable:$true] %s36
      %39 = dma.hbm_to_vmem [thread:$0]  %s1, 1408, %s37, [#allocation3]
    $region9: #{tpu_custom_call.1} parent=1 // pred_fallthru
      _
    // Predicated region
    $region10: #{tpu_custom_call.1} parent=1 // pred_check
      _
    $region11: #{tpu_custom_call.1} parent=1 // pred_check_branch
      %41 = sbr.rel (0) target = $region13
    $region12: #{tpu_custom_call.1} parent=1 // pred_region
      %s43 = ssub.s32 89600, 89600
      %44 = vsyncadd [#allocation8], %s43
      %s45 = sshll.u32 [#allocation7], 4
      %s46 = int_to_ptr.vmem [resolvable:$true] %s45
      %51 = dma.hbm_to_vmem [thread:$0]  %s2, 89600, %s46, [#allocation8], 256, 256, 16
    $region13: #{tpu_custom_call.1} parent=1 // pred_fallthru
      _
    // Predicated region
    $region14: #{tpu_custom_call.1} parent=1 // pred_check
      _
    $region15: #{tpu_custom_call.1} parent=1 // pred_check_branch
      %53 = sbr.rel (0) target = $region17
    $region16: #{tpu_custom_call.1} parent=1 // pred_region
      %s55 = ssub.s32 64, 64
      %56 = vsyncadd [#allocation8], %s55
      %s58 = sshll.u32 [#allocation9], 4
      %s59 = int_to_ptr.vmem [resolvable:$true] %s58
      %61 = dma.hbm_to_vmem [thread:$0]  %s3, 64, %s59, [#allocation8]
    $region17: #{tpu_custom_call.1} parent=1 // pred_fallthru
      _
    // Predicated region
    $region18: #{tpu_custom_call.1} parent=1 // pred_check
      _
    $region19: #{tpu_custom_call.1} parent=1 // pred_check_branch
      %63 = sbr.rel (0) target = $region21
    $region20: #{tpu_custom_call.1} parent=1 // pred_region
      %s65 = ssub.s32 8192, 8192
      %66 = vsyncadd [#allocation11], %s65
      %s67 = sshll.u32 [#allocation10], 4
      %s68 = int_to_ptr.vmem [resolvable:$true] %s67
      %73 = dma.hbm_to_vmem [thread:$0]  %s4, 8192, %s68, [#allocation11], 128, 128, 8
    $region21: #{tpu_custom_call.1} parent=1 // pred_fallthru
      _
    // Predicated region
    $region22: #{tpu_custom_call.1} parent=1 // pred_check
      _
    $region23: #{tpu_custom_call.1} parent=1 // pred_check_branch
      %75 = sbr.rel (0) target = $region25
    $region24: #{tpu_custom_call.1} parent=1 // pred_region
      %s77 = ssub.s32 32, 32
      %78 = vsyncadd [#allocation11], %s77
      %s80 = sshll.u32 [#allocation12], 4
      %s81 = int_to_ptr.vmem [resolvable:$true] %s80
      %83 = dma.hbm_to_vmem [thread:$0]  %s5, 32, %s81, [#allocation11]
    $region25: #{tpu_custom_call.1} parent=1 // pred_fallthru
      _
    // Predicated region
    $region26: #{tpu_custom_call.1} parent=1 // pred_check
      _
    $region27: #{tpu_custom_call.1} parent=1 // pred_check_branch
      %85 = sbr.rel (0) target = $region29
    $region28: #{tpu_custom_call.1} parent=1 // pred_region
      %s87 = ssub.s32 2048, 2048
      %88 = vsyncadd [#allocation14], %s87
      %s89 = sshll.u32 [#allocation13], 4
      %s90 = int_to_ptr.vmem [resolvable:$true] %s89
      %95 = dma.hbm_to_vmem [thread:$0]  %s6, 2048, %s90, [#allocation14], 64, 64, 4
    $region29: #{tpu_custom_call.1} parent=1 // pred_fallthru
      _
    // Predicated region
    $region30: #{tpu_custom_call.1} parent=1 // pred_check
      _
    $region31: #{tpu_custom_call.1} parent=1 // pred_check_branch
      %97 = sbr.rel (0) target = $region33
    $region32: #{tpu_custom_call.1} parent=1 // pred_region
      %s99 = ssub.s32 16, 16
      %100 = vsyncadd [#allocation14], %s99
      %s102 = sshll.u32 [#allocation15], 4
      %s103 = int_to_ptr.vmem [resolvable:$true] %s102
      %105 = dma.hbm_to_vmem [thread:$0]  %s7, 16, %s103, [#allocation14]
    $region33: #{tpu_custom_call.1} parent=1 // pred_fallthru
      _
    // Predicated region
    $region34: #{tpu_custom_call.1} parent=1 // pred_check
      _
    $region35: #{tpu_custom_call.1} parent=1 // pred_check_branch
      %107 = sbr.rel (0) target = $region37
    $region36: #{tpu_custom_call.1} parent=1 // pred_region
      %s109 = ssub.s32 1024, 1024
      %110 = vsyncadd [#allocation17], %s109
      %s111 = sshll.u32 [#allocation16], 4
      %s112 = int_to_ptr.vmem [resolvable:$true] %s111
      %117 = dma.hbm_to_vmem [thread:$0]  %s8, 1024, %s112, [#allocation17], 64, 64, 4
    $region37: #{tpu_custom_call.1} parent=1 // pred_fallthru
      _
    // Predicated region
    $region38: #{tpu_custom_call.1} parent=1 // pred_check
      _
    $region39: #{tpu_custom_call.1} parent=1 // pred_check_branch
      %119 = sbr.rel (0) target = $region41
    $region40: #{tpu_custom_call.1} parent=1 // pred_region
      %s121 = ssub.s32 16, 16
      %122 = vsyncadd [#allocation17], %s121
      %s124 = sshll.u32 [#allocation18], 4
      %s125 = int_to_ptr.vmem [resolvable:$true] %s124
      %127 = dma.hbm_to_vmem [thread:$0]  %s9, 16, %s125, [#allocation17]
    $region41: #{tpu_custom_call.1} parent=1 // pred_fallthru
      _
    // Predicated region
    $region42: #{tpu_custom_call.1} parent=1 // pred_check
      _
    $region43: #{tpu_custom_call.1} parent=1 // pred_check_branch
      %129 = sbr.rel (0) target = $region45
    $region44: #{tpu_custom_call.1} parent=1 // pred_region
      %130 = dma.done [#allocation5], 16
    $region45: #{tpu_custom_call.1} parent=1 // pred_fallthru
      _
    // Predicated region
    $region46: #{tpu_custom_call.1} parent=1 // pred_check
      _
    $region47: #{tpu_custom_call.1} parent=1 // pred_check_branch
      %132 = sbr.rel (0) target = $region49
    $region48: #{tpu_custom_call.1} parent=1 // pred_region
      %133 = dma.done [#allocation3], 1408
    $region49: #{tpu_custom_call.1} parent=1 // pred_fallthru
      _
    // Predicated region
    $region50: #{tpu_custom_call.1} parent=1 // pred_check
      _
    $region51: #{tpu_custom_call.1} parent=1 // pred_check_branch
      %135 = sbr.rel (0) target = $region53
    $region52: #{tpu_custom_call.1} parent=1 // pred_region
      %136 = dma.done [#allocation8], 89600
    $region53: #{tpu_custom_call.1} parent=1 // pred_fallthru
      _
    // Predicated region
    $region54: #{tpu_custom_call.1} parent=1 // pred_check
      _
    $region55: #{tpu_custom_call.1} parent=1 // pred_check_branch
      %138 = sbr.rel (0) target = $region57
    $region56: #{tpu_custom_call.1} parent=1 // pred_region
      %139 = dma.done [#allocation8], 64
    $region57: #{tpu_custom_call.1} parent=1 // pred_fallthru
      _
    // Predicated region
    $region58: #{tpu_custom_call.1} parent=1 // pred_check
      _
    $region59: #{tpu_custom_call.1} parent=1 // pred_check_branch
      %141 = sbr.rel (0) target = $region61
    $region60: #{tpu_custom_call.1} parent=1 // pred_region
      %142 = dma.done [#allocation11], 8192
    $region61: #{tpu_custom_call.1} parent=1 // pred_fallthru
      _
    // Predicated region
    $region62: #{tpu_custom_call.1} parent=1 // pred_check
      _
    $region63: #{tpu_custom_call.1} parent=1 // pred_check_branch
      %144 = sbr.rel (0) target = $region65
    $region64: #{tpu_custom_call.1} parent=1 // pred_region
      %145 = dma.done [#allocation11], 32
    $region65: #{tpu_custom_call.1} parent=1 // pred_fallthru
      _
    // Predicated region
    $region66: #{tpu_custom_call.1} parent=1 // pred_check
      _
    $region67: #{tpu_custom_call.1} parent=1 // pred_check_branch
      %147 = sbr.rel (0) target = $region69
    $region68: #{tpu_custom_call.1} parent=1 // pred_region
      %148 = dma.done [#allocation14], 2048
    $region69: #{tpu_custom_call.1} parent=1 // pred_fallthru
      _
    // Predicated region
    $region70: #{tpu_custom_call.1} parent=1 // pred_check
      _
    $region71: #{tpu_custom_call.1} parent=1 // pred_check_branch
      %150 = sbr.rel (0) target = $region73
    $region72: #{tpu_custom_call.1} parent=1 // pred_region
      %151 = dma.done [#allocation14], 16
    $region73: #{tpu_custom_call.1} parent=1 // pred_fallthru
      _
    // Predicated region
    $region74: #{tpu_custom_call.1} parent=1 // pred_check
      _
    $region75: #{tpu_custom_call.1} parent=1 // pred_check_branch
      %153 = sbr.rel (0) target = $region77
    $region76: #{tpu_custom_call.1} parent=1 // pred_region
      %154 = dma.done [#allocation17], 1024
    $region77: #{tpu_custom_call.1} parent=1 // pred_fallthru
      _
    // Predicated region
    $region78: #{tpu_custom_call.1} parent=1 // pred_check
      _
    $region79: #{tpu_custom_call.1} parent=1 // pred_check_branch
      %156 = sbr.rel (0) target = $region81
    $region80: #{tpu_custom_call.1} parent=1 // pred_region
      %157 = dma.done [#allocation17], 16
    $region81: #{tpu_custom_call.1} parent=1 // pred_fallthru
      _
    %158 = sfence
    %v160 = vld [vmem:[#allocation6] sm:$0xff]
    %v161 = vld [vmem:[#allocation6 + $0x8] sm:$0xff]
    %v162 = vld [vmem:[#allocation6 + $0x10] sm:$0xff]
    %v163 = vld [vmem:[#allocation6 + $0x18] sm:$0xff]
    %v164 = vld [vmem:[#allocation6 + $0x20] sm:$0xff]
    %v165 = vld [vmem:[#allocation6 + $0x28] sm:$0xff]
    %v166 = vld [vmem:[#allocation6 + $0x30] sm:$0xff]
    %v167 = vld [vmem:[#allocation6 + $0x38] sm:$0xff]
    %v168 = vld [vmem:[#allocation6 + $0x40] sm:$0xff]
    %v169 = vld [vmem:[#allocation6 + $0x48] sm:$0xff]
    %v170 = vld [vmem:[#allocation6 + $0x50] sm:$0xff]
    %v171 = vld [vmem:[#allocation7] sm:$0xff]
    %v172 = vld [vmem:[#allocation7 + $0x8] sm:$0xff]
    %v173 = vld [vmem:[#allocation7 + $0x10] sm:$0xff]
    %v174 = vld [vmem:[#allocation7 + $0x18] sm:$0xff]
    %v175 = vld [vmem:[#allocation7 + $0x20] sm:$0xff]
    %v176 = vld [vmem:[#allocation7 + $0x28] sm:$0xff]
    %v177 = vld [vmem:[#allocation7 + $0x30] sm:$0xff]
    %v178 = vld [vmem:[#allocation7 + $0x38] sm:$0xff]
    %v179 = vld [vmem:[#allocation7 + $0x40] sm:$0xff]
    %v180 = vld [vmem:[#allocation7 + $0x48] sm:$0xff]
    %v181 = vld [vmem:[#allocation7 + $0x50] sm:$0xff]
    %v182 = vld [vmem:[#allocation7 + $0x58] sm:$0xff]
    %v183 = vld [vmem:[#allocation7 + $0x60] sm:$0xff]
    %v184 = vld [vmem:[#allocation7 + $0x68] sm:$0xff]
    %v185 = vld [vmem:[#allocation7 + $0x70] sm:$0xff]
    %v186 = vld [vmem:[#allocation7 + $0x78] sm:$0xff]
    %v187 = vld [vmem:[#allocation7 + $0x80] sm:$0xff]
    %v188 = vld [vmem:[#allocation7 + $0x88] sm:$0xff]
    %v189 = vld [vmem:[#allocation7 + $0x90] sm:$0xff]
    %v190 = vld [vmem:[#allocation7 + $0x98] sm:$0xff]
    %v191 = vld [vmem:[#allocation7 + $0xa0] sm:$0xff]
    %v192 = vld [vmem:[#allocation7 + $0xa8] sm:$0xff]
    %v193 = vld [vmem:[#allocation7 + $0xb0] sm:$0xff]
    %v194 = vld [vmem:[#allocation7 + $0xb8] sm:$0xff]
    %v195 = vld [vmem:[#allocation7 + $0xc0] sm:$0xff]
    %v196 = vld [vmem:[#allocation7 + $0xc8] sm:$0xff]
    %v197 = vld [vmem:[#allocation7 + $0xd0] sm:$0xff]
    %v198 = vld [vmem:[#allocation7 + $0xd8] sm:$0xff]
    %v199 = vld [vmem:[#allocation7 + $0xe0] sm:$0xff]
    %v200 = vld [vmem:[#allocation7 + $0xe8] sm:$0xff]
    %v201 = vld [vmem:[#allocation7 + $0xf0] sm:$0xff]
    %v202 = vld [vmem:[#allocation7 + $0xf8] sm:$0xff]
    %v203 = vld [vmem:[#allocation7 + $0x100] sm:$0xff]
    %v204 = vld [vmem:[#allocation7 + $0x108] sm:$0xff]
    %v205 = vld [vmem:[#allocation7 + $0x110] sm:$0xff]
    %v206 = vld [vmem:[#allocation7 + $0x118] sm:$0xff]
    %v207 = vld [vmem:[#allocation7 + $0x120] sm:$0xff]
    %v208 = vld [vmem:[#allocation7 + $0x128] sm:$0xff]
    %v209 = vld [vmem:[#allocation7 + $0x130] sm:$0xff]
    %v210 = vld [vmem:[#allocation7 + $0x138] sm:$0xff]
    %v211 = vld [vmem:[#allocation7 + $0x140] sm:$0xff]
    %v212 = vld [vmem:[#allocation7 + $0x148] sm:$0xff]
    %v213 = vld [vmem:[#allocation7 + $0x150] sm:$0xff]
    %v214 = vld [vmem:[#allocation7 + $0x158] sm:$0xff]
    %v215 = vld [vmem:[#allocation7 + $0x160] sm:$0xff]
    %v216 = vld [vmem:[#allocation7 + $0x168] sm:$0xff]
    %v217 = vld [vmem:[#allocation7 + $0x170] sm:$0xff]
    %v218 = vld [vmem:[#allocation7 + $0x178] sm:$0xff]
    %v219 = vld [vmem:[#allocation7 + $0x180] sm:$0xff]
    %v220 = vld [vmem:[#allocation7 + $0x188] sm:$0xff]
    %v221 = vld [vmem:[#allocation7 + $0x190] sm:$0xff]
    %v222 = vld [vmem:[#allocation7 + $0x198] sm:$0xff]
    %v223 = vld [vmem:[#allocation7 + $0x1a0] sm:$0xff]
    %v224 = vld [vmem:[#allocation7 + $0x1a8] sm:$0xff]
    %v225 = vld [vmem:[#allocation7 + $0x1b0] sm:$0xff]
    %v226 = vld [vmem:[#allocation7 + $0x1b8] sm:$0xff]
    %v227 = vld [vmem:[#allocation7 + $0x1c0] sm:$0xff]
    %v228 = vld [vmem:[#allocation7 + $0x1c8] sm:$0xff]
    %v229 = vld [vmem:[#allocation7 + $0x1d0] sm:$0xff]
    %v230 = vld [vmem:[#allocation7 + $0x1d8] sm:$0xff]
    %v231 = vld [vmem:[#allocation7 + $0x1e0] sm:$0xff]
    %v232 = vld [vmem:[#allocation7 + $0x1e8] sm:$0xff]
    %v233 = vld [vmem:[#allocation7 + $0x1f0] sm:$0xff]
    %v234 = vld [vmem:[#allocation7 + $0x1f8] sm:$0xff]
    %v235 = vld [vmem:[#allocation7 + $0x200] sm:$0xff]
    %v236 = vld [vmem:[#allocation7 + $0x208] sm:$0xff]
    %v237 = vld [vmem:[#allocation7 + $0x210] sm:$0xff]
    %v238 = vld [vmem:[#allocation7 + $0x218] sm:$0xff]
    %v239 = vld [vmem:[#allocation7 + $0x220] sm:$0xff]
    %v240 = vld [vmem:[#allocation7 + $0x228] sm:$0xff]
    %v241 = vld [vmem:[#allocation7 + $0x230] sm:$0xff]
    %v242 = vld [vmem:[#allocation7 + $0x238] sm:$0xff]
    %v243 = vld [vmem:[#allocation7 + $0x240] sm:$0xff]
    %v244 = vld [vmem:[#allocation7 + $0x248] sm:$0xff]
    %v245 = vld [vmem:[#allocation7 + $0x250] sm:$0xff]
    %v246 = vld [vmem:[#allocation7 + $0x258] sm:$0xff]
    %v247 = vld [vmem:[#allocation7 + $0x260] sm:$0xff]
    %v248 = vld [vmem:[#allocation7 + $0x268] sm:$0xff]
    %v249 = vld [vmem:[#allocation7 + $0x270] sm:$0xff]
    %v250 = vld [vmem:[#allocation7 + $0x278] sm:$0xff]
    %v251 = vld [vmem:[#allocation7 + $0x280] sm:$0xff]
    %v252 = vld [vmem:[#allocation7 + $0x288] sm:$0xff]
    %v253 = vld [vmem:[#allocation7 + $0x290] sm:$0xff]
    %v254 = vld [vmem:[#allocation7 + $0x298] sm:$0xff]
    %v255 = vld [vmem:[#allocation7 + $0x2a0] sm:$0xff]
    %v256 = vld [vmem:[#allocation7 + $0x2a8] sm:$0xff]
    %v257 = vld [vmem:[#allocation7 + $0x2b0] sm:$0xff]
    %v258 = vld [vmem:[#allocation7 + $0x2b8] sm:$0xff]
    %v259 = vld [vmem:[#allocation7 + $0x2c0] sm:$0xff]
    %v260 = vld [vmem:[#allocation7 + $0x2c8] sm:$0xff]
    %v261 = vld [vmem:[#allocation7 + $0x2d0] sm:$0xff]
    %v262 = vld [vmem:[#allocation7 + $0x2d8] sm:$0xff]
    %v263 = vld [vmem:[#allocation7 + $0x2e0] sm:$0xff]
    %v264 = vld [vmem:[#allocation7 + $0x2e8] sm:$0xff]
    %v265 = vld [vmem:[#allocation7 + $0x2f0] sm:$0xff]
    %v266 = vld [vmem:[#allocation7 + $0x2f8] sm:$0xff]
    %v267 = vld [vmem:[#allocation7 + $0x300] sm:$0xff]
    %v268 = vld [vmem:[#allocation7 + $0x308] sm:$0xff]
    %v269 = vld [vmem:[#allocation7 + $0x310] sm:$0xff]
    %v270 = vld [vmem:[#allocation7 + $0x318] sm:$0xff]
    %v271 = vld [vmem:[#allocation7 + $0x320] sm:$0xff]
    %v272 = vld [vmem:[#allocation7 + $0x328] sm:$0xff]
    %v273 = vld [vmem:[#allocation7 + $0x330] sm:$0xff]
    %v274 = vld [vmem:[#allocation7 + $0x338] sm:$0xff]
    %v275 = vld [vmem:[#allocation7 + $0x340] sm:$0xff]
    %v276 = vld [vmem:[#allocation7 + $0x348] sm:$0xff]
    %v277 = vld [vmem:[#allocation7 + $0x350] sm:$0xff]
    %v278 = vld [vmem:[#allocation7 + $0x358] sm:$0xff]
    %v279 = vld [vmem:[#allocation7 + $0x360] sm:$0xff]
    %v280 = vld [vmem:[#allocation7 + $0x368] sm:$0xff]
    %v281 = vld [vmem:[#allocation7 + $0x370] sm:$0xff]
    %v282 = vld [vmem:[#allocation7 + $0x378] sm:$0xff]
    %v283 = vld [vmem:[#allocation7 + $0x380] sm:$0xff]
    %v284 = vld [vmem:[#allocation7 + $0x388] sm:$0xff]
    %v285 = vld [vmem:[#allocation7 + $0x390] sm:$0xff]
    %v286 = vld [vmem:[#allocation7 + $0x398] sm:$0xff]
    %v287 = vld [vmem:[#allocation7 + $0x3a0] sm:$0xff]
    %v288 = vld [vmem:[#allocation7 + $0x3a8] sm:$0xff]
    %v289 = vld [vmem:[#allocation7 + $0x3b0] sm:$0xff]
    %v290 = vld [vmem:[#allocation7 + $0x3b8] sm:$0xff]
    %v291 = vld [vmem:[#allocation7 + $0x3c0] sm:$0xff]
    %v292 = vld [vmem:[#allocation7 + $0x3c8] sm:$0xff]
    %v293 = vld [vmem:[#allocation7 + $0x3d0] sm:$0xff]
    %v294 = vld [vmem:[#allocation7 + $0x3d8] sm:$0xff]
    %v295 = vld [vmem:[#allocation7 + $0x3e0] sm:$0xff]
    %v296 = vld [vmem:[#allocation7 + $0x3e8] sm:$0xff]
    %v297 = vld [vmem:[#allocation7 + $0x3f0] sm:$0xff]
    %v298 = vld [vmem:[#allocation7 + $0x3f8] sm:$0xff]
    %v299 = vld [vmem:[#allocation7 + $0x400] sm:$0xff]
    %v300 = vld [vmem:[#allocation7 + $0x408] sm:$0xff]
    %v301 = vld [vmem:[#allocation7 + $0x410] sm:$0xff]
    %v302 = vld [vmem:[#allocation7 + $0x418] sm:$0xff]
    %v303 = vld [vmem:[#allocation7 + $0x420] sm:$0xff]
    %v304 = vld [vmem:[#allocation7 + $0x428] sm:$0xff]
    %v305 = vld [vmem:[#allocation7 + $0x430] sm:$0xff]
    %v306 = vld [vmem:[#allocation7 + $0x438] sm:$0xff]
    %v307 = vld [vmem:[#allocation7 + $0x440] sm:$0xff]
    %v308 = vld [vmem:[#allocation7 + $0x448] sm:$0xff]
    %v309 = vld [vmem:[#allocation7 + $0x450] sm:$0xff]
    %v310 = vld [vmem:[#allocation7 + $0x458] sm:$0xff]
    %v311 = vld [vmem:[#allocation7 + $0x460] sm:$0xff]
    %v312 = vld [vmem:[#allocation7 + $0x468] sm:$0xff]
    %v313 = vld [vmem:[#allocation7 + $0x470] sm:$0xff]
    %v314 = vld [vmem:[#allocation7 + $0x478] sm:$0xff]
    %v315 = vld [vmem:[#allocation7 + $0x480] sm:$0xff]
    %v316 = vld [vmem:[#allocation7 + $0x488] sm:$0xff]
    %v317 = vld [vmem:[#allocation7 + $0x490] sm:$0xff]
    %v318 = vld [vmem:[#allocation7 + $0x498] sm:$0xff]
    %v319 = vld [vmem:[#allocation7 + $0x4a0] sm:$0xff]
    %v320 = vld [vmem:[#allocation7 + $0x4a8] sm:$0xff]
    %v321 = vld [vmem:[#allocation7 + $0x4b0] sm:$0xff]
    %v322 = vld [vmem:[#allocation7 + $0x4b8] sm:$0xff]
    %v323 = vld [vmem:[#allocation7 + $0x4c0] sm:$0xff]
    %v324 = vld [vmem:[#allocation7 + $0x4c8] sm:$0xff]
    %v325 = vld [vmem:[#allocation7 + $0x4d0] sm:$0xff]
    %v326 = vld [vmem:[#allocation7 + $0x4d8] sm:$0xff]
    %v327 = vld [vmem:[#allocation7 + $0x4e0] sm:$0xff]
    %v328 = vld [vmem:[#allocation7 + $0x4e8] sm:$0xff]
    %v329 = vld [vmem:[#allocation7 + $0x4f0] sm:$0xff]
    %v330 = vld [vmem:[#allocation7 + $0x4f8] sm:$0xff]
    %v331 = vld [vmem:[#allocation7 + $0x500] sm:$0xff]
    %v332 = vld [vmem:[#allocation7 + $0x508] sm:$0xff]
    %v333 = vld [vmem:[#allocation7 + $0x510] sm:$0xff]
    %v334 = vld [vmem:[#allocation7 + $0x518] sm:$0xff]
    %v335 = vld [vmem:[#allocation7 + $0x520] sm:$0xff]
    %v336 = vld [vmem:[#allocation7 + $0x528] sm:$0xff]
    %v337 = vld [vmem:[#allocation7 + $0x530] sm:$0xff]
    %v338 = vld [vmem:[#allocation7 + $0x538] sm:$0xff]
    %v339 = vld [vmem:[#allocation7 + $0x540] sm:$0xff]
    %v340 = vld [vmem:[#allocation7 + $0x548] sm:$0xff]
    %v341 = vld [vmem:[#allocation7 + $0x550] sm:$0xff]
    %v342 = vld [vmem:[#allocation7 + $0x558] sm:$0xff]
    %v343 = vld [vmem:[#allocation7 + $0x560] sm:$0xff]
    %v344 = vld [vmem:[#allocation7 + $0x568] sm:$0xff]
    %v345 = vld [vmem:[#allocation7 + $0x570] sm:$0xff]
    %v346 = vld [vmem:[#allocation7 + $0x578] sm:$0xff]
    %v347 = vld [vmem:[#allocation7 + $0x580] sm:$0xff]
    %v348 = vld [vmem:[#allocation7 + $0x588] sm:$0xff]
    %v349 = vld [vmem:[#allocation7 + $0x590] sm:$0xff]
    %v350 = vld [vmem:[#allocation7 + $0x598] sm:$0xff]
    %v351 = vld [vmem:[#allocation7 + $0x5a0] sm:$0xff]
    %v352 = vld [vmem:[#allocation7 + $0x5a8] sm:$0xff]
    %v353 = vld [vmem:[#allocation7 + $0x5b0] sm:$0xff]
    %v354 = vld [vmem:[#allocation7 + $0x5b8] sm:$0xff]
    %v355 = vld [vmem:[#allocation7 + $0x5c0] sm:$0xff]
    %v356 = vld [vmem:[#allocation7 + $0x5c8] sm:$0xff]
    %v357 = vld [vmem:[#allocation7 + $0x5d0] sm:$0xff]
    %v358 = vld [vmem:[#allocation7 + $0x5d8] sm:$0xff]
    %v359 = vld [vmem:[#allocation7 + $0x5e0] sm:$0xff]
    %v360 = vld [vmem:[#allocation7 + $0x5e8] sm:$0xff]
    %v361 = vld [vmem:[#allocation7 + $0x5f0] sm:$0xff]
    %v362 = vld [vmem:[#allocation7 + $0x5f8] sm:$0xff]
    %v363 = vld [vmem:[#allocation7 + $0x600] sm:$0xff]
    %v364 = vld [vmem:[#allocation7 + $0x608] sm:$0xff]
    %v365 = vld [vmem:[#allocation7 + $0x610] sm:$0xff]
    %v366 = vld [vmem:[#allocation7 + $0x618] sm:$0xff]
    %v367 = vld [vmem:[#allocation7 + $0x620] sm:$0xff]
    %v368 = vld [vmem:[#allocation7 + $0x628] sm:$0xff]
    %v369 = vld [vmem:[#allocation7 + $0x630] sm:$0xff]
    %v370 = vld [vmem:[#allocation7 + $0x638] sm:$0xff]
    %v371 = vld [vmem:[#allocation7 + $0x640] sm:$0xff]
    %v372 = vld [vmem:[#allocation7 + $0x648] sm:$0xff]
    %v373 = vld [vmem:[#allocation7 + $0x650] sm:$0xff]
    %v374 = vld [vmem:[#allocation7 + $0x658] sm:$0xff]
    %v375 = vld [vmem:[#allocation7 + $0x660] sm:$0xff]
    %v376 = vld [vmem:[#allocation7 + $0x668] sm:$0xff]
    %v377 = vld [vmem:[#allocation7 + $0x670] sm:$0xff]
    %v378 = vld [vmem:[#allocation7 + $0x678] sm:$0xff]
    %v379 = vld [vmem:[#allocation7 + $0x680] sm:$0xff]
    %v380 = vld [vmem:[#allocation7 + $0x688] sm:$0xff]
    %v381 = vld [vmem:[#allocation7 + $0x690] sm:$0xff]
    %v382 = vld [vmem:[#allocation7 + $0x698] sm:$0xff]
    %v383 = vld [vmem:[#allocation7 + $0x6a0] sm:$0xff]
    %v384 = vld [vmem:[#allocation7 + $0x6a8] sm:$0xff]
    %v385 = vld [vmem:[#allocation7 + $0x6b0] sm:$0xff]
    %v386 = vld [vmem:[#allocation7 + $0x6b8] sm:$0xff]
    %v387 = vld [vmem:[#allocation7 + $0x6c0] sm:$0xff]
    %v388 = vld [vmem:[#allocation7 + $0x6c8] sm:$0xff]
    %v389 = vld [vmem:[#allocation7 + $0x6d0] sm:$0xff]
    %v390 = vld [vmem:[#allocation7 + $0x6d8] sm:$0xff]
    %v391 = vld [vmem:[#allocation7 + $0x6e0] sm:$0xff]
    %v392 = vld [vmem:[#allocation7 + $0x6e8] sm:$0xff]
    %v393 = vld [vmem:[#allocation7 + $0x6f0] sm:$0xff]
    %v394 = vld [vmem:[#allocation7 + $0x6f8] sm:$0xff]
    %v395 = vld [vmem:[#allocation7 + $0x700] sm:$0xff]
    %v396 = vld [vmem:[#allocation7 + $0x708] sm:$0xff]
    %v397 = vld [vmem:[#allocation7 + $0x710] sm:$0xff]
    %v398 = vld [vmem:[#allocation7 + $0x718] sm:$0xff]
    %v399 = vld [vmem:[#allocation7 + $0x720] sm:$0xff]
    %v400 = vld [vmem:[#allocation7 + $0x728] sm:$0xff]
    %v401 = vld [vmem:[#allocation7 + $0x730] sm:$0xff]
    %v402 = vld [vmem:[#allocation7 + $0x738] sm:$0xff]
    %v403 = vld [vmem:[#allocation7 + $0x740] sm:$0xff]
    %v404 = vld [vmem:[#allocation7 + $0x748] sm:$0xff]
    %v405 = vld [vmem:[#allocation7 + $0x750] sm:$0xff]
    %v406 = vld [vmem:[#allocation7 + $0x758] sm:$0xff]
    %v407 = vld [vmem:[#allocation7 + $0x760] sm:$0xff]
    %v408 = vld [vmem:[#allocation7 + $0x768] sm:$0xff]
    %v409 = vld [vmem:[#allocation7 + $0x770] sm:$0xff]
    %v410 = vld [vmem:[#allocation7 + $0x778] sm:$0xff]
    %v411 = vld [vmem:[#allocation7 + $0x780] sm:$0xff]
    %v412 = vld [vmem:[#allocation7 + $0x788] sm:$0xff]
    %v413 = vld [vmem:[#allocation7 + $0x790] sm:$0xff]
    %v414 = vld [vmem:[#allocation7 + $0x798] sm:$0xff]
    %v415 = vld [vmem:[#allocation7 + $0x7a0] sm:$0xff]
    %v416 = vld [vmem:[#allocation7 + $0x7a8] sm:$0xff]
    %v417 = vld [vmem:[#allocation7 + $0x7b0] sm:$0xff]
    %v418 = vld [vmem:[#allocation7 + $0x7b8] sm:$0xff]
    %v419 = vld [vmem:[#allocation7 + $0x7c0] sm:$0xff]
    %v420 = vld [vmem:[#allocation7 + $0x7c8] sm:$0xff]
    %v421 = vld [vmem:[#allocation7 + $0x7d0] sm:$0xff]
    %v422 = vld [vmem:[#allocation7 + $0x7d8] sm:$0xff]
    %v423 = vld [vmem:[#allocation7 + $0x7e0] sm:$0xff]
    %v424 = vld [vmem:[#allocation7 + $0x7e8] sm:$0xff]
    %v425 = vld [vmem:[#allocation7 + $0x7f0] sm:$0xff]
    %v426 = vld [vmem:[#allocation7 + $0x7f8] sm:$0xff]
    %v427 = vld [vmem:[#allocation7 + $0x800] sm:$0xff]
    %v428 = vld [vmem:[#allocation7 + $0x808] sm:$0xff]
    %v429 = vld [vmem:[#allocation7 + $0x810] sm:$0xff]
    %v430 = vld [vmem:[#allocation7 + $0x818] sm:$0xff]
    %v431 = vld [vmem:[#allocation7 + $0x820] sm:$0xff]
    %v432 = vld [vmem:[#allocation7 + $0x828] sm:$0xff]
    %v433 = vld [vmem:[#allocation7 + $0x830] sm:$0xff]
    %v434 = vld [vmem:[#allocation7 + $0x838] sm:$0xff]
    %v435 = vld [vmem:[#allocation7 + $0x840] sm:$0xff]
    %v436 = vld [vmem:[#allocation7 + $0x848] sm:$0xff]
    %v437 = vld [vmem:[#allocation7 + $0x850] sm:$0xff]
    %v438 = vld [vmem:[#allocation7 + $0x858] sm:$0xff]
    %v439 = vld [vmem:[#allocation7 + $0x860] sm:$0xff]
    %v440 = vld [vmem:[#allocation7 + $0x868] sm:$0xff]
    %v441 = vld [vmem:[#allocation7 + $0x870] sm:$0xff]
    %v442 = vld [vmem:[#allocation7 + $0x878] sm:$0xff]
    %v443 = vld [vmem:[#allocation7 + $0x880] sm:$0xff]
    %v444 = vld [vmem:[#allocation7 + $0x888] sm:$0xff]
    %v445 = vld [vmem:[#allocation7 + $0x890] sm:$0xff]
    %v446 = vld [vmem:[#allocation7 + $0x898] sm:$0xff]
    %v447 = vld [vmem:[#allocation7 + $0x8a0] sm:$0xff]
    %v448 = vld [vmem:[#allocation7 + $0x8a8] sm:$0xff]
    %v449 = vld [vmem:[#allocation7 + $0x8b0] sm:$0xff]
    %v450 = vld [vmem:[#allocation7 + $0x8b8] sm:$0xff]
    %v451 = vld [vmem:[#allocation7 + $0x8c0] sm:$0xff]
    %v452 = vld [vmem:[#allocation7 + $0x8c8] sm:$0xff]
    %v453 = vld [vmem:[#allocation7 + $0x8d0] sm:$0xff]
    %v454 = vld [vmem:[#allocation7 + $0x8d8] sm:$0xff]
    %v455 = vld [vmem:[#allocation7 + $0x8e0] sm:$0xff]
    %v456 = vld [vmem:[#allocation7 + $0x8e8] sm:$0xff]
    %v457 = vld [vmem:[#allocation7 + $0x8f0] sm:$0xff]
    %v458 = vld [vmem:[#allocation7 + $0x8f8] sm:$0xff]
    %v459 = vld [vmem:[#allocation7 + $0x900] sm:$0xff]
    %v460 = vld [vmem:[#allocation7 + $0x908] sm:$0xff]
    %v461 = vld [vmem:[#allocation7 + $0x910] sm:$0xff]
    %v462 = vld [vmem:[#allocation7 + $0x918] sm:$0xff]
    %v463 = vld [vmem:[#allocation7 + $0x920] sm:$0xff]
    %v464 = vld [vmem:[#allocation7 + $0x928] sm:$0xff]
    %v465 = vld [vmem:[#allocation7 + $0x930] sm:$0xff]
    %v466 = vld [vmem:[#allocation7 + $0x938] sm:$0xff]
    %v467 = vld [vmem:[#allocation7 + $0x940] sm:$0xff]
    %v468 = vld [vmem:[#allocation7 + $0x948] sm:$0xff]
    %v469 = vld [vmem:[#allocation7 + $0x950] sm:$0xff]
    %v470 = vld [vmem:[#allocation7 + $0x958] sm:$0xff]
    %v471 = vld [vmem:[#allocation7 + $0x960] sm:$0xff]
    %v472 = vld [vmem:[#allocation7 + $0x968] sm:$0xff]
    %v473 = vld [vmem:[#allocation7 + $0x970] sm:$0xff]
    %v474 = vld [vmem:[#allocation7 + $0x978] sm:$0xff]
    %v475 = vld [vmem:[#allocation7 + $0x980] sm:$0xff]
    %v476 = vld [vmem:[#allocation7 + $0x988] sm:$0xff]
    %v477 = vld [vmem:[#allocation7 + $0x990] sm:$0xff]
    %v478 = vld [vmem:[#allocation7 + $0x998] sm:$0xff]
    %v479 = vld [vmem:[#allocation7 + $0x9a0] sm:$0xff]
    %v480 = vld [vmem:[#allocation7 + $0x9a8] sm:$0xff]
    %v481 = vld [vmem:[#allocation7 + $0x9b0] sm:$0xff]
    %v482 = vld [vmem:[#allocation7 + $0x9b8] sm:$0xff]
    %v483 = vld [vmem:[#allocation7 + $0x9c0] sm:$0xff]
    %v484 = vld [vmem:[#allocation7 + $0x9c8] sm:$0xff]
    %v485 = vld [vmem:[#allocation7 + $0x9d0] sm:$0xff]
    %v486 = vld [vmem:[#allocation7 + $0x9d8] sm:$0xff]
    %v487 = vld [vmem:[#allocation7 + $0x9e0] sm:$0xff]
    %v488 = vld [vmem:[#allocation7 + $0x9e8] sm:$0xff]
    %v489 = vld [vmem:[#allocation7 + $0x9f0] sm:$0xff]
    %v490 = vld [vmem:[#allocation7 + $0x9f8] sm:$0xff]
    %v491 = vld [vmem:[#allocation7 + $0xa00] sm:$0xff]
    %v492 = vld [vmem:[#allocation7 + $0xa08] sm:$0xff]
    %v493 = vld [vmem:[#allocation7 + $0xa10] sm:$0xff]
    %v494 = vld [vmem:[#allocation7 + $0xa18] sm:$0xff]
    %v495 = vld [vmem:[#allocation7 + $0xa20] sm:$0xff]
    %v496 = vld [vmem:[#allocation7 + $0xa28] sm:$0xff]
    %v497 = vld [vmem:[#allocation7 + $0xa30] sm:$0xff]
    %v498 = vld [vmem:[#allocation7 + $0xa38] sm:$0xff]
    %v499 = vld [vmem:[#allocation7 + $0xa40] sm:$0xff]
    %v500 = vld [vmem:[#allocation7 + $0xa48] sm:$0xff]
    %v501 = vld [vmem:[#allocation7 + $0xa50] sm:$0xff]
    %v502 = vld [vmem:[#allocation7 + $0xa58] sm:$0xff]
    %v503 = vld [vmem:[#allocation7 + $0xa60] sm:$0xff]
    %v504 = vld [vmem:[#allocation7 + $0xa68] sm:$0xff]
    %v505 = vld [vmem:[#allocation7 + $0xa70] sm:$0xff]
    %v506 = vld [vmem:[#allocation7 + $0xa78] sm:$0xff]
    %v507 = vld [vmem:[#allocation7 + $0xa80] sm:$0xff]
    %v508 = vld [vmem:[#allocation7 + $0xa88] sm:$0xff]
    %v509 = vld [vmem:[#allocation7 + $0xa90] sm:$0xff]
    %v510 = vld [vmem:[#allocation7 + $0xa98] sm:$0xff]
    %v511 = vld [vmem:[#allocation7 + $0xaa0] sm:$0xff]
    %v512 = vld [vmem:[#allocation7 + $0xaa8] sm:$0xff]
    %v513 = vld [vmem:[#allocation7 + $0xab0] sm:$0xff]
    %v514 = vld [vmem:[#allocation7 + $0xab8] sm:$0xff]
    %v515 = vld [vmem:[#allocation7 + $0xac0] sm:$0xff]
    %v516 = vld [vmem:[#allocation7 + $0xac8] sm:$0xff]
    %v517 = vld [vmem:[#allocation7 + $0xad0] sm:$0xff]
    %v518 = vld [vmem:[#allocation7 + $0xad8] sm:$0xff]
    %v519 = vld [vmem:[#allocation7 + $0xae0] sm:$0xff]
    %v520 = vld [vmem:[#allocation7 + $0xae8] sm:$0xff]
    %v521 = vld [vmem:[#allocation7 + $0xaf0] sm:$0xff]
    %v522 = vld [vmem:[#allocation7 + $0xaf8] sm:$0xff]
    %v523 = vld [vmem:[#allocation7 + $0xb00] sm:$0xff]
    %v524 = vld [vmem:[#allocation7 + $0xb08] sm:$0xff]
    %v525 = vld [vmem:[#allocation7 + $0xb10] sm:$0xff]
    %v526 = vld [vmem:[#allocation7 + $0xb18] sm:$0xff]
    %v527 = vld [vmem:[#allocation7 + $0xb20] sm:$0xff]
    %v528 = vld [vmem:[#allocation7 + $0xb28] sm:$0xff]
    %v529 = vld [vmem:[#allocation7 + $0xb30] sm:$0xff]
    %v530 = vld [vmem:[#allocation7 + $0xb38] sm:$0xff]
    %v531 = vld [vmem:[#allocation7 + $0xb40] sm:$0xff]
    %v532 = vld [vmem:[#allocation7 + $0xb48] sm:$0xff]
    %v533 = vld [vmem:[#allocation7 + $0xb50] sm:$0xff]
    %v534 = vld [vmem:[#allocation7 + $0xb58] sm:$0xff]
    %v535 = vld [vmem:[#allocation7 + $0xb60] sm:$0xff]
    %v536 = vld [vmem:[#allocation7 + $0xb68] sm:$0xff]
    %v537 = vld [vmem:[#allocation7 + $0xb70] sm:$0xff]
    %v538 = vld [vmem:[#allocation7 + $0xb78] sm:$0xff]
    %v539 = vld [vmem:[#allocation7 + $0xb80] sm:$0xff]
    %v540 = vld [vmem:[#allocation7 + $0xb88] sm:$0xff]
    %v541 = vld [vmem:[#allocation7 + $0xb90] sm:$0xff]
    %v542 = vld [vmem:[#allocation7 + $0xb98] sm:$0xff]
    %v543 = vld [vmem:[#allocation7 + $0xba0] sm:$0xff]
    %v544 = vld [vmem:[#allocation7 + $0xba8] sm:$0xff]
    %v545 = vld [vmem:[#allocation7 + $0xbb0] sm:$0xff]
    %v546 = vld [vmem:[#allocation7 + $0xbb8] sm:$0xff]
    %v547 = vld [vmem:[#allocation7 + $0xbc0] sm:$0xff]
    %v548 = vld [vmem:[#allocation7 + $0xbc8] sm:$0xff]
    %v549 = vld [vmem:[#allocation7 + $0xbd0] sm:$0xff]
    %v550 = vld [vmem:[#allocation7 + $0xbd8] sm:$0xff]
    %v551 = vld [vmem:[#allocation7 + $0xbe0] sm:$0xff]
    %v552 = vld [vmem:[#allocation7 + $0xbe8] sm:$0xff]
    %v553 = vld [vmem:[#allocation7 + $0xbf0] sm:$0xff]
    %v554 = vld [vmem:[#allocation7 + $0xbf8] sm:$0xff]
    %v555 = vld [vmem:[#allocation7 + $0xc00] sm:$0xff]
    %v556 = vld [vmem:[#allocation7 + $0xc08] sm:$0xff]
    %v557 = vld [vmem:[#allocation7 + $0xc10] sm:$0xff]
    %v558 = vld [vmem:[#allocation7 + $0xc18] sm:$0xff]
    %v559 = vld [vmem:[#allocation7 + $0xc20] sm:$0xff]
    %v560 = vld [vmem:[#allocation7 + $0xc28] sm:$0xff]
    %v561 = vld [vmem:[#allocation7 + $0xc30] sm:$0xff]
    %v562 = vld [vmem:[#allocation7 + $0xc38] sm:$0xff]
    %v563 = vld [vmem:[#allocation7 + $0xc40] sm:$0xff]
    %v564 = vld [vmem:[#allocation7 + $0xc48] sm:$0xff]
    %v565 = vld [vmem:[#allocation7 + $0xc50] sm:$0xff]
    %v566 = vld [vmem:[#allocation7 + $0xc58] sm:$0xff]
    %v567 = vld [vmem:[#allocation7 + $0xc60] sm:$0xff]
    %v568 = vld [vmem:[#allocation7 + $0xc68] sm:$0xff]
    %v569 = vld [vmem:[#allocation7 + $0xc70] sm:$0xff]
    %v570 = vld [vmem:[#allocation7 + $0xc78] sm:$0xff]
    %v571 = vld [vmem:[#allocation7 + $0xc80] sm:$0xff]
    %v572 = vld [vmem:[#allocation7 + $0xc88] sm:$0xff]
    %v573 = vld [vmem:[#allocation7 + $0xc90] sm:$0xff]
    %v574 = vld [vmem:[#allocation7 + $0xc98] sm:$0xff]
    %v575 = vld [vmem:[#allocation7 + $0xca0] sm:$0xff]
    %v576 = vld [vmem:[#allocation7 + $0xca8] sm:$0xff]
    %v577 = vld [vmem:[#allocation7 + $0xcb0] sm:$0xff]
    %v578 = vld [vmem:[#allocation7 + $0xcb8] sm:$0xff]
    %v579 = vld [vmem:[#allocation7 + $0xcc0] sm:$0xff]
    %v580 = vld [vmem:[#allocation7 + $0xcc8] sm:$0xff]
    %v581 = vld [vmem:[#allocation7 + $0xcd0] sm:$0xff]
    %v582 = vld [vmem:[#allocation7 + $0xcd8] sm:$0xff]
    %v583 = vld [vmem:[#allocation7 + $0xce0] sm:$0xff]
    %v584 = vld [vmem:[#allocation7 + $0xce8] sm:$0xff]
    %v585 = vld [vmem:[#allocation7 + $0xcf0] sm:$0xff]
    %v586 = vld [vmem:[#allocation7 + $0xcf8] sm:$0xff]
    %v587 = vld [vmem:[#allocation7 + $0xd00] sm:$0xff]
    %v588 = vld [vmem:[#allocation7 + $0xd08] sm:$0xff]
    %v589 = vld [vmem:[#allocation7 + $0xd10] sm:$0xff]
    %v590 = vld [vmem:[#allocation7 + $0xd18] sm:$0xff]
    %v591 = vld [vmem:[#allocation7 + $0xd20] sm:$0xff]
    %v592 = vld [vmem:[#allocation7 + $0xd28] sm:$0xff]
    %v593 = vld [vmem:[#allocation7 + $0xd30] sm:$0xff]
    %v594 = vld [vmem:[#allocation7 + $0xd38] sm:$0xff]
    %v595 = vld [vmem:[#allocation7 + $0xd40] sm:$0xff]
    %v596 = vld [vmem:[#allocation7 + $0xd48] sm:$0xff]
    %v597 = vld [vmem:[#allocation7 + $0xd50] sm:$0xff]
    %v598 = vld [vmem:[#allocation7 + $0xd58] sm:$0xff]
    %v599 = vld [vmem:[#allocation7 + $0xd60] sm:$0xff]
    %v600 = vld [vmem:[#allocation7 + $0xd68] sm:$0xff]
    %v601 = vld [vmem:[#allocation7 + $0xd70] sm:$0xff]
    %v602 = vld [vmem:[#allocation7 + $0xd78] sm:$0xff]
    %v603 = vld [vmem:[#allocation7 + $0xd80] sm:$0xff]
    %v604 = vld [vmem:[#allocation7 + $0xd88] sm:$0xff]
    %v605 = vld [vmem:[#allocation7 + $0xd90] sm:$0xff]
    %v606 = vld [vmem:[#allocation7 + $0xd98] sm:$0xff]
    %v607 = vld [vmem:[#allocation7 + $0xda0] sm:$0xff]
    %v608 = vld [vmem:[#allocation7 + $0xda8] sm:$0xff]
    %v609 = vld [vmem:[#allocation7 + $0xdb0] sm:$0xff]
    %v610 = vld [vmem:[#allocation7 + $0xdb8] sm:$0xff]
    %v611 = vld [vmem:[#allocation7 + $0xdc0] sm:$0xff]
    %v612 = vld [vmem:[#allocation7 + $0xdc8] sm:$0xff]
    %v613 = vld [vmem:[#allocation7 + $0xdd0] sm:$0xff]
    %v614 = vld [vmem:[#allocation7 + $0xdd8] sm:$0xff]
    %v615 = vld [vmem:[#allocation7 + $0xde0] sm:$0xff]
    %v616 = vld [vmem:[#allocation7 + $0xde8] sm:$0xff]
    %v617 = vld [vmem:[#allocation7 + $0xdf0] sm:$0xff]
    %v618 = vld [vmem:[#allocation7 + $0xdf8] sm:$0xff]
    %v619 = vld [vmem:[#allocation7 + $0xe00] sm:$0xff]
    %v620 = vld [vmem:[#allocation7 + $0xe08] sm:$0xff]
    %v621 = vld [vmem:[#allocation7 + $0xe10] sm:$0xff]
    %v622 = vld [vmem:[#allocation7 + $0xe18] sm:$0xff]
    %v623 = vld [vmem:[#allocation7 + $0xe20] sm:$0xff]
    %v624 = vld [vmem:[#allocation7 + $0xe28] sm:$0xff]
    %v625 = vld [vmem:[#allocation7 + $0xe30] sm:$0xff]
    %v626 = vld [vmem:[#allocation7 + $0xe38] sm:$0xff]
    %v627 = vld [vmem:[#allocation7 + $0xe40] sm:$0xff]
    %v628 = vld [vmem:[#allocation7 + $0xe48] sm:$0xff]
    %v629 = vld [vmem:[#allocation7 + $0xe50] sm:$0xff]
    %v630 = vld [vmem:[#allocation7 + $0xe58] sm:$0xff]
    %v631 = vld [vmem:[#allocation7 + $0xe60] sm:$0xff]
    %v632 = vld [vmem:[#allocation7 + $0xe68] sm:$0xff]
    %v633 = vld [vmem:[#allocation7 + $0xe70] sm:$0xff]
    %v634 = vld [vmem:[#allocation7 + $0xe78] sm:$0xff]
    %v635 = vld [vmem:[#allocation7 + $0xe80] sm:$0xff]
    %v636 = vld [vmem:[#allocation7 + $0xe88] sm:$0xff]
    %v637 = vld [vmem:[#allocation7 + $0xe90] sm:$0xff]
    %v638 = vld [vmem:[#allocation7 + $0xe98] sm:$0xff]
    %v639 = vld [vmem:[#allocation7 + $0xea0] sm:$0xff]
    %v640 = vld [vmem:[#allocation7 + $0xea8] sm:$0xff]
    %v641 = vld [vmem:[#allocation7 + $0xeb0] sm:$0xff]
    %v642 = vld [vmem:[#allocation7 + $0xeb8] sm:$0xff]
    %v643 = vld [vmem:[#allocation7 + $0xec0] sm:$0xff]
    %v644 = vld [vmem:[#allocation7 + $0xec8] sm:$0xff]
    %v645 = vld [vmem:[#allocation7 + $0xed0] sm:$0xff]
    %v646 = vld [vmem:[#allocation7 + $0xed8] sm:$0xff]
    %v647 = vld [vmem:[#allocation7 + $0xee0] sm:$0xff]
    %v648 = vld [vmem:[#allocation7 + $0xee8] sm:$0xff]
    %v649 = vld [vmem:[#allocation7 + $0xef0] sm:$0xff]
    %v650 = vld [vmem:[#allocation7 + $0xef8] sm:$0xff]
    %v651 = vld [vmem:[#allocation7 + $0xf00] sm:$0xff]
    %v652 = vld [vmem:[#allocation7 + $0xf08] sm:$0xff]
    %v653 = vld [vmem:[#allocation7 + $0xf10] sm:$0xff]
    %v654 = vld [vmem:[#allocation7 + $0xf18] sm:$0xff]
    %v655 = vld [vmem:[#allocation7 + $0xf20] sm:$0xff]
    %v656 = vld [vmem:[#allocation7 + $0xf28] sm:$0xff]
    %v657 = vld [vmem:[#allocation7 + $0xf30] sm:$0xff]
    %v658 = vld [vmem:[#allocation7 + $0xf38] sm:$0xff]
    %v659 = vld [vmem:[#allocation7 + $0xf40] sm:$0xff]
    %v660 = vld [vmem:[#allocation7 + $0xf48] sm:$0xff]
    %v661 = vld [vmem:[#allocation7 + $0xf50] sm:$0xff]
    %v662 = vld [vmem:[#allocation7 + $0xf58] sm:$0xff]
    %v663 = vld [vmem:[#allocation7 + $0xf60] sm:$0xff]
    %v664 = vld [vmem:[#allocation7 + $0xf68] sm:$0xff]
    %v665 = vld [vmem:[#allocation7 + $0xf70] sm:$0xff]
    %v666 = vld [vmem:[#allocation7 + $0xf78] sm:$0xff]
    %v667 = vld [vmem:[#allocation7 + $0xf80] sm:$0xff]
    %v668 = vld [vmem:[#allocation7 + $0xf88] sm:$0xff]
    %v669 = vld [vmem:[#allocation7 + $0xf90] sm:$0xff]
    %v670 = vld [vmem:[#allocation7 + $0xf98] sm:$0xff]
    %v671 = vld [vmem:[#allocation7 + $0xfa0] sm:$0xff]
    %v672 = vld [vmem:[#allocation7 + $0xfa8] sm:$0xff]
    %v673 = vld [vmem:[#allocation7 + $0xfb0] sm:$0xff]
    %v674 = vld [vmem:[#allocation7 + $0xfb8] sm:$0xff]
    %v675 = vld [vmem:[#allocation7 + $0xfc0] sm:$0xff]
    %v676 = vld [vmem:[#allocation7 + $0xfc8] sm:$0xff]
    %v677 = vld [vmem:[#allocation7 + $0xfd0] sm:$0xff]
    %v678 = vld [vmem:[#allocation7 + $0xfd8] sm:$0xff]
    %v679 = vld [vmem:[#allocation7 + $0xfe0] sm:$0xff]
    %v680 = vld [vmem:[#allocation7 + $0xfe8] sm:$0xff]
    %v681 = vld [vmem:[#allocation7 + $0xff0] sm:$0xff]
    %v682 = vld [vmem:[#allocation7 + $0xff8] sm:$0xff]
    %v683 = vld [vmem:[#allocation7 + $0x1000] sm:$0xff]
    %v684 = vld [vmem:[#allocation7 + $0x1008] sm:$0xff]
    %v685 = vld [vmem:[#allocation7 + $0x1010] sm:$0xff]
    %v686 = vld [vmem:[#allocation7 + $0x1018] sm:$0xff]
    %v687 = vld [vmem:[#allocation7 + $0x1020] sm:$0xff]
    %v688 = vld [vmem:[#allocation7 + $0x1028] sm:$0xff]
    %v689 = vld [vmem:[#allocation7 + $0x1030] sm:$0xff]
    %v690 = vld [vmem:[#allocation7 + $0x1038] sm:$0xff]
    %v691 = vld [vmem:[#allocation7 + $0x1040] sm:$0xff]
    %v692 = vld [vmem:[#allocation7 + $0x1048] sm:$0xff]
    %v693 = vld [vmem:[#allocation7 + $0x1050] sm:$0xff]
    %v694 = vld [vmem:[#allocation7 + $0x1058] sm:$0xff]
    %v695 = vld [vmem:[#allocation7 + $0x1060] sm:$0xff]
    %v696 = vld [vmem:[#allocation7 + $0x1068] sm:$0xff]
    %v697 = vld [vmem:[#allocation7 + $0x1070] sm:$0xff]
    %v698 = vld [vmem:[#allocation7 + $0x1078] sm:$0xff]
    %v699 = vld [vmem:[#allocation7 + $0x1080] sm:$0xff]
    %v700 = vld [vmem:[#allocation7 + $0x1088] sm:$0xff]
    %v701 = vld [vmem:[#allocation7 + $0x1090] sm:$0xff]
    %v702 = vld [vmem:[#allocation7 + $0x1098] sm:$0xff]
    %v703 = vld [vmem:[#allocation7 + $0x10a0] sm:$0xff]
    %v704 = vld [vmem:[#allocation7 + $0x10a8] sm:$0xff]
    %v705 = vld [vmem:[#allocation7 + $0x10b0] sm:$0xff]
    %v706 = vld [vmem:[#allocation7 + $0x10b8] sm:$0xff]
    %v707 = vld [vmem:[#allocation7 + $0x10c0] sm:$0xff]
    %v708 = vld [vmem:[#allocation7 + $0x10c8] sm:$0xff]
    %v709 = vld [vmem:[#allocation7 + $0x10d0] sm:$0xff]
    %v710 = vld [vmem:[#allocation7 + $0x10d8] sm:$0xff]
    %v711 = vld [vmem:[#allocation7 + $0x10e0] sm:$0xff]
    %v712 = vld [vmem:[#allocation7 + $0x10e8] sm:$0xff]
    %v713 = vld [vmem:[#allocation7 + $0x10f0] sm:$0xff]
    %v714 = vld [vmem:[#allocation7 + $0x10f8] sm:$0xff]
    %v715 = vld [vmem:[#allocation7 + $0x1100] sm:$0xff]
    %v716 = vld [vmem:[#allocation7 + $0x1108] sm:$0xff]
    %v717 = vld [vmem:[#allocation7 + $0x1110] sm:$0xff]
    %v718 = vld [vmem:[#allocation7 + $0x1118] sm:$0xff]
    %v719 = vld [vmem:[#allocation7 + $0x1120] sm:$0xff]
    %v720 = vld [vmem:[#allocation7 + $0x1128] sm:$0xff]
    %v721 = vld [vmem:[#allocation7 + $0x1130] sm:$0xff]
    %v722 = vld [vmem:[#allocation7 + $0x1138] sm:$0xff]
    %v723 = vld [vmem:[#allocation7 + $0x1140] sm:$0xff]
    %v724 = vld [vmem:[#allocation7 + $0x1148] sm:$0xff]
    %v725 = vld [vmem:[#allocation7 + $0x1150] sm:$0xff]
    %v726 = vld [vmem:[#allocation7 + $0x1158] sm:$0xff]
    %v727 = vld [vmem:[#allocation7 + $0x1160] sm:$0xff]
    %v728 = vld [vmem:[#allocation7 + $0x1168] sm:$0xff]
    %v729 = vld [vmem:[#allocation7 + $0x1170] sm:$0xff]
    %v730 = vld [vmem:[#allocation7 + $0x1178] sm:$0xff]
    %v731 = vld [vmem:[#allocation7 + $0x1180] sm:$0xff]
    %v732 = vld [vmem:[#allocation7 + $0x1188] sm:$0xff]
    %v733 = vld [vmem:[#allocation7 + $0x1190] sm:$0xff]
    %v734 = vld [vmem:[#allocation7 + $0x1198] sm:$0xff]
    %v735 = vld [vmem:[#allocation7 + $0x11a0] sm:$0xff]
    %v736 = vld [vmem:[#allocation7 + $0x11a8] sm:$0xff]
    %v737 = vld [vmem:[#allocation7 + $0x11b0] sm:$0xff]
    %v738 = vld [vmem:[#allocation7 + $0x11b8] sm:$0xff]
    %v739 = vld [vmem:[#allocation7 + $0x11c0] sm:$0xff]
    %v740 = vld [vmem:[#allocation7 + $0x11c8] sm:$0xff]
    %v741 = vld [vmem:[#allocation7 + $0x11d0] sm:$0xff]
    %v742 = vld [vmem:[#allocation7 + $0x11d8] sm:$0xff]
    %v743 = vld [vmem:[#allocation7 + $0x11e0] sm:$0xff]
    %v744 = vld [vmem:[#allocation7 + $0x11e8] sm:$0xff]
    %v745 = vld [vmem:[#allocation7 + $0x11f0] sm:$0xff]
    %v746 = vld [vmem:[#allocation7 + $0x11f8] sm:$0xff]
    %v747 = vld [vmem:[#allocation7 + $0x1200] sm:$0xff]
    %v748 = vld [vmem:[#allocation7 + $0x1208] sm:$0xff]
    %v749 = vld [vmem:[#allocation7 + $0x1210] sm:$0xff]
    %v750 = vld [vmem:[#allocation7 + $0x1218] sm:$0xff]
    %v751 = vld [vmem:[#allocation7 + $0x1220] sm:$0xff]
    %v752 = vld [vmem:[#allocation7 + $0x1228] sm:$0xff]
    %v753 = vld [vmem:[#allocation7 + $0x1230] sm:$0xff]
    %v754 = vld [vmem:[#allocation7 + $0x1238] sm:$0xff]
    %v755 = vld [vmem:[#allocation7 + $0x1240] sm:$0xff]
    %v756 = vld [vmem:[#allocation7 + $0x1248] sm:$0xff]
    %v757 = vld [vmem:[#allocation7 + $0x1250] sm:$0xff]
    %v758 = vld [vmem:[#allocation7 + $0x1258] sm:$0xff]
    %v759 = vld [vmem:[#allocation7 + $0x1260] sm:$0xff]
    %v760 = vld [vmem:[#allocation7 + $0x1268] sm:$0xff]
    %v761 = vld [vmem:[#allocation7 + $0x1270] sm:$0xff]
    %v762 = vld [vmem:[#allocation7 + $0x1278] sm:$0xff]
    %v763 = vld [vmem:[#allocation7 + $0x1280] sm:$0xff]
    %v764 = vld [vmem:[#allocation7 + $0x1288] sm:$0xff]
    %v765 = vld [vmem:[#allocation7 + $0x1290] sm:$0xff]
    %v766 = vld [vmem:[#allocation7 + $0x1298] sm:$0xff]
    %v767 = vld [vmem:[#allocation7 + $0x12a0] sm:$0xff]
    %v768 = vld [vmem:[#allocation7 + $0x12a8] sm:$0xff]
    %v769 = vld [vmem:[#allocation7 + $0x12b0] sm:$0xff]
    %v770 = vld [vmem:[#allocation7 + $0x12b8] sm:$0xff]
    %v771 = vld [vmem:[#allocation7 + $0x12c0] sm:$0xff]
    %v772 = vld [vmem:[#allocation7 + $0x12c8] sm:$0xff]
    %v773 = vld [vmem:[#allocation7 + $0x12d0] sm:$0xff]
    %v774 = vld [vmem:[#allocation7 + $0x12d8] sm:$0xff]
    %v775 = vld [vmem:[#allocation7 + $0x12e0] sm:$0xff]
    %v776 = vld [vmem:[#allocation7 + $0x12e8] sm:$0xff]
    %v777 = vld [vmem:[#allocation7 + $0x12f0] sm:$0xff]
    %v778 = vld [vmem:[#allocation7 + $0x12f8] sm:$0xff]
    %v779 = vld [vmem:[#allocation7 + $0x1300] sm:$0xff]
    %v780 = vld [vmem:[#allocation7 + $0x1308] sm:$0xff]
    %v781 = vld [vmem:[#allocation7 + $0x1310] sm:$0xff]
    %v782 = vld [vmem:[#allocation7 + $0x1318] sm:$0xff]
    %v783 = vld [vmem:[#allocation7 + $0x1320] sm:$0xff]
    %v784 = vld [vmem:[#allocation7 + $0x1328] sm:$0xff]
    %v785 = vld [vmem:[#allocation7 + $0x1330] sm:$0xff]
    %v786 = vld [vmem:[#allocation7 + $0x1338] sm:$0xff]
    %v787 = vld [vmem:[#allocation7 + $0x1340] sm:$0xff]
    %v788 = vld [vmem:[#allocation7 + $0x1348] sm:$0xff]
    %v789 = vld [vmem:[#allocation7 + $0x1350] sm:$0xff]
    %v790 = vld [vmem:[#allocation7 + $0x1358] sm:$0xff]
    %v791 = vld [vmem:[#allocation7 + $0x1360] sm:$0xff]
    %v792 = vld [vmem:[#allocation7 + $0x1368] sm:$0xff]
    %v793 = vld [vmem:[#allocation7 + $0x1370] sm:$0xff]
    %v794 = vld [vmem:[#allocation7 + $0x1378] sm:$0xff]
    %v795 = vld [vmem:[#allocation7 + $0x1380] sm:$0xff]
    %v796 = vld [vmem:[#allocation7 + $0x1388] sm:$0xff]
    %v797 = vld [vmem:[#allocation7 + $0x1390] sm:$0xff]
    %v798 = vld [vmem:[#allocation7 + $0x1398] sm:$0xff]
    %v799 = vld [vmem:[#allocation7 + $0x13a0] sm:$0xff]
    %v800 = vld [vmem:[#allocation7 + $0x13a8] sm:$0xff]
    %v801 = vld [vmem:[#allocation7 + $0x13b0] sm:$0xff]
    %v802 = vld [vmem:[#allocation7 + $0x13b8] sm:$0xff]
    %v803 = vld [vmem:[#allocation7 + $0x13c0] sm:$0xff]
    %v804 = vld [vmem:[#allocation7 + $0x13c8] sm:$0xff]
    %v805 = vld [vmem:[#allocation7 + $0x13d0] sm:$0xff]
    %v806 = vld [vmem:[#allocation7 + $0x13d8] sm:$0xff]
    %v807 = vld [vmem:[#allocation7 + $0x13e0] sm:$0xff]
    %v808 = vld [vmem:[#allocation7 + $0x13e8] sm:$0xff]
    %v809 = vld [vmem:[#allocation7 + $0x13f0] sm:$0xff]
    %v810 = vld [vmem:[#allocation7 + $0x13f8] sm:$0xff]
    %v811 = vld [vmem:[#allocation7 + $0x1400] sm:$0xff]
    %v812 = vld [vmem:[#allocation7 + $0x1408] sm:$0xff]
    %v813 = vld [vmem:[#allocation7 + $0x1410] sm:$0xff]
    %v814 = vld [vmem:[#allocation7 + $0x1418] sm:$0xff]
    %v815 = vld [vmem:[#allocation7 + $0x1420] sm:$0xff]
    %v816 = vld [vmem:[#allocation7 + $0x1428] sm:$0xff]
    %v817 = vld [vmem:[#allocation7 + $0x1430] sm:$0xff]
    %v818 = vld [vmem:[#allocation7 + $0x1438] sm:$0xff]
    %v819 = vld [vmem:[#allocation7 + $0x1440] sm:$0xff]
    %v820 = vld [vmem:[#allocation7 + $0x1448] sm:$0xff]
    %v821 = vld [vmem:[#allocation7 + $0x1450] sm:$0xff]
    %v822 = vld [vmem:[#allocation7 + $0x1458] sm:$0xff]
    %v823 = vld [vmem:[#allocation7 + $0x1460] sm:$0xff]
    %v824 = vld [vmem:[#allocation7 + $0x1468] sm:$0xff]
    %v825 = vld [vmem:[#allocation7 + $0x1470] sm:$0xff]
    %v826 = vld [vmem:[#allocation7 + $0x1478] sm:$0xff]
    %v827 = vld [vmem:[#allocation7 + $0x1480] sm:$0xff]
    %v828 = vld [vmem:[#allocation7 + $0x1488] sm:$0xff]
    %v829 = vld [vmem:[#allocation7 + $0x1490] sm:$0xff]
    %v830 = vld [vmem:[#allocation7 + $0x1498] sm:$0xff]
    %v831 = vld [vmem:[#allocation7 + $0x14a0] sm:$0xff]
    %v832 = vld [vmem:[#allocation7 + $0x14a8] sm:$0xff]
    %v833 = vld [vmem:[#allocation7 + $0x14b0] sm:$0xff]
    %v834 = vld [vmem:[#allocation7 + $0x14b8] sm:$0xff]
    %v835 = vld [vmem:[#allocation7 + $0x14c0] sm:$0xff]
    %v836 = vld [vmem:[#allocation7 + $0x14c8] sm:$0xff]
    %v837 = vld [vmem:[#allocation7 + $0x14d0] sm:$0xff]
    %v838 = vld [vmem:[#allocation7 + $0x14d8] sm:$0xff]
    %v839 = vld [vmem:[#allocation7 + $0x14e0] sm:$0xff]
    %v840 = vld [vmem:[#allocation7 + $0x14e8] sm:$0xff]
    %v841 = vld [vmem:[#allocation7 + $0x14f0] sm:$0xff]
    %v842 = vld [vmem:[#allocation7 + $0x14f8] sm:$0xff]
    %v843 = vld [vmem:[#allocation7 + $0x1500] sm:$0xff]
    %v844 = vld [vmem:[#allocation7 + $0x1508] sm:$0xff]
    %v845 = vld [vmem:[#allocation7 + $0x1510] sm:$0xff]
    %v846 = vld [vmem:[#allocation7 + $0x1518] sm:$0xff]
    %v847 = vld [vmem:[#allocation7 + $0x1520] sm:$0xff]
    %v848 = vld [vmem:[#allocation7 + $0x1528] sm:$0xff]
    %v849 = vld [vmem:[#allocation7 + $0x1530] sm:$0xff]
    %v850 = vld [vmem:[#allocation7 + $0x1538] sm:$0xff]
    %v851 = vld [vmem:[#allocation7 + $0x1540] sm:$0xff]
    %v852 = vld [vmem:[#allocation7 + $0x1548] sm:$0xff]
    %v853 = vld [vmem:[#allocation7 + $0x1550] sm:$0xff]
    %v854 = vld [vmem:[#allocation7 + $0x1558] sm:$0xff]
    %v855 = vld [vmem:[#allocation7 + $0x1560] sm:$0xff]
    %v856 = vld [vmem:[#allocation7 + $0x1568] sm:$0xff]
    %v857 = vld [vmem:[#allocation7 + $0x1570] sm:$0xff]
    %v858 = vld [vmem:[#allocation7 + $0x1578] sm:$0xff]
    %v859 = vld [vmem:[#allocation7 + $0x1580] sm:$0xff]
    %v860 = vld [vmem:[#allocation7 + $0x1588] sm:$0xff]
    %v861 = vld [vmem:[#allocation7 + $0x1590] sm:$0xff]
    %v862 = vld [vmem:[#allocation7 + $0x1598] sm:$0xff]
    %v863 = vld [vmem:[#allocation7 + $0x15a0] sm:$0xff]
    %v864 = vld [vmem:[#allocation7 + $0x15a8] sm:$0xff]
    %v865 = vld [vmem:[#allocation7 + $0x15b0] sm:$0xff]
    %v866 = vld [vmem:[#allocation7 + $0x15b8] sm:$0xff]
    %v867 = vld [vmem:[#allocation7 + $0x15c0] sm:$0xff]
    %v868 = vld [vmem:[#allocation7 + $0x15c8] sm:$0xff]
    %v869 = vld [vmem:[#allocation7 + $0x15d0] sm:$0xff]
    %v870 = vld [vmem:[#allocation7 + $0x15d8] sm:$0xff]
    %v871 = vld [vmem:[#allocation9] sm:$0xf]
    %v873 = vlaneseq
    %v874 = vshrl.u32 %v873, 7
    %v875 = vsub.s32 0, %v874
    %v876 = vrot.slane %v871, %v875
    %v877 = vlaneseq
    %v878 = vshrl.u32 %v877, 7
    %v879 = vsub.s32 1, %v878
    %v880 = vrot.slane %v871, %v879
    %v881 = vlaneseq
    %v882 = vshrl.u32 %v881, 7
    %v883 = vsub.s32 2, %v882
    %v884 = vrot.slane %v871, %v883
    %v885 = vlaneseq
    %v886 = vshrl.u32 %v885, 7
    %v887 = vsub.s32 3, %v886
    %v888 = vrot.slane %v871, %v887
    %v904 = vunpack.c.l.b16 %v160
    %v905 = vunpack.c.h.b16 %v160
    %v906 = vunpack.c.l.b16 %v161
    %v907 = vunpack.c.h.b16 %v161
    %v908 = vunpack.c.l.b16 %v162
    %v909 = vunpack.c.h.b16 %v162
    %v910 = vunpack.c.l.b16 %v163
    %v911 = vunpack.c.h.b16 %v163
    %v912 = vunpack.c.l.b16 %v164
    %v913 = vunpack.c.h.b16 %v164
    %v914 = vunpack.c.l.b16 %v165
    %v915 = vunpack.c.h.b16 %v165
    %v916 = vunpack.c.l.b16 %v166
    %v917 = vunpack.c.h.b16 %v166
    %v918 = vunpack.c.l.b16 %v167
    %v919 = vunpack.c.h.b16 %v167
    %v920 = vunpack.c.l.b16 %v168
    %v921 = vunpack.c.h.b16 %v168
    %v922 = vunpack.c.l.b16 %v169
    %v923 = vunpack.c.h.b16 %v169
    %v924 = vunpack.c.l.b16 %v170
    %v925 = vunpack.c.h.b16 %v170
    %v926 = vpack.c.b16 %v904, %v904
    %v927 = vpack.c.b16 %v905, %v905
    %v928 = vpack.c.b16 %v906, %v906
    %v929 = vpack.c.b16 %v907, %v907
    %v930 = vpack.c.b16 %v908, %v908
    %v931 = vpack.c.b16 %v909, %v909
    %v932 = vpack.c.b16 %v910, %v910
    %v933 = vpack.c.b16 %v911, %v911
    %v934 = vpack.c.b16 %v912, %v912
    %v935 = vpack.c.b16 %v913, %v913
    %v936 = vpack.c.b16 %v914, %v914
    %v937 = vpack.c.b16 %v915, %v915
    %v938 = vpack.c.b16 %v916, %v916
    %v939 = vpack.c.b16 %v917, %v917
    %v940 = vpack.c.b16 %v918, %v918
    %v941 = vpack.c.b16 %v919, %v919
    %v942 = vpack.c.b16 %v920, %v920
    %v943 = vpack.c.b16 %v921, %v921
    %v944 = vpack.c.b16 %v922, %v922
    %v945 = vpack.c.b16 %v923, %v923
    %v946 = vpack.c.b16 %v924, %v924
    %v947 = vpack.c.b16 %v925, %v925
    %v1669 = vunpack.c.l.b16 %v171
    %v1670 = vunpack.c.h.b16 %v171
    %v1671 = vunpack.c.l.b16 %v172
    %v1672 = vunpack.c.h.b16 %v172
    %v1673 = vunpack.c.l.b16 %v173
    %v1674 = vunpack.c.h.b16 %v173
    %v1675 = vunpack.c.l.b16 %v174
    %v1676 = vunpack.c.h.b16 %v174
    %v1677 = vunpack.c.l.b16 %v175
    %v1678 = vunpack.c.h.b16 %v175
    %v1679 = vunpack.c.l.b16 %v176
    %v1680 = vunpack.c.h.b16 %v176
    %v1681 = vunpack.c.l.b16 %v177
    %v1682 = vunpack.c.h.b16 %v177
    %v1683 = vunpack.c.l.b16 %v178
    %v1684 = vunpack.c.h.b16 %v178
    %v1685 = vunpack.c.l.b16 %v179
    %v1686 = vunpack.c.h.b16 %v179
    %v1687 = vunpack.c.l.b16 %v180
    %v1688 = vunpack.c.h.b16 %v180
    %v1689 = vunpack.c.l.b16 %v181
    %v1690 = vunpack.c.h.b16 %v181
    %v1691 = vunpack.c.l.b16 %v182
    %v1692 = vunpack.c.h.b16 %v182
    %v1693 = vunpack.c.l.b16 %v183
    %v1694 = vunpack.c.h.b16 %v183
    %v1695 = vunpack.c.l.b16 %v184
    %v1696 = vunpack.c.h.b16 %v184
    %v1697 = vunpack.c.l.b16 %v185
    %v1698 = vunpack.c.h.b16 %v185
    %v1699 = vunpack.c.l.b16 %v186
    %v1700 = vunpack.c.h.b16 %v186
    %v1701 = vunpack.c.l.b16 %v187
    %v1702 = vunpack.c.h.b16 %v187
    %v1703 = vunpack.c.l.b16 %v188
    %v1704 = vunpack.c.h.b16 %v188
    %v1705 = vunpack.c.l.b16 %v189
    %v1706 = vunpack.c.h.b16 %v189
    %v1707 = vunpack.c.l.b16 %v190
    %v1708 = vunpack.c.h.b16 %v190
    %v1709 = vunpack.c.l.b16 %v191
    %v1710 = vunpack.c.h.b16 %v191
    %v1711 = vunpack.c.l.b16 %v192
    %v1712 = vunpack.c.h.b16 %v192
    %v1713 = vunpack.c.l.b16 %v193
    %v1714 = vunpack.c.h.b16 %v193
    %v1715 = vunpack.c.l.b16 %v194
    %v1716 = vunpack.c.h.b16 %v194
    %v1717 = vunpack.c.l.b16 %v195
    %v1718 = vunpack.c.h.b16 %v195
    %v1719 = vunpack.c.l.b16 %v196
    %v1720 = vunpack.c.h.b16 %v196
    %v1721 = vunpack.c.l.b16 %v197
    %v1722 = vunpack.c.h.b16 %v197
    %v1723 = vunpack.c.l.b16 %v198
    %v1724 = vunpack.c.h.b16 %v198
    %v1725 = vunpack.c.l.b16 %v199
    %v1726 = vunpack.c.h.b16 %v199
    %v1727 = vunpack.c.l.b16 %v200
    %v1728 = vunpack.c.h.b16 %v200
    %v1729 = vunpack.c.l.b16 %v201
    %v1730 = vunpack.c.h.b16 %v201
    %v1731 = vunpack.c.l.b16 %v202
    %v1732 = vunpack.c.h.b16 %v202
    %v1733 = vunpack.c.l.b16 %v203
    %v1734 = vunpack.c.h.b16 %v203
    %v1735 = vunpack.c.l.b16 %v204
    %v1736 = vunpack.c.h.b16 %v204
    %v1737 = vunpack.c.l.b16 %v205
    %v1738 = vunpack.c.h.b16 %v205
    %v1739 = vunpack.c.l.b16 %v206
    %v1740 = vunpack.c.h.b16 %v206
    %v1741 = vunpack.c.l.b16 %v207
    %v1742 = vunpack.c.h.b16 %v207
    %v1743 = vunpack.c.l.b16 %v208
    %v1744 = vunpack.c.h.b16 %v208
    %v1745 = vunpack.c.l.b16 %v209
    %v1746 = vunpack.c.h.b16 %v209
    %v1747 = vunpack.c.l.b16 %v210
    %v1748 = vunpack.c.h.b16 %v210
    %v1749 = vunpack.c.l.b16 %v211
    %v1750 = vunpack.c.h.b16 %v211
    %v1751 = vunpack.c.l.b16 %v212
    %v1752 = vunpack.c.h.b16 %v212
    %v1753 = vunpack.c.l.b16 %v213
    %v1754 = vunpack.c.h.b16 %v213
    %v1755 = vunpack.c.l.b16 %v214
    %v1756 = vunpack.c.h.b16 %v214
    %v1757 = vunpack.c.l.b16 %v215
    %v1758 = vunpack.c.h.b16 %v215
    %v1759 = vunpack.c.l.b16 %v216
    %v1760 = vunpack.c.h.b16 %v216
    %v1761 = vunpack.c.l.b16 %v217
    %v1762 = vunpack.c.h.b16 %v217
    %v1763 = vunpack.c.l.b16 %v218
    %v1764 = vunpack.c.h.b16 %v218
    %v1765 = vunpack.c.l.b16 %v219
    %v1766 = vunpack.c.h.b16 %v219
    %v1767 = vunpack.c.l.b16 %v220
    %v1768 = vunpack.c.h.b16 %v220
    %v1769 = vunpack.c.l.b16 %v221
    %v1770 = vunpack.c.h.b16 %v221
    %v1771 = vunpack.c.l.b16 %v222
    %v1772 = vunpack.c.h.b16 %v222
    %v1773 = vunpack.c.l.b16 %v223
    %v1774 = vunpack.c.h.b16 %v223
    %v1775 = vunpack.c.l.b16 %v224
    %v1776 = vunpack.c.h.b16 %v224
    %v1777 = vunpack.c.l.b16 %v225
    %v1778 = vunpack.c.h.b16 %v225
    %v1779 = vunpack.c.l.b16 %v226
    %v1780 = vunpack.c.h.b16 %v226
    %v1781 = vunpack.c.l.b16 %v227
    %v1782 = vunpack.c.h.b16 %v227
    %v1783 = vunpack.c.l.b16 %v228
    %v1784 = vunpack.c.h.b16 %v228
    %v1785 = vunpack.c.l.b16 %v229
    %v1786 = vunpack.c.h.b16 %v229
    %v1787 = vunpack.c.l.b16 %v230
    %v1788 = vunpack.c.h.b16 %v230
    %v1789 = vunpack.c.l.b16 %v231
    %v1790 = vunpack.c.h.b16 %v231
    %v1791 = vunpack.c.l.b16 %v232
    %v1792 = vunpack.c.h.b16 %v232
    %v1793 = vunpack.c.l.b16 %v233
    %v1794 = vunpack.c.h.b16 %v233
    %v1795 = vunpack.c.l.b16 %v234
    %v1796 = vunpack.c.h.b16 %v234
    %v1797 = vunpack.c.l.b16 %v235
    %v1798 = vunpack.c.h.b16 %v235
    %v1799 = vunpack.c.l.b16 %v236
    %v1800 = vunpack.c.h.b16 %v236
    %v1801 = vunpack.c.l.b16 %v237
    %v1802 = vunpack.c.h.b16 %v237
    %v1803 = vunpack.c.l.b16 %v238
    %v1804 = vunpack.c.h.b16 %v238
    %v1805 = vunpack.c.l.b16 %v239
    %v1806 = vunpack.c.h.b16 %v239
    %v1807 = vunpack.c.l.b16 %v240
    %v1808 = vunpack.c.h.b16 %v240
    %v1809 = vunpack.c.l.b16 %v241
    %v1810 = vunpack.c.h.b16 %v241
    %v1811 = vunpack.c.l.b16 %v242
    %v1812 = vunpack.c.h.b16 %v242
    %v1813 = vunpack.c.l.b16 %v243
    %v1814 = vunpack.c.h.b16 %v243
    %v1815 = vunpack.c.l.b16 %v244
    %v1816 = vunpack.c.h.b16 %v244
    %v1817 = vunpack.c.l.b16 %v245
    %v1818 = vunpack.c.h.b16 %v245
    %v1819 = vunpack.c.l.b16 %v246
    %v1820 = vunpack.c.h.b16 %v246
    %v1821 = vunpack.c.l.b16 %v247
    %v1822 = vunpack.c.h.b16 %v247
    %v1823 = vunpack.c.l.b16 %v248
    %v1824 = vunpack.c.h.b16 %v248
    %v1825 = vunpack.c.l.b16 %v249
    %v1826 = vunpack.c.h.b16 %v249
    %v1827 = vunpack.c.l.b16 %v250
    %v1828 = vunpack.c.h.b16 %v250
    %v1829 = vunpack.c.l.b16 %v251
    %v1830 = vunpack.c.h.b16 %v251
    %v1831 = vunpack.c.l.b16 %v252
    %v1832 = vunpack.c.h.b16 %v252
    %v1833 = vunpack.c.l.b16 %v253
    %v1834 = vunpack.c.h.b16 %v253
    %v1835 = vunpack.c.l.b16 %v254
    %v1836 = vunpack.c.h.b16 %v254
    %v1837 = vunpack.c.l.b16 %v255
    %v1838 = vunpack.c.h.b16 %v255
    %v1839 = vunpack.c.l.b16 %v256
    %v1840 = vunpack.c.h.b16 %v256
    %v1841 = vunpack.c.l.b16 %v257
    %v1842 = vunpack.c.h.b16 %v257
    %v1843 = vunpack.c.l.b16 %v258
    %v1844 = vunpack.c.h.b16 %v258
    %v1845 = vunpack.c.l.b16 %v259
    %v1846 = vunpack.c.h.b16 %v259
    %v1847 = vunpack.c.l.b16 %v260
    %v1848 = vunpack.c.h.b16 %v260
    %v1849 = vunpack.c.l.b16 %v261
    %v1850 = vunpack.c.h.b16 %v261
    %v1851 = vunpack.c.l.b16 %v262
    %v1852 = vunpack.c.h.b16 %v262
    %v1853 = vunpack.c.l.b16 %v263
    %v1854 = vunpack.c.h.b16 %v263
    %v1855 = vunpack.c.l.b16 %v264
    %v1856 = vunpack.c.h.b16 %v264
    %v1857 = vunpack.c.l.b16 %v265
    %v1858 = vunpack.c.h.b16 %v265
    %v1859 = vunpack.c.l.b16 %v266
    %v1860 = vunpack.c.h.b16 %v266
    %v1861 = vunpack.c.l.b16 %v267
    %v1862 = vunpack.c.h.b16 %v267
    %v1863 = vunpack.c.l.b16 %v268
    %v1864 = vunpack.c.h.b16 %v268
    %v1865 = vunpack.c.l.b16 %v269
    %v1866 = vunpack.c.h.b16 %v269
    %v1867 = vunpack.c.l.b16 %v270
    %v1868 = vunpack.c.h.b16 %v270
    %v1869 = vunpack.c.l.b16 %v271
    %v1870 = vunpack.c.h.b16 %v271
    %v1871 = vunpack.c.l.b16 %v272
    %v1872 = vunpack.c.h.b16 %v272
    %v1873 = vunpack.c.l.b16 %v273
    %v1874 = vunpack.c.h.b16 %v273
    %v1875 = vunpack.c.l.b16 %v274
    %v1876 = vunpack.c.h.b16 %v274
    %v1877 = vunpack.c.l.b16 %v275
    %v1878 = vunpack.c.h.b16 %v275
    %v1879 = vunpack.c.l.b16 %v276
    %v1880 = vunpack.c.h.b16 %v276
    %v1881 = vunpack.c.l.b16 %v277
    %v1882 = vunpack.c.h.b16 %v277
    %v1883 = vunpack.c.l.b16 %v278
    %v1884 = vunpack.c.h.b16 %v278
    %v1885 = vunpack.c.l.b16 %v279
    %v1886 = vunpack.c.h.b16 %v279
    %v1887 = vunpack.c.l.b16 %v280
    %v1888 = vunpack.c.h.b16 %v280
    %v1889 = vunpack.c.l.b16 %v281
    %v1890 = vunpack.c.h.b16 %v281
    %v1891 = vunpack.c.l.b16 %v282
    %v1892 = vunpack.c.h.b16 %v282
    %v1893 = vunpack.c.l.b16 %v283
    %v1894 = vunpack.c.h.b16 %v283
    %v1895 = vunpack.c.l.b16 %v284
    %v1896 = vunpack.c.h.b16 %v284
    %v1897 = vunpack.c.l.b16 %v285
    %v1898 = vunpack.c.h.b16 %v285
    %v1899 = vunpack.c.l.b16 %v286
    %v1900 = vunpack.c.h.b16 %v286
    %v1901 = vunpack.c.l.b16 %v287
    %v1902 = vunpack.c.h.b16 %v287
    %v1903 = vunpack.c.l.b16 %v288
    %v1904 = vunpack.c.h.b16 %v288
    %v1905 = vunpack.c.l.b16 %v289
    %v1906 = vunpack.c.h.b16 %v289
    %v1907 = vunpack.c.l.b16 %v290
    %v1908 = vunpack.c.h.b16 %v290
    %v1909 = vunpack.c.l.b16 %v291
    %v1910 = vunpack.c.h.b16 %v291
    %v1911 = vunpack.c.l.b16 %v292
    %v1912 = vunpack.c.h.b16 %v292
    %v1913 = vunpack.c.l.b16 %v293
    %v1914 = vunpack.c.h.b16 %v293
    %v1915 = vunpack.c.l.b16 %v294
    %v1916 = vunpack.c.h.b16 %v294
    %v1917 = vunpack.c.l.b16 %v295
    %v1918 = vunpack.c.h.b16 %v295
    %v1919 = vunpack.c.l.b16 %v296
    %v1920 = vunpack.c.h.b16 %v296
    %v1921 = vunpack.c.l.b16 %v297
    %v1922 = vunpack.c.h.b16 %v297
    %v1923 = vunpack.c.l.b16 %v298
    %v1924 = vunpack.c.h.b16 %v298
    %v1925 = vunpack.c.l.b16 %v299
    %v1926 = vunpack.c.h.b16 %v299
    %v1927 = vunpack.c.l.b16 %v300
    %v1928 = vunpack.c.h.b16 %v300
    %v1929 = vunpack.c.l.b16 %v301
    %v1930 = vunpack.c.h.b16 %v301
    %v1931 = vunpack.c.l.b16 %v302
    %v1932 = vunpack.c.h.b16 %v302
    %v1933 = vunpack.c.l.b16 %v303
    %v1934 = vunpack.c.h.b16 %v303
    %v1935 = vunpack.c.l.b16 %v304
    %v1936 = vunpack.c.h.b16 %v304
    %v1937 = vunpack.c.l.b16 %v305
    %v1938 = vunpack.c.h.b16 %v305
    %v1939 = vunpack.c.l.b16 %v306
    %v1940 = vunpack.c.h.b16 %v306
    %v1941 = vunpack.c.l.b16 %v307
    %v1942 = vunpack.c.h.b16 %v307
    %v1943 = vunpack.c.l.b16 %v308
    %v1944 = vunpack.c.h.b16 %v308
    %v1945 = vunpack.c.l.b16 %v309
    %v1946 = vunpack.c.h.b16 %v309
    %v1947 = vunpack.c.l.b16 %v310
    %v1948 = vunpack.c.h.b16 %v310
    %v1949 = vunpack.c.l.b16 %v311
    %v1950 = vunpack.c.h.b16 %v311
    %v1951 = vunpack.c.l.b16 %v312
    %v1952 = vunpack.c.h.b16 %v312
    %v1953 = vunpack.c.l.b16 %v313
    %v1954 = vunpack.c.h.b16 %v313
    %v1955 = vunpack.c.l.b16 %v314
    %v1956 = vunpack.c.h.b16 %v314
    %v1957 = vunpack.c.l.b16 %v315
    %v1958 = vunpack.c.h.b16 %v315
    %v1959 = vunpack.c.l.b16 %v316
    %v1960 = vunpack.c.h.b16 %v316
    %v1961 = vunpack.c.l.b16 %v317
    %v1962 = vunpack.c.h.b16 %v317
    %v1963 = vunpack.c.l.b16 %v318
    %v1964 = vunpack.c.h.b16 %v318
    %v1965 = vunpack.c.l.b16 %v319
    %v1966 = vunpack.c.h.b16 %v319
    %v1967 = vunpack.c.l.b16 %v320
    %v1968 = vunpack.c.h.b16 %v320
    %v1969 = vunpack.c.l.b16 %v321
    %v1970 = vunpack.c.h.b16 %v321
    %v1971 = vunpack.c.l.b16 %v322
    %v1972 = vunpack.c.h.b16 %v322
    %v1973 = vunpack.c.l.b16 %v323
    %v1974 = vunpack.c.h.b16 %v323
    %v1975 = vunpack.c.l.b16 %v324
    %v1976 = vunpack.c.h.b16 %v324
    %v1977 = vunpack.c.l.b16 %v325
    %v1978 = vunpack.c.h.b16 %v325
    %v1979 = vunpack.c.l.b16 %v326
    %v1980 = vunpack.c.h.b16 %v326
    %v1981 = vunpack.c.l.b16 %v327
    %v1982 = vunpack.c.h.b16 %v327
    %v1983 = vunpack.c.l.b16 %v328
    %v1984 = vunpack.c.h.b16 %v328
    %v1985 = vunpack.c.l.b16 %v329
    %v1986 = vunpack.c.h.b16 %v329
    %v1987 = vunpack.c.l.b16 %v330
    %v1988 = vunpack.c.h.b16 %v330
    %v1989 = vunpack.c.l.b16 %v331
    %v1990 = vunpack.c.h.b16 %v331
    %v1991 = vunpack.c.l.b16 %v332
    %v1992 = vunpack.c.h.b16 %v332
    %v1993 = vunpack.c.l.b16 %v333
    %v1994 = vunpack.c.h.b16 %v333
    %v1995 = vunpack.c.l.b16 %v334
    %v1996 = vunpack.c.h.b16 %v334
    %v1997 = vunpack.c.l.b16 %v335
    %v1998 = vunpack.c.h.b16 %v335
    %v1999 = vunpack.c.l.b16 %v336
    %v2000 = vunpack.c.h.b16 %v336
    %v2001 = vunpack.c.l.b16 %v337
    %v2002 = vunpack.c.h.b16 %v337
    %v2003 = vunpack.c.l.b16 %v338
    %v2004 = vunpack.c.h.b16 %v338
    %v2005 = vunpack.c.l.b16 %v339
    %v2006 = vunpack.c.h.b16 %v339
    %v2007 = vunpack.c.l.b16 %v340
    %v2008 = vunpack.c.h.b16 %v340
    %v2009 = vunpack.c.l.b16 %v341
    %v2010 = vunpack.c.h.b16 %v341
    %v2011 = vunpack.c.l.b16 %v342
    %v2012 = vunpack.c.h.b16 %v342
    %v2013 = vunpack.c.l.b16 %v343
    %v2014 = vunpack.c.h.b16 %v343
    %v2015 = vunpack.c.l.b16 %v344
    %v2016 = vunpack.c.h.b16 %v344
    %v2017 = vunpack.c.l.b16 %v345
    %v2018 = vunpack.c.h.b16 %v345
    %v2019 = vunpack.c.l.b16 %v346
    %v2020 = vunpack.c.h.b16 %v346
    %v2021 = vunpack.c.l.b16 %v347
    %v2022 = vunpack.c.h.b16 %v347
    %v2023 = vunpack.c.l.b16 %v348
    %v2024 = vunpack.c.h.b16 %v348
    %v2025 = vunpack.c.l.b16 %v349
    %v2026 = vunpack.c.h.b16 %v349
    %v2027 = vunpack.c.l.b16 %v350
    %v2028 = vunpack.c.h.b16 %v350
    %v2029 = vunpack.c.l.b16 %v351
    %v2030 = vunpack.c.h.b16 %v351
    %v2031 = vunpack.c.l.b16 %v352
    %v2032 = vunpack.c.h.b16 %v352
    %v2033 = vunpack.c.l.b16 %v353
    %v2034 = vunpack.c.h.b16 %v353
    %v2035 = vunpack.c.l.b16 %v354
    %v2036 = vunpack.c.h.b16 %v354
    %v2037 = vunpack.c.l.b16 %v355
    %v2038 = vunpack.c.h.b16 %v355
    %v2039 = vunpack.c.l.b16 %v356
    %v2040 = vunpack.c.h.b16 %v356
    %v2041 = vunpack.c.l.b16 %v357
    %v2042 = vunpack.c.h.b16 %v357
    %v2043 = vunpack.c.l.b16 %v358
    %v2044 = vunpack.c.h.b16 %v358
    %v2045 = vunpack.c.l.b16 %v359
    %v2046 = vunpack.c.h.b16 %v359
    %v2047 = vunpack.c.l.b16 %v360
    %v2048 = vunpack.c.h.b16 %v360
    %v2049 = vunpack.c.l.b16 %v361
    %v2050 = vunpack.c.h.b16 %v361
    %v2051 = vunpack.c.l.b16 %v362
    %v2052 = vunpack.c.h.b16 %v362
    %v2053 = vunpack.c.l.b16 %v363
    %v2054 = vunpack.c.h.b16 %v363
    %v2055 = vunpack.c.l.b16 %v364
    %v2056 = vunpack.c.h.b16 %v364
    %v2057 = vunpack.c.l.b16 %v365
    %v2058 = vunpack.c.h.b16 %v365
    %v2059 = vunpack.c.l.b16 %v366
    %v2060 = vunpack.c.h.b16 %v366
    %v2061 = vunpack.c.l.b16 %v367
    %v2062 = vunpack.c.h.b16 %v367
    %v2063 = vunpack.c.l.b16 %v368
    %v2064 = vunpack.c.h.b16 %v368
    %v2065 = vunpack.c.l.b16 %v369
    %v2066 = vunpack.c.h.b16 %v369
    %v2067 = vunpack.c.l.b16 %v370
    %v2068 = vunpack.c.h.b16 %v370
    %v2069 = vunpack.c.l.b16 %v371
    %v2070 = vunpack.c.h.b16 %v371
    %v2071 = vunpack.c.l.b16 %v372
    %v2072 = vunpack.c.h.b16 %v372
    %v2073 = vunpack.c.l.b16 %v373
    %v2074 = vunpack.c.h.b16 %v373
    %v2075 = vunpack.c.l.b16 %v374
    %v2076 = vunpack.c.h.b16 %v374
    %v2077 = vunpack.c.l.b16 %v375
    %v2078 = vunpack.c.h.b16 %v375
    %v2079 = vunpack.c.l.b16 %v376
    %v2080 = vunpack.c.h.b16 %v376
    %v2081 = vunpack.c.l.b16 %v377
    %v2082 = vunpack.c.h.b16 %v377
    %v2083 = vunpack.c.l.b16 %v378
    %v2084 = vunpack.c.h.b16 %v378
    %v2085 = vunpack.c.l.b16 %v379
    %v2086 = vunpack.c.h.b16 %v379
    %v2087 = vunpack.c.l.b16 %v380
    %v2088 = vunpack.c.h.b16 %v380
    %v2089 = vunpack.c.l.b16 %v381
    %v2090 = vunpack.c.h.b16 %v381
    %v2091 = vunpack.c.l.b16 %v382
    %v2092 = vunpack.c.h.b16 %v382
    %v2093 = vunpack.c.l.b16 %v383
    %v2094 = vunpack.c.h.b16 %v383
    %v2095 = vunpack.c.l.b16 %v384
    %v2096 = vunpack.c.h.b16 %v384
    %v2097 = vunpack.c.l.b16 %v385
    %v2098 = vunpack.c.h.b16 %v385
    %v2099 = vunpack.c.l.b16 %v386
    %v2100 = vunpack.c.h.b16 %v386
    %v2101 = vunpack.c.l.b16 %v387
    %v2102 = vunpack.c.h.b16 %v387
    %v2103 = vunpack.c.l.b16 %v388
    %v2104 = vunpack.c.h.b16 %v388
    %v2105 = vunpack.c.l.b16 %v389
    %v2106 = vunpack.c.h.b16 %v389
    %v2107 = vunpack.c.l.b16 %v390
    %v2108 = vunpack.c.h.b16 %v390
    %v2109 = vunpack.c.l.b16 %v391
    %v2110 = vunpack.c.h.b16 %v391
    %v2111 = vunpack.c.l.b16 %v392
    %v2112 = vunpack.c.h.b16 %v392
    %v2113 = vunpack.c.l.b16 %v393
    %v2114 = vunpack.c.h.b16 %v393
    %v2115 = vunpack.c.l.b16 %v394
    %v2116 = vunpack.c.h.b16 %v394
    %v2117 = vunpack.c.l.b16 %v395
    %v2118 = vunpack.c.h.b16 %v395
    %v2119 = vunpack.c.l.b16 %v396
    %v2120 = vunpack.c.h.b16 %v396
    %v2121 = vunpack.c.l.b16 %v397
    %v2122 = vunpack.c.h.b16 %v397
    %v2123 = vunpack.c.l.b16 %v398
    %v2124 = vunpack.c.h.b16 %v398
    %v2125 = vunpack.c.l.b16 %v399
    %v2126 = vunpack.c.h.b16 %v399
    %v2127 = vunpack.c.l.b16 %v400
    %v2128 = vunpack.c.h.b16 %v400
    %v2129 = vunpack.c.l.b16 %v401
    %v2130 = vunpack.c.h.b16 %v401
    %v2131 = vunpack.c.l.b16 %v402
    %v2132 = vunpack.c.h.b16 %v402
    %v2133 = vunpack.c.l.b16 %v403
    %v2134 = vunpack.c.h.b16 %v403
    %v2135 = vunpack.c.l.b16 %v404
    %v2136 = vunpack.c.h.b16 %v404
    %v2137 = vunpack.c.l.b16 %v405
    %v2138 = vunpack.c.h.b16 %v405
    %v2139 = vunpack.c.l.b16 %v406
    %v2140 = vunpack.c.h.b16 %v406
    %v2141 = vunpack.c.l.b16 %v407
    %v2142 = vunpack.c.h.b16 %v407
    %v2143 = vunpack.c.l.b16 %v408
    %v2144 = vunpack.c.h.b16 %v408
    %v2145 = vunpack.c.l.b16 %v409
    %v2146 = vunpack.c.h.b16 %v409
    %v2147 = vunpack.c.l.b16 %v410
    %v2148 = vunpack.c.h.b16 %v410
    %v2149 = vunpack.c.l.b16 %v411
    %v2150 = vunpack.c.h.b16 %v411
    %v2151 = vunpack.c.l.b16 %v412
    %v2152 = vunpack.c.h.b16 %v412
    %v2153 = vunpack.c.l.b16 %v413
    %v2154 = vunpack.c.h.b16 %v413
    %v2155 = vunpack.c.l.b16 %v414
    %v2156 = vunpack.c.h.b16 %v414
    %v2157 = vunpack.c.l.b16 %v415
    %v2158 = vunpack.c.h.b16 %v415
    %v2159 = vunpack.c.l.b16 %v416
    %v2160 = vunpack.c.h.b16 %v416
    %v2161 = vunpack.c.l.b16 %v417
    %v2162 = vunpack.c.h.b16 %v417
    %v2163 = vunpack.c.l.b16 %v418
    %v2164 = vunpack.c.h.b16 %v418
    %v2165 = vunpack.c.l.b16 %v419
    %v2166 = vunpack.c.h.b16 %v419
    %v2167 = vunpack.c.l.b16 %v420
    %v2168 = vunpack.c.h.b16 %v420
    %v2169 = vunpack.c.l.b16 %v421
    %v2170 = vunpack.c.h.b16 %v421
    %v2171 = vunpack.c.l.b16 %v422
    %v2172 = vunpack.c.h.b16 %v422
    %v2173 = vunpack.c.l.b16 %v423
    %v2174 = vunpack.c.h.b16 %v423
    %v2175 = vunpack.c.l.b16 %v424
    %v2176 = vunpack.c.h.b16 %v424
    %v2177 = vunpack.c.l.b16 %v425
    %v2178 = vunpack.c.h.b16 %v425
    %v2179 = vunpack.c.l.b16 %v426
    %v2180 = vunpack.c.h.b16 %v426
    %v2181 = vunpack.c.l.b16 %v427
    %v2182 = vunpack.c.h.b16 %v427
    %v2183 = vunpack.c.l.b16 %v428
    %v2184 = vunpack.c.h.b16 %v428
    %v2185 = vunpack.c.l.b16 %v429
    %v2186 = vunpack.c.h.b16 %v429
    %v2187 = vunpack.c.l.b16 %v430
    %v2188 = vunpack.c.h.b16 %v430
    %v2189 = vunpack.c.l.b16 %v431
    %v2190 = vunpack.c.h.b16 %v431
    %v2191 = vunpack.c.l.b16 %v432
    %v2192 = vunpack.c.h.b16 %v432
    %v2193 = vunpack.c.l.b16 %v433
    %v2194 = vunpack.c.h.b16 %v433
    %v2195 = vunpack.c.l.b16 %v434
    %v2196 = vunpack.c.h.b16 %v434
    %v2197 = vunpack.c.l.b16 %v435
    %v2198 = vunpack.c.h.b16 %v435
    %v2199 = vunpack.c.l.b16 %v436
    %v2200 = vunpack.c.h.b16 %v436
    %v2201 = vunpack.c.l.b16 %v437
    %v2202 = vunpack.c.h.b16 %v437
    %v2203 = vunpack.c.l.b16 %v438
    %v2204 = vunpack.c.h.b16 %v438
    %v2205 = vunpack.c.l.b16 %v439
    %v2206 = vunpack.c.h.b16 %v439
    %v2207 = vunpack.c.l.b16 %v440
    %v2208 = vunpack.c.h.b16 %v440
    %v2209 = vunpack.c.l.b16 %v441
    %v2210 = vunpack.c.h.b16 %v441
    %v2211 = vunpack.c.l.b16 %v442
    %v2212 = vunpack.c.h.b16 %v442
    %v2213 = vunpack.c.l.b16 %v443
    %v2214 = vunpack.c.h.b16 %v443
    %v2215 = vunpack.c.l.b16 %v444
    %v2216 = vunpack.c.h.b16 %v444
    %v2217 = vunpack.c.l.b16 %v445
    %v2218 = vunpack.c.h.b16 %v445
    %v2219 = vunpack.c.l.b16 %v446
    %v2220 = vunpack.c.h.b16 %v446
    %v2221 = vunpack.c.l.b16 %v447
    %v2222 = vunpack.c.h.b16 %v447
    %v2223 = vunpack.c.l.b16 %v448
    %v2224 = vunpack.c.h.b16 %v448
    %v2225 = vunpack.c.l.b16 %v449
    %v2226 = vunpack.c.h.b16 %v449
    %v2227 = vunpack.c.l.b16 %v450
    %v2228 = vunpack.c.h.b16 %v450
    %v2229 = vunpack.c.l.b16 %v451
    %v2230 = vunpack.c.h.b16 %v451
    %v2231 = vunpack.c.l.b16 %v452
    %v2232 = vunpack.c.h.b16 %v452
    %v2233 = vunpack.c.l.b16 %v453
    %v2234 = vunpack.c.h.b16 %v453
    %v2235 = vunpack.c.l.b16 %v454
    %v2236 = vunpack.c.h.b16 %v454
    %v2237 = vunpack.c.l.b16 %v455
    %v2238 = vunpack.c.h.b16 %v455
    %v2239 = vunpack.c.l.b16 %v456
    %v2240 = vunpack.c.h.b16 %v456
    %v2241 = vunpack.c.l.b16 %v457
    %v2242 = vunpack.c.h.b16 %v457
    %v2243 = vunpack.c.l.b16 %v458
    %v2244 = vunpack.c.h.b16 %v458
    %v2245 = vunpack.c.l.b16 %v459
    %v2246 = vunpack.c.h.b16 %v459
    %v2247 = vunpack.c.l.b16 %v460
    %v2248 = vunpack.c.h.b16 %v460
    %v2249 = vunpack.c.l.b16 %v461
    %v2250 = vunpack.c.h.b16 %v461
    %v2251 = vunpack.c.l.b16 %v462
    %v2252 = vunpack.c.h.b16 %v462
    %v2253 = vunpack.c.l.b16 %v463
    %v2254 = vunpack.c.h.b16 %v463
    %v2255 = vunpack.c.l.b16 %v464
    %v2256 = vunpack.c.h.b16 %v464
    %v2257 = vunpack.c.l.b16 %v465
    %v2258 = vunpack.c.h.b16 %v465
    %v2259 = vunpack.c.l.b16 %v466
    %v2260 = vunpack.c.h.b16 %v466
    %v2261 = vunpack.c.l.b16 %v467
    %v2262 = vunpack.c.h.b16 %v467
    %v2263 = vunpack.c.l.b16 %v468
    %v2264 = vunpack.c.h.b16 %v468
    %v2265 = vunpack.c.l.b16 %v469
    %v2266 = vunpack.c.h.b16 %v469
    %v2267 = vunpack.c.l.b16 %v470
    %v2268 = vunpack.c.h.b16 %v470
    %v2269 = vunpack.c.l.b16 %v471
    %v2270 = vunpack.c.h.b16 %v471
    %v2271 = vunpack.c.l.b16 %v472
    %v2272 = vunpack.c.h.b16 %v472
    %v2273 = vunpack.c.l.b16 %v473
    %v2274 = vunpack.c.h.b16 %v473
    %v2275 = vunpack.c.l.b16 %v474
    %v2276 = vunpack.c.h.b16 %v474
    %v2277 = vunpack.c.l.b16 %v475
    %v2278 = vunpack.c.h.b16 %v475
    %v2279 = vunpack.c.l.b16 %v476
    %v2280 = vunpack.c.h.b16 %v476
    %v2281 = vunpack.c.l.b16 %v477
    %v2282 = vunpack.c.h.b16 %v477
    %v2283 = vunpack.c.l.b16 %v478
    %v2284 = vunpack.c.h.b16 %v478
    %v2285 = vunpack.c.l.b16 %v479
    %v2286 = vunpack.c.h.b16 %v479
    %v2287 = vunpack.c.l.b16 %v480
    %v2288 = vunpack.c.h.b16 %v480
    %v2289 = vunpack.c.l.b16 %v481
    %v2290 = vunpack.c.h.b16 %v481
    %v2291 = vunpack.c.l.b16 %v482
    %v2292 = vunpack.c.h.b16 %v482
    %v2293 = vunpack.c.l.b16 %v483
    %v2294 = vunpack.c.h.b16 %v483
    %v2295 = vunpack.c.l.b16 %v484
    %v2296 = vunpack.c.h.b16 %v484
    %v2297 = vunpack.c.l.b16 %v485
    %v2298 = vunpack.c.h.b16 %v485
    %v2299 = vunpack.c.l.b16 %v486
    %v2300 = vunpack.c.h.b16 %v486
    %v2301 = vunpack.c.l.b16 %v487
    %v2302 = vunpack.c.h.b16 %v487
    %v2303 = vunpack.c.l.b16 %v488
    %v2304 = vunpack.c.h.b16 %v488
    %v2305 = vunpack.c.l.b16 %v489
    %v2306 = vunpack.c.h.b16 %v489
    %v2307 = vunpack.c.l.b16 %v490
    %v2308 = vunpack.c.h.b16 %v490
    %v2309 = vunpack.c.l.b16 %v491
    %v2310 = vunpack.c.h.b16 %v491
    %v2311 = vunpack.c.l.b16 %v492
    %v2312 = vunpack.c.h.b16 %v492
    %v2313 = vunpack.c.l.b16 %v493
    %v2314 = vunpack.c.h.b16 %v493
    %v2315 = vunpack.c.l.b16 %v494
    %v2316 = vunpack.c.h.b16 %v494
    %v2317 = vunpack.c.l.b16 %v495
    %v2318 = vunpack.c.h.b16 %v495
    %v2319 = vunpack.c.l.b16 %v496
    %v2320 = vunpack.c.h.b16 %v496
    %v2321 = vunpack.c.l.b16 %v497
    %v2322 = vunpack.c.h.b16 %v497
    %v2323 = vunpack.c.l.b16 %v498
    %v2324 = vunpack.c.h.b16 %v498
    %v2325 = vunpack.c.l.b16 %v499
    %v2326 = vunpack.c.h.b16 %v499
    %v2327 = vunpack.c.l.b16 %v500
    %v2328 = vunpack.c.h.b16 %v500
    %v2329 = vunpack.c.l.b16 %v501
    %v2330 = vunpack.c.h.b16 %v501
    %v2331 = vunpack.c.l.b16 %v502
    %v2332 = vunpack.c.h.b16 %v502
    %v2333 = vunpack.c.l.b16 %v503
    %v2334 = vunpack.c.h.b16 %v503
    %v2335 = vunpack.c.l.b16 %v504
    %v2336 = vunpack.c.h.b16 %v504
    %v2337 = vunpack.c.l.b16 %v505
    %v2338 = vunpack.c.h.b16 %v505
    %v2339 = vunpack.c.l.b16 %v506
    %v2340 = vunpack.c.h.b16 %v506
    %v2341 = vunpack.c.l.b16 %v507
    %v2342 = vunpack.c.h.b16 %v507
    %v2343 = vunpack.c.l.b16 %v508
    %v2344 = vunpack.c.h.b16 %v508
    %v2345 = vunpack.c.l.b16 %v509
    %v2346 = vunpack.c.h.b16 %v509
    %v2347 = vunpack.c.l.b16 %v510
    %v2348 = vunpack.c.h.b16 %v510
    %v2349 = vunpack.c.l.b16 %v511
    %v2350 = vunpack.c.h.b16 %v511
    %v2351 = vunpack.c.l.b16 %v512
    %v2352 = vunpack.c.h.b16 %v512
    %v2353 = vunpack.c.l.b16 %v513
    %v2354 = vunpack.c.h.b16 %v513
    %v2355 = vunpack.c.l.b16 %v514
    %v2356 = vunpack.c.h.b16 %v514
    %v2357 = vunpack.c.l.b16 %v515
    %v2358 = vunpack.c.h.b16 %v515
    %v2359 = vunpack.c.l.b16 %v516
    %v2360 = vunpack.c.h.b16 %v516
    %v2361 = vunpack.c.l.b16 %v517
    %v2362 = vunpack.c.h.b16 %v517
    %v2363 = vunpack.c.l.b16 %v518
    %v2364 = vunpack.c.h.b16 %v518
    %v2365 = vunpack.c.l.b16 %v519
    %v2366 = vunpack.c.h.b16 %v519
    %v2367 = vunpack.c.l.b16 %v520
    %v2368 = vunpack.c.h.b16 %v520
    %v2369 = vunpack.c.l.b16 %v521
    %v2370 = vunpack.c.h.b16 %v521
    %v2371 = vunpack.c.l.b16 %v522
    %v2372 = vunpack.c.h.b16 %v522
    %v2373 = vunpack.c.l.b16 %v523
    %v2374 = vunpack.c.h.b16 %v523
    %v2375 = vunpack.c.l.b16 %v524
    %v2376 = vunpack.c.h.b16 %v524
    %v2377 = vunpack.c.l.b16 %v525
    %v2378 = vunpack.c.h.b16 %v525
    %v2379 = vunpack.c.l.b16 %v526
    %v2380 = vunpack.c.h.b16 %v526
    %v2381 = vunpack.c.l.b16 %v527
    %v2382 = vunpack.c.h.b16 %v527
    %v2383 = vunpack.c.l.b16 %v528
    %v2384 = vunpack.c.h.b16 %v528
    %v2385 = vunpack.c.l.b16 %v529
    %v2386 = vunpack.c.h.b16 %v529
    %v2387 = vunpack.c.l.b16 %v530
    %v2388 = vunpack.c.h.b16 %v530
    %v2389 = vunpack.c.l.b16 %v531
    %v2390 = vunpack.c.h.b16 %v531
    %v2391 = vunpack.c.l.b16 %v532
    %v2392 = vunpack.c.h.b16 %v532
    %v2393 = vunpack.c.l.b16 %v533
    %v2394 = vunpack.c.h.b16 %v533
    %v2395 = vunpack.c.l.b16 %v534
    %v2396 = vunpack.c.h.b16 %v534
    %v2397 = vunpack.c.l.b16 %v535
    %v2398 = vunpack.c.h.b16 %v535
    %v2399 = vunpack.c.l.b16 %v536
    %v2400 = vunpack.c.h.b16 %v536
    %v2401 = vunpack.c.l.b16 %v537
    %v2402 = vunpack.c.h.b16 %v537
    %v2403 = vunpack.c.l.b16 %v538
    %v2404 = vunpack.c.h.b16 %v538
    %v2405 = vunpack.c.l.b16 %v539
    %v2406 = vunpack.c.h.b16 %v539
    %v2407 = vunpack.c.l.b16 %v540
    %v2408 = vunpack.c.h.b16 %v540
    %v2409 = vunpack.c.l.b16 %v541
    %v2410 = vunpack.c.h.b16 %v541
    %v2411 = vunpack.c.l.b16 %v542
    %v2412 = vunpack.c.h.b16 %v542
    %v2413 = vunpack.c.l.b16 %v543
    %v2414 = vunpack.c.h.b16 %v543
    %v2415 = vunpack.c.l.b16 %v544
    %v2416 = vunpack.c.h.b16 %v544
    %v2417 = vunpack.c.l.b16 %v545
    %v2418 = vunpack.c.h.b16 %v545
    %v2419 = vunpack.c.l.b16 %v546
    %v2420 = vunpack.c.h.b16 %v546
    %v2421 = vunpack.c.l.b16 %v547
    %v2422 = vunpack.c.h.b16 %v547
    %v2423 = vunpack.c.l.b16 %v548
    %v2424 = vunpack.c.h.b16 %v548
    %v2425 = vunpack.c.l.b16 %v549
    %v2426 = vunpack.c.h.b16 %v549
    %v2427 = vunpack.c.l.b16 %v550
    %v2428 = vunpack.c.h.b16 %v550
    %v2429 = vunpack.c.l.b16 %v551
    %v2430 = vunpack.c.h.b16 %v551
    %v2431 = vunpack.c.l.b16 %v552
    %v2432 = vunpack.c.h.b16 %v552
    %v2433 = vunpack.c.l.b16 %v553
    %v2434 = vunpack.c.h.b16 %v553
    %v2435 = vunpack.c.l.b16 %v554
    %v2436 = vunpack.c.h.b16 %v554
    %v2437 = vunpack.c.l.b16 %v555
    %v2438 = vunpack.c.h.b16 %v555
    %v2439 = vunpack.c.l.b16 %v556
    %v2440 = vunpack.c.h.b16 %v556
    %v2441 = vunpack.c.l.b16 %v557
    %v2442 = vunpack.c.h.b16 %v557
    %v2443 = vunpack.c.l.b16 %v558
    %v2444 = vunpack.c.h.b16 %v558
    %v2445 = vunpack.c.l.b16 %v559
    %v2446 = vunpack.c.h.b16 %v559
    %v2447 = vunpack.c.l.b16 %v560
    %v2448 = vunpack.c.h.b16 %v560
    %v2449 = vunpack.c.l.b16 %v561
    %v2450 = vunpack.c.h.b16 %v561
    %v2451 = vunpack.c.l.b16 %v562
    %v2452 = vunpack.c.h.b16 %v562
    %v2453 = vunpack.c.l.b16 %v563
    %v2454 = vunpack.c.h.b16 %v563
    %v2455 = vunpack.c.l.b16 %v564
    %v2456 = vunpack.c.h.b16 %v564
    %v2457 = vunpack.c.l.b16 %v565
    %v2458 = vunpack.c.h.b16 %v565
    %v2459 = vunpack.c.l.b16 %v566
    %v2460 = vunpack.c.h.b16 %v566
    %v2461 = vunpack.c.l.b16 %v567
    %v2462 = vunpack.c.h.b16 %v567
    %v2463 = vunpack.c.l.b16 %v568
    %v2464 = vunpack.c.h.b16 %v568
    %v2465 = vunpack.c.l.b16 %v569
    %v2466 = vunpack.c.h.b16 %v569
    %v2467 = vunpack.c.l.b16 %v570
    %v2468 = vunpack.c.h.b16 %v570
    %v2469 = vunpack.c.l.b16 %v571
    %v2470 = vunpack.c.h.b16 %v571
    %v2471 = vunpack.c.l.b16 %v572
    %v2472 = vunpack.c.h.b16 %v572
    %v2473 = vunpack.c.l.b16 %v573
    %v2474 = vunpack.c.h.b16 %v573
    %v2475 = vunpack.c.l.b16 %v574
    %v2476 = vunpack.c.h.b16 %v574
    %v2477 = vunpack.c.l.b16 %v575
    %v2478 = vunpack.c.h.b16 %v575
    %v2479 = vunpack.c.l.b16 %v576
    %v2480 = vunpack.c.h.b16 %v576
    %v2481 = vunpack.c.l.b16 %v577
    %v2482 = vunpack.c.h.b16 %v577
    %v2483 = vunpack.c.l.b16 %v578
    %v2484 = vunpack.c.h.b16 %v578
    %v2485 = vunpack.c.l.b16 %v579
    %v2486 = vunpack.c.h.b16 %v579
    %v2487 = vunpack.c.l.b16 %v580
    %v2488 = vunpack.c.h.b16 %v580
    %v2489 = vunpack.c.l.b16 %v581
    %v2490 = vunpack.c.h.b16 %v581
    %v2491 = vunpack.c.l.b16 %v582
    %v2492 = vunpack.c.h.b16 %v582
    %v2493 = vunpack.c.l.b16 %v583
    %v2494 = vunpack.c.h.b16 %v583
    %v2495 = vunpack.c.l.b16 %v584
    %v2496 = vunpack.c.h.b16 %v584
    %v2497 = vunpack.c.l.b16 %v585
    %v2498 = vunpack.c.h.b16 %v585
    %v2499 = vunpack.c.l.b16 %v586
    %v2500 = vunpack.c.h.b16 %v586
    %v2501 = vunpack.c.l.b16 %v587
    %v2502 = vunpack.c.h.b16 %v587
    %v2503 = vunpack.c.l.b16 %v588
    %v2504 = vunpack.c.h.b16 %v588
    %v2505 = vunpack.c.l.b16 %v589
    %v2506 = vunpack.c.h.b16 %v589
    %v2507 = vunpack.c.l.b16 %v590
    %v2508 = vunpack.c.h.b16 %v590
    %v2509 = vunpack.c.l.b16 %v591
    %v2510 = vunpack.c.h.b16 %v591
    %v2511 = vunpack.c.l.b16 %v592
    %v2512 = vunpack.c.h.b16 %v592
    %v2513 = vunpack.c.l.b16 %v593
    %v2514 = vunpack.c.h.b16 %v593
    %v2515 = vunpack.c.l.b16 %v594
    %v2516 = vunpack.c.h.b16 %v594
    %v2517 = vunpack.c.l.b16 %v595
    %v2518 = vunpack.c.h.b16 %v595
    %v2519 = vunpack.c.l.b16 %v596
    %v2520 = vunpack.c.h.b16 %v596
    %v2521 = vunpack.c.l.b16 %v597
    %v2522 = vunpack.c.h.b16 %v597
    %v2523 = vunpack.c.l.b16 %v598
    %v2524 = vunpack.c.h.b16 %v598
    %v2525 = vunpack.c.l.b16 %v599
    %v2526 = vunpack.c.h.b16 %v599
    %v2527 = vunpack.c.l.b16 %v600
    %v2528 = vunpack.c.h.b16 %v600
    %v2529 = vunpack.c.l.b16 %v601
    %v2530 = vunpack.c.h.b16 %v601
    %v2531 = vunpack.c.l.b16 %v602
    %v2532 = vunpack.c.h.b16 %v602
    %v2533 = vunpack.c.l.b16 %v603
    %v2534 = vunpack.c.h.b16 %v603
    %v2535 = vunpack.c.l.b16 %v604
    %v2536 = vunpack.c.h.b16 %v604
    %v2537 = vunpack.c.l.b16 %v605
    %v2538 = vunpack.c.h.b16 %v605
    %v2539 = vunpack.c.l.b16 %v606
    %v2540 = vunpack.c.h.b16 %v606
    %v2541 = vunpack.c.l.b16 %v607
    %v2542 = vunpack.c.h.b16 %v607
    %v2543 = vunpack.c.l.b16 %v608
    %v2544 = vunpack.c.h.b16 %v608
    %v2545 = vunpack.c.l.b16 %v609
    %v2546 = vunpack.c.h.b16 %v609
    %v2547 = vunpack.c.l.b16 %v610
    %v2548 = vunpack.c.h.b16 %v610
    %v2549 = vunpack.c.l.b16 %v611
    %v2550 = vunpack.c.h.b16 %v611
    %v2551 = vunpack.c.l.b16 %v612
    %v2552 = vunpack.c.h.b16 %v612
    %v2553 = vunpack.c.l.b16 %v613
    %v2554 = vunpack.c.h.b16 %v613
    %v2555 = vunpack.c.l.b16 %v614
    %v2556 = vunpack.c.h.b16 %v614
    %v2557 = vunpack.c.l.b16 %v615
    %v2558 = vunpack.c.h.b16 %v615
    %v2559 = vunpack.c.l.b16 %v616
    %v2560 = vunpack.c.h.b16 %v616
    %v2561 = vunpack.c.l.b16 %v617
    %v2562 = vunpack.c.h.b16 %v617
    %v2563 = vunpack.c.l.b16 %v618
    %v2564 = vunpack.c.h.b16 %v618
    %v2565 = vunpack.c.l.b16 %v619
    %v2566 = vunpack.c.h.b16 %v619
    %v2567 = vunpack.c.l.b16 %v620
    %v2568 = vunpack.c.h.b16 %v620
    %v2569 = vunpack.c.l.b16 %v621
    %v2570 = vunpack.c.h.b16 %v621
    %v2571 = vunpack.c.l.b16 %v622
    %v2572 = vunpack.c.h.b16 %v622
    %v2573 = vunpack.c.l.b16 %v623
    %v2574 = vunpack.c.h.b16 %v623
    %v2575 = vunpack.c.l.b16 %v624
    %v2576 = vunpack.c.h.b16 %v624
    %v2577 = vunpack.c.l.b16 %v625
    %v2578 = vunpack.c.h.b16 %v625
    %v2579 = vunpack.c.l.b16 %v626
    %v2580 = vunpack.c.h.b16 %v626
    %v2581 = vunpack.c.l.b16 %v627
    %v2582 = vunpack.c.h.b16 %v627
    %v2583 = vunpack.c.l.b16 %v628
    %v2584 = vunpack.c.h.b16 %v628
    %v2585 = vunpack.c.l.b16 %v629
    %v2586 = vunpack.c.h.b16 %v629
    %v2587 = vunpack.c.l.b16 %v630
    %v2588 = vunpack.c.h.b16 %v630
    %v2589 = vunpack.c.l.b16 %v631
    %v2590 = vunpack.c.h.b16 %v631
    %v2591 = vunpack.c.l.b16 %v632
    %v2592 = vunpack.c.h.b16 %v632
    %v2593 = vunpack.c.l.b16 %v633
    %v2594 = vunpack.c.h.b16 %v633
    %v2595 = vunpack.c.l.b16 %v634
    %v2596 = vunpack.c.h.b16 %v634
    %v2597 = vunpack.c.l.b16 %v635
    %v2598 = vunpack.c.h.b16 %v635
    %v2599 = vunpack.c.l.b16 %v636
    %v2600 = vunpack.c.h.b16 %v636
    %v2601 = vunpack.c.l.b16 %v637
    %v2602 = vunpack.c.h.b16 %v637
    %v2603 = vunpack.c.l.b16 %v638
    %v2604 = vunpack.c.h.b16 %v638
    %v2605 = vunpack.c.l.b16 %v639
    %v2606 = vunpack.c.h.b16 %v639
    %v2607 = vunpack.c.l.b16 %v640
    %v2608 = vunpack.c.h.b16 %v640
    %v2609 = vunpack.c.l.b16 %v641
    %v2610 = vunpack.c.h.b16 %v641
    %v2611 = vunpack.c.l.b16 %v642
    %v2612 = vunpack.c.h.b16 %v642
    %v2613 = vunpack.c.l.b16 %v643
    %v2614 = vunpack.c.h.b16 %v643
    %v2615 = vunpack.c.l.b16 %v644
    %v2616 = vunpack.c.h.b16 %v644
    %v2617 = vunpack.c.l.b16 %v645
    %v2618 = vunpack.c.h.b16 %v645
    %v2619 = vunpack.c.l.b16 %v646
    %v2620 = vunpack.c.h.b16 %v646
    %v2621 = vunpack.c.l.b16 %v647
    %v2622 = vunpack.c.h.b16 %v647
    %v2623 = vunpack.c.l.b16 %v648
    %v2624 = vunpack.c.h.b16 %v648
    %v2625 = vunpack.c.l.b16 %v649
    %v2626 = vunpack.c.h.b16 %v649
    %v2627 = vunpack.c.l.b16 %v650
    %v2628 = vunpack.c.h.b16 %v650
    %v2629 = vunpack.c.l.b16 %v651
    %v2630 = vunpack.c.h.b16 %v651
    %v2631 = vunpack.c.l.b16 %v652
    %v2632 = vunpack.c.h.b16 %v652
    %v2633 = vunpack.c.l.b16 %v653
    %v2634 = vunpack.c.h.b16 %v653
    %v2635 = vunpack.c.l.b16 %v654
    %v2636 = vunpack.c.h.b16 %v654
    %v2637 = vunpack.c.l.b16 %v655
    %v2638 = vunpack.c.h.b16 %v655
    %v2639 = vunpack.c.l.b16 %v656
    %v2640 = vunpack.c.h.b16 %v656
    %v2641 = vunpack.c.l.b16 %v657
    %v2642 = vunpack.c.h.b16 %v657
    %v2643 = vunpack.c.l.b16 %v658
    %v2644 = vunpack.c.h.b16 %v658
    %v2645 = vunpack.c.l.b16 %v659
    %v2646 = vunpack.c.h.b16 %v659
    %v2647 = vunpack.c.l.b16 %v660
    %v2648 = vunpack.c.h.b16 %v660
    %v2649 = vunpack.c.l.b16 %v661
    %v2650 = vunpack.c.h.b16 %v661
    %v2651 = vunpack.c.l.b16 %v662
    %v2652 = vunpack.c.h.b16 %v662
    %v2653 = vunpack.c.l.b16 %v663
    %v2654 = vunpack.c.h.b16 %v663
    %v2655 = vunpack.c.l.b16 %v664
    %v2656 = vunpack.c.h.b16 %v664
    %v2657 = vunpack.c.l.b16 %v665
    %v2658 = vunpack.c.h.b16 %v665
    %v2659 = vunpack.c.l.b16 %v666
    %v2660 = vunpack.c.h.b16 %v666
    %v2661 = vunpack.c.l.b16 %v667
    %v2662 = vunpack.c.h.b16 %v667
    %v2663 = vunpack.c.l.b16 %v668
    %v2664 = vunpack.c.h.b16 %v668
    %v2665 = vunpack.c.l.b16 %v669
    %v2666 = vunpack.c.h.b16 %v669
    %v2667 = vunpack.c.l.b16 %v670
    %v2668 = vunpack.c.h.b16 %v670
    %v2669 = vunpack.c.l.b16 %v671
    %v2670 = vunpack.c.h.b16 %v671
    %v2671 = vunpack.c.l.b16 %v672
    %v2672 = vunpack.c.h.b16 %v672
    %v2673 = vunpack.c.l.b16 %v673
    %v2674 = vunpack.c.h.b16 %v673
    %v2675 = vunpack.c.l.b16 %v674
    %v2676 = vunpack.c.h.b16 %v674
    %v2677 = vunpack.c.l.b16 %v675
    %v2678 = vunpack.c.h.b16 %v675
    %v2679 = vunpack.c.l.b16 %v676
    %v2680 = vunpack.c.h.b16 %v676
    %v2681 = vunpack.c.l.b16 %v677
    %v2682 = vunpack.c.h.b16 %v677
    %v2683 = vunpack.c.l.b16 %v678
    %v2684 = vunpack.c.h.b16 %v678
    %v2685 = vunpack.c.l.b16 %v679
    %v2686 = vunpack.c.h.b16 %v679
    %v2687 = vunpack.c.l.b16 %v680
    %v2688 = vunpack.c.h.b16 %v680
    %v2689 = vunpack.c.l.b16 %v681
    %v2690 = vunpack.c.h.b16 %v681
    %v2691 = vunpack.c.l.b16 %v682
    %v2692 = vunpack.c.h.b16 %v682
    %v2693 = vunpack.c.l.b16 %v683
    %v2694 = vunpack.c.h.b16 %v683
    %v2695 = vunpack.c.l.b16 %v684
    %v2696 = vunpack.c.h.b16 %v684
    %v2697 = vunpack.c.l.b16 %v685
    %v2698 = vunpack.c.h.b16 %v685
    %v2699 = vunpack.c.l.b16 %v686
    %v2700 = vunpack.c.h.b16 %v686
    %v2701 = vunpack.c.l.b16 %v687
    %v2702 = vunpack.c.h.b16 %v687
    %v2703 = vunpack.c.l.b16 %v688
    %v2704 = vunpack.c.h.b16 %v688
    %v2705 = vunpack.c.l.b16 %v689
    %v2706 = vunpack.c.h.b16 %v689
    %v2707 = vunpack.c.l.b16 %v690
    %v2708 = vunpack.c.h.b16 %v690
    %v2709 = vunpack.c.l.b16 %v691
    %v2710 = vunpack.c.h.b16 %v691
    %v2711 = vunpack.c.l.b16 %v692
    %v2712 = vunpack.c.h.b16 %v692
    %v2713 = vunpack.c.l.b16 %v693
    %v2714 = vunpack.c.h.b16 %v693
    %v2715 = vunpack.c.l.b16 %v694
    %v2716 = vunpack.c.h.b16 %v694
    %v2717 = vunpack.c.l.b16 %v695
    %v2718 = vunpack.c.h.b16 %v695
    %v2719 = vunpack.c.l.b16 %v696
    %v2720 = vunpack.c.h.b16 %v696
    %v2721 = vunpack.c.l.b16 %v697
    %v2722 = vunpack.c.h.b16 %v697
    %v2723 = vunpack.c.l.b16 %v698
    %v2724 = vunpack.c.h.b16 %v698
    %v2725 = vunpack.c.l.b16 %v699
    %v2726 = vunpack.c.h.b16 %v699
    %v2727 = vunpack.c.l.b16 %v700
    %v2728 = vunpack.c.h.b16 %v700
    %v2729 = vunpack.c.l.b16 %v701
    %v2730 = vunpack.c.h.b16 %v701
    %v2731 = vunpack.c.l.b16 %v702
    %v2732 = vunpack.c.h.b16 %v702
    %v2733 = vunpack.c.l.b16 %v703
    %v2734 = vunpack.c.h.b16 %v703
    %v2735 = vunpack.c.l.b16 %v704
    %v2736 = vunpack.c.h.b16 %v704
    %v2737 = vunpack.c.l.b16 %v705
    %v2738 = vunpack.c.h.b16 %v705
    %v2739 = vunpack.c.l.b16 %v706
    %v2740 = vunpack.c.h.b16 %v706
    %v2741 = vunpack.c.l.b16 %v707
    %v2742 = vunpack.c.h.b16 %v707
    %v2743 = vunpack.c.l.b16 %v708
    %v2744 = vunpack.c.h.b16 %v708
    %v2745 = vunpack.c.l.b16 %v709
    %v2746 = vunpack.c.h.b16 %v709
    %v2747 = vunpack.c.l.b16 %v710
    %v2748 = vunpack.c.h.b16 %v710
    %v2749 = vunpack.c.l.b16 %v711
    %v2750 = vunpack.c.h.b16 %v711
    %v2751 = vunpack.c.l.b16 %v712
    %v2752 = vunpack.c.h.b16 %v712
    %v2753 = vunpack.c.l.b16 %v713
    %v2754 = vunpack.c.h.b16 %v713
    %v2755 = vunpack.c.l.b16 %v714
    %v2756 = vunpack.c.h.b16 %v714
    %v2757 = vunpack.c.l.b16 %v715
    %v2758 = vunpack.c.h.b16 %v715
    %v2759 = vunpack.c.l.b16 %v716
    %v2760 = vunpack.c.h.b16 %v716
    %v2761 = vunpack.c.l.b16 %v717
    %v2762 = vunpack.c.h.b16 %v717
    %v2763 = vunpack.c.l.b16 %v718
    %v2764 = vunpack.c.h.b16 %v718
    %v2765 = vunpack.c.l.b16 %v719
    %v2766 = vunpack.c.h.b16 %v719
    %v2767 = vunpack.c.l.b16 %v720
    %v2768 = vunpack.c.h.b16 %v720
    %v2769 = vunpack.c.l.b16 %v721
    %v2770 = vunpack.c.h.b16 %v721
    %v2771 = vunpack.c.l.b16 %v722
    %v2772 = vunpack.c.h.b16 %v722
    %v2773 = vunpack.c.l.b16 %v723
    %v2774 = vunpack.c.h.b16 %v723
    %v2775 = vunpack.c.l.b16 %v724
    %v2776 = vunpack.c.h.b16 %v724
    %v2777 = vunpack.c.l.b16 %v725
    %v2778 = vunpack.c.h.b16 %v725
    %v2779 = vunpack.c.l.b16 %v726
    %v2780 = vunpack.c.h.b16 %v726
    %v2781 = vunpack.c.l.b16 %v727
    %v2782 = vunpack.c.h.b16 %v727
    %v2783 = vunpack.c.l.b16 %v728
    %v2784 = vunpack.c.h.b16 %v728
    %v2785 = vunpack.c.l.b16 %v729
    %v2786 = vunpack.c.h.b16 %v729
    %v2787 = vunpack.c.l.b16 %v730
    %v2788 = vunpack.c.h.b16 %v730
    %v2789 = vunpack.c.l.b16 %v731
    %v2790 = vunpack.c.h.b16 %v731
    %v2791 = vunpack.c.l.b16 %v732
    %v2792 = vunpack.c.h.b16 %v732
    %v2793 = vunpack.c.l.b16 %v733
    %v2794 = vunpack.c.h.b16 %v733
    %v2795 = vunpack.c.l.b16 %v734
    %v2796 = vunpack.c.h.b16 %v734
    %v2797 = vunpack.c.l.b16 %v735
    %v2798 = vunpack.c.h.b16 %v735
    %v2799 = vunpack.c.l.b16 %v736
    %v2800 = vunpack.c.h.b16 %v736
    %v2801 = vunpack.c.l.b16 %v737
    %v2802 = vunpack.c.h.b16 %v737
    %v2803 = vunpack.c.l.b16 %v738
    %v2804 = vunpack.c.h.b16 %v738
    %v2805 = vunpack.c.l.b16 %v739
    %v2806 = vunpack.c.h.b16 %v739
    %v2807 = vunpack.c.l.b16 %v740
    %v2808 = vunpack.c.h.b16 %v740
    %v2809 = vunpack.c.l.b16 %v741
    %v2810 = vunpack.c.h.b16 %v741
    %v2811 = vunpack.c.l.b16 %v742
    %v2812 = vunpack.c.h.b16 %v742
    %v2813 = vunpack.c.l.b16 %v743
    %v2814 = vunpack.c.h.b16 %v743
    %v2815 = vunpack.c.l.b16 %v744
    %v2816 = vunpack.c.h.b16 %v744
    %v2817 = vunpack.c.l.b16 %v745
    %v2818 = vunpack.c.h.b16 %v745
    %v2819 = vunpack.c.l.b16 %v746
    %v2820 = vunpack.c.h.b16 %v746
    %v2821 = vunpack.c.l.b16 %v747
    %v2822 = vunpack.c.h.b16 %v747
    %v2823 = vunpack.c.l.b16 %v748
    %v2824 = vunpack.c.h.b16 %v748
    %v2825 = vunpack.c.l.b16 %v749
    %v2826 = vunpack.c.h.b16 %v749
    %v2827 = vunpack.c.l.b16 %v750
    %v2828 = vunpack.c.h.b16 %v750
    %v2829 = vunpack.c.l.b16 %v751
    %v2830 = vunpack.c.h.b16 %v751
    %v2831 = vunpack.c.l.b16 %v752
    %v2832 = vunpack.c.h.b16 %v752
    %v2833 = vunpack.c.l.b16 %v753
    %v2834 = vunpack.c.h.b16 %v753
    %v2835 = vunpack.c.l.b16 %v754
    %v2836 = vunpack.c.h.b16 %v754
    %v2837 = vunpack.c.l.b16 %v755
    %v2838 = vunpack.c.h.b16 %v755
    %v2839 = vunpack.c.l.b16 %v756
    %v2840 = vunpack.c.h.b16 %v756
    %v2841 = vunpack.c.l.b16 %v757
    %v2842 = vunpack.c.h.b16 %v757
    %v2843 = vunpack.c.l.b16 %v758
    %v2844 = vunpack.c.h.b16 %v758
    %v2845 = vunpack.c.l.b16 %v759
    %v2846 = vunpack.c.h.b16 %v759
    %v2847 = vunpack.c.l.b16 %v760
    %v2848 = vunpack.c.h.b16 %v760
    %v2849 = vunpack.c.l.b16 %v761
    %v2850 = vunpack.c.h.b16 %v761
    %v2851 = vunpack.c.l.b16 %v762
    %v2852 = vunpack.c.h.b16 %v762
    %v2853 = vunpack.c.l.b16 %v763
    %v2854 = vunpack.c.h.b16 %v763
    %v2855 = vunpack.c.l.b16 %v764
    %v2856 = vunpack.c.h.b16 %v764
    %v2857 = vunpack.c.l.b16 %v765
    %v2858 = vunpack.c.h.b16 %v765
    %v2859 = vunpack.c.l.b16 %v766
    %v2860 = vunpack.c.h.b16 %v766
    %v2861 = vunpack.c.l.b16 %v767
    %v2862 = vunpack.c.h.b16 %v767
    %v2863 = vunpack.c.l.b16 %v768
    %v2864 = vunpack.c.h.b16 %v768
    %v2865 = vunpack.c.l.b16 %v769
    %v2866 = vunpack.c.h.b16 %v769
    %v2867 = vunpack.c.l.b16 %v770
    %v2868 = vunpack.c.h.b16 %v770
    %v2869 = vunpack.c.l.b16 %v771
    %v2870 = vunpack.c.h.b16 %v771
    %v2871 = vunpack.c.l.b16 %v772
    %v2872 = vunpack.c.h.b16 %v772
    %v2873 = vunpack.c.l.b16 %v773
    %v2874 = vunpack.c.h.b16 %v773
    %v2875 = vunpack.c.l.b16 %v774
    %v2876 = vunpack.c.h.b16 %v774
    %v2877 = vunpack.c.l.b16 %v775
    %v2878 = vunpack.c.h.b16 %v775
    %v2879 = vunpack.c.l.b16 %v776
    %v2880 = vunpack.c.h.b16 %v776
    %v2881 = vunpack.c.l.b16 %v777
    %v2882 = vunpack.c.h.b16 %v777
    %v2883 = vunpack.c.l.b16 %v778
    %v2884 = vunpack.c.h.b16 %v778
    %v2885 = vunpack.c.l.b16 %v779
    %v2886 = vunpack.c.h.b16 %v779
    %v2887 = vunpack.c.l.b16 %v780
    %v2888 = vunpack.c.h.b16 %v780
    %v2889 = vunpack.c.l.b16 %v781
    %v2890 = vunpack.c.h.b16 %v781
    %v2891 = vunpack.c.l.b16 %v782
    %v2892 = vunpack.c.h.b16 %v782
    %v2893 = vunpack.c.l.b16 %v783
    %v2894 = vunpack.c.h.b16 %v783
    %v2895 = vunpack.c.l.b16 %v784
    %v2896 = vunpack.c.h.b16 %v784
    %v2897 = vunpack.c.l.b16 %v785
    %v2898 = vunpack.c.h.b16 %v785
    %v2899 = vunpack.c.l.b16 %v786
    %v2900 = vunpack.c.h.b16 %v786
    %v2901 = vunpack.c.l.b16 %v787
    %v2902 = vunpack.c.h.b16 %v787
    %v2903 = vunpack.c.l.b16 %v788
    %v2904 = vunpack.c.h.b16 %v788
    %v2905 = vunpack.c.l.b16 %v789
    %v2906 = vunpack.c.h.b16 %v789
    %v2907 = vunpack.c.l.b16 %v790
    %v2908 = vunpack.c.h.b16 %v790
    %v2909 = vunpack.c.l.b16 %v791
    %v2910 = vunpack.c.h.b16 %v791
    %v2911 = vunpack.c.l.b16 %v792
    %v2912 = vunpack.c.h.b16 %v792
    %v2913 = vunpack.c.l.b16 %v793
    %v2914 = vunpack.c.h.b16 %v793
    %v2915 = vunpack.c.l.b16 %v794
    %v2916 = vunpack.c.h.b16 %v794
    %v2917 = vunpack.c.l.b16 %v795
    %v2918 = vunpack.c.h.b16 %v795
    %v2919 = vunpack.c.l.b16 %v796
    %v2920 = vunpack.c.h.b16 %v796
    %v2921 = vunpack.c.l.b16 %v797
    %v2922 = vunpack.c.h.b16 %v797
    %v2923 = vunpack.c.l.b16 %v798
    %v2924 = vunpack.c.h.b16 %v798
    %v2925 = vunpack.c.l.b16 %v799
    %v2926 = vunpack.c.h.b16 %v799
    %v2927 = vunpack.c.l.b16 %v800
    %v2928 = vunpack.c.h.b16 %v800
    %v2929 = vunpack.c.l.b16 %v801
    %v2930 = vunpack.c.h.b16 %v801
    %v2931 = vunpack.c.l.b16 %v802
    %v2932 = vunpack.c.h.b16 %v802
    %v2933 = vunpack.c.l.b16 %v803
    %v2934 = vunpack.c.h.b16 %v803
    %v2935 = vunpack.c.l.b16 %v804
    %v2936 = vunpack.c.h.b16 %v804
    %v2937 = vunpack.c.l.b16 %v805
    %v2938 = vunpack.c.h.b16 %v805
    %v2939 = vunpack.c.l.b16 %v806
    %v2940 = vunpack.c.h.b16 %v806
    %v2941 = vunpack.c.l.b16 %v807
    %v2942 = vunpack.c.h.b16 %v807
    %v2943 = vunpack.c.l.b16 %v808
    %v2944 = vunpack.c.h.b16 %v808
    %v2945 = vunpack.c.l.b16 %v809
    %v2946 = vunpack.c.h.b16 %v809
    %v2947 = vunpack.c.l.b16 %v810
    %v2948 = vunpack.c.h.b16 %v810
    %v2949 = vunpack.c.l.b16 %v811
    %v2950 = vunpack.c.h.b16 %v811
    %v2951 = vunpack.c.l.b16 %v812
    %v2952 = vunpack.c.h.b16 %v812
    %v2953 = vunpack.c.l.b16 %v813
    %v2954 = vunpack.c.h.b16 %v813
    %v2955 = vunpack.c.l.b16 %v814
    %v2956 = vunpack.c.h.b16 %v814
    %v2957 = vunpack.c.l.b16 %v815
    %v2958 = vunpack.c.h.b16 %v815
    %v2959 = vunpack.c.l.b16 %v816
    %v2960 = vunpack.c.h.b16 %v816
    %v2961 = vunpack.c.l.b16 %v817
    %v2962 = vunpack.c.h.b16 %v817
    %v2963 = vunpack.c.l.b16 %v818
    %v2964 = vunpack.c.h.b16 %v818
    %v2965 = vunpack.c.l.b16 %v819
    %v2966 = vunpack.c.h.b16 %v819
    %v2967 = vunpack.c.l.b16 %v820
    %v2968 = vunpack.c.h.b16 %v820
    %v2969 = vunpack.c.l.b16 %v821
    %v2970 = vunpack.c.h.b16 %v821
    %v2971 = vunpack.c.l.b16 %v822
    %v2972 = vunpack.c.h.b16 %v822
    %v2973 = vunpack.c.l.b16 %v823
    %v2974 = vunpack.c.h.b16 %v823
    %v2975 = vunpack.c.l.b16 %v824
    %v2976 = vunpack.c.h.b16 %v824
    %v2977 = vunpack.c.l.b16 %v825
    %v2978 = vunpack.c.h.b16 %v825
    %v2979 = vunpack.c.l.b16 %v826
    %v2980 = vunpack.c.h.b16 %v826
    %v2981 = vunpack.c.l.b16 %v827
    %v2982 = vunpack.c.h.b16 %v827
    %v2983 = vunpack.c.l.b16 %v828
    %v2984 = vunpack.c.h.b16 %v828
    %v2985 = vunpack.c.l.b16 %v829
    %v2986 = vunpack.c.h.b16 %v829
    %v2987 = vunpack.c.l.b16 %v830
    %v2988 = vunpack.c.h.b16 %v830
    %v2989 = vunpack.c.l.b16 %v831
    %v2990 = vunpack.c.h.b16 %v831
    %v2991 = vunpack.c.l.b16 %v832
    %v2992 = vunpack.c.h.b16 %v832
    %v2993 = vunpack.c.l.b16 %v833
    %v2994 = vunpack.c.h.b16 %v833
    %v2995 = vunpack.c.l.b16 %v834
    %v2996 = vunpack.c.h.b16 %v834
    %v2997 = vunpack.c.l.b16 %v835
    %v2998 = vunpack.c.h.b16 %v835
    %v2999 = vunpack.c.l.b16 %v836
    %v3000 = vunpack.c.h.b16 %v836
    %v3001 = vunpack.c.l.b16 %v837
    %v3002 = vunpack.c.h.b16 %v837
    %v3003 = vunpack.c.l.b16 %v838
    %v3004 = vunpack.c.h.b16 %v838
    %v3005 = vunpack.c.l.b16 %v839
    %v3006 = vunpack.c.h.b16 %v839
    %v3007 = vunpack.c.l.b16 %v840
    %v3008 = vunpack.c.h.b16 %v840
    %v3009 = vunpack.c.l.b16 %v841
    %v3010 = vunpack.c.h.b16 %v841
    %v3011 = vunpack.c.l.b16 %v842
    %v3012 = vunpack.c.h.b16 %v842
    %v3013 = vunpack.c.l.b16 %v843
    %v3014 = vunpack.c.h.b16 %v843
    %v3015 = vunpack.c.l.b16 %v844
    %v3016 = vunpack.c.h.b16 %v844
    %v3017 = vunpack.c.l.b16 %v845
    %v3018 = vunpack.c.h.b16 %v845
    %v3019 = vunpack.c.l.b16 %v846
    %v3020 = vunpack.c.h.b16 %v846
    %v3021 = vunpack.c.l.b16 %v847
    %v3022 = vunpack.c.h.b16 %v847
    %v3023 = vunpack.c.l.b16 %v848
    %v3024 = vunpack.c.h.b16 %v848
    %v3025 = vunpack.c.l.b16 %v849
    %v3026 = vunpack.c.h.b16 %v849
    %v3027 = vunpack.c.l.b16 %v850
    %v3028 = vunpack.c.h.b16 %v850
    %v3029 = vunpack.c.l.b16 %v851
    %v3030 = vunpack.c.h.b16 %v851
    %v3031 = vunpack.c.l.b16 %v852
    %v3032 = vunpack.c.h.b16 %v852
    %v3033 = vunpack.c.l.b16 %v853
    %v3034 = vunpack.c.h.b16 %v853
    %v3035 = vunpack.c.l.b16 %v854
    %v3036 = vunpack.c.h.b16 %v854
    %v3037 = vunpack.c.l.b16 %v855
    %v3038 = vunpack.c.h.b16 %v855
    %v3039 = vunpack.c.l.b16 %v856
    %v3040 = vunpack.c.h.b16 %v856
    %v3041 = vunpack.c.l.b16 %v857
    %v3042 = vunpack.c.h.b16 %v857
    %v3043 = vunpack.c.l.b16 %v858
    %v3044 = vunpack.c.h.b16 %v858
    %v3045 = vunpack.c.l.b16 %v859
    %v3046 = vunpack.c.h.b16 %v859
    %v3047 = vunpack.c.l.b16 %v860
    %v3048 = vunpack.c.h.b16 %v860
    %v3049 = vunpack.c.l.b16 %v861
    %v3050 = vunpack.c.h.b16 %v861
    %v3051 = vunpack.c.l.b16 %v862
    %v3052 = vunpack.c.h.b16 %v862
    %v3053 = vunpack.c.l.b16 %v863
    %v3054 = vunpack.c.h.b16 %v863
    %v3055 = vunpack.c.l.b16 %v864
    %v3056 = vunpack.c.h.b16 %v864
    %v3057 = vunpack.c.l.b16 %v865
    %v3058 = vunpack.c.h.b16 %v865
    %v3059 = vunpack.c.l.b16 %v866
    %v3060 = vunpack.c.h.b16 %v866
    %v3061 = vunpack.c.l.b16 %v867
    %v3062 = vunpack.c.h.b16 %v867
    %v3063 = vunpack.c.l.b16 %v868
    %v3064 = vunpack.c.h.b16 %v868
    %v3065 = vunpack.c.l.b16 %v869
    %v3066 = vunpack.c.h.b16 %v869
    %v3067 = vunpack.c.l.b16 %v870
    %v3068 = vunpack.c.h.b16 %v870
    %v3069 = vpack.c.b16 %v1673, %v1669
    %v3070 = vpack.c.b16 %v1674, %v1670
    %v3071 = vpack.c.b16 %v1675, %v1671
    %v3072 = vpack.c.b16 %v1676, %v1672
    %v3073 = vpack.c.b16 %v1681, %v1677
    %v3074 = vpack.c.b16 %v1682, %v1678
    %v3075 = vpack.c.b16 %v1683, %v1679
    %v3076 = vpack.c.b16 %v1684, %v1680
    %v3077 = vpack.c.b16 %v1689, %v1685
    %v3078 = vpack.c.b16 %v1690, %v1686
    %v3079 = vpack.c.b16 %v1691, %v1687
    %v3080 = vpack.c.b16 %v1692, %v1688
    %v3081 = vpack.c.b16 %v1697, %v1693
    %v3082 = vpack.c.b16 %v1698, %v1694
    %v3083 = vpack.c.b16 %v1699, %v1695
    %v3084 = vpack.c.b16 %v1700, %v1696
    %v3085 = vpack.c.b16 %v1705, %v1701
    %v3086 = vpack.c.b16 %v1706, %v1702
    %v3087 = vpack.c.b16 %v1707, %v1703
    %v3088 = vpack.c.b16 %v1708, %v1704
    %v3089 = vpack.c.b16 %v1713, %v1709
    %v3090 = vpack.c.b16 %v1714, %v1710
    %v3091 = vpack.c.b16 %v1715, %v1711
    %v3092 = vpack.c.b16 %v1716, %v1712
    %v3093 = vpack.c.b16 %v1721, %v1717
    %v3094 = vpack.c.b16 %v1722, %v1718
    %v3095 = vpack.c.b16 %v1723, %v1719
    %v3096 = vpack.c.b16 %v1724, %v1720
    %v3097 = vpack.c.b16 %v1729, %v1725
    %v3098 = vpack.c.b16 %v1730, %v1726
    %v3099 = vpack.c.b16 %v1731, %v1727
    %v3100 = vpack.c.b16 %v1732, %v1728
    %v3101 = vpack.c.b16 %v1737, %v1733
    %v3102 = vpack.c.b16 %v1738, %v1734
    %v3103 = vpack.c.b16 %v1739, %v1735
    %v3104 = vpack.c.b16 %v1740, %v1736
    %v3105 = vpack.c.b16 %v1745, %v1741
    %v3106 = vpack.c.b16 %v1746, %v1742
    %v3107 = vpack.c.b16 %v1747, %v1743
    %v3108 = vpack.c.b16 %v1748, %v1744
    %v3109 = vpack.c.b16 %v1753, %v1749
    %v3110 = vpack.c.b16 %v1754, %v1750
    %v3111 = vpack.c.b16 %v1755, %v1751
    %v3112 = vpack.c.b16 %v1756, %v1752
    %v3113 = vpack.c.b16 %v1761, %v1757
    %v3114 = vpack.c.b16 %v1762, %v1758
    %v3115 = vpack.c.b16 %v1763, %v1759
    %v3116 = vpack.c.b16 %v1764, %v1760
    %v3117 = vpack.c.b16 %v1769, %v1765
    %v3118 = vpack.c.b16 %v1770, %v1766
    %v3119 = vpack.c.b16 %v1771, %v1767
    %v3120 = vpack.c.b16 %v1772, %v1768
    %v3121 = vpack.c.b16 %v1777, %v1773
    %v3122 = vpack.c.b16 %v1778, %v1774
    %v3123 = vpack.c.b16 %v1779, %v1775
    %v3124 = vpack.c.b16 %v1780, %v1776
    %v3125 = vpack.c.b16 %v1785, %v1781
    %v3126 = vpack.c.b16 %v1786, %v1782
    %v3127 = vpack.c.b16 %v1787, %v1783
    %v3128 = vpack.c.b16 %v1788, %v1784
    %v3129 = vpack.c.b16 %v1793, %v1789
    %v3130 = vpack.c.b16 %v1794, %v1790
    %v3131 = vpack.c.b16 %v1795, %v1791
    %v3132 = vpack.c.b16 %v1796, %v1792
    %v3133 = vpack.c.b16 %v1801, %v1797
    %v3134 = vpack.c.b16 %v1802, %v1798
    %v3135 = vpack.c.b16 %v1803, %v1799
    %v3136 = vpack.c.b16 %v1804, %v1800
    %v3137 = vpack.c.b16 %v1809, %v1805
    %v3138 = vpack.c.b16 %v1810, %v1806
    %v3139 = vpack.c.b16 %v1811, %v1807
    %v3140 = vpack.c.b16 %v1812, %v1808
    %v3141 = vpack.c.b16 %v1817, %v1813
    %v3142 = vpack.c.b16 %v1818, %v1814
    %v3143 = vpack.c.b16 %v1819, %v1815
    %v3144 = vpack.c.b16 %v1820, %v1816
    %v3145 = vpack.c.b16 %v1825, %v1821
    %v3146 = vpack.c.b16 %v1826, %v1822
    %v3147 = vpack.c.b16 %v1827, %v1823
    %v3148 = vpack.c.b16 %v1828, %v1824
    %v3149 = vpack.c.b16 %v1833, %v1829
    %v3150 = vpack.c.b16 %v1834, %v1830
    %v3151 = vpack.c.b16 %v1835, %v1831
    %v3152 = vpack.c.b16 %v1836, %v1832
    %v3153 = vpack.c.b16 %v1841, %v1837
    %v3154 = vpack.c.b16 %v1842, %v1838
    %v3155 = vpack.c.b16 %v1843, %v1839
    %v3156 = vpack.c.b16 %v1844, %v1840
    %v3157 = vpack.c.b16 %v1849, %v1845
    %v3158 = vpack.c.b16 %v1850, %v1846
    %v3159 = vpack.c.b16 %v1851, %v1847
    %v3160 = vpack.c.b16 %v1852, %v1848
    %v3161 = vpack.c.b16 %v1857, %v1853
    %v3162 = vpack.c.b16 %v1858, %v1854
    %v3163 = vpack.c.b16 %v1859, %v1855
    %v3164 = vpack.c.b16 %v1860, %v1856
    %v3165 = vpack.c.b16 %v1865, %v1861
    %v3166 = vpack.c.b16 %v1866, %v1862
    %v3167 = vpack.c.b16 %v1867, %v1863
    %v3168 = vpack.c.b16 %v1868, %v1864
    %v3169 = vpack.c.b16 %v1873, %v1869
    %v3170 = vpack.c.b16 %v1874, %v1870
    %v3171 = vpack.c.b16 %v1875, %v1871
    %v3172 = vpack.c.b16 %v1876, %v1872
    %v3173 = vpack.c.b16 %v1881, %v1877
    %v3174 = vpack.c.b16 %v1882, %v1878
    %v3175 = vpack.c.b16 %v1883, %v1879
    %v3176 = vpack.c.b16 %v1884, %v1880
    %v3177 = vpack.c.b16 %v1889, %v1885
    %v3178 = vpack.c.b16 %v1890, %v1886
    %v3179 = vpack.c.b16 %v1891, %v1887
    %v3180 = vpack.c.b16 %v1892, %v1888
    %v3181 = vpack.c.b16 %v1897, %v1893
    %v3182 = vpack.c.b16 %v1898, %v1894
    %v3183 = vpack.c.b16 %v1899, %v1895
    %v3184 = vpack.c.b16 %v1900, %v1896
    %v3185 = vpack.c.b16 %v1905, %v1901
    %v3186 = vpack.c.b16 %v1906, %v1902
    %v3187 = vpack.c.b16 %v1907, %v1903
    %v3188 = vpack.c.b16 %v1908, %v1904
    %v3189 = vpack.c.b16 %v1913, %v1909
    %v3190 = vpack.c.b16 %v1914, %v1910
    %v3191 = vpack.c.b16 %v1915, %v1911
    %v3192 = vpack.c.b16 %v1916, %v1912
    %v3193 = vpack.c.b16 %v1921, %v1917
    %v3194 = vpack.c.b16 %v1922, %v1918
    %v3195 = vpack.c.b16 %v1923, %v1919
    %v3196 = vpack.c.b16 %v1924, %v1920
    %v3197 = vpack.c.b16 %v1929, %v1925
    %v3198 = vpack.c.b16 %v1930, %v1926
    %v3199 = vpack.c.b16 %v1931, %v1927
    %v3200 = vpack.c.b16 %v1932, %v1928
    %v3201 = vpack.c.b16 %v1937, %v1933
    %v3202 = vpack.c.b16 %v1938, %v1934
    %v3203 = vpack.c.b16 %v1939, %v1935
    %v3204 = vpack.c.b16 %v1940, %v1936
    %v3205 = vpack.c.b16 %v1945, %v1941
    %v3206 = vpack.c.b16 %v1946, %v1942
    %v3207 = vpack.c.b16 %v1947, %v1943
    %v3208 = vpack.c.b16 %v1948, %v1944
    %v3209 = vpack.c.b16 %v1953, %v1949
    %v3210 = vpack.c.b16 %v1954, %v1950
    %v3211 = vpack.c.b16 %v1955, %v1951
    %v3212 = vpack.c.b16 %v1956, %v1952
    %v3213 = vpack.c.b16 %v1961, %v1957
    %v3214 = vpack.c.b16 %v1962, %v1958
    %v3215 = vpack.c.b16 %v1963, %v1959
    %v3216 = vpack.c.b16 %v1964, %v1960
    %v3217 = vpack.c.b16 %v1969, %v1965
    %v3218 = vpack.c.b16 %v1970, %v1966
    %v3219 = vpack.c.b16 %v1971, %v1967
    %v3220 = vpack.c.b16 %v1972, %v1968
    %v3221 = vpack.c.b16 %v1977, %v1973
    %v3222 = vpack.c.b16 %v1978, %v1974
    %v3223 = vpack.c.b16 %v1979, %v1975
    %v3224 = vpack.c.b16 %v1980, %v1976
    %v3225 = vpack.c.b16 %v1985, %v1981
    %v3226 = vpack.c.b16 %v1986, %v1982
    %v3227 = vpack.c.b16 %v1987, %v1983
    %v3228 = vpack.c.b16 %v1988, %v1984
    %v3229 = vpack.c.b16 %v1993, %v1989
    %v3230 = vpack.c.b16 %v1994, %v1990
    %v3231 = vpack.c.b16 %v1995, %v1991
    %v3232 = vpack.c.b16 %v1996, %v1992
    %v3233 = vpack.c.b16 %v2001, %v1997
    %v3234 = vpack.c.b16 %v2002, %v1998
    %v3235 = vpack.c.b16 %v2003, %v1999
    %v3236 = vpack.c.b16 %v2004, %v2000
    %v3237 = vpack.c.b16 %v2009, %v2005
    %v3238 = vpack.c.b16 %v2010, %v2006
    %v3239 = vpack.c.b16 %v2011, %v2007
    %v3240 = vpack.c.b16 %v2012, %v2008
    %v3241 = vpack.c.b16 %v2017, %v2013
    %v3242 = vpack.c.b16 %v2018, %v2014
    %v3243 = vpack.c.b16 %v2019, %v2015
    %v3244 = vpack.c.b16 %v2020, %v2016
    %v3245 = vpack.c.b16 %v2025, %v2021
    %v3246 = vpack.c.b16 %v2026, %v2022
    %v3247 = vpack.c.b16 %v2027, %v2023
    %v3248 = vpack.c.b16 %v2028, %v2024
    %v3249 = vpack.c.b16 %v2033, %v2029
    %v3250 = vpack.c.b16 %v2034, %v2030
    %v3251 = vpack.c.b16 %v2035, %v2031
    %v3252 = vpack.c.b16 %v2036, %v2032
    %v3253 = vpack.c.b16 %v2041, %v2037
    %v3254 = vpack.c.b16 %v2042, %v2038
    %v3255 = vpack.c.b16 %v2043, %v2039
    %v3256 = vpack.c.b16 %v2044, %v2040
    %v3257 = vpack.c.b16 %v2049, %v2045
    %v3258 = vpack.c.b16 %v2050, %v2046
    %v3259 = vpack.c.b16 %v2051, %v2047
    %v3260 = vpack.c.b16 %v2052, %v2048
    %v3261 = vpack.c.b16 %v2057, %v2053
    %v3262 = vpack.c.b16 %v2058, %v2054
    %v3263 = vpack.c.b16 %v2059, %v2055
    %v3264 = vpack.c.b16 %v2060, %v2056
    %v3265 = vpack.c.b16 %v2065, %v2061
    %v3266 = vpack.c.b16 %v2066, %v2062
    %v3267 = vpack.c.b16 %v2067, %v2063
    %v3268 = vpack.c.b16 %v2068, %v2064
    %v3269 = vpack.c.b16 %v2073, %v2069
    %v3270 = vpack.c.b16 %v2074, %v2070
    %v3271 = vpack.c.b16 %v2075, %v2071
    %v3272 = vpack.c.b16 %v2076, %v2072
    %v3273 = vpack.c.b16 %v2081, %v2077
    %v3274 = vpack.c.b16 %v2082, %v2078
    %v3275 = vpack.c.b16 %v2083, %v2079
    %v3276 = vpack.c.b16 %v2084, %v2080
    %v3277 = vpack.c.b16 %v2089, %v2085
    %v3278 = vpack.c.b16 %v2090, %v2086
    %v3279 = vpack.c.b16 %v2091, %v2087
    %v3280 = vpack.c.b16 %v2092, %v2088
    %v3281 = vpack.c.b16 %v2097, %v2093
    %v3282 = vpack.c.b16 %v2098, %v2094
    %v3283 = vpack.c.b16 %v2099, %v2095
    %v3284 = vpack.c.b16 %v2100, %v2096
    %v3285 = vpack.c.b16 %v2105, %v2101
    %v3286 = vpack.c.b16 %v2106, %v2102
    %v3287 = vpack.c.b16 %v2107, %v2103
    %v3288 = vpack.c.b16 %v2108, %v2104
    %v3289 = vpack.c.b16 %v2113, %v2109
    %v3290 = vpack.c.b16 %v2114, %v2110
    %v3291 = vpack.c.b16 %v2115, %v2111
    %v3292 = vpack.c.b16 %v2116, %v2112
    %v3293 = vpack.c.b16 %v2121, %v2117
    %v3294 = vpack.c.b16 %v2122, %v2118
    %v3295 = vpack.c.b16 %v2123, %v2119
    %v3296 = vpack.c.b16 %v2124, %v2120
    %v3297 = vpack.c.b16 %v2129, %v2125
    %v3298 = vpack.c.b16 %v2130, %v2126
    %v3299 = vpack.c.b16 %v2131, %v2127
    %v3300 = vpack.c.b16 %v2132, %v2128
    %v3301 = vpack.c.b16 %v2137, %v2133
    %v3302 = vpack.c.b16 %v2138, %v2134
    %v3303 = vpack.c.b16 %v2139, %v2135
    %v3304 = vpack.c.b16 %v2140, %v2136
    %v3305 = vpack.c.b16 %v2145, %v2141
    %v3306 = vpack.c.b16 %v2146, %v2142
    %v3307 = vpack.c.b16 %v2147, %v2143
    %v3308 = vpack.c.b16 %v2148, %v2144
    %v3309 = vpack.c.b16 %v2153, %v2149
    %v3310 = vpack.c.b16 %v2154, %v2150
    %v3311 = vpack.c.b16 %v2155, %v2151
    %v3312 = vpack.c.b16 %v2156, %v2152
    %v3313 = vpack.c.b16 %v2161, %v2157
    %v3314 = vpack.c.b16 %v2162, %v2158
    %v3315 = vpack.c.b16 %v2163, %v2159
    %v3316 = vpack.c.b16 %v2164, %v2160
    %v3317 = vpack.c.b16 %v2169, %v2165
    %v3318 = vpack.c.b16 %v2170, %v2166
    %v3319 = vpack.c.b16 %v2171, %v2167
    %v3320 = vpack.c.b16 %v2172, %v2168
    %v3321 = vpack.c.b16 %v2177, %v2173
    %v3322 = vpack.c.b16 %v2178, %v2174
    %v3323 = vpack.c.b16 %v2179, %v2175
    %v3324 = vpack.c.b16 %v2180, %v2176
    %v3325 = vpack.c.b16 %v2185, %v2181
    %v3326 = vpack.c.b16 %v2186, %v2182
    %v3327 = vpack.c.b16 %v2187, %v2183
    %v3328 = vpack.c.b16 %v2188, %v2184
    %v3329 = vpack.c.b16 %v2193, %v2189
    %v3330 = vpack.c.b16 %v2194, %v2190
    %v3331 = vpack.c.b16 %v2195, %v2191
    %v3332 = vpack.c.b16 %v2196, %v2192
    %v3333 = vpack.c.b16 %v2201, %v2197
    %v3334 = vpack.c.b16 %v2202, %v2198
    %v3335 = vpack.c.b16 %v2203, %v2199
    %v3336 = vpack.c.b16 %v2204, %v2200
    %v3337 = vpack.c.b16 %v2209, %v2205
    %v3338 = vpack.c.b16 %v2210, %v2206
    %v3339 = vpack.c.b16 %v2211, %v2207
    %v3340 = vpack.c.b16 %v2212, %v2208
    %v3341 = vpack.c.b16 %v2217, %v2213
    %v3342 = vpack.c.b16 %v2218, %v2214
    %v3343 = vpack.c.b16 %v2219, %v2215
    %v3344 = vpack.c.b16 %v2220, %v2216
    %v3345 = vpack.c.b16 %v2225, %v2221
    %v3346 = vpack.c.b16 %v2226, %v2222
    %v3347 = vpack.c.b16 %v2227, %v2223
    %v3348 = vpack.c.b16 %v2228, %v2224
    %v3349 = vpack.c.b16 %v2233, %v2229
    %v3350 = vpack.c.b16 %v2234, %v2230
    %v3351 = vpack.c.b16 %v2235, %v2231
    %v3352 = vpack.c.b16 %v2236, %v2232
    %v3353 = vpack.c.b16 %v2241, %v2237
    %v3354 = vpack.c.b16 %v2242, %v2238
    %v3355 = vpack.c.b16 %v2243, %v2239
    %v3356 = vpack.c.b16 %v2244, %v2240
    %v3357 = vpack.c.b16 %v2249, %v2245
    %v3358 = vpack.c.b16 %v2250, %v2246
    %v3359 = vpack.c.b16 %v2251, %v2247
    %v3360 = vpack.c.b16 %v2252, %v2248
    %v3361 = vpack.c.b16 %v2257, %v2253
    %v3362 = vpack.c.b16 %v2258, %v2254
    %v3363 = vpack.c.b16 %v2259, %v2255
    %v3364 = vpack.c.b16 %v2260, %v2256
    %v3365 = vpack.c.b16 %v2265, %v2261
    %v3366 = vpack.c.b16 %v2266, %v2262
    %v3367 = vpack.c.b16 %v2267, %v2263
    %v3368 = vpack.c.b16 %v2268, %v2264
    %v3369 = vpack.c.b16 %v2273, %v2269
    %v3370 = vpack.c.b16 %v2274, %v2270
    %v3371 = vpack.c.b16 %v2275, %v2271
    %v3372 = vpack.c.b16 %v2276, %v2272
    %v3373 = vpack.c.b16 %v2281, %v2277
    %v3374 = vpack.c.b16 %v2282, %v2278
    %v3375 = vpack.c.b16 %v2283, %v2279
    %v3376 = vpack.c.b16 %v2284, %v2280
    %v3377 = vpack.c.b16 %v2289, %v2285
    %v3378 = vpack.c.b16 %v2290, %v2286
    %v3379 = vpack.c.b16 %v2291, %v2287
    %v3380 = vpack.c.b16 %v2292, %v2288
    %v3381 = vpack.c.b16 %v2297, %v2293
    %v3382 = vpack.c.b16 %v2298, %v2294
    %v3383 = vpack.c.b16 %v2299, %v2295
    %v3384 = vpack.c.b16 %v2300, %v2296
    %v3385 = vpack.c.b16 %v2305, %v2301
    %v3386 = vpack.c.b16 %v2306, %v2302
    %v3387 = vpack.c.b16 %v2307, %v2303
    %v3388 = vpack.c.b16 %v2308, %v2304
    %v3389 = vpack.c.b16 %v2313, %v2309
    %v3390 = vpack.c.b16 %v2314, %v2310
    %v3391 = vpack.c.b16 %v2315, %v2311
    %v3392 = vpack.c.b16 %v2316, %v2312
    %v3393 = vpack.c.b16 %v2321, %v2317
    %v3394 = vpack.c.b16 %v2322, %v2318
    %v3395 = vpack.c.b16 %v2323, %v2319
    %v3396 = vpack.c.b16 %v2324, %v2320
    %v3397 = vpack.c.b16 %v2329, %v2325
    %v3398 = vpack.c.b16 %v2330, %v2326
    %v3399 = vpack.c.b16 %v2331, %v2327
    %v3400 = vpack.c.b16 %v2332, %v2328
    %v3401 = vpack.c.b16 %v2337, %v2333
    %v3402 = vpack.c.b16 %v2338, %v2334
    %v3403 = vpack.c.b16 %v2339, %v2335
    %v3404 = vpack.c.b16 %v2340, %v2336
    %v3405 = vpack.c.b16 %v2345, %v2341
    %v3406 = vpack.c.b16 %v2346, %v2342
    %v3407 = vpack.c.b16 %v2347, %v2343
    %v3408 = vpack.c.b16 %v2348, %v2344
    %v3409 = vpack.c.b16 %v2353, %v2349
    %v3410 = vpack.c.b16 %v2354, %v2350
    %v3411 = vpack.c.b16 %v2355, %v2351
    %v3412 = vpack.c.b16 %v2356, %v2352
    %v3413 = vpack.c.b16 %v2361, %v2357
    %v3414 = vpack.c.b16 %v2362, %v2358
    %v3415 = vpack.c.b16 %v2363, %v2359
    %v3416 = vpack.c.b16 %v2364, %v2360
    %v3417 = vpack.c.b16 %v2369, %v2365
    %v3418 = vpack.c.b16 %v2370, %v2366
    %v3419 = vpack.c.b16 %v2371, %v2367
    %v3420 = vpack.c.b16 %v2372, %v2368
    %v3421 = vpack.c.b16 %v2377, %v2373
    %v3422 = vpack.c.b16 %v2378, %v2374
    %v3423 = vpack.c.b16 %v2379, %v2375
    %v3424 = vpack.c.b16 %v2380, %v2376
    %v3425 = vpack.c.b16 %v2385, %v2381
    %v3426 = vpack.c.b16 %v2386, %v2382
    %v3427 = vpack.c.b16 %v2387, %v2383
    %v3428 = vpack.c.b16 %v2388, %v2384
    %v3429 = vpack.c.b16 %v2393, %v2389
    %v3430 = vpack.c.b16 %v2394, %v2390
    %v3431 = vpack.c.b16 %v2395, %v2391
    %v3432 = vpack.c.b16 %v2396, %v2392
    %v3433 = vpack.c.b16 %v2401, %v2397
    %v3434 = vpack.c.b16 %v2402, %v2398
    %v3435 = vpack.c.b16 %v2403, %v2399
    %v3436 = vpack.c.b16 %v2404, %v2400
    %v3437 = vpack.c.b16 %v2409, %v2405
    %v3438 = vpack.c.b16 %v2410, %v2406
    %v3439 = vpack.c.b16 %v2411, %v2407
    %v3440 = vpack.c.b16 %v2412, %v2408
    %v3441 = vpack.c.b16 %v2417, %v2413
    %v3442 = vpack.c.b16 %v2418, %v2414
    %v3443 = vpack.c.b16 %v2419, %v2415
    %v3444 = vpack.c.b16 %v2420, %v2416
    %v3445 = vpack.c.b16 %v2425, %v2421
    %v3446 = vpack.c.b16 %v2426, %v2422
    %v3447 = vpack.c.b16 %v2427, %v2423
    %v3448 = vpack.c.b16 %v2428, %v2424
    %v3449 = vpack.c.b16 %v2433, %v2429
    %v3450 = vpack.c.b16 %v2434, %v2430
    %v3451 = vpack.c.b16 %v2435, %v2431
    %v3452 = vpack.c.b16 %v2436, %v2432
    %v3453 = vpack.c.b16 %v2441, %v2437
    %v3454 = vpack.c.b16 %v2442, %v2438
    %v3455 = vpack.c.b16 %v2443, %v2439
    %v3456 = vpack.c.b16 %v2444, %v2440
    %v3457 = vpack.c.b16 %v2449, %v2445
    %v3458 = vpack.c.b16 %v2450, %v2446
    %v3459 = vpack.c.b16 %v2451, %v2447
    %v3460 = vpack.c.b16 %v2452, %v2448
    %v3461 = vpack.c.b16 %v2457, %v2453
    %v3462 = vpack.c.b16 %v2458, %v2454
    %v3463 = vpack.c.b16 %v2459, %v2455
    %v3464 = vpack.c.b16 %v2460, %v2456
    %v3465 = vpack.c.b16 %v2465, %v2461
    %v3466 = vpack.c.b16 %v2466, %v2462
    %v3467 = vpack.c.b16 %v2467, %v2463
    %v3468 = vpack.c.b16 %v2468, %v2464
    %v3469 = vpack.c.b16 %v2473, %v2469
    %v3470 = vpack.c.b16 %v2474, %v2470
    %v3471 = vpack.c.b16 %v2475, %v2471
    %v3472 = vpack.c.b16 %v2476, %v2472
    %v3473 = vpack.c.b16 %v2481, %v2477
    %v3474 = vpack.c.b16 %v2482, %v2478
    %v3475 = vpack.c.b16 %v2483, %v2479
    %v3476 = vpack.c.b16 %v2484, %v2480
    %v3477 = vpack.c.b16 %v2489, %v2485
    %v3478 = vpack.c.b16 %v2490, %v2486
    %v3479 = vpack.c.b16 %v2491, %v2487
    %v3480 = vpack.c.b16 %v2492, %v2488
    %v3481 = vpack.c.b16 %v2497, %v2493
    %v3482 = vpack.c.b16 %v2498, %v2494
    %v3483 = vpack.c.b16 %v2499, %v2495
    %v3484 = vpack.c.b16 %v2500, %v2496
    %v3485 = vpack.c.b16 %v2505, %v2501
    %v3486 = vpack.c.b16 %v2506, %v2502
    %v3487 = vpack.c.b16 %v2507, %v2503
    %v3488 = vpack.c.b16 %v2508, %v2504
    %v3489 = vpack.c.b16 %v2513, %v2509
    %v3490 = vpack.c.b16 %v2514, %v2510
    %v3491 = vpack.c.b16 %v2515, %v2511
    %v3492 = vpack.c.b16 %v2516, %v2512
    %v3493 = vpack.c.b16 %v2521, %v2517
    %v3494 = vpack.c.b16 %v2522, %v2518
    %v3495 = vpack.c.b16 %v2523, %v2519
    %v3496 = vpack.c.b16 %v2524, %v2520
    %v3497 = vpack.c.b16 %v2529, %v2525
    %v3498 = vpack.c.b16 %v2530, %v2526
    %v3499 = vpack.c.b16 %v2531, %v2527
    %v3500 = vpack.c.b16 %v2532, %v2528
    %v3501 = vpack.c.b16 %v2537, %v2533
    %v3502 = vpack.c.b16 %v2538, %v2534
    %v3503 = vpack.c.b16 %v2539, %v2535
    %v3504 = vpack.c.b16 %v2540, %v2536
    %v3505 = vpack.c.b16 %v2545, %v2541
    %v3506 = vpack.c.b16 %v2546, %v2542
    %v3507 = vpack.c.b16 %v2547, %v2543
    %v3508 = vpack.c.b16 %v2548, %v2544
    %v3509 = vpack.c.b16 %v2553, %v2549
    %v3510 = vpack.c.b16 %v2554, %v2550
    %v3511 = vpack.c.b16 %v2555, %v2551
    %v3512 = vpack.c.b16 %v2556, %v2552
    %v3513 = vpack.c.b16 %v2561, %v2557
    %v3514 = vpack.c.b16 %v2562, %v2558
    %v3515 = vpack.c.b16 %v2563, %v2559
    %v3516 = vpack.c.b16 %v2564, %v2560
    %v3517 = vpack.c.b16 %v2569, %v2565
    %v3518 = vpack.c.b16 %v2570, %v2566
    %v3519 = vpack.c.b16 %v2571, %v2567
    %v3520 = vpack.c.b16 %v2572, %v2568
    %v3521 = vpack.c.b16 %v2577, %v2573
    %v3522 = vpack.c.b16 %v2578, %v2574
    %v3523 = vpack.c.b16 %v2579, %v2575
    %v3524 = vpack.c.b16 %v2580, %v2576
    %v3525 = vpack.c.b16 %v2585, %v2581
    %v3526 = vpack.c.b16 %v2586, %v2582
    %v3527 = vpack.c.b16 %v2587, %v2583
    %v3528 = vpack.c.b16 %v2588, %v2584
    %v3529 = vpack.c.b16 %v2593, %v2589
    %v3530 = vpack.c.b16 %v2594, %v2590
    %v3531 = vpack.c.b16 %v2595, %v2591
    %v3532 = vpack.c.b16 %v2596, %v2592
    %v3533 = vpack.c.b16 %v2601, %v2597
    %v3534 = vpack.c.b16 %v2602, %v2598
    %v3535 = vpack.c.b16 %v2603, %v2599
    %v3536 = vpack.c.b16 %v2604, %v2600
    %v3537 = vpack.c.b16 %v2609, %v2605
    %v3538 = vpack.c.b16 %v2610, %v2606
    %v3539 = vpack.c.b16 %v2611, %v2607
    %v3540 = vpack.c.b16 %v2612, %v2608
    %v3541 = vpack.c.b16 %v2617, %v2613
    %v3542 = vpack.c.b16 %v2618, %v2614
    %v3543 = vpack.c.b16 %v2619, %v2615
    %v3544 = vpack.c.b16 %v2620, %v2616
    %v3545 = vpack.c.b16 %v2625, %v2621
    %v3546 = vpack.c.b16 %v2626, %v2622
    %v3547 = vpack.c.b16 %v2627, %v2623
    %v3548 = vpack.c.b16 %v2628, %v2624
    %v3549 = vpack.c.b16 %v2633, %v2629
    %v3550 = vpack.c.b16 %v2634, %v2630
    %v3551 = vpack.c.b16 %v2635, %v2631
    %v3552 = vpack.c.b16 %v2636, %v2632
    %v3553 = vpack.c.b16 %v2641, %v2637
    %v3554 = vpack.c.b16 %v2642, %v2638
    %v3555 = vpack.c.b16 %v2643, %v2639
    %v3556 = vpack.c.b16 %v2644, %v2640
    %v3557 = vpack.c.b16 %v2649, %v2645
    %v3558 = vpack.c.b16 %v2650, %v2646
    %v3559 = vpack.c.b16 %v2651, %v2647
    %v3560 = vpack.c.b16 %v2652, %v2648
    %v3561 = vpack.c.b16 %v2657, %v2653
    %v3562 = vpack.c.b16 %v2658, %v2654
    %v3563 = vpack.c.b16 %v2659, %v2655
    %v3564 = vpack.c.b16 %v2660, %v2656
    %v3565 = vpack.c.b16 %v2665, %v2661
    %v3566 = vpack.c.b16 %v2666, %v2662
    %v3567 = vpack.c.b16 %v2667, %v2663
    %v3568 = vpack.c.b16 %v2668, %v2664
    %v3569 = vpack.c.b16 %v2673, %v2669
    %v3570 = vpack.c.b16 %v2674, %v2670
    %v3571 = vpack.c.b16 %v2675, %v2671
    %v3572 = vpack.c.b16 %v2676, %v2672
    %v3573 = vpack.c.b16 %v2681, %v2677
    %v3574 = vpack.c.b16 %v2682, %v2678
    %v3575 = vpack.c.b16 %v2683, %v2679
    %v3576 = vpack.c.b16 %v2684, %v2680
    %v3577 = vpack.c.b16 %v2689, %v2685
    %v3578 = vpack.c.b16 %v2690, %v2686
    %v3579 = vpack.c.b16 %v2691, %v2687
    %v3580 = vpack.c.b16 %v2692, %v2688
    %v3581 = vpack.c.b16 %v2697, %v2693
    %v3582 = vpack.c.b16 %v2698, %v2694
    %v3583 = vpack.c.b16 %v2699, %v2695
    %v3584 = vpack.c.b16 %v2700, %v2696
    %v3585 = vpack.c.b16 %v2705, %v2701
    %v3586 = vpack.c.b16 %v2706, %v2702
    %v3587 = vpack.c.b16 %v2707, %v2703
    %v3588 = vpack.c.b16 %v2708, %v2704
    %v3589 = vpack.c.b16 %v2713, %v2709
    %v3590 = vpack.c.b16 %v2714, %v2710
    %v3591 = vpack.c.b16 %v2715, %v2711
    %v3592 = vpack.c.b16 %v2716, %v2712
    %v3593 = vpack.c.b16 %v2721, %v2717
    %v3594 = vpack.c.b16 %v2722, %v2718
    %v3595 = vpack.c.b16 %v2723, %v2719
    %v3596 = vpack.c.b16 %v2724, %v2720
    %v3597 = vpack.c.b16 %v2729, %v2725
    %v3598 = vpack.c.b16 %v2730, %v2726
    %v3599 = vpack.c.b16 %v2731, %v2727
    %v3600 = vpack.c.b16 %v2732, %v2728
    %v3601 = vpack.c.b16 %v2737, %v2733
    %v3602 = vpack.c.b16 %v2738, %v2734
    %v3603 = vpack.c.b16 %v2739, %v2735
    %v3604 = vpack.c.b16 %v2740, %v2736
    %v3605 = vpack.c.b16 %v2745, %v2741
    %v3606 = vpack.c.b16 %v2746, %v2742
    %v3607 = vpack.c.b16 %v2747, %v2743
    %v3608 = vpack.c.b16 %v2748, %v2744
    %v3609 = vpack.c.b16 %v2753, %v2749
    %v3610 = vpack.c.b16 %v2754, %v2750
    %v3611 = vpack.c.b16 %v2755, %v2751
    %v3612 = vpack.c.b16 %v2756, %v2752
    %v3613 = vpack.c.b16 %v2761, %v2757
    %v3614 = vpack.c.b16 %v2762, %v2758
    %v3615 = vpack.c.b16 %v2763, %v2759
    %v3616 = vpack.c.b16 %v2764, %v2760
    %v3617 = vpack.c.b16 %v2769, %v2765
    %v3618 = vpack.c.b16 %v2770, %v2766
    %v3619 = vpack.c.b16 %v2771, %v2767
    %v3620 = vpack.c.b16 %v2772, %v2768
    %v3621 = vpack.c.b16 %v2777, %v2773
    %v3622 = vpack.c.b16 %v2778, %v2774
    %v3623 = vpack.c.b16 %v2779, %v2775
    %v3624 = vpack.c.b16 %v2780, %v2776
    %v3625 = vpack.c.b16 %v2785, %v2781
    %v3626 = vpack.c.b16 %v2786, %v2782
    %v3627 = vpack.c.b16 %v2787, %v2783
    %v3628 = vpack.c.b16 %v2788, %v2784
    %v3629 = vpack.c.b16 %v2793, %v2789
    %v3630 = vpack.c.b16 %v2794, %v2790
    %v3631 = vpack.c.b16 %v2795, %v2791
    %v3632 = vpack.c.b16 %v2796, %v2792
    %v3633 = vpack.c.b16 %v2801, %v2797
    %v3634 = vpack.c.b16 %v2802, %v2798
    %v3635 = vpack.c.b16 %v2803, %v2799
    %v3636 = vpack.c.b16 %v2804, %v2800
    %v3637 = vpack.c.b16 %v2809, %v2805
    %v3638 = vpack.c.b16 %v2810, %v2806
    %v3639 = vpack.c.b16 %v2811, %v2807
    %v3640 = vpack.c.b16 %v2812, %v2808
    %v3641 = vpack.c.b16 %v2817, %v2813
    %v3642 = vpack.c.b16 %v2818, %v2814
    %v3643 = vpack.c.b16 %v2819, %v2815
    %v3644 = vpack.c.b16 %v2820, %v2816
    %v3645 = vpack.c.b16 %v2825, %v2821
    %v3646 = vpack.c.b16 %v2826, %v2822
    %v3647 = vpack.c.b16 %v2827, %v2823
    %v3648 = vpack.c.b16 %v2828, %v2824
    %v3649 = vpack.c.b16 %v2833, %v2829
    %v3650 = vpack.c.b16 %v2834, %v2830
    %v3651 = vpack.c.b16 %v2835, %v2831
    %v3652 = vpack.c.b16 %v2836, %v2832
    %v3653 = vpack.c.b16 %v2841, %v2837
    %v3654 = vpack.c.b16 %v2842, %v2838
    %v3655 = vpack.c.b16 %v2843, %v2839
    %v3656 = vpack.c.b16 %v2844, %v2840
    %v3657 = vpack.c.b16 %v2849, %v2845
    %v3658 = vpack.c.b16 %v2850, %v2846
    %v3659 = vpack.c.b16 %v2851, %v2847
    %v3660 = vpack.c.b16 %v2852, %v2848
    %v3661 = vpack.c.b16 %v2857, %v2853
    %v3662 = vpack.c.b16 %v2858, %v2854
    %v3663 = vpack.c.b16 %v2859, %v2855
    %v3664 = vpack.c.b16 %v2860, %v2856
    %v3665 = vpack.c.b16 %v2865, %v2861
    %v3666 = vpack.c.b16 %v2866, %v2862
    %v3667 = vpack.c.b16 %v2867, %v2863
    %v3668 = vpack.c.b16 %v2868, %v2864
    %v3669 = vpack.c.b16 %v2873, %v2869
    %v3670 = vpack.c.b16 %v2874, %v2870
    %v3671 = vpack.c.b16 %v2875, %v2871
    %v3672 = vpack.c.b16 %v2876, %v2872
    %v3673 = vpack.c.b16 %v2881, %v2877
    %v3674 = vpack.c.b16 %v2882, %v2878
    %v3675 = vpack.c.b16 %v2883, %v2879
    %v3676 = vpack.c.b16 %v2884, %v2880
    %v3677 = vpack.c.b16 %v2889, %v2885
    %v3678 = vpack.c.b16 %v2890, %v2886
    %v3679 = vpack.c.b16 %v2891, %v2887
    %v3680 = vpack.c.b16 %v2892, %v2888
    %v3681 = vpack.c.b16 %v2897, %v2893
    %v3682 = vpack.c.b16 %v2898, %v2894
    %v3683 = vpack.c.b16 %v2899, %v2895
    %v3684 = vpack.c.b16 %v2900, %v2896
    %v3685 = vpack.c.b16 %v2905, %v2901
    %v3686 = vpack.c.b16 %v2906, %v2902
    %v3687 = vpack.c.b16 %v2907, %v2903
    %v3688 = vpack.c.b16 %v2908, %v2904
    %v3689 = vpack.c.b16 %v2913, %v2909
    %v3690 = vpack.c.b16 %v2914, %v2910
    %v3691 = vpack.c.b16 %v2915, %v2911
    %v3692 = vpack.c.b16 %v2916, %v2912
    %v3693 = vpack.c.b16 %v2921, %v2917
    %v3694 = vpack.c.b16 %v2922, %v2918
    %v3695 = vpack.c.b16 %v2923, %v2919
    %v3696 = vpack.c.b16 %v2924, %v2920
    %v3697 = vpack.c.b16 %v2929, %v2925
    %v3698 = vpack.c.b16 %v2930, %v2926
    %v3699 = vpack.c.b16 %v2931, %v2927
    %v3700 = vpack.c.b16 %v2932, %v2928
    %v3701 = vpack.c.b16 %v2937, %v2933
    %v3702 = vpack.c.b16 %v2938, %v2934
    %v3703 = vpack.c.b16 %v2939, %v2935
    %v3704 = vpack.c.b16 %v2940, %v2936
    %v3705 = vpack.c.b16 %v2945, %v2941
    %v3706 = vpack.c.b16 %v2946, %v2942
    %v3707 = vpack.c.b16 %v2947, %v2943
    %v3708 = vpack.c.b16 %v2948, %v2944
    %v3709 = vpack.c.b16 %v2953, %v2949
    %v3710 = vpack.c.b16 %v2954, %v2950
    %v3711 = vpack.c.b16 %v2955, %v2951
    %v3712 = vpack.c.b16 %v2956, %v2952
    %v3713 = vpack.c.b16 %v2961, %v2957
    %v3714 = vpack.c.b16 %v2962, %v2958
    %v3715 = vpack.c.b16 %v2963, %v2959
    %v3716 = vpack.c.b16 %v2964, %v2960
    %v3717 = vpack.c.b16 %v2969, %v2965
    %v3718 = vpack.c.b16 %v2970, %v2966
    %v3719 = vpack.c.b16 %v2971, %v2967
    %v3720 = vpack.c.b16 %v2972, %v2968
    %v3721 = vpack.c.b16 %v2977, %v2973
    %v3722 = vpack.c.b16 %v2978, %v2974
    %v3723 = vpack.c.b16 %v2979, %v2975
    %v3724 = vpack.c.b16 %v2980, %v2976
    %v3725 = vpack.c.b16 %v2985, %v2981
    %v3726 = vpack.c.b16 %v2986, %v2982
    %v3727 = vpack.c.b16 %v2987, %v2983
    %v3728 = vpack.c.b16 %v2988, %v2984
    %v3729 = vpack.c.b16 %v2993, %v2989
    %v3730 = vpack.c.b16 %v2994, %v2990
    %v3731 = vpack.c.b16 %v2995, %v2991
    %v3732 = vpack.c.b16 %v2996, %v2992
    %v3733 = vpack.c.b16 %v3001, %v2997
    %v3734 = vpack.c.b16 %v3002, %v2998
    %v3735 = vpack.c.b16 %v3003, %v2999
    %v3736 = vpack.c.b16 %v3004, %v3000
    %v3737 = vpack.c.b16 %v3009, %v3005
    %v3738 = vpack.c.b16 %v3010, %v3006
    %v3739 = vpack.c.b16 %v3011, %v3007
    %v3740 = vpack.c.b16 %v3012, %v3008
    %v3741 = vpack.c.b16 %v3017, %v3013
    %v3742 = vpack.c.b16 %v3018, %v3014
    %v3743 = vpack.c.b16 %v3019, %v3015
    %v3744 = vpack.c.b16 %v3020, %v3016
    %v3745 = vpack.c.b16 %v3025, %v3021
    %v3746 = vpack.c.b16 %v3026, %v3022
    %v3747 = vpack.c.b16 %v3027, %v3023
    %v3748 = vpack.c.b16 %v3028, %v3024
    %v3749 = vpack.c.b16 %v3033, %v3029
    %v3750 = vpack.c.b16 %v3034, %v3030
    %v3751 = vpack.c.b16 %v3035, %v3031
    %v3752 = vpack.c.b16 %v3036, %v3032
    %v3753 = vpack.c.b16 %v3041, %v3037
    %v3754 = vpack.c.b16 %v3042, %v3038
    %v3755 = vpack.c.b16 %v3043, %v3039
    %v3756 = vpack.c.b16 %v3044, %v3040
    %v3757 = vpack.c.b16 %v3049, %v3045
    %v3758 = vpack.c.b16 %v3050, %v3046
    %v3759 = vpack.c.b16 %v3051, %v3047
    %v3760 = vpack.c.b16 %v3052, %v3048
    %v3761 = vpack.c.b16 %v3057, %v3053
    %v3762 = vpack.c.b16 %v3058, %v3054
    %v3763 = vpack.c.b16 %v3059, %v3055
    %v3764 = vpack.c.b16 %v3060, %v3056
    %v3765 = vpack.c.b16 %v3065, %v3061
    %v3766 = vpack.c.b16 %v3066, %v3062
    %v3767 = vpack.c.b16 %v3067, %v3063
    %v3768 = vpack.c.b16 %v3068, %v3064
    %vm4469 = vcmask 916480
    %v4471 = vsel %vm4469, %v947, 0
    %4473 = vmatprep.subr.bf16.mxu0 %v3070
    %4474 = vmatpush1.bf16.msra.mxu0 %v3069
    %4475 = vmatprep.subr.bf16.mxu0 %v3074
    %4476 = vmatpush1.bf16.msra.mxu0 %v3073
    %4477 = vmatprep.subr.bf16.mxu0 %v3078
    %4478 = vmatpush1.bf16.msra.mxu0 %v3077
    %4479 = vmatprep.subr.bf16.mxu0 %v3082
    %4480 = vmatpush1.bf16.msra.mxu0 %v3081
    %4481 = vmatprep.subr.bf16.mxu0 %v3086
    %4482 = vmatpush1.bf16.msra.mxu0 %v3085
    %4483 = vmatprep.subr.bf16.mxu0 %v3090
    %4484 = vmatpush1.bf16.msra.mxu0 %v3089
    %4485 = vmatprep.subr.bf16.mxu0 %v3094
    %4486 = vmatpush1.bf16.msra.mxu0 %v3093
    %4487 = vmatprep.subr.bf16.mxu0 %v3098
    %4488 = vmatpush1.bf16.msra.mxu0 %v3097
    %4489 = vmatprep.subr.bf16.mxu0 %v3102
    %4490 = vmatpush1.bf16.msra.mxu0 %v3101
    %4491 = vmatprep.subr.bf16.mxu0 %v3106
    %4492 = vmatpush1.bf16.msra.mxu0 %v3105
    %4493 = vmatprep.subr.bf16.mxu0 %v3110
    %4494 = vmatpush1.bf16.msra.mxu0 %v3109
    %4495 = vmatprep.subr.bf16.mxu0 %v3114
    %4496 = vmatpush1.bf16.msra.mxu0 %v3113
    %4497 = vmatprep.subr.bf16.mxu0 %v3118
    %4498 = vmatpush1.bf16.msra.mxu0 %v3117
    %4499 = vmatprep.subr.bf16.mxu0 %v3122
    %4500 = vmatpush1.bf16.msra.mxu0 %v3121
    %4501 = vmatprep.subr.bf16.mxu0 %v3126
    %4502 = vmatpush1.bf16.msra.mxu0 %v3125
    %4503 = vmatprep.subr.bf16.mxu0 %v3130
    %4504 = vmatpush1.bf16.msra.mxu0 %v3129
    %4505 = vmatprep.mubr.bf16.mxu0 %v927
    %4506 = vmatmul.mubr.bf16.gmra.mrb[0].mxu0 %v926
    %v4507 = vpop.f32.mrb[0].mxu0
    %v4508 = vadd.f32 %v876, %v4507
    %v4509 = vpop.f32.mrb[0].mxu0
    %v4510 = vadd.f32 %v880, %v4509
    %v4511 = vpop.f32.mrb[0].mxu0
    %v4512 = vpop.f32.mrb[0].mxu0
    %4513 = vdwg.mxu0
    %4514 = vmatprep.subr.bf16.mxu0 %v3134
    %4515 = vmatpush1.bf16.msra.mxu0 %v3133
    %4516 = vmatprep.subr.bf16.mxu0 %v3138
    %4517 = vmatpush1.bf16.msra.mxu0 %v3137
    %4518 = vmatprep.subr.bf16.mxu0 %v3142
    %4519 = vmatpush1.bf16.msra.mxu0 %v3141
    %4520 = vmatprep.subr.bf16.mxu0 %v3146
    %4521 = vmatpush1.bf16.msra.mxu0 %v3145
    %4522 = vmatprep.subr.bf16.mxu0 %v3150
    %4523 = vmatpush1.bf16.msra.mxu0 %v3149
    %4524 = vmatprep.subr.bf16.mxu0 %v3154
    %4525 = vmatpush1.bf16.msra.mxu0 %v3153
    %4526 = vmatprep.subr.bf16.mxu0 %v3158
    %4527 = vmatpush1.bf16.msra.mxu0 %v3157
    %4528 = vmatprep.subr.bf16.mxu0 %v3162
    %4529 = vmatpush1.bf16.msra.mxu0 %v3161
    %4530 = vmatprep.subr.bf16.mxu0 %v3166
    %4531 = vmatpush1.bf16.msra.mxu0 %v3165
    %4532 = vmatprep.subr.bf16.mxu0 %v3170
    %4533 = vmatpush1.bf16.msra.mxu0 %v3169
    %4534 = vmatprep.subr.bf16.mxu0 %v3174
    %4535 = vmatpush1.bf16.msra.mxu0 %v3173
    %4536 = vmatprep.subr.bf16.mxu0 %v3178
    %4537 = vmatpush1.bf16.msra.mxu0 %v3177
    %4538 = vmatprep.subr.bf16.mxu0 %v3182
    %4539 = vmatpush1.bf16.msra.mxu0 %v3181
    %4540 = vmatprep.subr.bf16.mxu0 %v3186
    %4541 = vmatpush1.bf16.msra.mxu0 %v3185
    %4542 = vmatprep.subr.bf16.mxu0 %v3190
    %4543 = vmatpush1.bf16.msra.mxu0 %v3189
    %4544 = vmatprep.subr.bf16.mxu0 %v3194
    %4545 = vmatpush1.bf16.msra.mxu0 %v3193
    %4546 = vmatprep.mubr.bf16.mxu0 %v929
    %4547 = vmatmul.mubr.bf16.gmra.mrb[0].mxu0 %v928
    %v4548 = vpop.f32.mrb[0].mxu0
    %v4549 = vadd.f32 %v4508, %v4548
    %v4550 = vpop.f32.mrb[0].mxu0
    %v4551 = vadd.f32 %v4510, %v4550
    %v4552 = vpop.f32.mrb[0].mxu0
    %v4553 = vpop.f32.mrb[0].mxu0
    %4554 = vdwg.mxu0
    %4555 = vmatprep.subr.bf16.mxu0 %v3198
    %4556 = vmatpush1.bf16.msra.mxu0 %v3197
    %4557 = vmatprep.subr.bf16.mxu0 %v3202
    %4558 = vmatpush1.bf16.msra.mxu0 %v3201
    %4559 = vmatprep.subr.bf16.mxu0 %v3206
    %4560 = vmatpush1.bf16.msra.mxu0 %v3205
    %4561 = vmatprep.subr.bf16.mxu0 %v3210
    %4562 = vmatpush1.bf16.msra.mxu0 %v3209
    %4563 = vmatprep.subr.bf16.mxu0 %v3214
    %4564 = vmatpush1.bf16.msra.mxu0 %v3213
    %4565 = vmatprep.subr.bf16.mxu0 %v3218
    %4566 = vmatpush1.bf16.msra.mxu0 %v3217
    %4567 = vmatprep.subr.bf16.mxu0 %v3222
    %4568 = vmatpush1.bf16.msra.mxu0 %v3221
    %4569 = vmatprep.subr.bf16.mxu0 %v3226
    %4570 = vmatpush1.bf16.msra.mxu0 %v3225
    %4571 = vmatprep.subr.bf16.mxu0 %v3230
    %4572 = vmatpush1.bf16.msra.mxu0 %v3229
    %4573 = vmatprep.subr.bf16.mxu0 %v3234
    %4574 = vmatpush1.bf16.msra.mxu0 %v3233
    %4575 = vmatprep.subr.bf16.mxu0 %v3238
    %4576 = vmatpush1.bf16.msra.mxu0 %v3237
    %4577 = vmatprep.subr.bf16.mxu0 %v3242
    %4578 = vmatpush1.bf16.msra.mxu0 %v3241
    %4579 = vmatprep.subr.bf16.mxu0 %v3246
    %4580 = vmatpush1.bf16.msra.mxu0 %v3245
    %4581 = vmatprep.subr.bf16.mxu0 %v3250
    %4582 = vmatpush1.bf16.msra.mxu0 %v3249
    %4583 = vmatprep.subr.bf16.mxu0 %v3254
    %4584 = vmatpush1.bf16.msra.mxu0 %v3253
    %4585 = vmatprep.subr.bf16.mxu0 %v3258
    %4586 = vmatpush1.bf16.msra.mxu0 %v3257
    %4587 = vmatprep.mubr.bf16.mxu0 %v931
    %4588 = vmatmul.mubr.bf16.gmra.mrb[0].mxu0 %v930
    %v4589 = vpop.f32.mrb[0].mxu0
    %v4590 = vadd.f32 %v4549, %v4589
    %v4591 = vpop.f32.mrb[0].mxu0
    %v4592 = vadd.f32 %v4551, %v4591
    %v4593 = vpop.f32.mrb[0].mxu0
    %v4594 = vpop.f32.mrb[0].mxu0
    %4595 = vdwg.mxu0
    %4596 = vmatprep.subr.bf16.mxu0 %v3262
    %4597 = vmatpush1.bf16.msra.mxu0 %v3261
    %4598 = vmatprep.subr.bf16.mxu0 %v3266
    %4599 = vmatpush1.bf16.msra.mxu0 %v3265
    %4600 = vmatprep.subr.bf16.mxu0 %v3270
    %4601 = vmatpush1.bf16.msra.mxu0 %v3269
    %4602 = vmatprep.subr.bf16.mxu0 %v3274
    %4603 = vmatpush1.bf16.msra.mxu0 %v3273
    %4604 = vmatprep.subr.bf16.mxu0 %v3278
    %4605 = vmatpush1.bf16.msra.mxu0 %v3277
    %4606 = vmatprep.subr.bf16.mxu0 %v3282
    %4607 = vmatpush1.bf16.msra.mxu0 %v3281
    %4608 = vmatprep.subr.bf16.mxu0 %v3286
    %4609 = vmatpush1.bf16.msra.mxu0 %v3285
    %4610 = vmatprep.subr.bf16.mxu0 %v3290
    %4611 = vmatpush1.bf16.msra.mxu0 %v3289
    %4612 = vmatprep.subr.bf16.mxu0 %v3294
    %4613 = vmatpush1.bf16.msra.mxu0 %v3293
    %4614 = vmatprep.subr.bf16.mxu0 %v3298
    %4615 = vmatpush1.bf16.msra.mxu0 %v3297
    %4616 = vmatprep.subr.bf16.mxu0 %v3302
    %4617 = vmatpush1.bf16.msra.mxu0 %v3301
    %4618 = vmatprep.subr.bf16.mxu0 %v3306
    %4619 = vmatpush1.bf16.msra.mxu0 %v3305
    %4620 = vmatprep.subr.bf16.mxu0 %v3310
    %4621 = vmatpush1.bf16.msra.mxu0 %v3309
    %4622 = vmatprep.subr.bf16.mxu0 %v3314
    %4623 = vmatpush1.bf16.msra.mxu0 %v3313
    %4624 = vmatprep.subr.bf16.mxu0 %v3318
    %4625 = vmatpush1.bf16.msra.mxu0 %v3317
    %4626 = vmatprep.subr.bf16.mxu0 %v3322
    %4627 = vmatpush1.bf16.msra.mxu0 %v3321
    %4628 = vmatprep.mubr.bf16.mxu0 %v933
    %4629 = vmatmul.mubr.bf16.gmra.mrb[0].mxu0 %v932
    %v4630 = vpop.f32.mrb[0].mxu0
    %v4631 = vadd.f32 %v4590, %v4630
    %v4632 = vpop.f32.mrb[0].mxu0
    %v4633 = vadd.f32 %v4592, %v4632
    %v4634 = vpop.f32.mrb[0].mxu0
    %v4635 = vpop.f32.mrb[0].mxu0
    %4636 = vdwg.mxu0
    %4637 = vmatprep.subr.bf16.mxu0 %v3326
    %4638 = vmatpush1.bf16.msra.mxu0 %v3325
    %4639 = vmatprep.subr.bf16.mxu0 %v3330
    %4640 = vmatpush1.bf16.msra.mxu0 %v3329
    %4641 = vmatprep.subr.bf16.mxu0 %v3334
    %4642 = vmatpush1.bf16.msra.mxu0 %v3333
    %4643 = vmatprep.subr.bf16.mxu0 %v3338
    %4644 = vmatpush1.bf16.msra.mxu0 %v3337
    %4645 = vmatprep.subr.bf16.mxu0 %v3342
    %4646 = vmatpush1.bf16.msra.mxu0 %v3341
    %4647 = vmatprep.subr.bf16.mxu0 %v3346
    %4648 = vmatpush1.bf16.msra.mxu0 %v3345
    %4649 = vmatprep.subr.bf16.mxu0 %v3350
    %4650 = vmatpush1.bf16.msra.mxu0 %v3349
    %4651 = vmatprep.subr.bf16.mxu0 %v3354
    %4652 = vmatpush1.bf16.msra.mxu0 %v3353
    %4653 = vmatprep.subr.bf16.mxu0 %v3358
    %4654 = vmatpush1.bf16.msra.mxu0 %v3357
    %4655 = vmatprep.subr.bf16.mxu0 %v3362
    %4656 = vmatpush1.bf16.msra.mxu0 %v3361
    %4657 = vmatprep.subr.bf16.mxu0 %v3366
    %4658 = vmatpush1.bf16.msra.mxu0 %v3365
    %4659 = vmatprep.subr.bf16.mxu0 %v3370
    %4660 = vmatpush1.bf16.msra.mxu0 %v3369
    %4661 = vmatprep.subr.bf16.mxu0 %v3374
    %4662 = vmatpush1.bf16.msra.mxu0 %v3373
    %4663 = vmatprep.subr.bf16.mxu0 %v3378
    %4664 = vmatpush1.bf16.msra.mxu0 %v3377
    %4665 = vmatprep.subr.bf16.mxu0 %v3382
    %4666 = vmatpush1.bf16.msra.mxu0 %v3381
    %4667 = vmatprep.subr.bf16.mxu0 %v3386
    %4668 = vmatpush1.bf16.msra.mxu0 %v3385
    %4669 = vmatprep.mubr.bf16.mxu0 %v935
    %4670 = vmatmul.mubr.bf16.gmra.mrb[0].mxu0 %v934
    %v4671 = vpop.f32.mrb[0].mxu0
    %v4672 = vadd.f32 %v4631, %v4671
    %v4673 = vpop.f32.mrb[0].mxu0
    %v4674 = vadd.f32 %v4633, %v4673
    %v4675 = vpop.f32.mrb[0].mxu0
    %v4676 = vpop.f32.mrb[0].mxu0
    %4677 = vdwg.mxu0
    %4678 = vmatprep.subr.bf16.mxu0 %v3390
    %4679 = vmatpush1.bf16.msra.mxu0 %v3389
    %4680 = vmatprep.subr.bf16.mxu0 %v3394
    %4681 = vmatpush1.bf16.msra.mxu0 %v3393
    %4682 = vmatprep.subr.bf16.mxu0 %v3398
    %4683 = vmatpush1.bf16.msra.mxu0 %v3397
    %4684 = vmatprep.subr.bf16.mxu0 %v3402
    %4685 = vmatpush1.bf16.msra.mxu0 %v3401
    %4686 = vmatprep.subr.bf16.mxu0 %v3406
    %4687 = vmatpush1.bf16.msra.mxu0 %v3405
    %4688 = vmatprep.subr.bf16.mxu0 %v3410
    %4689 = vmatpush1.bf16.msra.mxu0 %v3409
    %4690 = vmatprep.subr.bf16.mxu0 %v3414
    %4691 = vmatpush1.bf16.msra.mxu0 %v3413
    %4692 = vmatprep.subr.bf16.mxu0 %v3418
    %4693 = vmatpush1.bf16.msra.mxu0 %v3417
    %4694 = vmatprep.subr.bf16.mxu0 %v3422
    %4695 = vmatpush1.bf16.msra.mxu0 %v3421
    %4696 = vmatprep.subr.bf16.mxu0 %v3426
    %4697 = vmatpush1.bf16.msra.mxu0 %v3425
    %4698 = vmatprep.subr.bf16.mxu0 %v3430
    %4699 = vmatpush1.bf16.msra.mxu0 %v3429
    %4700 = vmatprep.subr.bf16.mxu0 %v3434
    %4701 = vmatpush1.bf16.msra.mxu0 %v3433
    %4702 = vmatprep.subr.bf16.mxu0 %v3438
    %4703 = vmatpush1.bf16.msra.mxu0 %v3437
    %4704 = vmatprep.subr.bf16.mxu0 %v3442
    %4705 = vmatpush1.bf16.msra.mxu0 %v3441
    %4706 = vmatprep.subr.bf16.mxu0 %v3446
    %4707 = vmatpush1.bf16.msra.mxu0 %v3445
    %4708 = vmatprep.subr.bf16.mxu0 %v3450
    %4709 = vmatpush1.bf16.msra.mxu0 %v3449
    %4710 = vmatprep.mubr.bf16.mxu0 %v937
    %4711 = vmatmul.mubr.bf16.gmra.mrb[0].mxu0 %v936
    %v4712 = vpop.f32.mrb[0].mxu0
    %v4713 = vadd.f32 %v4672, %v4712
    %v4714 = vpop.f32.mrb[0].mxu0
    %v4715 = vadd.f32 %v4674, %v4714
    %v4716 = vpop.f32.mrb[0].mxu0
    %v4717 = vpop.f32.mrb[0].mxu0
    %4718 = vdwg.mxu0
    %4719 = vmatprep.subr.bf16.mxu0 %v3454
    %4720 = vmatpush1.bf16.msra.mxu0 %v3453
    %4721 = vmatprep.subr.bf16.mxu0 %v3458
    %4722 = vmatpush1.bf16.msra.mxu0 %v3457
    %4723 = vmatprep.subr.bf16.mxu0 %v3462
    %4724 = vmatpush1.bf16.msra.mxu0 %v3461
    %4725 = vmatprep.subr.bf16.mxu0 %v3466
    %4726 = vmatpush1.bf16.msra.mxu0 %v3465
    %4727 = vmatprep.subr.bf16.mxu0 %v3470
    %4728 = vmatpush1.bf16.msra.mxu0 %v3469
    %4729 = vmatprep.subr.bf16.mxu0 %v3474
    %4730 = vmatpush1.bf16.msra.mxu0 %v3473
    %4731 = vmatprep.subr.bf16.mxu0 %v3478
    %4732 = vmatpush1.bf16.msra.mxu0 %v3477
    %4733 = vmatprep.subr.bf16.mxu0 %v3482
    %4734 = vmatpush1.bf16.msra.mxu0 %v3481
    %4735 = vmatprep.subr.bf16.mxu0 %v3486
    %4736 = vmatpush1.bf16.msra.mxu0 %v3485
    %4737 = vmatprep.subr.bf16.mxu0 %v3490
    %4738 = vmatpush1.bf16.msra.mxu0 %v3489
    %4739 = vmatprep.subr.bf16.mxu0 %v3494
    %4740 = vmatpush1.bf16.msra.mxu0 %v3493
    %4741 = vmatprep.subr.bf16.mxu0 %v3498
    %4742 = vmatpush1.bf16.msra.mxu0 %v3497
    %4743 = vmatprep.subr.bf16.mxu0 %v3502
    %4744 = vmatpush1.bf16.msra.mxu0 %v3501
    %4745 = vmatprep.subr.bf16.mxu0 %v3506
    %4746 = vmatpush1.bf16.msra.mxu0 %v3505
    %4747 = vmatprep.subr.bf16.mxu0 %v3510
    %4748 = vmatpush1.bf16.msra.mxu0 %v3509
    %4749 = vmatprep.subr.bf16.mxu0 %v3514
    %4750 = vmatpush1.bf16.msra.mxu0 %v3513
    %4751 = vmatprep.mubr.bf16.mxu0 %v939
    %4752 = vmatmul.mubr.bf16.gmra.mrb[0].mxu0 %v938
    %v4753 = vpop.f32.mrb[0].mxu0
    %v4754 = vadd.f32 %v4713, %v4753
    %v4755 = vpop.f32.mrb[0].mxu0
    %v4756 = vadd.f32 %v4715, %v4755
    %v4757 = vpop.f32.mrb[0].mxu0
    %v4758 = vpop.f32.mrb[0].mxu0
    %4759 = vdwg.mxu0
    %4760 = vmatprep.subr.bf16.mxu0 %v3518
    %4761 = vmatpush1.bf16.msra.mxu0 %v3517
    %4762 = vmatprep.subr.bf16.mxu0 %v3522
    %4763 = vmatpush1.bf16.msra.mxu0 %v3521
    %4764 = vmatprep.subr.bf16.mxu0 %v3526
    %4765 = vmatpush1.bf16.msra.mxu0 %v3525
    %4766 = vmatprep.subr.bf16.mxu0 %v3530
    %4767 = vmatpush1.bf16.msra.mxu0 %v3529
    %4768 = vmatprep.subr.bf16.mxu0 %v3534
    %4769 = vmatpush1.bf16.msra.mxu0 %v3533
    %4770 = vmatprep.subr.bf16.mxu0 %v3538
    %4771 = vmatpush1.bf16.msra.mxu0 %v3537
    %4772 = vmatprep.subr.bf16.mxu0 %v3542
    %4773 = vmatpush1.bf16.msra.mxu0 %v3541
    %4774 = vmatprep.subr.bf16.mxu0 %v3546
    %4775 = vmatpush1.bf16.msra.mxu0 %v3545
    %4776 = vmatprep.subr.bf16.mxu0 %v3550
    %4777 = vmatpush1.bf16.msra.mxu0 %v3549
    %4778 = vmatprep.subr.bf16.mxu0 %v3554
    %4779 = vmatpush1.bf16.msra.mxu0 %v3553
    %4780 = vmatprep.subr.bf16.mxu0 %v3558
    %4781 = vmatpush1.bf16.msra.mxu0 %v3557
    %4782 = vmatprep.subr.bf16.mxu0 %v3562
    %4783 = vmatpush1.bf16.msra.mxu0 %v3561
    %4784 = vmatprep.subr.bf16.mxu0 %v3566
    %4785 = vmatpush1.bf16.msra.mxu0 %v3565
    %4786 = vmatprep.subr.bf16.mxu0 %v3570
    %4787 = vmatpush1.bf16.msra.mxu0 %v3569
    %4788 = vmatprep.subr.bf16.mxu0 %v3574
    %4789 = vmatpush1.bf16.msra.mxu0 %v3573
    %4790 = vmatprep.subr.bf16.mxu0 %v3578
    %4791 = vmatpush1.bf16.msra.mxu0 %v3577
    %4792 = vmatprep.mubr.bf16.mxu0 %v941
    %4793 = vmatmul.mubr.bf16.gmra.mrb[0].mxu0 %v940
    %v4794 = vpop.f32.mrb[0].mxu0
    %v4795 = vadd.f32 %v4754, %v4794
    %v4796 = vpop.f32.mrb[0].mxu0
    %v4797 = vadd.f32 %v4756, %v4796
    %v4798 = vpop.f32.mrb[0].mxu0
    %v4799 = vpop.f32.mrb[0].mxu0
    %4800 = vdwg.mxu0
    %4801 = vmatprep.subr.bf16.mxu0 %v3582
    %4802 = vmatpush1.bf16.msra.mxu0 %v3581
    %4803 = vmatprep.subr.bf16.mxu0 %v3586
    %4804 = vmatpush1.bf16.msra.mxu0 %v3585
    %4805 = vmatprep.subr.bf16.mxu0 %v3590
    %4806 = vmatpush1.bf16.msra.mxu0 %v3589
    %4807 = vmatprep.subr.bf16.mxu0 %v3594
    %4808 = vmatpush1.bf16.msra.mxu0 %v3593
    %4809 = vmatprep.subr.bf16.mxu0 %v3598
    %4810 = vmatpush1.bf16.msra.mxu0 %v3597
    %4811 = vmatprep.subr.bf16.mxu0 %v3602
    %4812 = vmatpush1.bf16.msra.mxu0 %v3601
    %4813 = vmatprep.subr.bf16.mxu0 %v3606
    %4814 = vmatpush1.bf16.msra.mxu0 %v3605
    %4815 = vmatprep.subr.bf16.mxu0 %v3610
    %4816 = vmatpush1.bf16.msra.mxu0 %v3609
    %4817 = vmatprep.subr.bf16.mxu0 %v3614
    %4818 = vmatpush1.bf16.msra.mxu0 %v3613
    %4819 = vmatprep.subr.bf16.mxu0 %v3618
    %4820 = vmatpush1.bf16.msra.mxu0 %v3617
    %4821 = vmatprep.subr.bf16.mxu0 %v3622
    %4822 = vmatpush1.bf16.msra.mxu0 %v3621
    %4823 = vmatprep.subr.bf16.mxu0 %v3626
    %4824 = vmatpush1.bf16.msra.mxu0 %v3625
    %4825 = vmatprep.subr.bf16.mxu0 %v3630
    %4826 = vmatpush1.bf16.msra.mxu0 %v3629
    %4827 = vmatprep.subr.bf16.mxu0 %v3634
    %4828 = vmatpush1.bf16.msra.mxu0 %v3633
    %4829 = vmatprep.subr.bf16.mxu0 %v3638
    %4830 = vmatpush1.bf16.msra.mxu0 %v3637
    %4831 = vmatprep.subr.bf16.mxu0 %v3642
    %4832 = vmatpush1.bf16.msra.mxu0 %v3641
    %4833 = vmatprep.mubr.bf16.mxu0 %v943
    %4834 = vmatmul.mubr.bf16.gmra.mrb[0].mxu0 %v942
    %v4835 = vpop.f32.mrb[0].mxu0
    %v4836 = vadd.f32 %v4795, %v4835
    %v4837 = vpop.f32.mrb[0].mxu0
    %v4838 = vadd.f32 %v4797, %v4837
    %v4839 = vpop.f32.mrb[0].mxu0
    %v4840 = vpop.f32.mrb[0].mxu0
    %4841 = vdwg.mxu0
    %4842 = vmatprep.subr.bf16.mxu0 %v3646
    %4843 = vmatpush1.bf16.msra.mxu0 %v3645
    %4844 = vmatprep.subr.bf16.mxu0 %v3650
    %4845 = vmatpush1.bf16.msra.mxu0 %v3649
    %4846 = vmatprep.subr.bf16.mxu0 %v3654
    %4847 = vmatpush1.bf16.msra.mxu0 %v3653
    %4848 = vmatprep.subr.bf16.mxu0 %v3658
    %4849 = vmatpush1.bf16.msra.mxu0 %v3657
    %4850 = vmatprep.subr.bf16.mxu0 %v3662
    %4851 = vmatpush1.bf16.msra.mxu0 %v3661
    %4852 = vmatprep.subr.bf16.mxu0 %v3666
    %4853 = vmatpush1.bf16.msra.mxu0 %v3665
    %4854 = vmatprep.subr.bf16.mxu0 %v3670
    %4855 = vmatpush1.bf16.msra.mxu0 %v3669
    %4856 = vmatprep.subr.bf16.mxu0 %v3674
    %4857 = vmatpush1.bf16.msra.mxu0 %v3673
    %4858 = vmatprep.subr.bf16.mxu0 %v3678
    %4859 = vmatpush1.bf16.msra.mxu0 %v3677
    %4860 = vmatprep.subr.bf16.mxu0 %v3682
    %4861 = vmatpush1.bf16.msra.mxu0 %v3681
    %4862 = vmatprep.subr.bf16.mxu0 %v3686
    %4863 = vmatpush1.bf16.msra.mxu0 %v3685
    %4864 = vmatprep.subr.bf16.mxu0 %v3690
    %4865 = vmatpush1.bf16.msra.mxu0 %v3689
    %4866 = vmatprep.subr.bf16.mxu0 %v3694
    %4867 = vmatpush1.bf16.msra.mxu0 %v3693
    %4868 = vmatprep.subr.bf16.mxu0 %v3698
    %4869 = vmatpush1.bf16.msra.mxu0 %v3697
    %4870 = vmatprep.subr.bf16.mxu0 %v3702
    %4871 = vmatpush1.bf16.msra.mxu0 %v3701
    %4872 = vmatprep.subr.bf16.mxu0 %v3706
    %4873 = vmatpush1.bf16.msra.mxu0 %v3705
    %4874 = vmatprep.mubr.bf16.mxu0 %v945
    %4875 = vmatmul.mubr.bf16.gmra.mrb[0].mxu0 %v944
    %v4876 = vpop.f32.mrb[0].mxu0
    %v4877 = vadd.f32 %v4836, %v4876
    %v4878 = vpop.f32.mrb[0].mxu0
    %v4879 = vadd.f32 %v4838, %v4878
    %v4880 = vpop.f32.mrb[0].mxu0
    %v4881 = vpop.f32.mrb[0].mxu0
    %4882 = vdwg.mxu0
    %4883 = vmatprep.subr.bf16.mxu0 %v3710
    %4884 = vmatpush1.bf16.msra.mxu0 %v3709
    %4885 = vmatprep.subr.bf16.mxu0 %v3714
    %4886 = vmatpush1.bf16.msra.mxu0 %v3713
    %4887 = vmatprep.subr.bf16.mxu0 %v3718
    %4888 = vmatpush1.bf16.msra.mxu0 %v3717
    %4889 = vmatprep.subr.bf16.mxu0 %v3722
    %4890 = vmatpush1.bf16.msra.mxu0 %v3721
    %4891 = vmatprep.subr.bf16.mxu0 %v3726
    %4892 = vmatpush1.bf16.msra.mxu0 %v3725
    %4893 = vmatprep.subr.bf16.mxu0 %v3730
    %4894 = vmatpush1.bf16.msra.mxu0 %v3729
    %4895 = vmatprep.subr.bf16.mxu0 %v3734
    %4896 = vmatpush1.bf16.msra.mxu0 %v3733
    %4897 = vmatprep.subr.bf16.mxu0 %v3738
    %4898 = vmatpush1.bf16.msra.mxu0 %v3737
    %4899 = vmatprep.subr.bf16.mxu0 %v3742
    %4900 = vmatpush1.bf16.msra.mxu0 %v3741
    %4901 = vmatprep.subr.bf16.mxu0 %v3746
    %4902 = vmatpush1.bf16.msra.mxu0 %v3745
    %4903 = vmatprep.subr.bf16.mxu0 %v3750
    %4904 = vmatpush1.bf16.msra.mxu0 %v3749
    %4905 = vmatprep.subr.bf16.mxu0 %v3754
    %4906 = vmatpush1.bf16.msra.mxu0 %v3753
    %4907 = vmatprep.subr.bf16.mxu0 %v3758
    %4908 = vmatpush1.bf16.msra.mxu0 %v3757
    %4909 = vmatprep.subr.bf16.mxu0 %v3762
    %4910 = vmatpush1.bf16.msra.mxu0 %v3761
    %4911 = vmatprep.subr.bf16.mxu0 %v3766
    %4912 = vmatpush1.bf16.msra.mxu0 %v3765
    %4913 = vmatprep.subr.bf16.mxu0 0
    %4914 = vmatpush1.bf16.msra.mxu0 0
    %4915 = vmatprep.mubr.bf16.mxu0 %v4471
    %4916 = vmatmul.mubr.bf16.gmra.mrb[0].mxu0 %v946
    %v4917 = vpop.f32.mrb[0].mxu0
    %v4918 = vadd.f32 %v4877, %v4917
    %v4919 = vpop.f32.mrb[0].mxu0
    %v4920 = vadd.f32 %v4879, %v4919
    %v4921 = vpop.f32.mrb[0].mxu0
    %v4922 = vpop.f32.mrb[0].mxu0
    %4923 = vdwg.mxu0
    %4924 = vmatprep.subr.bf16.mxu0 %v3072
    %4925 = vmatpush1.bf16.msra.mxu0 %v3071
    %4926 = vmatprep.subr.bf16.mxu0 %v3076
    %4927 = vmatpush1.bf16.msra.mxu0 %v3075
    %4928 = vmatprep.subr.bf16.mxu0 %v3080
    %4929 = vmatpush1.bf16.msra.mxu0 %v3079
    %4930 = vmatprep.subr.bf16.mxu0 %v3084
    %4931 = vmatpush1.bf16.msra.mxu0 %v3083
    %4932 = vmatprep.subr.bf16.mxu0 %v3088
    %4933 = vmatpush1.bf16.msra.mxu0 %v3087
    %4934 = vmatprep.subr.bf16.mxu0 %v3092
    %4935 = vmatpush1.bf16.msra.mxu0 %v3091
    %4936 = vmatprep.subr.bf16.mxu0 %v3096
    %4937 = vmatpush1.bf16.msra.mxu0 %v3095
    %4938 = vmatprep.subr.bf16.mxu0 %v3100
    %4939 = vmatpush1.bf16.msra.mxu0 %v3099
    %4940 = vmatprep.subr.bf16.mxu0 %v3104
    %4941 = vmatpush1.bf16.msra.mxu0 %v3103
    %4942 = vmatprep.subr.bf16.mxu0 %v3108
    %4943 = vmatpush1.bf16.msra.mxu0 %v3107
    %4944 = vmatprep.subr.bf16.mxu0 %v3112
    %4945 = vmatpush1.bf16.msra.mxu0 %v3111
    %4946 = vmatprep.subr.bf16.mxu0 %v3116
    %4947 = vmatpush1.bf16.msra.mxu0 %v3115
    %4948 = vmatprep.subr.bf16.mxu0 %v3120
    %4949 = vmatpush1.bf16.msra.mxu0 %v3119
    %4950 = vmatprep.subr.bf16.mxu0 %v3124
    %4951 = vmatpush1.bf16.msra.mxu0 %v3123
    %4952 = vmatprep.subr.bf16.mxu0 %v3128
    %4953 = vmatpush1.bf16.msra.mxu0 %v3127
    %4954 = vmatprep.subr.bf16.mxu0 %v3132
    %4955 = vmatpush1.bf16.msra.mxu0 %v3131
    %4956 = vmatprep.mubr.bf16.mxu0 %v927
    %4957 = vmatmul.mubr.bf16.gmra.mrb[0].mxu0 %v926
    %v4958 = vpop.f32.mrb[0].mxu0
    %v4959 = vadd.f32 %v884, %v4958
    %v4960 = vpop.f32.mrb[0].mxu0
    %v4961 = vadd.f32 %v888, %v4960
    %v4962 = vpop.f32.mrb[0].mxu0
    %v4963 = vpop.f32.mrb[0].mxu0
    %4964 = vdwg.mxu0
    %4965 = vmatprep.subr.bf16.mxu0 %v3136
    %4966 = vmatpush1.bf16.msra.mxu0 %v3135
    %4967 = vmatprep.subr.bf16.mxu0 %v3140
    %4968 = vmatpush1.bf16.msra.mxu0 %v3139
    %4969 = vmatprep.subr.bf16.mxu0 %v3144
    %4970 = vmatpush1.bf16.msra.mxu0 %v3143
    %4971 = vmatprep.subr.bf16.mxu0 %v3148
    %4972 = vmatpush1.bf16.msra.mxu0 %v3147
    %4973 = vmatprep.subr.bf16.mxu0 %v3152
    %4974 = vmatpush1.bf16.msra.mxu0 %v3151
    %4975 = vmatprep.subr.bf16.mxu0 %v3156
    %4976 = vmatpush1.bf16.msra.mxu0 %v3155
    %4977 = vmatprep.subr.bf16.mxu0 %v3160
    %4978 = vmatpush1.bf16.msra.mxu0 %v3159
    %4979 = vmatprep.subr.bf16.mxu0 %v3164
    %4980 = vmatpush1.bf16.msra.mxu0 %v3163
    %4981 = vmatprep.subr.bf16.mxu0 %v3168
    %4982 = vmatpush1.bf16.msra.mxu0 %v3167
    %4983 = vmatprep.subr.bf16.mxu0 %v3172
    %4984 = vmatpush1.bf16.msra.mxu0 %v3171
    %4985 = vmatprep.subr.bf16.mxu0 %v3176
    %4986 = vmatpush1.bf16.msra.mxu0 %v3175
    %4987 = vmatprep.subr.bf16.mxu0 %v3180
    %4988 = vmatpush1.bf16.msra.mxu0 %v3179
    %4989 = vmatprep.subr.bf16.mxu0 %v3184
    %4990 = vmatpush1.bf16.msra.mxu0 %v3183
    %4991 = vmatprep.subr.bf16.mxu0 %v3188
    %4992 = vmatpush1.bf16.msra.mxu0 %v3187
    %4993 = vmatprep.subr.bf16.mxu0 %v3192
    %4994 = vmatpush1.bf16.msra.mxu0 %v3191
    %4995 = vmatprep.subr.bf16.mxu0 %v3196
    %4996 = vmatpush1.bf16.msra.mxu0 %v3195
    %4997 = vmatprep.mubr.bf16.mxu0 %v929
    %4998 = vmatmul.mubr.bf16.gmra.mrb[0].mxu0 %v928
    %v4999 = vpop.f32.mrb[0].mxu0
    %v5000 = vadd.f32 %v4959, %v4999
    %v5001 = vpop.f32.mrb[0].mxu0
    %v5002 = vadd.f32 %v4961, %v5001
    %v5003 = vpop.f32.mrb[0].mxu0
    %v5004 = vpop.f32.mrb[0].mxu0
    %5005 = vdwg.mxu0
    %5006 = vmatprep.subr.bf16.mxu0 %v3200
    %5007 = vmatpush1.bf16.msra.mxu0 %v3199
    %5008 = vmatprep.subr.bf16.mxu0 %v3204
    %5009 = vmatpush1.bf16.msra.mxu0 %v3203
    %5010 = vmatprep.subr.bf16.mxu0 %v3208
    %5011 = vmatpush1.bf16.msra.mxu0 %v3207
    %5012 = vmatprep.subr.bf16.mxu0 %v3212
    %5013 = vmatpush1.bf16.msra.mxu0 %v3211
    %5014 = vmatprep.subr.bf16.mxu0 %v3216
    %5015 = vmatpush1.bf16.msra.mxu0 %v3215
    %5016 = vmatprep.subr.bf16.mxu0 %v3220
    %5017 = vmatpush1.bf16.msra.mxu0 %v3219
    %5018 = vmatprep.subr.bf16.mxu0 %v3224
    %5019 = vmatpush1.bf16.msra.mxu0 %v3223
    %5020 = vmatprep.subr.bf16.mxu0 %v3228
    %5021 = vmatpush1.bf16.msra.mxu0 %v3227
    %5022 = vmatprep.subr.bf16.mxu0 %v3232
    %5023 = vmatpush1.bf16.msra.mxu0 %v3231
    %5024 = vmatprep.subr.bf16.mxu0 %v3236
    %5025 = vmatpush1.bf16.msra.mxu0 %v3235
    %5026 = vmatprep.subr.bf16.mxu0 %v3240
    %5027 = vmatpush1.bf16.msra.mxu0 %v3239
    %5028 = vmatprep.subr.bf16.mxu0 %v3244
    %5029 = vmatpush1.bf16.msra.mxu0 %v3243
    %5030 = vmatprep.subr.bf16.mxu0 %v3248
    %5031 = vmatpush1.bf16.msra.mxu0 %v3247
    %5032 = vmatprep.subr.bf16.mxu0 %v3252
    %5033 = vmatpush1.bf16.msra.mxu0 %v3251
    %5034 = vmatprep.subr.bf16.mxu0 %v3256
    %5035 = vmatpush1.bf16.msra.mxu0 %v3255
    %5036 = vmatprep.subr.bf16.mxu0 %v3260
    %5037 = vmatpush1.bf16.msra.mxu0 %v3259
    %5038 = vmatprep.mubr.bf16.mxu0 %v931
    %5039 = vmatmul.mubr.bf16.gmra.mrb[0].mxu0 %v930
    %v5040 = vpop.f32.mrb[0].mxu0
    %v5041 = vadd.f32 %v5000, %v5040
    %v5042 = vpop.f32.mrb[0].mxu0
    %v5043 = vadd.f32 %v5002, %v5042
    %v5044 = vpop.f32.mrb[0].mxu0
    %v5045 = vpop.f32.mrb[0].mxu0
    %5046 = vdwg.mxu0
    %5047 = vmatprep.subr.bf16.mxu0 %v3264
    %5048 = vmatpush1.bf16.msra.mxu0 %v3263
    %5049 = vmatprep.subr.bf16.mxu0 %v3268
    %5050 = vmatpush1.bf16.msra.mxu0 %v3267
    %5051 = vmatprep.subr.bf16.mxu0 %v3272
    %5052 = vmatpush1.bf16.msra.mxu0 %v3271
    %5053 = vmatprep.subr.bf16.mxu0 %v3276
    %5054 = vmatpush1.bf16.msra.mxu0 %v3275
    %5055 = vmatprep.subr.bf16.mxu0 %v3280
    %5056 = vmatpush1.bf16.msra.mxu0 %v3279
    %5057 = vmatprep.subr.bf16.mxu0 %v3284
    %5058 = vmatpush1.bf16.msra.mxu0 %v3283
    %5059 = vmatprep.subr.bf16.mxu0 %v3288
    %5060 = vmatpush1.bf16.msra.mxu0 %v3287
    %5061 = vmatprep.subr.bf16.mxu0 %v3292
    %5062 = vmatpush1.bf16.msra.mxu0 %v3291
    %5063 = vmatprep.subr.bf16.mxu0 %v3296
    %5064 = vmatpush1.bf16.msra.mxu0 %v3295
    %5065 = vmatprep.subr.bf16.mxu0 %v3300
    %5066 = vmatpush1.bf16.msra.mxu0 %v3299
    %5067 = vmatprep.subr.bf16.mxu0 %v3304
    %5068 = vmatpush1.bf16.msra.mxu0 %v3303
    %5069 = vmatprep.subr.bf16.mxu0 %v3308
    %5070 = vmatpush1.bf16.msra.mxu0 %v3307
    %5071 = vmatprep.subr.bf16.mxu0 %v3312
    %5072 = vmatpush1.bf16.msra.mxu0 %v3311
    %5073 = vmatprep.subr.bf16.mxu0 %v3316
    %5074 = vmatpush1.bf16.msra.mxu0 %v3315
    %5075 = vmatprep.subr.bf16.mxu0 %v3320
    %5076 = vmatpush1.bf16.msra.mxu0 %v3319
    %5077 = vmatprep.subr.bf16.mxu0 %v3324
    %5078 = vmatpush1.bf16.msra.mxu0 %v3323
    %5079 = vmatprep.mubr.bf16.mxu0 %v933
    %5080 = vmatmul.mubr.bf16.gmra.mrb[0].mxu0 %v932
    %v5081 = vpop.f32.mrb[0].mxu0
    %v5082 = vadd.f32 %v5041, %v5081
    %v5083 = vpop.f32.mrb[0].mxu0
    %v5084 = vadd.f32 %v5043, %v5083
    %v5085 = vpop.f32.mrb[0].mxu0
    %v5086 = vpop.f32.mrb[0].mxu0
    %5087 = vdwg.mxu0
    %5088 = vmatprep.subr.bf16.mxu0 %v3328
    %5089 = vmatpush1.bf16.msra.mxu0 %v3327
    %5090 = vmatprep.subr.bf16.mxu0 %v3332
    %5091 = vmatpush1.bf16.msra.mxu0 %v3331
    %5092 = vmatprep.subr.bf16.mxu0 %v3336
    %5093 = vmatpush1.bf16.msra.mxu0 %v3335
    %5094 = vmatprep.subr.bf16.mxu0 %v3340
    %5095 = vmatpush1.bf16.msra.mxu0 %v3339
    %5096 = vmatprep.subr.bf16.mxu0 %v3344
    %5097 = vmatpush1.bf16.msra.mxu0 %v3343
    %5098 = vmatprep.subr.bf16.mxu0 %v3348
    %5099 = vmatpush1.bf16.msra.mxu0 %v3347
    %5100 = vmatprep.subr.bf16.mxu0 %v3352
    %5101 = vmatpush1.bf16.msra.mxu0 %v3351
    %5102 = vmatprep.subr.bf16.mxu0 %v3356
    %5103 = vmatpush1.bf16.msra.mxu0 %v3355
    %5104 = vmatprep.subr.bf16.mxu0 %v3360
    %5105 = vmatpush1.bf16.msra.mxu0 %v3359
    %5106 = vmatprep.subr.bf16.mxu0 %v3364
    %5107 = vmatpush1.bf16.msra.mxu0 %v3363
    %5108 = vmatprep.subr.bf16.mxu0 %v3368
    %5109 = vmatpush1.bf16.msra.mxu0 %v3367
    %5110 = vmatprep.subr.bf16.mxu0 %v3372
    %5111 = vmatpush1.bf16.msra.mxu0 %v3371
    %5112 = vmatprep.subr.bf16.mxu0 %v3376
    %5113 = vmatpush1.bf16.msra.mxu0 %v3375
    %5114 = vmatprep.subr.bf16.mxu0 %v3380
    %5115 = vmatpush1.bf16.msra.mxu0 %v3379
    %5116 = vmatprep.subr.bf16.mxu0 %v3384
    %5117 = vmatpush1.bf16.msra.mxu0 %v3383
    %5118 = vmatprep.subr.bf16.mxu0 %v3388
    %5119 = vmatpush1.bf16.msra.mxu0 %v3387
    %5120 = vmatprep.mubr.bf16.mxu0 %v935
    %5121 = vmatmul.mubr.bf16.gmra.mrb[0].mxu0 %v934
    %v5122 = vpop.f32.mrb[0].mxu0
    %v5123 = vadd.f32 %v5082, %v5122
    %v5124 = vpop.f32.mrb[0].mxu0
    %v5125 = vadd.f32 %v5084, %v5124
    %v5126 = vpop.f32.mrb[0].mxu0
    %v5127 = vpop.f32.mrb[0].mxu0
    %5128 = vdwg.mxu0
    %5129 = vmatprep.subr.bf16.mxu0 %v3392
    %5130 = vmatpush1.bf16.msra.mxu0 %v3391
    %5131 = vmatprep.subr.bf16.mxu0 %v3396
    %5132 = vmatpush1.bf16.msra.mxu0 %v3395
    %5133 = vmatprep.subr.bf16.mxu0 %v3400
    %5134 = vmatpush1.bf16.msra.mxu0 %v3399
    %5135 = vmatprep.subr.bf16.mxu0 %v3404
    %5136 = vmatpush1.bf16.msra.mxu0 %v3403
    %5137 = vmatprep.subr.bf16.mxu0 %v3408
    %5138 = vmatpush1.bf16.msra.mxu0 %v3407
    %5139 = vmatprep.subr.bf16.mxu0 %v3412
    %5140 = vmatpush1.bf16.msra.mxu0 %v3411
    %5141 = vmatprep.subr.bf16.mxu0 %v3416
    %5142 = vmatpush1.bf16.msra.mxu0 %v3415
    %5143 = vmatprep.subr.bf16.mxu0 %v3420
    %5144 = vmatpush1.bf16.msra.mxu0 %v3419
    %5145 = vmatprep.subr.bf16.mxu0 %v3424
    %5146 = vmatpush1.bf16.msra.mxu0 %v3423
    %5147 = vmatprep.subr.bf16.mxu0 %v3428
    %5148 = vmatpush1.bf16.msra.mxu0 %v3427
    %5149 = vmatprep.subr.bf16.mxu0 %v3432
    %5150 = vmatpush1.bf16.msra.mxu0 %v3431
    %5151 = vmatprep.subr.bf16.mxu0 %v3436
    %5152 = vmatpush1.bf16.msra.mxu0 %v3435
    %5153 = vmatprep.subr.bf16.mxu0 %v3440
    %5154 = vmatpush1.bf16.msra.mxu0 %v3439
    %5155 = vmatprep.subr.bf16.mxu0 %v3444
    %5156 = vmatpush1.bf16.msra.mxu0 %v3443
    %5157 = vmatprep.subr.bf16.mxu0 %v3448
    %5158 = vmatpush1.bf16.msra.mxu0 %v3447
    %5159 = vmatprep.subr.bf16.mxu0 %v3452
    %5160 = vmatpush1.bf16.msra.mxu0 %v3451
    %5161 = vmatprep.mubr.bf16.mxu0 %v937
    %5162 = vmatmul.mubr.bf16.gmra.mrb[0].mxu0 %v936
    %v5163 = vpop.f32.mrb[0].mxu0
    %v5164 = vadd.f32 %v5123, %v5163
    %v5165 = vpop.f32.mrb[0].mxu0
    %v5166 = vadd.f32 %v5125, %v5165
    %v5167 = vpop.f32.mrb[0].mxu0
    %v5168 = vpop.f32.mrb[0].mxu0
    %5169 = vdwg.mxu0
    %5170 = vmatprep.subr.bf16.mxu0 %v3456
    %5171 = vmatpush1.bf16.msra.mxu0 %v3455
    %5172 = vmatprep.subr.bf16.mxu0 %v3460
    %5173 = vmatpush1.bf16.msra.mxu0 %v3459
    %5174 = vmatprep.subr.bf16.mxu0 %v3464
    %5175 = vmatpush1.bf16.msra.mxu0 %v3463
    %5176 = vmatprep.subr.bf16.mxu0 %v3468
    %5177 = vmatpush1.bf16.msra.mxu0 %v3467
    %5178 = vmatprep.subr.bf16.mxu0 %v3472
    %5179 = vmatpush1.bf16.msra.mxu0 %v3471
    %5180 = vmatprep.subr.bf16.mxu0 %v3476
    %5181 = vmatpush1.bf16.msra.mxu0 %v3475
    %5182 = vmatprep.subr.bf16.mxu0 %v3480
    %5183 = vmatpush1.bf16.msra.mxu0 %v3479
    %5184 = vmatprep.subr.bf16.mxu0 %v3484
    %5185 = vmatpush1.bf16.msra.mxu0 %v3483
    %5186 = vmatprep.subr.bf16.mxu0 %v3488
    %5187 = vmatpush1.bf16.msra.mxu0 %v3487
    %5188 = vmatprep.subr.bf16.mxu0 %v3492
    %5189 = vmatpush1.bf16.msra.mxu0 %v3491
    %5190 = vmatprep.subr.bf16.mxu0 %v3496
    %5191 = vmatpush1.bf16.msra.mxu0 %v3495
    %5192 = vmatprep.subr.bf16.mxu0 %v3500
    %5193 = vmatpush1.bf16.msra.mxu0 %v3499
    %5194 = vmatprep.subr.bf16.mxu0 %v3504
    %5195 = vmatpush1.bf16.msra.mxu0 %v3503
    %5196 = vmatprep.subr.bf16.mxu0 %v3508
    %5197 = vmatpush1.bf16.msra.mxu0 %v3507
    %5198 = vmatprep.subr.bf16.mxu0 %v3512
    %5199 = vmatpush1.bf16.msra.mxu0 %v3511
    %5200 = vmatprep.subr.bf16.mxu0 %v3516
    %5201 = vmatpush1.bf16.msra.mxu0 %v3515
    %5202 = vmatprep.mubr.bf16.mxu0 %v939
    %5203 = vmatmul.mubr.bf16.gmra.mrb[0].mxu0 %v938
    %v5204 = vpop.f32.mrb[0].mxu0
    %v5205 = vadd.f32 %v5164, %v5204
    %v5206 = vpop.f32.mrb[0].mxu0
    %v5207 = vadd.f32 %v5166, %v5206
    %v5208 = vpop.f32.mrb[0].mxu0
    %v5209 = vpop.f32.mrb[0].mxu0
    %5210 = vdwg.mxu0
    %5211 = vmatprep.subr.bf16.mxu0 %v3520
    %5212 = vmatpush1.bf16.msra.mxu0 %v3519
    %5213 = vmatprep.subr.bf16.mxu0 %v3524
    %5214 = vmatpush1.bf16.msra.mxu0 %v3523
    %5215 = vmatprep.subr.bf16.mxu0 %v3528
    %5216 = vmatpush1.bf16.msra.mxu0 %v3527
    %5217 = vmatprep.subr.bf16.mxu0 %v3532
    %5218 = vmatpush1.bf16.msra.mxu0 %v3531
    %5219 = vmatprep.subr.bf16.mxu0 %v3536
    %5220 = vmatpush1.bf16.msra.mxu0 %v3535
    %5221 = vmatprep.subr.bf16.mxu0 %v3540
    %5222 = vmatpush1.bf16.msra.mxu0 %v3539
    %5223 = vmatprep.subr.bf16.mxu0 %v3544
    %5224 = vmatpush1.bf16.msra.mxu0 %v3543
    %5225 = vmatprep.subr.bf16.mxu0 %v3548
    %5226 = vmatpush1.bf16.msra.mxu0 %v3547
    %5227 = vmatprep.subr.bf16.mxu0 %v3552
    %5228 = vmatpush1.bf16.msra.mxu0 %v3551
    %5229 = vmatprep.subr.bf16.mxu0 %v3556
    %5230 = vmatpush1.bf16.msra.mxu0 %v3555
    %5231 = vmatprep.subr.bf16.mxu0 %v3560
    %5232 = vmatpush1.bf16.msra.mxu0 %v3559
    %5233 = vmatprep.subr.bf16.mxu0 %v3564
    %5234 = vmatpush1.bf16.msra.mxu0 %v3563
    %5235 = vmatprep.subr.bf16.mxu0 %v3568
    %5236 = vmatpush1.bf16.msra.mxu0 %v3567
    %5237 = vmatprep.subr.bf16.mxu0 %v3572
    %5238 = vmatpush1.bf16.msra.mxu0 %v3571
    %5239 = vmatprep.subr.bf16.mxu0 %v3576
    %5240 = vmatpush1.bf16.msra.mxu0 %v3575
    %5241 = vmatprep.subr.bf16.mxu0 %v3580
    %5242 = vmatpush1.bf16.msra.mxu0 %v3579
    %5243 = vmatprep.mubr.bf16.mxu0 %v941
    %5244 = vmatmul.mubr.bf16.gmra.mrb[0].mxu0 %v940
    %v5245 = vpop.f32.mrb[0].mxu0
    %v5246 = vadd.f32 %v5205, %v5245
    %v5247 = vpop.f32.mrb[0].mxu0
    %v5248 = vadd.f32 %v5207, %v5247
    %v5249 = vpop.f32.mrb[0].mxu0
    %v5250 = vpop.f32.mrb[0].mxu0
    %5251 = vdwg.mxu0
    %5252 = vmatprep.subr.bf16.mxu0 %v3584
    %5253 = vmatpush1.bf16.msra.mxu0 %v3583
    %5254 = vmatprep.subr.bf16.mxu0 %v3588
    %5255 = vmatpush1.bf16.msra.mxu0 %v3587
    %5256 = vmatprep.subr.bf16.mxu0 %v3592
    %5257 = vmatpush1.bf16.msra.mxu0 %v3591
    %5258 = vmatprep.subr.bf16.mxu0 %v3596
    %5259 = vmatpush1.bf16.msra.mxu0 %v3595
    %5260 = vmatprep.subr.bf16.mxu0 %v3600
    %5261 = vmatpush1.bf16.msra.mxu0 %v3599
    %5262 = vmatprep.subr.bf16.mxu0 %v3604
    %5263 = vmatpush1.bf16.msra.mxu0 %v3603
    %5264 = vmatprep.subr.bf16.mxu0 %v3608
    %5265 = vmatpush1.bf16.msra.mxu0 %v3607
    %5266 = vmatprep.subr.bf16.mxu0 %v3612
    %5267 = vmatpush1.bf16.msra.mxu0 %v3611
    %5268 = vmatprep.subr.bf16.mxu0 %v3616
    %5269 = vmatpush1.bf16.msra.mxu0 %v3615
    %5270 = vmatprep.subr.bf16.mxu0 %v3620
    %5271 = vmatpush1.bf16.msra.mxu0 %v3619
    %5272 = vmatprep.subr.bf16.mxu0 %v3624
    %5273 = vmatpush1.bf16.msra.mxu0 %v3623
    %5274 = vmatprep.subr.bf16.mxu0 %v3628
    %5275 = vmatpush1.bf16.msra.mxu0 %v3627
    %5276 = vmatprep.subr.bf16.mxu0 %v3632
    %5277 = vmatpush1.bf16.msra.mxu0 %v3631
    %5278 = vmatprep.subr.bf16.mxu0 %v3636
    %5279 = vmatpush1.bf16.msra.mxu0 %v3635
    %5280 = vmatprep.subr.bf16.mxu0 %v3640
    %5281 = vmatpush1.bf16.msra.mxu0 %v3639
    %5282 = vmatprep.subr.bf16.mxu0 %v3644
    %5283 = vmatpush1.bf16.msra.mxu0 %v3643
    %5284 = vmatprep.mubr.bf16.mxu0 %v943
    %5285 = vmatmul.mubr.bf16.gmra.mrb[0].mxu0 %v942
    %v5286 = vpop.f32.mrb[0].mxu0
    %v5287 = vadd.f32 %v5246, %v5286
    %v5288 = vpop.f32.mrb[0].mxu0
    %v5289 = vadd.f32 %v5248, %v5288
    %v5290 = vpop.f32.mrb[0].mxu0
    %v5291 = vpop.f32.mrb[0].mxu0
    %5292 = vdwg.mxu0
    %5293 = vmatprep.subr.bf16.mxu0 %v3648
    %5294 = vmatpush1.bf16.msra.mxu0 %v3647
    %5295 = vmatprep.subr.bf16.mxu0 %v3652
    %5296 = vmatpush1.bf16.msra.mxu0 %v3651
    %5297 = vmatprep.subr.bf16.mxu0 %v3656
    %5298 = vmatpush1.bf16.msra.mxu0 %v3655
    %5299 = vmatprep.subr.bf16.mxu0 %v3660
    %5300 = vmatpush1.bf16.msra.mxu0 %v3659
    %5301 = vmatprep.subr.bf16.mxu0 %v3664
    %5302 = vmatpush1.bf16.msra.mxu0 %v3663
    %5303 = vmatprep.subr.bf16.mxu0 %v3668
    %5304 = vmatpush1.bf16.msra.mxu0 %v3667
    %5305 = vmatprep.subr.bf16.mxu0 %v3672
    %5306 = vmatpush1.bf16.msra.mxu0 %v3671
    %5307 = vmatprep.subr.bf16.mxu0 %v3676
    %5308 = vmatpush1.bf16.msra.mxu0 %v3675
    %5309 = vmatprep.subr.bf16.mxu0 %v3680
    %5310 = vmatpush1.bf16.msra.mxu0 %v3679
    %5311 = vmatprep.subr.bf16.mxu0 %v3684
    %5312 = vmatpush1.bf16.msra.mxu0 %v3683
    %5313 = vmatprep.subr.bf16.mxu0 %v3688
    %5314 = vmatpush1.bf16.msra.mxu0 %v3687
    %5315 = vmatprep.subr.bf16.mxu0 %v3692
    %5316 = vmatpush1.bf16.msra.mxu0 %v3691
    %5317 = vmatprep.subr.bf16.mxu0 %v3696
    %5318 = vmatpush1.bf16.msra.mxu0 %v3695
    %5319 = vmatprep.subr.bf16.mxu0 %v3700
    %5320 = vmatpush1.bf16.msra.mxu0 %v3699
    %5321 = vmatprep.subr.bf16.mxu0 %v3704
    %5322 = vmatpush1.bf16.msra.mxu0 %v3703
    %5323 = vmatprep.subr.bf16.mxu0 %v3708
    %5324 = vmatpush1.bf16.msra.mxu0 %v3707
    %5325 = vmatprep.mubr.bf16.mxu0 %v945
    %5326 = vmatmul.mubr.bf16.gmra.mrb[0].mxu0 %v944
    %v5327 = vpop.f32.mrb[0].mxu0
    %v5328 = vadd.f32 %v5287, %v5327
    %v5329 = vpop.f32.mrb[0].mxu0
    %v5330 = vadd.f32 %v5289, %v5329
    %v5331 = vpop.f32.mrb[0].mxu0
    %v5332 = vpop.f32.mrb[0].mxu0
    %5333 = vdwg.mxu0
    %5334 = vmatprep.subr.bf16.mxu0 %v3712
    %5335 = vmatpush1.bf16.msra.mxu0 %v3711
    %5336 = vmatprep.subr.bf16.mxu0 %v3716
    %5337 = vmatpush1.bf16.msra.mxu0 %v3715
    %5338 = vmatprep.subr.bf16.mxu0 %v3720
    %5339 = vmatpush1.bf16.msra.mxu0 %v3719
    %5340 = vmatprep.subr.bf16.mxu0 %v3724
    %5341 = vmatpush1.bf16.msra.mxu0 %v3723
    %5342 = vmatprep.subr.bf16.mxu0 %v3728
    %5343 = vmatpush1.bf16.msra.mxu0 %v3727
    %5344 = vmatprep.subr.bf16.mxu0 %v3732
    %5345 = vmatpush1.bf16.msra.mxu0 %v3731
    %5346 = vmatprep.subr.bf16.mxu0 %v3736
    %5347 = vmatpush1.bf16.msra.mxu0 %v3735
    %5348 = vmatprep.subr.bf16.mxu0 %v3740
    %5349 = vmatpush1.bf16.msra.mxu0 %v3739
    %5350 = vmatprep.subr.bf16.mxu0 %v3744
    %5351 = vmatpush1.bf16.msra.mxu0 %v3743
    %5352 = vmatprep.subr.bf16.mxu0 %v3748
    %5353 = vmatpush1.bf16.msra.mxu0 %v3747
    %5354 = vmatprep.subr.bf16.mxu0 %v3752
    %5355 = vmatpush1.bf16.msra.mxu0 %v3751
    %5356 = vmatprep.subr.bf16.mxu0 %v3756
    %5357 = vmatpush1.bf16.msra.mxu0 %v3755
    %5358 = vmatprep.subr.bf16.mxu0 %v3760
    %5359 = vmatpush1.bf16.msra.mxu0 %v3759
    %5360 = vmatprep.subr.bf16.mxu0 %v3764
    %5361 = vmatpush1.bf16.msra.mxu0 %v3763
    %5362 = vmatprep.subr.bf16.mxu0 %v3768
    %5363 = vmatpush1.bf16.msra.mxu0 %v3767
    %5364 = vmatprep.subr.bf16.mxu0 0
    %5365 = vmatpush1.bf16.msra.mxu0 0
    %5366 = vmatprep.mubr.bf16.mxu0 %v4471
    %5367 = vmatmul.mubr.bf16.gmra.mrb[0].mxu0 %v946
    %v5368 = vpop.f32.mrb[0].mxu0
    %v5369 = vadd.f32 %v5328, %v5368
    %v5370 = vpop.f32.mrb[0].mxu0
    %v5371 = vadd.f32 %v5330, %v5370
    %v5372 = vpop.f32.mrb[0].mxu0
    %v5373 = vpop.f32.mrb[0].mxu0
    %5374 = vdwg.mxu0
    %s5375 = sld [smem:[#allocation2]]
    %vm5376 = vcmp.ge.f32.partialorder %v4918, 0.0
    %vm5377 = vcmp.ge.f32.partialorder %v4920, 0.0
    %vm5378 = vcmp.ge.f32.partialorder %v5369, 0.0
    %vm5379 = vcmp.ge.f32.partialorder %v5371, 0.0
    %v5380 = vstv %s5375
    %v5381 = vmul.f32 %v5380, %v4918
    %v5382 = vmul.f32 %v5380, %v4920
    %v5383 = vmul.f32 %v5380, %v5369
    %v5384 = vmul.f32 %v5380, %v5371
    %v5385 = vsel %vm5376, %v4918, %v5381
    %v5386 = vsel %vm5377, %v4920, %v5382
    %v5387 = vsel %vm5378, %v5369, %v5383
    %v5388 = vsel %vm5379, %v5371, %v5384
    %v5389 = vpack.c.bf16 %v5385, %v5385
    %v5390 = vpack.c.bf16 %v5386, %v5386
    %v5391 = vpack.c.bf16 %v5387, %v5387
    %v5392 = vpack.c.bf16 %v5388, %v5388
    %v5393 = vld [vmem:[#allocation10] sm:$0xff]
    %v5394 = vld [vmem:[#allocation10 + $0x8] sm:$0xff]
    %v5395 = vld [vmem:[#allocation10 + $0x10] sm:$0xff]
    %v5396 = vld [vmem:[#allocation10 + $0x18] sm:$0xff]
    %v5397 = vld [vmem:[#allocation10 + $0x20] sm:$0xff]
    %v5398 = vld [vmem:[#allocation10 + $0x28] sm:$0xff]
    %v5399 = vld [vmem:[#allocation10 + $0x30] sm:$0xff]
    %v5400 = vld [vmem:[#allocation10 + $0x38] sm:$0xff]
    %v5401 = vld [vmem:[#allocation10 + $0x40] sm:$0xff]
    %v5402 = vld [vmem:[#allocation10 + $0x48] sm:$0xff]
    %v5403 = vld [vmem:[#allocation10 + $0x50] sm:$0xff]
    %v5404 = vld [vmem:[#allocation10 + $0x58] sm:$0xff]
    %v5405 = vld [vmem:[#allocation10 + $0x60] sm:$0xff]
    %v5406 = vld [vmem:[#allocation10 + $0x68] sm:$0xff]
    %v5407 = vld [vmem:[#allocation10 + $0x70] sm:$0xff]
    %v5408 = vld [vmem:[#allocation10 + $0x78] sm:$0xff]
    %v5409 = vld [vmem:[#allocation10 + $0x80] sm:$0xff]
    %v5410 = vld [vmem:[#allocation10 + $0x88] sm:$0xff]
    %v5411 = vld [vmem:[#allocation10 + $0x90] sm:$0xff]
    %v5412 = vld [vmem:[#allocation10 + $0x98] sm:$0xff]
    %v5413 = vld [vmem:[#allocation10 + $0xa0] sm:$0xff]
    %v5414 = vld [vmem:[#allocation10 + $0xa8] sm:$0xff]
    %v5415 = vld [vmem:[#allocation10 + $0xb0] sm:$0xff]
    %v5416 = vld [vmem:[#allocation10 + $0xb8] sm:$0xff]
    %v5417 = vld [vmem:[#allocation10 + $0xc0] sm:$0xff]
    %v5418 = vld [vmem:[#allocation10 + $0xc8] sm:$0xff]
    %v5419 = vld [vmem:[#allocation10 + $0xd0] sm:$0xff]
    %v5420 = vld [vmem:[#allocation10 + $0xd8] sm:$0xff]
    %v5421 = vld [vmem:[#allocation10 + $0xe0] sm:$0xff]
    %v5422 = vld [vmem:[#allocation10 + $0xe8] sm:$0xff]
    %v5423 = vld [vmem:[#allocation10 + $0xf0] sm:$0xff]
    %v5424 = vld [vmem:[#allocation10 + $0xf8] sm:$0xff]
    %v5425 = vld [vmem:[#allocation10 + $0x100] sm:$0xff]
    %v5426 = vld [vmem:[#allocation10 + $0x108] sm:$0xff]
    %v5427 = vld [vmem:[#allocation10 + $0x110] sm:$0xff]
    %v5428 = vld [vmem:[#allocation10 + $0x118] sm:$0xff]
    %v5429 = vld [vmem:[#allocation10 + $0x120] sm:$0xff]
    %v5430 = vld [vmem:[#allocation10 + $0x128] sm:$0xff]
    %v5431 = vld [vmem:[#allocation10 + $0x130] sm:$0xff]
    %v5432 = vld [vmem:[#allocation10 + $0x138] sm:$0xff]
    %v5433 = vld [vmem:[#allocation10 + $0x140] sm:$0xff]
    %v5434 = vld [vmem:[#allocation10 + $0x148] sm:$0xff]
    %v5435 = vld [vmem:[#allocation10 + $0x150] sm:$0xff]
    %v5436 = vld [vmem:[#allocation10 + $0x158] sm:$0xff]
    %v5437 = vld [vmem:[#allocation10 + $0x160] sm:$0xff]
    %v5438 = vld [vmem:[#allocation10 + $0x168] sm:$0xff]
    %v5439 = vld [vmem:[#allocation10 + $0x170] sm:$0xff]
    %v5440 = vld [vmem:[#allocation10 + $0x178] sm:$0xff]
    %v5441 = vld [vmem:[#allocation10 + $0x180] sm:$0xff]
    %v5442 = vld [vmem:[#allocation10 + $0x188] sm:$0xff]
    %v5443 = vld [vmem:[#allocation10 + $0x190] sm:$0xff]
    %v5444 = vld [vmem:[#allocation10 + $0x198] sm:$0xff]
    %v5445 = vld [vmem:[#allocation10 + $0x1a0] sm:$0xff]
    %v5446 = vld [vmem:[#allocation10 + $0x1a8] sm:$0xff]
    %v5447 = vld [vmem:[#allocation10 + $0x1b0] sm:$0xff]
    %v5448 = vld [vmem:[#allocation10 + $0x1b8] sm:$0xff]
    %v5449 = vld [vmem:[#allocation10 + $0x1c0] sm:$0xff]
    %v5450 = vld [vmem:[#allocation10 + $0x1c8] sm:$0xff]
    %v5451 = vld [vmem:[#allocation10 + $0x1d0] sm:$0xff]
    %v5452 = vld [vmem:[#allocation10 + $0x1d8] sm:$0xff]
    %v5453 = vld [vmem:[#allocation10 + $0x1e0] sm:$0xff]
    %v5454 = vld [vmem:[#allocation10 + $0x1e8] sm:$0xff]
    %v5455 = vld [vmem:[#allocation10 + $0x1f0] sm:$0xff]
    %v5456 = vld [vmem:[#allocation10 + $0x1f8] sm:$0xff]
    %v5457 = vld [vmem:[#allocation12] sm:$0x3]
    %v5459 = vlaneseq
    %v5460 = vshrl.u32 %v5459, 7
    %v5461 = vsub.s32 0, %v5460
    %v5462 = vrot.slane %v5457, %v5461
    %v5463 = vlaneseq
    %v5464 = vshrl.u32 %v5463, 7
    %v5465 = vsub.s32 1, %v5464
    %v5466 = vrot.slane %v5457, %v5465
    %v5533 = vunpack.c.l.b16 %v5393
    %v5534 = vunpack.c.h.b16 %v5393
    %v5535 = vunpack.c.l.b16 %v5394
    %v5536 = vunpack.c.h.b16 %v5394
    %v5537 = vunpack.c.l.b16 %v5395
    %v5538 = vunpack.c.h.b16 %v5395
    %v5539 = vunpack.c.l.b16 %v5396
    %v5540 = vunpack.c.h.b16 %v5396
    %v5541 = vunpack.c.l.b16 %v5397
    %v5542 = vunpack.c.h.b16 %v5397
    %v5543 = vunpack.c.l.b16 %v5398
    %v5544 = vunpack.c.h.b16 %v5398
    %v5545 = vunpack.c.l.b16 %v5399
    %v5546 = vunpack.c.h.b16 %v5399
    %v5547 = vunpack.c.l.b16 %v5400
    %v5548 = vunpack.c.h.b16 %v5400
    %v5549 = vunpack.c.l.b16 %v5401
    %v5550 = vunpack.c.h.b16 %v5401
    %v5551 = vunpack.c.l.b16 %v5402
    %v5552 = vunpack.c.h.b16 %v5402
    %v5553 = vunpack.c.l.b16 %v5403
    %v5554 = vunpack.c.h.b16 %v5403
    %v5555 = vunpack.c.l.b16 %v5404
    %v5556 = vunpack.c.h.b16 %v5404
    %v5557 = vunpack.c.l.b16 %v5405
    %v5558 = vunpack.c.h.b16 %v5405
    %v5559 = vunpack.c.l.b16 %v5406
    %v5560 = vunpack.c.h.b16 %v5406
    %v5561 = vunpack.c.l.b16 %v5407
    %v5562 = vunpack.c.h.b16 %v5407
    %v5563 = vunpack.c.l.b16 %v5408
    %v5564 = vunpack.c.h.b16 %v5408
    %v5565 = vunpack.c.l.b16 %v5409
    %v5566 = vunpack.c.h.b16 %v5409
    %v5567 = vunpack.c.l.b16 %v5410
    %v5568 = vunpack.c.h.b16 %v5410
    %v5569 = vunpack.c.l.b16 %v5411
    %v5570 = vunpack.c.h.b16 %v5411
    %v5571 = vunpack.c.l.b16 %v5412
    %v5572 = vunpack.c.h.b16 %v5412
    %v5573 = vunpack.c.l.b16 %v5413
    %v5574 = vunpack.c.h.b16 %v5413
    %v5575 = vunpack.c.l.b16 %v5414
    %v5576 = vunpack.c.h.b16 %v5414
    %v5577 = vunpack.c.l.b16 %v5415
    %v5578 = vunpack.c.h.b16 %v5415
    %v5579 = vunpack.c.l.b16 %v5416
    %v5580 = vunpack.c.h.b16 %v5416
    %v5581 = vunpack.c.l.b16 %v5417
    %v5582 = vunpack.c.h.b16 %v5417
    %v5583 = vunpack.c.l.b16 %v5418
    %v5584 = vunpack.c.h.b16 %v5418
    %v5585 = vunpack.c.l.b16 %v5419
    %v5586 = vunpack.c.h.b16 %v5419
    %v5587 = vunpack.c.l.b16 %v5420
    %v5588 = vunpack.c.h.b16 %v5420
    %v5589 = vunpack.c.l.b16 %v5421
    %v5590 = vunpack.c.h.b16 %v5421
    %v5591 = vunpack.c.l.b16 %v5422
    %v5592 = vunpack.c.h.b16 %v5422
    %v5593 = vunpack.c.l.b16 %v5423
    %v5594 = vunpack.c.h.b16 %v5423
    %v5595 = vunpack.c.l.b16 %v5424
    %v5596 = vunpack.c.h.b16 %v5424
    %v5597 = vunpack.c.l.b16 %v5425
    %v5598 = vunpack.c.h.b16 %v5425
    %v5599 = vunpack.c.l.b16 %v5426
    %v5600 = vunpack.c.h.b16 %v5426
    %v5601 = vunpack.c.l.b16 %v5427
    %v5602 = vunpack.c.h.b16 %v5427
    %v5603 = vunpack.c.l.b16 %v5428
    %v5604 = vunpack.c.h.b16 %v5428
    %v5605 = vunpack.c.l.b16 %v5429
    %v5606 = vunpack.c.h.b16 %v5429
    %v5607 = vunpack.c.l.b16 %v5430
    %v5608 = vunpack.c.h.b16 %v5430
    %v5609 = vunpack.c.l.b16 %v5431
    %v5610 = vunpack.c.h.b16 %v5431
    %v5611 = vunpack.c.l.b16 %v5432
    %v5612 = vunpack.c.h.b16 %v5432
    %v5613 = vunpack.c.l.b16 %v5433
    %v5614 = vunpack.c.h.b16 %v5433
    %v5615 = vunpack.c.l.b16 %v5434
    %v5616 = vunpack.c.h.b16 %v5434
    %v5617 = vunpack.c.l.b16 %v5435
    %v5618 = vunpack.c.h.b16 %v5435
    %v5619 = vunpack.c.l.b16 %v5436
    %v5620 = vunpack.c.h.b16 %v5436
    %v5621 = vunpack.c.l.b16 %v5437
    %v5622 = vunpack.c.h.b16 %v5437
    %v5623 = vunpack.c.l.b16 %v5438
    %v5624 = vunpack.c.h.b16 %v5438
    %v5625 = vunpack.c.l.b16 %v5439
    %v5626 = vunpack.c.h.b16 %v5439
    %v5627 = vunpack.c.l.b16 %v5440
    %v5628 = vunpack.c.h.b16 %v5440
    %v5629 = vunpack.c.l.b16 %v5441
    %v5630 = vunpack.c.h.b16 %v5441
    %v5631 = vunpack.c.l.b16 %v5442
    %v5632 = vunpack.c.h.b16 %v5442
    %v5633 = vunpack.c.l.b16 %v5443
    %v5634 = vunpack.c.h.b16 %v5443
    %v5635 = vunpack.c.l.b16 %v5444
    %v5636 = vunpack.c.h.b16 %v5444
    %v5637 = vunpack.c.l.b16 %v5445
    %v5638 = vunpack.c.h.b16 %v5445
    %v5639 = vunpack.c.l.b16 %v5446
    %v5640 = vunpack.c.h.b16 %v5446
    %v5641 = vunpack.c.l.b16 %v5447
    %v5642 = vunpack.c.h.b16 %v5447
    %v5643 = vunpack.c.l.b16 %v5448
    %v5644 = vunpack.c.h.b16 %v5448
    %v5645 = vunpack.c.l.b16 %v5449
    %v5646 = vunpack.c.h.b16 %v5449
    %v5647 = vunpack.c.l.b16 %v5450
    %v5648 = vunpack.c.h.b16 %v5450
    %v5649 = vunpack.c.l.b16 %v5451
    %v5650 = vunpack.c.h.b16 %v5451
    %v5651 = vunpack.c.l.b16 %v5452
    %v5652 = vunpack.c.h.b16 %v5452
    %v5653 = vunpack.c.l.b16 %v5453
    %v5654 = vunpack.c.h.b16 %v5453
    %v5655 = vunpack.c.l.b16 %v5454
    %v5656 = vunpack.c.h.b16 %v5454
    %v5657 = vunpack.c.l.b16 %v5455
    %v5658 = vunpack.c.h.b16 %v5455
    %v5659 = vunpack.c.l.b16 %v5456
    %v5660 = vunpack.c.h.b16 %v5456
    %v5661 = vpack.c.b16 %v5535, %v5533
    %v5662 = vpack.c.b16 %v5536, %v5534
    %v5663 = vpack.c.b16 %v5539, %v5537
    %v5664 = vpack.c.b16 %v5540, %v5538
    %v5665 = vpack.c.b16 %v5543, %v5541
    %v5666 = vpack.c.b16 %v5544, %v5542
    %v5667 = vpack.c.b16 %v5547, %v5545
    %v5668 = vpack.c.b16 %v5548, %v5546
    %v5669 = vpack.c.b16 %v5551, %v5549
    %v5670 = vpack.c.b16 %v5552, %v5550
    %v5671 = vpack.c.b16 %v5555, %v5553
    %v5672 = vpack.c.b16 %v5556, %v5554
    %v5673 = vpack.c.b16 %v5559, %v5557
    %v5674 = vpack.c.b16 %v5560, %v5558
    %v5675 = vpack.c.b16 %v5563, %v5561
    %v5676 = vpack.c.b16 %v5564, %v5562
    %v5677 = vpack.c.b16 %v5567, %v5565
    %v5678 = vpack.c.b16 %v5568, %v5566
    %v5679 = vpack.c.b16 %v5571, %v5569
    %v5680 = vpack.c.b16 %v5572, %v5570
    %v5681 = vpack.c.b16 %v5575, %v5573
    %v5682 = vpack.c.b16 %v5576, %v5574
    %v5683 = vpack.c.b16 %v5579, %v5577
    %v5684 = vpack.c.b16 %v5580, %v5578
    %v5685 = vpack.c.b16 %v5583, %v5581
    %v5686 = vpack.c.b16 %v5584, %v5582
    %v5687 = vpack.c.b16 %v5587, %v5585
    %v5688 = vpack.c.b16 %v5588, %v5586
    %v5689 = vpack.c.b16 %v5591, %v5589
    %v5690 = vpack.c.b16 %v5592, %v5590
    %v5691 = vpack.c.b16 %v5595, %v5593
    %v5692 = vpack.c.b16 %v5596, %v5594
    %v5693 = vpack.c.b16 %v5599, %v5597
    %v5694 = vpack.c.b16 %v5600, %v5598
    %v5695 = vpack.c.b16 %v5603, %v5601
    %v5696 = vpack.c.b16 %v5604, %v5602
    %v5697 = vpack.c.b16 %v5607, %v5605
    %v5698 = vpack.c.b16 %v5608, %v5606
    %v5699 = vpack.c.b16 %v5611, %v5609
    %v5700 = vpack.c.b16 %v5612, %v5610
    %v5701 = vpack.c.b16 %v5615, %v5613
    %v5702 = vpack.c.b16 %v5616, %v5614
    %v5703 = vpack.c.b16 %v5619, %v5617
    %v5704 = vpack.c.b16 %v5620, %v5618
    %v5705 = vpack.c.b16 %v5623, %v5621
    %v5706 = vpack.c.b16 %v5624, %v5622
    %v5707 = vpack.c.b16 %v5627, %v5625
    %v5708 = vpack.c.b16 %v5628, %v5626
    %v5709 = vpack.c.b16 %v5631, %v5629
    %v5710 = vpack.c.b16 %v5632, %v5630
    %v5711 = vpack.c.b16 %v5635, %v5633
    %v5712 = vpack.c.b16 %v5636, %v5634
    %v5713 = vpack.c.b16 %v5639, %v5637
    %v5714 = vpack.c.b16 %v5640, %v5638
    %v5715 = vpack.c.b16 %v5643, %v5641
    %v5716 = vpack.c.b16 %v5644, %v5642
    %v5717 = vpack.c.b16 %v5647, %v5645
    %v5718 = vpack.c.b16 %v5648, %v5646
    %v5719 = vpack.c.b16 %v5651, %v5649
    %v5720 = vpack.c.b16 %v5652, %v5650
    %v5721 = vpack.c.b16 %v5655, %v5653
    %v5722 = vpack.c.b16 %v5656, %v5654
    %v5723 = vpack.c.b16 %v5659, %v5657
    %v5724 = vpack.c.b16 %v5660, %v5658
    %5789 = vmatprep.subr.bf16.mxu0 %v5662
    %5790 = vmatpush1.bf16.msra.mxu0 %v5661
    %5791 = vmatprep.subr.bf16.mxu0 %v5664
    %5792 = vmatpush1.bf16.msra.mxu0 %v5663
    %5793 = vmatprep.subr.bf16.mxu0 %v5666
    %5794 = vmatpush1.bf16.msra.mxu0 %v5665
    %5795 = vmatprep.subr.bf16.mxu0 %v5668
    %5796 = vmatpush1.bf16.msra.mxu0 %v5667
    %5797 = vmatprep.subr.bf16.mxu0 %v5670
    %5798 = vmatpush1.bf16.msra.mxu0 %v5669
    %5799 = vmatprep.subr.bf16.mxu0 %v5672
    %5800 = vmatpush1.bf16.msra.mxu0 %v5671
    %5801 = vmatprep.subr.bf16.mxu0 %v5674
    %5802 = vmatpush1.bf16.msra.mxu0 %v5673
    %5803 = vmatprep.subr.bf16.mxu0 %v5676
    %5804 = vmatpush1.bf16.msra.mxu0 %v5675
    %5805 = vmatprep.subr.bf16.mxu0 %v5678
    %5806 = vmatpush1.bf16.msra.mxu0 %v5677
    %5807 = vmatprep.subr.bf16.mxu0 %v5680
    %5808 = vmatpush1.bf16.msra.mxu0 %v5679
    %5809 = vmatprep.subr.bf16.mxu0 %v5682
    %5810 = vmatpush1.bf16.msra.mxu0 %v5681
    %5811 = vmatprep.subr.bf16.mxu0 %v5684
    %5812 = vmatpush1.bf16.msra.mxu0 %v5683
    %5813 = vmatprep.subr.bf16.mxu0 %v5686
    %5814 = vmatpush1.bf16.msra.mxu0 %v5685
    %5815 = vmatprep.subr.bf16.mxu0 %v5688
    %5816 = vmatpush1.bf16.msra.mxu0 %v5687
    %5817 = vmatprep.subr.bf16.mxu0 %v5690
    %5818 = vmatpush1.bf16.msra.mxu0 %v5689
    %5819 = vmatprep.subr.bf16.mxu0 %v5692
    %5820 = vmatpush1.bf16.msra.mxu0 %v5691
    %5821 = vmatprep.mubr.bf16.mxu0 %v5390
    %5822 = vmatmul.mubr.bf16.gmra.mrb[0].mxu0 %v5389
    %v5823 = vpop.f32.mrb[0].mxu0
    %v5824 = vadd.f32 %v5462, %v5823
    %v5825 = vpop.f32.mrb[0].mxu0
    %v5826 = vadd.f32 %v5466, %v5825
    %v5827 = vpop.f32.mrb[0].mxu0
    %v5828 = vpop.f32.mrb[0].mxu0
    %5829 = vdwg.mxu0
    %5830 = vmatprep.subr.bf16.mxu0 %v5694
    %5831 = vmatpush1.bf16.msra.mxu0 %v5693
    %5832 = vmatprep.subr.bf16.mxu0 %v5696
    %5833 = vmatpush1.bf16.msra.mxu0 %v5695
    %5834 = vmatprep.subr.bf16.mxu0 %v5698
    %5835 = vmatpush1.bf16.msra.mxu0 %v5697
    %5836 = vmatprep.subr.bf16.mxu0 %v5700
    %5837 = vmatpush1.bf16.msra.mxu0 %v5699
    %5838 = vmatprep.subr.bf16.mxu0 %v5702
    %5839 = vmatpush1.bf16.msra.mxu0 %v5701
    %5840 = vmatprep.subr.bf16.mxu0 %v5704
    %5841 = vmatpush1.bf16.msra.mxu0 %v5703
    %5842 = vmatprep.subr.bf16.mxu0 %v5706
    %5843 = vmatpush1.bf16.msra.mxu0 %v5705
    %5844 = vmatprep.subr.bf16.mxu0 %v5708
    %5845 = vmatpush1.bf16.msra.mxu0 %v5707
    %5846 = vmatprep.subr.bf16.mxu0 %v5710
    %5847 = vmatpush1.bf16.msra.mxu0 %v5709
    %5848 = vmatprep.subr.bf16.mxu0 %v5712
    %5849 = vmatpush1.bf16.msra.mxu0 %v5711
    %5850 = vmatprep.subr.bf16.mxu0 %v5714
    %5851 = vmatpush1.bf16.msra.mxu0 %v5713
    %5852 = vmatprep.subr.bf16.mxu0 %v5716
    %5853 = vmatpush1.bf16.msra.mxu0 %v5715
    %5854 = vmatprep.subr.bf16.mxu0 %v5718
    %5855 = vmatpush1.bf16.msra.mxu0 %v5717
    %5856 = vmatprep.subr.bf16.mxu0 %v5720
    %5857 = vmatpush1.bf16.msra.mxu0 %v5719
    %5858 = vmatprep.subr.bf16.mxu0 %v5722
    %5859 = vmatpush1.bf16.msra.mxu0 %v5721
    %5860 = vmatprep.subr.bf16.mxu0 %v5724
    %5861 = vmatpush1.bf16.msra.mxu0 %v5723
    %5862 = vmatprep.mubr.bf16.mxu0 %v5392
    %5863 = vmatmul.mubr.bf16.gmra.mrb[0].mxu0 %v5391
    %v5864 = vpop.f32.mrb[0].mxu0
    %v5865 = vadd.f32 %v5824, %v5864
    %v5866 = vpop.f32.mrb[0].mxu0
    %v5867 = vadd.f32 %v5826, %v5866
    %v5868 = vpop.f32.mrb[0].mxu0
    %v5869 = vpop.f32.mrb[0].mxu0
    %5870 = vdwg.mxu0
    %s5871 = sld [smem:[#allocation2 + $0x1]]
    %vm5872 = vcmp.ge.f32.partialorder %v5865, 0.0
    %vm5873 = vcmp.ge.f32.partialorder %v5867, 0.0
    %v5874 = vstv %s5871
    %v5875 = vmul.f32 %v5874, %v5865
    %v5876 = vmul.f32 %v5874, %v5867
    %v5877 = vsel %vm5872, %v5865, %v5875
    %v5878 = vsel %vm5873, %v5867, %v5876
    %v5879 = vpack.c.bf16 %v5877, %v5877
    %v5880 = vpack.c.bf16 %v5878, %v5878
    %v5881 = vld [vmem:[#allocation13] sm:$0xf]
    %v5882 = vld [vmem:[#allocation13 + $0x4] sm:$0xf]
    %v5883 = vld [vmem:[#allocation13 + $0x8] sm:$0xf]
    %v5884 = vld [vmem:[#allocation13 + $0xc] sm:$0xf]
    %v5885 = vld [vmem:[#allocation13 + $0x10] sm:$0xf]
    %v5886 = vld [vmem:[#allocation13 + $0x14] sm:$0xf]
    %v5887 = vld [vmem:[#allocation13 + $0x18] sm:$0xf]
    %v5888 = vld [vmem:[#allocation13 + $0x1c] sm:$0xf]
    %v5889 = vld [vmem:[#allocation13 + $0x20] sm:$0xf]
    %v5890 = vld [vmem:[#allocation13 + $0x24] sm:$0xf]
    %v5891 = vld [vmem:[#allocation13 + $0x28] sm:$0xf]
    %v5892 = vld [vmem:[#allocation13 + $0x2c] sm:$0xf]
    %v5893 = vld [vmem:[#allocation13 + $0x30] sm:$0xf]
    %v5894 = vld [vmem:[#allocation13 + $0x34] sm:$0xf]
    %v5895 = vld [vmem:[#allocation13 + $0x38] sm:$0xf]
    %v5896 = vld [vmem:[#allocation13 + $0x3c] sm:$0xf]
    %v5897 = vld [vmem:[#allocation13 + $0x40] sm:$0xf]
    %v5898 = vld [vmem:[#allocation13 + $0x44] sm:$0xf]
    %v5899 = vld [vmem:[#allocation13 + $0x48] sm:$0xf]
    %v5900 = vld [vmem:[#allocation13 + $0x4c] sm:$0xf]
    %v5901 = vld [vmem:[#allocation13 + $0x50] sm:$0xf]
    %v5902 = vld [vmem:[#allocation13 + $0x54] sm:$0xf]
    %v5903 = vld [vmem:[#allocation13 + $0x58] sm:$0xf]
    %v5904 = vld [vmem:[#allocation13 + $0x5c] sm:$0xf]
    %v5905 = vld [vmem:[#allocation13 + $0x60] sm:$0xf]
    %v5906 = vld [vmem:[#allocation13 + $0x64] sm:$0xf]
    %v5907 = vld [vmem:[#allocation13 + $0x68] sm:$0xf]
    %v5908 = vld [vmem:[#allocation13 + $0x6c] sm:$0xf]
    %v5909 = vld [vmem:[#allocation13 + $0x70] sm:$0xf]
    %v5910 = vld [vmem:[#allocation13 + $0x74] sm:$0xf]
    %v5911 = vld [vmem:[#allocation13 + $0x78] sm:$0xf]
    %v5912 = vld [vmem:[#allocation13 + $0x7c] sm:$0xf]
    %v5913 = vld [vmem:[#allocation15] sm:$0x1]
    %v5915 = vlaneseq
    %v5916 = vshrl.u32 %v5915, 7
    %v5917 = vsub.s32 0, %v5916
    %v5918 = vrot.slane %v5913, %v5917
    %v5952 = vunpack.c.l.b16 %v5881
    %v5953 = vunpack.c.l.b16 %v5882
    %v5954 = vunpack.c.l.b16 %v5883
    %v5955 = vunpack.c.l.b16 %v5884
    %v5956 = vunpack.c.l.b16 %v5885
    %v5957 = vunpack.c.l.b16 %v5886
    %v5958 = vunpack.c.l.b16 %v5887
    %v5959 = vunpack.c.l.b16 %v5888
    %v5960 = vunpack.c.l.b16 %v5889
    %v5961 = vunpack.c.l.b16 %v5890
    %v5962 = vunpack.c.l.b16 %v5891
    %v5963 = vunpack.c.l.b16 %v5892
    %v5964 = vunpack.c.l.b16 %v5893
    %v5965 = vunpack.c.l.b16 %v5894
    %v5966 = vunpack.c.l.b16 %v5895
    %v5967 = vunpack.c.l.b16 %v5896
    %v5968 = vunpack.c.l.b16 %v5897
    %v5969 = vunpack.c.l.b16 %v5898
    %v5970 = vunpack.c.l.b16 %v5899
    %v5971 = vunpack.c.l.b16 %v5900
    %v5972 = vunpack.c.l.b16 %v5901
    %v5973 = vunpack.c.l.b16 %v5902
    %v5974 = vunpack.c.l.b16 %v5903
    %v5975 = vunpack.c.l.b16 %v5904
    %v5976 = vunpack.c.l.b16 %v5905
    %v5977 = vunpack.c.l.b16 %v5906
    %v5978 = vunpack.c.l.b16 %v5907
    %v5979 = vunpack.c.l.b16 %v5908
    %v5980 = vunpack.c.l.b16 %v5909
    %v5981 = vunpack.c.l.b16 %v5910
    %v5982 = vunpack.c.l.b16 %v5911
    %v5983 = vunpack.c.l.b16 %v5912
    %v5984 = vpack.c.b16 %v5953, %v5952
    %v5985 = vpack.c.b16 %v5955, %v5954
    %v5986 = vpack.c.b16 %v5957, %v5956
    %v5987 = vpack.c.b16 %v5959, %v5958
    %v5988 = vpack.c.b16 %v5961, %v5960
    %v5989 = vpack.c.b16 %v5963, %v5962
    %v5990 = vpack.c.b16 %v5965, %v5964
    %v5991 = vpack.c.b16 %v5967, %v5966
    %v5992 = vpack.c.b16 %v5969, %v5968
    %v5993 = vpack.c.b16 %v5971, %v5970
    %v5994 = vpack.c.b16 %v5973, %v5972
    %v5995 = vpack.c.b16 %v5975, %v5974
    %v5996 = vpack.c.b16 %v5977, %v5976
    %v5997 = vpack.c.b16 %v5979, %v5978
    %v5998 = vpack.c.b16 %v5981, %v5980
    %v5999 = vpack.c.b16 %v5983, %v5982
    %6016 = vmatprep.subr.bf16.mxu0 0
    %6017 = vmatpush1.bf16.msra.mxu0 %v5984
    %6018 = vmatprep.subr.bf16.mxu0 0
    %6019 = vmatpush1.bf16.msra.mxu0 %v5985
    %6020 = vmatprep.subr.bf16.mxu0 0
    %6021 = vmatpush1.bf16.msra.mxu0 %v5986
    %6022 = vmatprep.subr.bf16.mxu0 0
    %6023 = vmatpush1.bf16.msra.mxu0 %v5987
    %6024 = vmatprep.subr.bf16.mxu0 0
    %6025 = vmatpush1.bf16.msra.mxu0 %v5988
    %6026 = vmatprep.subr.bf16.mxu0 0
    %6027 = vmatpush1.bf16.msra.mxu0 %v5989
    %6028 = vmatprep.subr.bf16.mxu0 0
    %6029 = vmatpush1.bf16.msra.mxu0 %v5990
    %6030 = vmatprep.subr.bf16.mxu0 0
    %6031 = vmatpush1.bf16.msra.mxu0 %v5991
    %6032 = vmatprep.subr.bf16.mxu0 0
    %6033 = vmatpush1.bf16.msra.mxu0 %v5992
    %6034 = vmatprep.subr.bf16.mxu0 0
    %6035 = vmatpush1.bf16.msra.mxu0 %v5993
    %6036 = vmatprep.subr.bf16.mxu0 0
    %6037 = vmatpush1.bf16.msra.mxu0 %v5994
    %6038 = vmatprep.subr.bf16.mxu0 0
    %6039 = vmatpush1.bf16.msra.mxu0 %v5995
    %6040 = vmatprep.subr.bf16.mxu0 0
    %6041 = vmatpush1.bf16.msra.mxu0 %v5996
    %6042 = vmatprep.subr.bf16.mxu0 0
    %6043 = vmatpush1.bf16.msra.mxu0 %v5997
    %6044 = vmatprep.subr.bf16.mxu0 0
    %6045 = vmatpush1.bf16.msra.mxu0 %v5998
    %6046 = vmatprep.subr.bf16.mxu0 0
    %6047 = vmatpush1.bf16.msra.mxu0 %v5999
    %6048 = vmatprep.mubr.bf16.mxu0 %v5880
    %6049 = vmatmul.mubr.bf16.gmra.mrb[0].mxu0 %v5879
    %v6050 = vpop.f32.mrb[0].mxu0
    %v6051 = vadd.f32 %v5918, %v6050
    %v6052 = vpop.f32.mrb[0].mxu0
    %v6053 = vpop.f32.mrb[0].mxu0
    %v6054 = vpop.f32.mrb[0].mxu0
    %6055 = vdwg.mxu0
    %s6056 = sld [smem:[#allocation2 + $0x2]]
    %vm6057 = vcmp.ge.f32.partialorder %v6051, 0.0
    %v6058 = vstv %s6056
    %v6059 = vmul.f32 %v6058, %v6051
    %v6060 = vsel %vm6057, %v6051, %v6059
    %v6061 = vpack.c.bf16 %v6060, %v6060
    %v6062 = vld [vmem:[#allocation16] sm:$0xf]
    %v6063 = vld [vmem:[#allocation16 + $0x4] sm:$0xf]
    %v6064 = vld [vmem:[#allocation16 + $0x8] sm:$0xf]
    %v6065 = vld [vmem:[#allocation16 + $0xc] sm:$0xf]
    %v6066 = vld [vmem:[#allocation16 + $0x10] sm:$0xf]
    %v6067 = vld [vmem:[#allocation16 + $0x14] sm:$0xf]
    %v6068 = vld [vmem:[#allocation16 + $0x18] sm:$0xf]
    %v6069 = vld [vmem:[#allocation16 + $0x1c] sm:$0xf]
    %v6070 = vld [vmem:[#allocation16 + $0x20] sm:$0xf]
    %v6071 = vld [vmem:[#allocation16 + $0x24] sm:$0xf]
    %v6072 = vld [vmem:[#allocation16 + $0x28] sm:$0xf]
    %v6073 = vld [vmem:[#allocation16 + $0x2c] sm:$0xf]
    %v6074 = vld [vmem:[#allocation16 + $0x30] sm:$0xf]
    %v6075 = vld [vmem:[#allocation16 + $0x34] sm:$0xf]
    %v6076 = vld [vmem:[#allocation16 + $0x38] sm:$0xf]
    %v6077 = vld [vmem:[#allocation16 + $0x3c] sm:$0xf]
    %v6078 = vld [vmem:[#allocation18] sm:$0x1]
    %v6080 = vlaneseq
    %v6081 = vshrl.u32 %v6080, 7
    %v6082 = vsub.s32 0, %v6081
    %v6083 = vrot.slane %v6078, %v6082
    %v6101 = vunpack.c.l.b16 %v6062
    %v6102 = vunpack.c.l.b16 %v6063
    %v6103 = vunpack.c.l.b16 %v6064
    %v6104 = vunpack.c.l.b16 %v6065
    %v6105 = vunpack.c.l.b16 %v6066
    %v6106 = vunpack.c.l.b16 %v6067
    %v6107 = vunpack.c.l.b16 %v6068
    %v6108 = vunpack.c.l.b16 %v6069
    %v6109 = vunpack.c.l.b16 %v6070
    %v6110 = vunpack.c.l.b16 %v6071
    %v6111 = vunpack.c.l.b16 %v6072
    %v6112 = vunpack.c.l.b16 %v6073
    %v6113 = vunpack.c.l.b16 %v6074
    %v6114 = vunpack.c.l.b16 %v6075
    %v6115 = vunpack.c.l.b16 %v6076
    %v6116 = vunpack.c.l.b16 %v6077
    %v6117 = vpack.c.b16 %v6102, %v6101
    %v6118 = vpack.c.b16 %v6104, %v6103
    %v6119 = vpack.c.b16 %v6106, %v6105
    %v6120 = vpack.c.b16 %v6108, %v6107
    %v6121 = vpack.c.b16 %v6110, %v6109
    %v6122 = vpack.c.b16 %v6112, %v6111
    %v6123 = vpack.c.b16 %v6114, %v6113
    %v6124 = vpack.c.b16 %v6116, %v6115
    %6133 = vmatprep.subr.bf16.mxu0 0
    %6134 = vmatpush1.bf16.msra.mxu0 %v6117
    %6135 = vmatprep.subr.bf16.mxu0 0
    %6136 = vmatpush1.bf16.msra.mxu0 %v6118
    %6137 = vmatprep.subr.bf16.mxu0 0
    %6138 = vmatpush1.bf16.msra.mxu0 %v6119
    %6139 = vmatprep.subr.bf16.mxu0 0
    %6140 = vmatpush1.bf16.msra.mxu0 %v6120
    %6141 = vmatprep.subr.bf16.mxu0 0
    %6142 = vmatpush1.bf16.msra.mxu0 %v6121
    %6143 = vmatprep.subr.bf16.mxu0 0
    %6144 = vmatpush1.bf16.msra.mxu0 %v6122
    %6145 = vmatprep.subr.bf16.mxu0 0
    %6146 = vmatpush1.bf16.msra.mxu0 %v6123
    %6147 = vmatprep.subr.bf16.mxu0 0
    %6148 = vmatpush1.bf16.msra.mxu0 %v6124
    %6149 = vmatprep.subr.bf16.mxu0 0
    %6150 = vmatpush1.bf16.msra.mxu0 0
    %6151 = vmatprep.subr.bf16.mxu0 0
    %6152 = vmatpush1.bf16.msra.mxu0 0
    %6153 = vmatprep.subr.bf16.mxu0 0
    %6154 = vmatpush1.bf16.msra.mxu0 0
    %6155 = vmatprep.subr.bf16.mxu0 0
    %6156 = vmatpush1.bf16.msra.mxu0 0
    %6157 = vmatprep.subr.bf16.mxu0 0
    %6158 = vmatpush1.bf16.msra.mxu0 0
    %6159 = vmatprep.subr.bf16.mxu0 0
    %6160 = vmatpush1.bf16.msra.mxu0 0
    %6161 = vmatprep.subr.bf16.mxu0 0
    %6162 = vmatpush1.bf16.msra.mxu0 0
    %6163 = vmatprep.subr.bf16.mxu0 0
    %6164 = vmatpush1.bf16.msra.mxu0 0
    %6165 = vmatprep.mubr.bf16.mxu0 0
    %6166 = vmatmul.mubr.bf16.gmra.mrb[0].mxu0 %v6061
    %v6167 = vpop.f32.mrb[0].mxu0
    %v6168 = vadd.f32 %v6083, %v6167
    %v6169 = vpop.f32.mrb[0].mxu0
    %v6170 = vpop.f32.mrb[0].mxu0
    %v6171 = vpop.f32.mrb[0].mxu0
    %6172 = vdwg.mxu0
    %6173 = vst [vmem:[#allocation19] sm:$0xff] %v6168
    // Predicated region
    $region82: #{tpu_custom_call.1} parent=1 // pred_check
      _
    $region83: #{tpu_custom_call.1} parent=1 // pred_check_branch
      %6175 = sbr.rel (0) target = $region85
    $region84: #{tpu_custom_call.1} parent=1 // pred_region
      %s6177 = ssub.s32 128, 128
      %6178 = vsyncadd [#allocation4], %s6177
      %s6180 = sshll.u32 [#allocation19], 4
      %s6181 = int_to_ptr.vmem [resolvable:$true] %s6180
      %6183 = dma.vmem_to_hbm [thread:$0]  %s6181, 128, %s10, [#allocation4]
    $region85: #{tpu_custom_call.1} parent=1 // pred_fallthru
      _
    // Predicated region
    $region86: #{tpu_custom_call.1} parent=1 // pred_check
      _
    $region87: #{tpu_custom_call.1} parent=1 // pred_check_branch
      %6185 = sbr.rel (0) target = $region89
    $region88: #{tpu_custom_call.1} parent=1 // pred_region
      %6186 = dma.done [#allocation4], 128
    $region89: #{tpu_custom_call.1} parent=1 // pred_fallthru
      _
    %6187 = vsyncpa [#allocation3], 1
    %6188 = vsyncpa [#allocation8], 1
    %6189 = vsyncpa [#allocation11], 1
    %6190 = vsyncpa [#allocation14], 1
    %6191 = vsyncpa [#allocation17], 1
    %6192 = vsyncpa [#allocation4], 1
    %6193 = vsyncpa [#allocation5], 1

</llo_original>
